<compile_context>
chip_gen: v7x
topology: tpu7x:2x2x1
jax: 0.10.0
libtpu: 0.0.40
codegen_flags: <defaults>
</compile_context>

<pallas_src>
import jax
import jax.numpy as jnp
import numpy as np
from jax import lax
from jax.experimental import pallas as pl
from jax.experimental.pallas import tpu as pltpu

EPS = 1e-5


# --------------------------------------------------------------- kernels ----
def conv1_stats_kernel(x_ref, w1_ref, y_ref, p_ref):
    """conv1 (1x1 == channel matmul) + per-tile BN1 sum / sum-of-squares."""
    _, H, W, Cin = x_ref.shape
    M = H * W
    x = x_ref[...].reshape(M, Cin)                                  # bf16
    y = jnp.dot(x, w1_ref[...], preferred_element_type=jnp.float32)  # (M,P) f32
    y_ref[...] = y.reshape(1, H, W, -1)
    s = jnp.sum(y, axis=0, keepdims=True)
    ss = jnp.sum(y * y, axis=0, keepdims=True)
    p_ref[...] = jnp.concatenate([s, ss], axis=0)[None]


def bn1_conv2_stats_kernel(y_ref, sc1_ref, sh1_ref, w2_ref, z_ref, p_ref,
                           ypad_ref):
    """Apply folded BN1 + ReLU, 3x3 conv (9 per-tap K=P matmuls), BN2 partials."""
    _, H, W, P = y_ref.shape
    M = H * W
    pad = W + 1

    y = y_ref[...].reshape(M, P)                                    # f32
    a = jnp.maximum(y * sc1_ref[...] + sh1_ref[...], 0.0)           # bn1 + relu
    a16 = a.astype(jnp.bfloat16)                                    # cast once

    # Stage into a zero-padded window: each tap is then a static shifted VMEM
    # slice; rows above/below the image read zeros automatically.
    ypad_ref[pl.ds(0, pad), :] = jnp.zeros((pad, P), jnp.bfloat16)
    ypad_ref[pl.ds(pad + M, pad), :] = jnp.zeros((pad, P), jnp.bfloat16)
    ypad_ref[pl.ds(pad, M), :] = a16

    row = lax.broadcasted_iota(jnp.int32, (M, 1), 0)
    ww = row % W                                                    # x-coordinate

    acc = jnp.zeros((M, P), jnp.float32)
    for dh in range(3):
        for dw in range(3):
            off = (dh - 1) * W + (dw - 1)
            src = ypad_ref[pl.ds(pad + off, M), :]                  # (M,P) bf16
            if dw == 0:                                             # left edge
                src = jnp.where(ww >= 1, src, jnp.zeros_like(src))
            elif dw == 2:                                           # right edge
                src = jnp.where(ww < W - 1, src, jnp.zeros_like(src))
            acc = acc + jnp.dot(src, w2_ref[dh * 3 + dw],
                                preferred_element_type=jnp.float32)

    z_ref[...] = acc.reshape(1, H, W, P)
    s = jnp.sum(acc, axis=0, keepdims=True)
    ss = jnp.sum(acc * acc, axis=0, keepdims=True)
    p_ref[...] = jnp.concatenate([s, ss], axis=0)[None]


def bn2_conv3_stats_kernel(z_ref, sc2_ref, sh2_ref, w3_ref, p_ref):
    """BN2 + ReLU + conv3 (1x1); only BN3 partial stats are emitted."""
    _, H, W, P = z_ref.shape
    M = H * W
    z = z_ref[...].reshape(M, P)
    a = jnp.maximum(z * sc2_ref[...] + sh2_ref[...], 0.0).astype(jnp.bfloat16)
    o = jnp.dot(a, w3_ref[...], preferred_element_type=jnp.float32)  # (M,Cout)
    s = jnp.sum(o, axis=0, keepdims=True)
    ss = jnp.sum(o * o, axis=0, keepdims=True)
    p_ref[...] = jnp.concatenate([s, ss], axis=0)[None]


def finalize_kernel(z_ref, x_ref, sc2_ref, sh2_ref, sc3_ref, sh3_ref, w3_ref,
                    o_ref):
    """Recompute BN2+ReLU+conv3, apply BN3, add residual, final ReLU."""
    _, H, W, P = z_ref.shape
    Cout = x_ref.shape[-1]
    M = H * W
    z = z_ref[...].reshape(M, P)
    a = jnp.maximum(z * sc2_ref[...] + sh2_ref[...], 0.0).astype(jnp.bfloat16)
    o = jnp.dot(a, w3_ref[...], preferred_element_type=jnp.float32)
    o = o * sc3_ref[...] + sh3_ref[...]
    res = x_ref[...].reshape(M, Cout).astype(jnp.float32)
    o = jnp.maximum(o + res, 0.0)
    o_ref[...] = o.reshape(1, H, W, Cout).astype(o_ref.dtype)


# --------------------------------------------------------------- wrapper ----
def _scale_shift(part, gamma, beta, m):
    """Reduce per-tile partials -> folded per-channel BN scale/shift (f32)."""
    s = jnp.sum(part[:, 0, :], axis=0, keepdims=True)        # (1,C)
    ss = jnp.sum(part[:, 1, :], axis=0, keepdims=True)
    mean = s / m
    var = jnp.maximum(ss / m - mean * mean, 0.0)              # clamp (review)
    scale = gamma * lax.rsqrt(var + EPS)
    shift = beta - mean * scale
    return scale, shift


@jax.jit
def bottleneck_forward(x, params):
    """x: (N,H,W,Cin) bf16 NHWC.  Returns (N,H,W,Cin) bf16."""
    w1, w2, w3, g1, b1, g2, b2, g3, b3 = params
    N, H, W, Cin = x.shape
    P = w1.shape[1]
    Cout = w3.shape[1]
    M_total = N * H * W

    w1b = w1.astype(jnp.bfloat16)                       # (Cin, P)
    w2b = w2.reshape(9, P, P).astype(jnp.bfloat16)      # (9, P, P), HWIO order
    w3b = w3.astype(jnp.bfloat16)                       # (P, Cout)

    cp = pltpu.CompilerParams(dimension_semantics=("parallel",),
                              vmem_limit_bytes=32 * 1024 * 1024)

    img = lambda c: pl.BlockSpec((1, H, W, c), lambda n: (n, 0, 0, 0))
    const = lambda a: pl.BlockSpec(a.shape, lambda n, _nd=a.ndim: (0,) * _nd)
    part = lambda c: pl.BlockSpec((1, 2, c), lambda n: (n, 0, 0))

    # Pass 1: conv1 + BN1 partials.
    y, p1 = pl.pallas_call(
        conv1_stats_kernel, grid=(N,),
        in_specs=[img(Cin), const(w1b)],
        out_specs=[img(P), part(P)],
        out_shape=(jax.ShapeDtypeStruct((N, H, W, P), jnp.float32),
                   jax.ShapeDtypeStruct((N, 2, P), jnp.float32)),
        compiler_params=cp,
    )(x, w1b)
    sc1, sh1 = _scale_shift(p1, g1, b1, M_total)

    # Pass 2: BN1 + ReLU + conv2(3x3) + BN2 partials.
    z, p2 = pl.pallas_call(
        bn1_conv2_stats_kernel, grid=(N,),
        in_specs=[img(P), const(sc1), const(sh1), const(w2b)],
        out_specs=[img(P), part(P)],
        out_shape=(jax.ShapeDtypeStruct((N, H, W, P), jnp.float32),
                   jax.ShapeDtypeStruct((N, 2, P), jnp.float32)),
        scratch_shapes=[pltpu.VMEM((H * W + 2 * (W + 1), P), jnp.bfloat16)],
        compiler_params=cp,
    )(y, sc1, sh1, w2b)
    sc2, sh2 = _scale_shift(p2, g2, b2, M_total)

    # Pass 3: BN2 + ReLU + conv3 -> BN3 partials only.
    p3 = pl.pallas_call(
        bn2_conv3_stats_kernel, grid=(N,),
        in_specs=[img(P), const(sc2), const(sh2), const(w3b)],
        out_specs=part(Cout),
        out_shape=jax.ShapeDtypeStruct((N, 2, Cout), jnp.float32),
        compiler_params=cp,
    )(z, sc2, sh2, w3b)
    sc3, sh3 = _scale_shift(p3, g3, b3, M_total)

    # Pass 4: recompute conv3, apply BN3 + residual + ReLU, emit bf16 output.
    out = pl.pallas_call(
        finalize_kernel, grid=(N,),
        in_specs=[img(P), img(Cin), const(sc2), const(sh2),
                  const(sc3), const(sh3), const(w3b)],
        out_specs=img(Cout),
        out_shape=jax.ShapeDtypeStruct((N, H, W, Cout), jnp.bfloat16),
        compiler_params=cp,
    )(z, x, sc2, sh2, sc3, sh3, w3b)
    return out


# ------------------------------------------------------------- reference ----
@jax.jit
def reference_forward(x, params):
    """Pure-JAX (XLA) reference: same math, lax.conv with bf16 operands."""
    w1, w2, w3, g1, b1, g2, b2, g3, b3 = params
    N, H, W, Cin = x.shape
    P = w1.shape[1]
    dn = ("NHWC", "HWIO", "NHWC")

    def bn(y, g, b):
        m = jnp.mean(y, axis=(0, 1, 2), keepdims=True)
        v = jnp.maximum(jnp.mean(y * y, axis=(0, 1, 2), keepdims=True) - m * m, 0.0)
        return (y - m) * lax.rsqrt(v + EPS) * g.reshape(1, 1, 1, -1) + b.reshape(1, 1, 1, -1)

    def conv(inp, w, padding):
        return lax.conv_general_dilated(
            inp.astype(jnp.bfloat16), w.astype(jnp.bfloat16), (1, 1), padding,
            dimension_numbers=dn, preferred_element_type=jnp.float32)

    y = conv(x, w1.reshape(1, 1, Cin, P), "VALID")
    y = jnp.maximum(bn(y, g1, b1), 0.0)
    z = conv(y, w2, ((1, 1), (1, 1)))
    z = jnp.maximum(bn(z, g2, b2), 0.0)
    o = conv(z, w3.reshape(1, 1, P, -1), "VALID")
    o = jnp.maximum(bn(o, g3, b3) + x.astype(jnp.float32), 0.0)
    return o


def make_params(key, inplanes, planes):
    # Weights stored pre-transposed for NHWC:
    #   torch conv1 weight (planes, inplanes, 1, 1) -> w1: (inplanes, planes)
    #   torch conv2 weight (planes, planes, 3, 3)   -> w2: (3, 3, planes, planes) HWIO
    #   torch conv3 weight (4p, planes, 1, 1)       -> w3: (planes, 4*planes)
    ks = jax.random.split(key, 9)
    w1 = 0.05 * jax.random.normal(ks[0], (inplanes, planes), jnp.float32)
    w2 = 0.05 * jax.random.normal(ks[1], (3, 3, planes, planes), jnp.float32)
    w3 = 0.05 * jax.random.normal(ks[2], (planes, 4 * planes), jnp.float32)
    g1 = 1.0 + 0.1 * jax.random.normal(ks[3], (1, planes), jnp.float32)
    b1 = 0.1 * jax.random.normal(ks[4], (1, planes), jnp.float32)
    g2 = 1.0 + 0.1 * jax.random.normal(ks[5], (1, planes), jnp.float32)
    b2 = 0.1 * jax.random.normal(ks[6], (1, planes), jnp.float32)
    g3 = 1.0 + 0.1 * jax.random.normal(ks[7], (1, 4 * planes), jnp.float32)
    b3 = 0.1 * jax.random.normal(ks[8], (1, 4 * planes), jnp.float32)
    return (w1, w2, w3, g1, b1, g2, b2, g3, b3)


if __name__ == "__main__":
    # Bottleneck(inplanes=128, planes=32): identity residual requires
    # inplanes == planes * expansion (= 4*32 = 128).
    inplanes, planes = 128, 32
    N, H, W = 2, 16, 16

    key = jax.random.PRNGKey(0)
    kx, kp = jax.random.split(key)
    # NHWC, bf16 in HBM (PyTorch-NCHW callers transpose once at the model
    # boundary; the hot path never does an NCHW<->NHWC HBM round trip).
    x = jax.random.normal(kx, (N, H, W, inplanes), jnp.float32).astype(jnp.bfloat16)
    params = make_params(kp, inplanes, planes)

    out = jax.block_until_ready(bottleneck_forward(x, params))
    ref = jax.block_until_ready(reference_forward(x, params))

    assert out.shape == (N, H, W, inplanes) and out.dtype == jnp.bfloat16
    np.testing.assert_allclose(np.asarray(out, dtype=np.float32), np.asarray(ref),
                               rtol=1e-2, atol=1e-2)
    print("KERNEL_OK")
</pallas_src>

<mosaic_0001>
module attributes {stable_mosaic.version = 11 : i64} {
  func.func @conv1_stats_kernel(%arg0: i32, %arg1: memref<1x16x16x128xbf16, #tpu.memory_space<vmem>>, %arg2: memref<128x32xbf16, #tpu.memory_space<vmem>>, %arg3: memref<1x16x16x32xf32, #tpu.memory_space<vmem>>, %arg4: memref<1x2x32xf32, #tpu.memory_space<vmem>>) attributes {dimension_semantics = [#tpu.dimension_semantics<parallel>], iteration_bounds = array<i64: 2>, scalar_prefetch = 0 : i64, scratch_operands = 0 : i64, tpu.core_type = #tpu.core_type<tc>, window_params = [{transform_indices = @transform_0, window_bounds = array<i64: 1, 16, 16, 128>}, {pipeline_mode = #tpu.pipeline_mode<synchronous>, transform_indices = @transform_1, window_bounds = array<i64: 128, 32>}, {transform_indices = @transform_2, window_bounds = array<i64: 1, 16, 16, 32>}, {transform_indices = @transform_3, window_bounds = array<i64: 1, 2, 32>}]} {
    %c0 = arith.constant 0 : index
    %c0_0 = arith.constant 0 : index
    %c0_1 = arith.constant 0 : index
    %c0_2 = arith.constant 0 : index
    %0 = vector.load %arg1[%c0, %c0_0, %c0_1, %c0_2] : memref<1x16x16x128xbf16, #tpu.memory_space<vmem>>, vector<1x16x16x128xbf16>
    %1 = vector.shape_cast %0 : vector<1x16x16x128xbf16> to vector<256x128xbf16>
    %c0_3 = arith.constant 0 : index
    %c0_4 = arith.constant 0 : index
    %2 = vector.load %arg2[%c0_3, %c0_4] : memref<128x32xbf16, #tpu.memory_space<vmem>>, vector<128x32xbf16>
    %cst = arith.constant dense<0.000000e+00> : vector<256x32xf32>
    %3 = tpu.matmul %1, %2, %cst {dimension_numbers = #tpu.dot_dimension_numbers<[1], [0], [0], [1], [0, 0, 1, 1], [], []>} : vector<256x128xbf16>, vector<128x32xbf16>, vector<256x32xf32> -> vector<256x32xf32>
    %4 = vector.shape_cast %3 : vector<256x32xf32> to vector<1x16x16x32xf32>
    %c0_5 = arith.constant 0 : index
    %c0_6 = arith.constant 0 : index
    %c0_7 = arith.constant 0 : index
    %c0_8 = arith.constant 0 : index
    %5 = vector.load %arg3[%c0_5, %c0_6, %c0_7, %c0_8] : memref<1x16x16x32xf32, #tpu.memory_space<vmem>>, vector<1x16x16x32xf32>
    tpu.vector_store %arg3[%c0_5, %c0_6, %c0_7, %c0_8], %4 {strides = array<i32>} : memref<1x16x16x32xf32, #tpu.memory_space<vmem>>, vector<1x16x16x32xf32>,
    %cst_9 = arith.constant dense<0.000000e+00> : vector<32xf32>
    %6 = vector.multi_reduction <add>, %3, %cst_9 [0] : vector<256x32xf32> to vector<32xf32>
    %7 = vector.shape_cast %6 : vector<32xf32> to vector<1x32xf32>
    %8 = arith.mulf %3, %3 : vector<256x32xf32>
    %cst_10 = arith.constant dense<0.000000e+00> : vector<32xf32>
    %9 = vector.multi_reduction <add>, %8, %cst_10 [0] : vector<256x32xf32> to vector<32xf32>
    %10 = vector.shape_cast %9 : vector<32xf32> to vector<1x32xf32>
    %11 = tpu.concatenate %7, %10 in 0 : vector<1x32xf32>, vector<1x32xf32> -> vector<2x32xf32>
    %12 = vector.shape_cast %11 : vector<2x32xf32> to vector<1x2x32xf32>
    %c0_11 = arith.constant 0 : index
    %c0_12 = arith.constant 0 : index
    %c0_13 = arith.constant 0 : index
    %13 = vector.load %arg4[%c0_11, %c0_12, %c0_13] : memref<1x2x32xf32, #tpu.memory_space<vmem>>, vector<1x2x32xf32>
    tpu.vector_store %arg4[%c0_11, %c0_12, %c0_13], %12 {strides = array<i32>} : memref<1x2x32xf32, #tpu.memory_space<vmem>>, vector<1x2x32xf32>,
    return
  }
  func.func @transform_0(%arg0: i32) -> (i32, i32, i32, i32) {
    %c0_i32 = arith.constant 0 : i32
    %c0_i32_0 = arith.constant 0 : i32
    %c0_i32_1 = arith.constant 0 : i32
    %c0_i32_2 = arith.constant 0 : i32
    return %arg0, %c0_i32, %c0_i32_0, %c0_i32_1 : i32, i32, i32, i32
  }
  func.func @transform_1(%arg0: i32) -> (i32, i32) {
    %c0_i32 = arith.constant 0 : i32
    %c0_i32_0 = arith.constant 0 : i32
    %c0_i32_1 = arith.constant 0 : i32
    return %c0_i32, %c0_i32_0 : i32, i32
  }
  func.func @transform_2(%arg0: i32) -> (i32, i32, i32, i32) {
    %c0_i32 = arith.constant 0 : i32
    %c0_i32_0 = arith.constant 0 : i32
    %c0_i32_1 = arith.constant 0 : i32
    %c0_i32_2 = arith.constant 0 : i32
    return %arg0, %c0_i32, %c0_i32_0, %c0_i32_1 : i32, i32, i32, i32
  }
  func.func @transform_3(%arg0: i32) -> (i32, i32, i32) {
    %c0_i32 = arith.constant 0 : i32
    %c0_i32_0 = arith.constant 0 : i32
    %c0_i32_1 = arith.constant 0 : i32
    return %arg0, %c0_i32, %c0_i32_0 : i32, i32, i32
  }
}

module attributes {stable_mosaic.version = 11 : i64} {
  func.func @bn1_conv2_stats_kernel(%arg0: i32, %arg1: memref<1x16x16x32xf32, #tpu.memory_space<vmem>>, %arg2: memref<1x32xf32, #tpu.memory_space<vmem>>, %arg3: memref<1x32xf32, #tpu.memory_space<vmem>>, %arg4: memref<9x32x32xbf16, #tpu.memory_space<vmem>>, %arg5: memref<1x16x16x32xf32, #tpu.memory_space<vmem>>, %arg6: memref<1x2x32xf32, #tpu.memory_space<vmem>>, %arg7: memref<290x32xbf16, #tpu.memory_space<vmem>>) attributes {dimension_semantics = [#tpu.dimension_semantics<parallel>], iteration_bounds = array<i64: 2>, scalar_prefetch = 0 : i64, scratch_operands = 1 : i64, tpu.core_type = #tpu.core_type<tc>, window_params = [{transform_indices = @transform_0, window_bounds = array<i64: 1, 16, 16, 32>}, {pipeline_mode = #tpu.pipeline_mode<synchronous>, transform_indices = @transform_1, window_bounds = array<i64: 1, 32>}, {pipeline_mode = #tpu.pipeline_mode<synchronous>, transform_indices = @transform_2, window_bounds = array<i64: 1, 32>}, {pipeline_mode = #tpu.pipeline_mode<synchronous>, transform_indices = @transform_3, window_bounds = array<i64: 9, 32, 32>}, {transform_indices = @transform_4, window_bounds = array<i64: 1, 16, 16, 32>}, {transform_indices = @transform_5, window_bounds = array<i64: 1, 2, 32>}]} {
    %c0 = arith.constant 0 : index
    %c0_0 = arith.constant 0 : index
    %c0_1 = arith.constant 0 : index
    %c0_2 = arith.constant 0 : index
    %0 = vector.load %arg1[%c0, %c0_0, %c0_1, %c0_2] : memref<1x16x16x32xf32, #tpu.memory_space<vmem>>, vector<1x16x16x32xf32>
    %1 = vector.shape_cast %0 : vector<1x16x16x32xf32> to vector<256x32xf32>
    %c0_3 = arith.constant 0 : index
    %c0_4 = arith.constant 0 : index
    %2 = vector.load %arg2[%c0_3, %c0_4] : memref<1x32xf32, #tpu.memory_space<vmem>>, vector<1x32xf32>
    %3 = vector.broadcast %2 : vector<1x32xf32> to vector<256x32xf32>
    %4 = arith.mulf %1, %3 : vector<256x32xf32>
    %c0_5 = arith.constant 0 : index
    %c0_6 = arith.constant 0 : index
    %5 = vector.load %arg3[%c0_5, %c0_6] : memref<1x32xf32, #tpu.memory_space<vmem>>, vector<1x32xf32>
    %6 = vector.broadcast %5 : vector<1x32xf32> to vector<256x32xf32>
    %7 = arith.addf %4, %6 : vector<256x32xf32>
    %cst = arith.constant 0.000000e+00 : f32
    %8 = vector.broadcast %cst : f32 to vector<256x32xf32>
    %9 = arith.maximumf %7, %8 : vector<256x32xf32>
    %10 = arith.truncf %9 : vector<256x32xf32> to vector<256x32xbf16>
    %cst_7 = arith.constant 0.000000e+00 : bf16
    %11 = vector.broadcast %cst_7 : bf16 to vector<17x32xbf16>
    %c0_8 = arith.constant 0 : index
    %c0_9 = arith.constant 0 : index
    %12 = vector.load %arg7[%c0_8, %c0_9] : memref<290x32xbf16, #tpu.memory_space<vmem>>, vector<17x32xbf16>
    tpu.vector_store %arg7[%c0_8, %c0_9], %11 {strides = array<i32>} : memref<290x32xbf16, #tpu.memory_space<vmem>>, vector<17x32xbf16>,
    %cst_10 = arith.constant 0.000000e+00 : bf16
    %13 = vector.broadcast %cst_10 : bf16 to vector<17x32xbf16>
    %c273 = arith.constant 273 : index
    %c0_11 = arith.constant 0 : index
    %14 = vector.load %arg7[%c273, %c0_11] : memref<290x32xbf16, #tpu.memory_space<vmem>>, vector<17x32xbf16>
    tpu.vector_store %arg7[%c273, %c0_11], %13 {strides = array<i32>} : memref<290x32xbf16, #tpu.memory_space<vmem>>, vector<17x32xbf16>,
    %c17 = arith.constant 17 : index
    %c0_12 = arith.constant 0 : index
    %15 = vector.load %arg7[%c17, %c0_12] : memref<290x32xbf16, #tpu.memory_space<vmem>>, vector<256x32xbf16>
    tpu.vector_store %arg7[%c17, %c0_12], %10 {strides = array<i32>} : memref<290x32xbf16, #tpu.memory_space<vmem>>, vector<256x32xbf16>,
    %16 = tpu.iota {dimensions = array<i32: 0>} : vector<256x1xi32>
    %c16_i32 = arith.constant 16 : i32
    %c0_i32 = arith.constant 0 : i32
    %17 = arith.cmpi eq, %c16_i32, %c0_i32 : i32
    %c1_i32 = arith.constant 1 : i32
    %18 = arith.select %17, %c1_i32, %c16_i32 : i32
    %19 = vector.broadcast %18 : i32 to vector<256x1xi32>
    %20 = arith.remsi %16, %19 : vector<256x1xi32>
    %c0_i32_13 = arith.constant 0 : i32
    %21 = vector.broadcast %c0_i32_13 : i32 to vector<256x1xi32>
    %22 = arith.cmpi ne, %20, %21 : vector<256x1xi32>
    %c0_i32_14 = arith.constant 0 : i32
    %23 = vector.broadcast %c0_i32_14 : i32 to vector<256x1xi32>
    %24 = arith.cmpi slt, %20, %23 : vector<256x1xi32>
    %c0_i32_15 = arith.constant 0 : i32
    %25 = arith.cmpi slt, %18, %c0_i32_15 : i32
    %26 = vector.broadcast %25 : i1 to vector<256x1xi1>
    %27 = vector.broadcast %26 : vector<256x1xi1> to vector<256x1xi1>
    %28 = arith.xori %24, %27 : vector<256x1xi1>
    %29 = arith.andi %28, %22 : vector<256x1xi1>
    %30 = vector.broadcast %18 : i32 to vector<256x1xi32>
    %31 = arith.addi %20, %30 : vector<256x1xi32>
    %32 = arith.select %29, %31, %20 : vector<256x1xi1>, vector<256x1xi32>
    %cst_16 = arith.constant 0.000000e+00 : f32
    %33 = vector.broadcast %cst_16 : f32 to vector<256x32xf32>
    %c0_17 = arith.constant 0 : index
    %c0_18 = arith.constant 0 : index
    %34 = vector.load %arg7[%c0_17, %c0_18] : memref<290x32xbf16, #tpu.memory_space<vmem>>, vector<256x32xbf16>
    %c1_i32_19 = arith.constant 1 : i32
    %35 = vector.broadcast %c1_i32_19 : i32 to vector<256x1xi32>
    %36 = arith.cmpi sge, %32, %35 : vector<256x1xi32>
    %cst_20 = arith.constant 0.000000e+00 : bf16
    %37 = vector.broadcast %cst_20 : bf16 to vector<256x32xbf16>
    %38 = vector.shape_cast %36 : vector<256x1xi1> to vector<256x1xi1>
    %39 = vector.broadcast %38 : vector<256x1xi1> to vector<256x32xi1>
    %40 = arith.select %39, %34, %37 : vector<256x32xi1>, vector<256x32xbf16>
    %c0_21 = arith.constant 0 : index
    %c0_22 = arith.constant 0 : index
    %c0_23 = arith.constant 0 : index
    %41 = vector.load %arg4[%c0_21, %c0_22, %c0_23] : memref<9x32x32xbf16, #tpu.memory_space<vmem>>, vector<1x32x32xbf16>
    %42 = vector.shape_cast %41 : vector<1x32x32xbf16> to vector<32x32xbf16>
    %cst_24 = arith.constant dense<0.000000e+00> : vector<256x32xf32>
    %43 = tpu.matmul %40, %42, %cst_24 {dimension_numbers = #tpu.dot_dimension_numbers<[1], [0], [0], [1], [0, 0, 1, 1], [], []>} : vector<256x32xbf16>, vector<32x32xbf16>, vector<256x32xf32> -> vector<256x32xf32>
    %44 = arith.addf %33, %43 : vector<256x32xf32>
    %c1 = arith.constant 1 : index
    %c0_25 = arith.constant 0 : index
    %45 = vector.load %arg7[%c1, %c0_25] : memref<290x32xbf16, #tpu.memory_space<vmem>>, vector<256x32xbf16>
    %c1_26 = arith.constant 1 : index
    %c0_27 = arith.constant 0 : index
    %c0_28 = arith.constant 0 : index
    %46 = vector.load %arg4[%c1_26, %c0_27, %c0_28] : memref<9x32x32xbf16, #tpu.memory_space<vmem>>, vector<1x32x32xbf16>
    %47 = vector.shape_cast %46 : vector<1x32x32xbf16> to vector<32x32xbf16>
    %cst_29 = arith.constant dense<0.000000e+00> : vector<256x32xf32>
    %48 = tpu.matmul %45, %47, %cst_29 {dimension_numbers = #tpu.dot_dimension_numbers<[1], [0], [0], [1], [0, 0, 1, 1], [], []>} : vector<256x32xbf16>, vector<32x32xbf16>, vector<256x32xf32> -> vector<256x32xf32>
    %49 = arith.addf %44, %48 : vector<256x32xf32>
    %c2 = arith.constant 2 : index
    %c0_30 = arith.constant 0 : index
    %50 = vector.load %arg7[%c2, %c0_30] : memref<290x32xbf16, #tpu.memory_space<vmem>>, vector<256x32xbf16>
    %c15_i32 = arith.constant 15 : i32
    %51 = vector.broadcast %c15_i32 : i32 to vector<256x1xi32>
    %52 = arith.cmpi slt, %32, %51 : vector<256x1xi32>
    %cst_31 = arith.constant 0.000000e+00 : bf16
    %53 = vector.broadcast %cst_31 : bf16 to vector<256x32xbf16>
    %54 = vector.shape_cast %52 : vector<256x1xi1> to vector<256x1xi1>
    %55 = vector.broadcast %54 : vector<256x1xi1> to vector<256x32xi1>
    %56 = arith.select %55, %50, %53 : vector<256x32xi1>, vector<256x32xbf16>
    %c2_32 = arith.constant 2 : index
    %c0_33 = arith.constant 0 : index
    %c0_34 = arith.constant 0 : index
    %57 = vector.load %arg4[%c2_32, %c0_33, %c0_34] : memref<9x32x32xbf16, #tpu.memory_space<vmem>>, vector<1x32x32xbf16>
    %58 = vector.shape_cast %57 : vector<1x32x32xbf16> to vector<32x32xbf16>
    %cst_35 = arith.constant dense<0.000000e+00> : vector<256x32xf32>
    %59 = tpu.matmul %56, %58, %cst_35 {dimension_numbers = #tpu.dot_dimension_numbers<[1], [0], [0], [1], [0, 0, 1, 1], [], []>} : vector<256x32xbf16>, vector<32x32xbf16>, vector<256x32xf32> -> vector<256x32xf32>
    %60 = arith.addf %49, %59 : vector<256x32xf32>
    %c16 = arith.constant 16 : index
    %c0_36 = arith.constant 0 : index
    %61 = vector.load %arg7[%c16, %c0_36] : memref<290x32xbf16, #tpu.memory_space<vmem>>, vector<256x32xbf16>
    %c1_i32_37 = arith.constant 1 : i32
    %62 = vector.broadcast %c1_i32_37 : i32 to vector<256x1xi32>
    %63 = arith.cmpi sge, %32, %62 : vector<256x1xi32>
    %cst_38 = arith.constant 0.000000e+00 : bf16
    %64 = vector.broadcast %cst_38 : bf16 to vector<256x32xbf16>
    %65 = vector.shape_cast %63 : vector<256x1xi1> to vector<256x1xi1>
    %66 = vector.broadcast %65 : vector<256x1xi1> to vector<256x32xi1>
    %67 = arith.select %66, %61, %64 : vector<256x32xi1>, vector<256x32xbf16>
    %c3 = arith.constant 3 : index
    %c0_39 = arith.constant 0 : index
    %c0_40 = arith.constant 0 : index
    %68 = vector.load %arg4[%c3, %c0_39, %c0_40] : memref<9x32x32xbf16, #tpu.memory_space<vmem>>, vector<1x32x32xbf16>
    %69 = vector.shape_cast %68 : vector<1x32x32xbf16> to vector<32x32xbf16>
    %cst_41 = arith.constant dense<0.000000e+00> : vector<256x32xf32>
    %70 = tpu.matmul %67, %69, %cst_41 {dimension_numbers = #tpu.dot_dimension_numbers<[1], [0], [0], [1], [0, 0, 1, 1], [], []>} : vector<256x32xbf16>, vector<32x32xbf16>, vector<256x32xf32> -> vector<256x32xf32>
    %71 = arith.addf %60, %70 : vector<256x32xf32>
    %c17_42 = arith.constant 17 : index
    %c0_43 = arith.constant 0 : index
    %72 = vector.load %arg7[%c17_42, %c0_43] : memref<290x32xbf16, #tpu.memory_space<vmem>>, vector<256x32xbf16>
    %c4 = arith.constant 4 : index
    %c0_44 = arith.constant 0 : index
    %c0_45 = arith.constant 0 : index
    %73 = vector.load %arg4[%c4, %c0_44, %c0_45] : memref<9x32x32xbf16, #tpu.memory_space<vmem>>, vector<1x32x32xbf16>
    %74 = vector.shape_cast %73 : vector<1x32x32xbf16> to vector<32x32xbf16>
    %cst_46 = arith.constant dense<0.000000e+00> : vector<256x32xf32>
    %75 = tpu.matmul %72, %74, %cst_46 {dimension_numbers = #tpu.dot_dimension_numbers<[1], [0], [0], [1], [0, 0, 1, 1], [], []>} : vector<256x32xbf16>, vector<32x32xbf16>, vector<256x32xf32> -> vector<256x32xf32>
    %76 = arith.addf %71, %75 : vector<256x32xf32>
    %c18 = arith.constant 18 : index
    %c0_47 = arith.constant 0 : index
    %77 = vector.load %arg7[%c18, %c0_47] : memref<290x32xbf16, #tpu.memory_space<vmem>>, vector<256x32xbf16>
    %c15_i32_48 = arith.constant 15 : i32
    %78 = vector.broadcast %c15_i32_48 : i32 to vector<256x1xi32>
    %79 = arith.cmpi slt, %32, %78 : vector<256x1xi32>
    %cst_49 = arith.constant 0.000000e+00 : bf16
    %80 = vector.broadcast %cst_49 : bf16 to vector<256x32xbf16>
    %81 = vector.shape_cast %79 : vector<256x1xi1> to vector<256x1xi1>
    %82 = vector.broadcast %81 : vector<256x1xi1> to vector<256x32xi1>
    %83 = arith.select %82, %77, %80 : vector<256x32xi1>, vector<256x32xbf16>
    %c5 = arith.constant 5 : index
    %c0_50 = arith.constant 0 : index
    %c0_51 = arith.constant 0 : index
    %84 = vector.load %arg4[%c5, %c0_50, %c0_51] : memref<9x32x32xbf16, #tpu.memory_space<vmem>>, vector<1x32x32xbf16>
    %85 = vector.shape_cast %84 : vector<1x32x32xbf16> to vector<32x32xbf16>
    %cst_52 = arith.constant dense<0.000000e+00> : vector<256x32xf32>
    %86 = tpu.matmul %83, %85, %cst_52 {dimension_numbers = #tpu.dot_dimension_numbers<[1], [0], [0], [1], [0, 0, 1, 1], [], []>} : vector<256x32xbf16>, vector<32x32xbf16>, vector<256x32xf32> -> vector<256x32xf32>
    %87 = arith.addf %76, %86 : vector<256x32xf32>
    %c32 = arith.constant 32 : index
    %c0_53 = arith.constant 0 : index
    %88 = vector.load %arg7[%c32, %c0_53] : memref<290x32xbf16, #tpu.memory_space<vmem>>, vector<256x32xbf16>
    %c1_i32_54 = arith.constant 1 : i32
    %89 = vector.broadcast %c1_i32_54 : i32 to vector<256x1xi32>
    %90 = arith.cmpi sge, %32, %89 : vector<256x1xi32>
    %cst_55 = arith.constant 0.000000e+00 : bf16
    %91 = vector.broadcast %cst_55 : bf16 to vector<256x32xbf16>
    %92 = vector.shape_cast %90 : vector<256x1xi1> to vector<256x1xi1>
    %93 = vector.broadcast %92 : vector<256x1xi1> to vector<256x32xi1>
    %94 = arith.select %93, %88, %91 : vector<256x32xi1>, vector<256x32xbf16>
    %c6 = arith.constant 6 : index
    %c0_56 = arith.constant 0 : index
    %c0_57 = arith.constant 0 : index
    %95 = vector.load %arg4[%c6, %c0_56, %c0_57] : memref<9x32x32xbf16, #tpu.memory_space<vmem>>, vector<1x32x32xbf16>
    %96 = vector.shape_cast %95 : vector<1x32x32xbf16> to vector<32x32xbf16>
    %cst_58 = arith.constant dense<0.000000e+00> : vector<256x32xf32>
    %97 = tpu.matmul %94, %96, %cst_58 {dimension_numbers = #tpu.dot_dimension_numbers<[1], [0], [0], [1], [0, 0, 1, 1], [], []>} : vector<256x32xbf16>, vector<32x32xbf16>, vector<256x32xf32> -> vector<256x32xf32>
    %98 = arith.addf %87, %97 : vector<256x32xf32>
    %c33 = arith.constant 33 : index
    %c0_59 = arith.constant 0 : index
    %99 = vector.load %arg7[%c33, %c0_59] : memref<290x32xbf16, #tpu.memory_space<vmem>>, vector<256x32xbf16>
    %c7 = arith.constant 7 : index
    %c0_60 = arith.constant 0 : index
    %c0_61 = arith.constant 0 : index
    %100 = vector.load %arg4[%c7, %c0_60, %c0_61] : memref<9x32x32xbf16, #tpu.memory_space<vmem>>, vector<1x32x32xbf16>
    %101 = vector.shape_cast %100 : vector<1x32x32xbf16> to vector<32x32xbf16>
    %cst_62 = arith.constant dense<0.000000e+00> : vector<256x32xf32>
    %102 = tpu.matmul %99, %101, %cst_62 {dimension_numbers = #tpu.dot_dimension_numbers<[1], [0], [0], [1], [0, 0, 1, 1], [], []>} : vector<256x32xbf16>, vector<32x32xbf16>, vector<256x32xf32> -> vector<256x32xf32>
    %103 = arith.addf %98, %102 : vector<256x32xf32>
    %c34 = arith.constant 34 : index
    %c0_63 = arith.constant 0 : index
    %104 = vector.load %arg7[%c34, %c0_63] : memref<290x32xbf16, #tpu.memory_space<vmem>>, vector<256x32xbf16>
    %c15_i32_64 = arith.constant 15 : i32
    %105 = vector.broadcast %c15_i32_64 : i32 to vector<256x1xi32>
    %106 = arith.cmpi slt, %32, %105 : vector<256x1xi32>
    %cst_65 = arith.constant 0.000000e+00 : bf16
    %107 = vector.broadcast %cst_65 : bf16 to vector<256x32xbf16>
    %108 = vector.shape_cast %106 : vector<256x1xi1> to vector<256x1xi1>
    %109 = vector.broadcast %108 : vector<256x1xi1> to vector<256x32xi1>
    %110 = arith.select %109, %104, %107 : vector<256x32xi1>, vector<256x32xbf16>
    %c8 = arith.constant 8 : index
    %c0_66 = arith.constant 0 : index
    %c0_67 = arith.constant 0 : index
    %111 = vector.load %arg4[%c8, %c0_66, %c0_67] : memref<9x32x32xbf16, #tpu.memory_space<vmem>>, vector<1x32x32xbf16>
    %112 = vector.shape_cast %111 : vector<1x32x32xbf16> to vector<32x32xbf16>
    %cst_68 = arith.constant dense<0.000000e+00> : vector<256x32xf32>
    %113 = tpu.matmul %110, %112, %cst_68 {dimension_numbers = #tpu.dot_dimension_numbers<[1], [0], [0], [1], [0, 0, 1, 1], [], []>} : vector<256x32xbf16>, vector<32x32xbf16>, vector<256x32xf32> -> vector<256x32xf32>
    %114 = arith.addf %103, %113 : vector<256x32xf32>
    %115 = vector.shape_cast %114 : vector<256x32xf32> to vector<1x16x16x32xf32>
    %c0_69 = arith.constant 0 : index
    %c0_70 = arith.constant 0 : index
    %c0_71 = arith.constant 0 : index
    %c0_72 = arith.constant 0 : index
    %116 = vector.load %arg5[%c0_69, %c0_70, %c0_71, %c0_72] : memref<1x16x16x32xf32, #tpu.memory_space<vmem>>, vector<1x16x16x32xf32>
    tpu.vector_store %arg5[%c0_69, %c0_70, %c0_71, %c0_72], %115 {strides = array<i32>} : memref<1x16x16x32xf32, #tpu.memory_space<vmem>>, vector<1x16x16x32xf32>,
    %cst_73 = arith.constant dense<0.000000e+00> : vector<32xf32>
    %117 = vector.multi_reduction <add>, %114, %cst_73 [0] : vector<256x32xf32> to vector<32xf32>
    %118 = vector.shape_cast %117 : vector<32xf32> to vector<1x32xf32>
    %119 = arith.mulf %114, %114 : vector<256x32xf32>
    %cst_74 = arith.constant dense<0.000000e+00> : vector<32xf32>
    %120 = vector.multi_reduction <add>, %119, %cst_74 [0] : vector<256x32xf32> to vector<32xf32>
    %121 = vector.shape_cast %120 : vector<32xf32> to vector<1x32xf32>
    %122 = tpu.concatenate %118, %121 in 0 : vector<1x32xf32>, vector<1x32xf32> -> vector<2x32xf32>
    %123 = vector.shape_cast %122 : vector<2x32xf32> to vector<1x2x32xf32>
    %c0_75 = arith.constant 0 : index
    %c0_76 = arith.constant 0 : index
    %c0_77 = arith.constant 0 : index
    %124 = vector.load %arg6[%c0_75, %c0_76, %c0_77] : memref<1x2x32xf32, #tpu.memory_space<vmem>>, vector<1x2x32xf32>
    tpu.vector_store %arg6[%c0_75, %c0_76, %c0_77], %123 {strides = array<i32>} : memref<1x2x32xf32, #tpu.memory_space<vmem>>, vector<1x2x32xf32>,
    return
  }
  func.func @transform_0(%arg0: i32) -> (i32, i32, i32, i32) {
    %c0_i32 = arith.constant 0 : i32
    %c0_i32_0 = arith.constant 0 : i32
    %c0_i32_1 = arith.constant 0 : i32
    %c0_i32_2 = arith.constant 0 : i32
    return %arg0, %c0_i32, %c0_i32_0, %c0_i32_1 : i32, i32, i32, i32
  }
  func.func @transform_1(%arg0: i32) -> (i32, i32) {
    %c0_i32 = arith.constant 0 : i32
    %c0_i32_0 = arith.constant 0 : i32
    %c0_i32_1 = arith.constant 0 : i32
    return %c0_i32, %c0_i32_0 : i32, i32
  }
  func.func @transform_2(%arg0: i32) -> (i32, i32) {
    %c0_i32 = arith.constant 0 : i32
    %c0_i32_0 = arith.constant 0 : i32
    %c0_i32_1 = arith.constant 0 : i32
    return %c0_i32, %c0_i32_0 : i32, i32
  }
  func.func @transform_3(%arg0: i32) -> (i32, i32, i32) {
    %c0_i32 = arith.constant 0 : i32
    %c0_i32_0 = arith.constant 0 : i32
    %c0_i32_1 = arith.constant 0 : i32
    %c0_i32_2 = arith.constant 0 : i32
    return %c0_i32, %c0_i32_0, %c0_i32_1 : i32, i32, i32
  }
  func.func @transform_4(%arg0: i32) -> (i32, i32, i32, i32) {
    %c0_i32 = arith.constant 0 : i32
    %c0_i32_0 = arith.constant 0 : i32
    %c0_i32_1 = arith.constant 0 : i32
    %c0_i32_2 = arith.constant 0 : i32
    return %arg0, %c0_i32, %c0_i32_0, %c0_i32_1 : i32, i32, i32, i32
  }
  func.func @transform_5(%arg0: i32) -> (i32, i32, i32) {
    %c0_i32 = arith.constant 0 : i32
    %c0_i32_0 = arith.constant 0 : i32
    %c0_i32_1 = arith.constant 0 : i32
    return %arg0, %c0_i32, %c0_i32_0 : i32, i32, i32
  }
}

module attributes {stable_mosaic.version = 11 : i64} {
  func.func @bn2_conv3_stats_kernel(%arg0: i32, %arg1: memref<1x16x16x32xf32, #tpu.memory_space<vmem>>, %arg2: memref<1x32xf32, #tpu.memory_space<vmem>>, %arg3: memref<1x32xf32, #tpu.memory_space<vmem>>, %arg4: memref<32x128xbf16, #tpu.memory_space<vmem>>, %arg5: memref<1x2x128xf32, #tpu.memory_space<vmem>>) attributes {dimension_semantics = [#tpu.dimension_semantics<parallel>], iteration_bounds = array<i64: 2>, scalar_prefetch = 0 : i64, scratch_operands = 0 : i64, tpu.core_type = #tpu.core_type<tc>, window_params = [{transform_indices = @transform_0, window_bounds = array<i64: 1, 16, 16, 32>}, {pipeline_mode = #tpu.pipeline_mode<synchronous>, transform_indices = @transform_1, window_bounds = array<i64: 1, 32>}, {pipeline_mode = #tpu.pipeline_mode<synchronous>, transform_indices = @transform_2, window_bounds = array<i64: 1, 32>}, {pipeline_mode = #tpu.pipeline_mode<synchronous>, transform_indices = @transform_3, window_bounds = array<i64: 32, 128>}, {transform_indices = @transform_4, window_bounds = array<i64: 1, 2, 128>}]} {
    %c0 = arith.constant 0 : index
    %c0_0 = arith.constant 0 : index
    %c0_1 = arith.constant 0 : index
    %c0_2 = arith.constant 0 : index
    %0 = vector.load %arg1[%c0, %c0_0, %c0_1, %c0_2] : memref<1x16x16x32xf32, #tpu.memory_space<vmem>>, vector<1x16x16x32xf32>
    %1 = vector.shape_cast %0 : vector<1x16x16x32xf32> to vector<256x32xf32>
    %c0_3 = arith.constant 0 : index
    %c0_4 = arith.constant 0 : index
    %2 = vector.load %arg2[%c0_3, %c0_4] : memref<1x32xf32, #tpu.memory_space<vmem>>, vector<1x32xf32>
    %3 = vector.broadcast %2 : vector<1x32xf32> to vector<256x32xf32>
    %4 = arith.mulf %1, %3 : vector<256x32xf32>
    %c0_5 = arith.constant 0 : index
    %c0_6 = arith.constant 0 : index
    %5 = vector.load %arg3[%c0_5, %c0_6] : memref<1x32xf32, #tpu.memory_space<vmem>>, vector<1x32xf32>
    %6 = vector.broadcast %5 : vector<1x32xf32> to vector<256x32xf32>
    %7 = arith.addf %4, %6 : vector<256x32xf32>
    %cst = arith.constant 0.000000e+00 : f32
    %8 = vector.broadcast %cst : f32 to vector<256x32xf32>
    %9 = arith.maximumf %7, %8 : vector<256x32xf32>
    %10 = arith.truncf %9 : vector<256x32xf32> to vector<256x32xbf16>
    %c0_7 = arith.constant 0 : index
    %c0_8 = arith.constant 0 : index
    %11 = vector.load %arg4[%c0_7, %c0_8] : memref<32x128xbf16, #tpu.memory_space<vmem>>, vector<32x128xbf16>
    %cst_9 = arith.constant dense<0.000000e+00> : vector<256x128xf32>
    %12 = tpu.matmul %10, %11, %cst_9 {dimension_numbers = #tpu.dot_dimension_numbers<[1], [0], [0], [1], [0, 0, 1, 1], [], []>} : vector<256x32xbf16>, vector<32x128xbf16>, vector<256x128xf32> -> vector<256x128xf32>
    %cst_10 = arith.constant dense<0.000000e+00> : vector<128xf32>
    %13 = vector.multi_reduction <add>, %12, %cst_10 [0] : vector<256x128xf32> to vector<128xf32>
    %14 = vector.shape_cast %13 : vector<128xf32> to vector<1x128xf32>
    %15 = arith.mulf %12, %12 : vector<256x128xf32>
    %cst_11 = arith.constant dense<0.000000e+00> : vector<128xf32>
    %16 = vector.multi_reduction <add>, %15, %cst_11 [0] : vector<256x128xf32> to vector<128xf32>
    %17 = vector.shape_cast %16 : vector<128xf32> to vector<1x128xf32>
    %18 = tpu.concatenate %14, %17 in 0 : vector<1x128xf32>, vector<1x128xf32> -> vector<2x128xf32>
    %19 = vector.shape_cast %18 : vector<2x128xf32> to vector<1x2x128xf32>
    %c0_12 = arith.constant 0 : index
    %c0_13 = arith.constant 0 : index
    %c0_14 = arith.constant 0 : index
    %20 = vector.load %arg5[%c0_12, %c0_13, %c0_14] : memref<1x2x128xf32, #tpu.memory_space<vmem>>, vector<1x2x128xf32>
    tpu.vector_store %arg5[%c0_12, %c0_13, %c0_14], %19 {strides = array<i32>} : memref<1x2x128xf32, #tpu.memory_space<vmem>>, vector<1x2x128xf32>,
    return
  }
  func.func @transform_0(%arg0: i32) -> (i32, i32, i32, i32) {
    %c0_i32 = arith.constant 0 : i32
    %c0_i32_0 = arith.constant 0 : i32
    %c0_i32_1 = arith.constant 0 : i32
    %c0_i32_2 = arith.constant 0 : i32
    return %arg0, %c0_i32, %c0_i32_0, %c0_i32_1 : i32, i32, i32, i32
  }
  func.func @transform_1(%arg0: i32) -> (i32, i32) {
    %c0_i32 = arith.constant 0 : i32
    %c0_i32_0 = arith.constant 0 : i32
    %c0_i32_1 = arith.constant 0 : i32
    return %c0_i32, %c0_i32_0 : i32, i32
  }
  func.func @transform_2(%arg0: i32) -> (i32, i32) {
    %c0_i32 = arith.constant 0 : i32
    %c0_i32_0 = arith.constant 0 : i32
    %c0_i32_1 = arith.constant 0 : i32
    return %c0_i32, %c0_i32_0 : i32, i32
  }
  func.func @transform_3(%arg0: i32) -> (i32, i32) {
    %c0_i32 = arith.constant 0 : i32
    %c0_i32_0 = arith.constant 0 : i32
    %c0_i32_1 = arith.constant 0 : i32
    return %c0_i32, %c0_i32_0 : i32, i32
  }
  func.func @transform_4(%arg0: i32) -> (i32, i32, i32) {
    %c0_i32 = arith.constant 0 : i32
    %c0_i32_0 = arith.constant 0 : i32
    %c0_i32_1 = arith.constant 0 : i32
    return %arg0, %c0_i32, %c0_i32_0 : i32, i32, i32
  }
}

module attributes {stable_mosaic.version = 11 : i64} {
  func.func @finalize_kernel(%arg0: i32, %arg1: memref<1x16x16x32xf32, #tpu.memory_space<vmem>>, %arg2: memref<1x16x16x128xbf16, #tpu.memory_space<vmem>>, %arg3: memref<1x32xf32, #tpu.memory_space<vmem>>, %arg4: memref<1x32xf32, #tpu.memory_space<vmem>>, %arg5: memref<1x128xf32, #tpu.memory_space<vmem>>, %arg6: memref<1x128xf32, #tpu.memory_space<vmem>>, %arg7: memref<32x128xbf16, #tpu.memory_space<vmem>>, %arg8: memref<1x16x16x128xbf16, #tpu.memory_space<vmem>>) attributes {dimension_semantics = [#tpu.dimension_semantics<parallel>], iteration_bounds = array<i64: 2>, scalar_prefetch = 0 : i64, scratch_operands = 0 : i64, tpu.core_type = #tpu.core_type<tc>, window_params = [{transform_indices = @transform_0, window_bounds = array<i64: 1, 16, 16, 32>}, {transform_indices = @transform_1, window_bounds = array<i64: 1, 16, 16, 128>}, {pipeline_mode = #tpu.pipeline_mode<synchronous>, transform_indices = @transform_2, window_bounds = array<i64: 1, 32>}, {pipeline_mode = #tpu.pipeline_mode<synchronous>, transform_indices = @transform_3, window_bounds = array<i64: 1, 32>}, {pipeline_mode = #tpu.pipeline_mode<synchronous>, transform_indices = @transform_4, window_bounds = array<i64: 1, 128>}, {pipeline_mode = #tpu.pipeline_mode<synchronous>, transform_indices = @transform_5, window_bounds = array<i64: 1, 128>}, {pipeline_mode = #tpu.pipeline_mode<synchronous>, transform_indices = @transform_6, window_bounds = array<i64: 32, 128>}, {transform_indices = @transform_7, window_bounds = array<i64: 1, 16, 16, 128>}]} {
    %c0 = arith.constant 0 : index
    %c0_0 = arith.constant 0 : index
    %c0_1 = arith.constant 0 : index
    %c0_2 = arith.constant 0 : index
    %0 = vector.load %arg1[%c0, %c0_0, %c0_1, %c0_2] : memref<1x16x16x32xf32, #tpu.memory_space<vmem>>, vector<1x16x16x32xf32>
    %1 = vector.shape_cast %0 : vector<1x16x16x32xf32> to vector<256x32xf32>
    %c0_3 = arith.constant 0 : index
    %c0_4 = arith.constant 0 : index
    %2 = vector.load %arg3[%c0_3, %c0_4] : memref<1x32xf32, #tpu.memory_space<vmem>>, vector<1x32xf32>
    %3 = vector.broadcast %2 : vector<1x32xf32> to vector<256x32xf32>
    %4 = arith.mulf %1, %3 : vector<256x32xf32>
    %c0_5 = arith.constant 0 : index
    %c0_6 = arith.constant 0 : index
    %5 = vector.load %arg4[%c0_5, %c0_6] : memref<1x32xf32, #tpu.memory_space<vmem>>, vector<1x32xf32>
    %6 = vector.broadcast %5 : vector<1x32xf32> to vector<256x32xf32>
    %7 = arith.addf %4, %6 : vector<256x32xf32>
    %cst = arith.constant 0.000000e+00 : f32
    %8 = vector.broadcast %cst : f32 to vector<256x32xf32>
    %9 = arith.maximumf %7, %8 : vector<256x32xf32>
    %10 = arith.truncf %9 : vector<256x32xf32> to vector<256x32xbf16>
    %c0_7 = arith.constant 0 : index
    %c0_8 = arith.constant 0 : index
    %11 = vector.load %arg7[%c0_7, %c0_8] : memref<32x128xbf16, #tpu.memory_space<vmem>>, vector<32x128xbf16>
    %cst_9 = arith.constant dense<0.000000e+00> : vector<256x128xf32>
    %12 = tpu.matmul %10, %11, %cst_9 {dimension_numbers = #tpu.dot_dimension_numbers<[1], [0], [0], [1], [0, 0, 1, 1], [], []>} : vector<256x32xbf16>, vector<32x128xbf16>, vector<256x128xf32> -> vector<256x128xf32>
    %c0_10 = arith.constant 0 : index
    %c0_11 = arith.constant 0 : index
    %13 = vector.load %arg5[%c0_10, %c0_11] : memref<1x128xf32, #tpu.memory_space<vmem>>, vector<1x128xf32>
    %14 = vector.broadcast %13 : vector<1x128xf32> to vector<256x128xf32>
    %15 = arith.mulf %12, %14 : vector<256x128xf32>
    %c0_12 = arith.constant 0 : index
    %c0_13 = arith.constant 0 : index
    %16 = vector.load %arg6[%c0_12, %c0_13] : memref<1x128xf32, #tpu.memory_space<vmem>>, vector<1x128xf32>
    %17 = vector.broadcast %16 : vector<1x128xf32> to vector<256x128xf32>
    %18 = arith.addf %15, %17 : vector<256x128xf32>
    %c0_14 = arith.constant 0 : index
    %c0_15 = arith.constant 0 : index
    %c0_16 = arith.constant 0 : index
    %c0_17 = arith.constant 0 : index
    %19 = vector.load %arg2[%c0_14, %c0_15, %c0_16, %c0_17] : memref<1x16x16x128xbf16, #tpu.memory_space<vmem>>, vector<1x16x16x128xbf16>
    %20 = vector.shape_cast %19 : vector<1x16x16x128xbf16> to vector<256x128xbf16>
    %21 = arith.extf %20 : vector<256x128xbf16> to vector<256x128xf32>
    %22 = arith.addf %18, %21 : vector<256x128xf32>
    %cst_18 = arith.constant 0.000000e+00 : f32
    %23 = vector.broadcast %cst_18 : f32 to vector<256x128xf32>
    %24 = arith.maximumf %22, %23 : vector<256x128xf32>
    %25 = vector.shape_cast %24 : vector<256x128xf32> to vector<1x16x16x128xf32>
    %26 = arith.truncf %25 : vector<1x16x16x128xf32> to vector<1x16x16x128xbf16>
    %c0_19 = arith.constant 0 : index
    %c0_20 = arith.constant 0 : index
    %c0_21 = arith.constant 0 : index
    %c0_22 = arith.constant 0 : index
    %27 = vector.load %arg8[%c0_19, %c0_20, %c0_21, %c0_22] : memref<1x16x16x128xbf16, #tpu.memory_space<vmem>>, vector<1x16x16x128xbf16>
    tpu.vector_store %arg8[%c0_19, %c0_20, %c0_21, %c0_22], %26 {strides = array<i32>} : memref<1x16x16x128xbf16, #tpu.memory_space<vmem>>, vector<1x16x16x128xbf16>,
    return
  }
  func.func @transform_0(%arg0: i32) -> (i32, i32, i32, i32) {
    %c0_i32 = arith.constant 0 : i32
    %c0_i32_0 = arith.constant 0 : i32
    %c0_i32_1 = arith.constant 0 : i32
    %c0_i32_2 = arith.constant 0 : i32
    return %arg0, %c0_i32, %c0_i32_0, %c0_i32_1 : i32, i32, i32, i32
  }
  func.func @transform_1(%arg0: i32) -> (i32, i32, i32, i32) {
    %c0_i32 = arith.constant 0 : i32
    %c0_i32_0 = arith.constant 0 : i32
    %c0_i32_1 = arith.constant 0 : i32
    %c0_i32_2 = arith.constant 0 : i32
    return %arg0, %c0_i32, %c0_i32_0, %c0_i32_1 : i32, i32, i32, i32
  }
  func.func @transform_2(%arg0: i32) -> (i32, i32) {
    %c0_i32 = arith.constant 0 : i32
    %c0_i32_0 = arith.constant 0 : i32
    %c0_i32_1 = arith.constant 0 : i32
    return %c0_i32, %c0_i32_0 : i32, i32
  }
  func.func @transform_3(%arg0: i32) -> (i32, i32) {
    %c0_i32 = arith.constant 0 : i32
    %c0_i32_0 = arith.constant 0 : i32
    %c0_i32_1 = arith.constant 0 : i32
    return %c0_i32, %c0_i32_0 : i32, i32
  }
  func.func @transform_4(%arg0: i32) -> (i32, i32) {
    %c0_i32 = arith.constant 0 : i32
    %c0_i32_0 = arith.constant 0 : i32
    %c0_i32_1 = arith.constant 0 : i32
    return %c0_i32, %c0_i32_0 : i32, i32
  }
  func.func @transform_5(%arg0: i32) -> (i32, i32) {
    %c0_i32 = arith.constant 0 : i32
    %c0_i32_0 = arith.constant 0 : i32
    %c0_i32_1 = arith.constant 0 : i32
    return %c0_i32, %c0_i32_0 : i32, i32
  }
  func.func @transform_6(%arg0: i32) -> (i32, i32) {
    %c0_i32 = arith.constant 0 : i32
    %c0_i32_0 = arith.constant 0 : i32
    %c0_i32_1 = arith.constant 0 : i32
    return %c0_i32, %c0_i32_0 : i32, i32
  }
  func.func @transform_7(%arg0: i32) -> (i32, i32, i32, i32) {
    %c0_i32 = arith.constant 0 : i32
    %c0_i32_0 = arith.constant 0 : i32
    %c0_i32_1 = arith.constant 0 : i32
    %c0_i32_2 = arith.constant 0 : i32
    return %arg0, %c0_i32, %c0_i32_0, %c0_i32_1 : i32, i32, i32, i32
  }
}

</mosaic_0001>

<llo_original>
// kernel: bottleneck_forward.6
$region0: #{bottleneck_forward.6}
  #allocation0 [shape = 'u32[]', space=smem, size = 0x4, offset = 0x4, fixed_abs, tag = 'smem constant byte address 0x4 - core index']
  #allocation1 [shape = 'u32[144,128]{1,0:T(1,128)}', space=vmem, size = 0x12000, scoped, tag = 'internal scratch']
  %s0 = inlined_call_operand.vmem [shape: f32[2,16,16,32], index: 0, kind: input, shape index: {}]
  %s1 = inlined_call_operand.vmem [shape: f32[1,32], index: 1, kind: input, shape index: {}]
  %s2 = inlined_call_operand.vmem [shape: f32[1,32], index: 2, kind: input, shape index: {}]
  %s3 = inlined_call_operand.vmem [shape: bf16[32,128], index: 3, kind: input, shape index: {}]
  %s4 = inlined_call_operand.vmem [shape: f32[2,2,128], index: 4, kind: output, shape index: {}]
  %s5 = sld [smem:[#allocation0]]
  $region49: #{bottleneck_forward.6} parent=0
    _
  %s7 = ssub.s32 1, %s5
  %s8 = scalar_select 0, %s7, %s5
  loop: start=0, step=1, limit=4
  $region2: #{bottleneck_forward.6} parent=0 // loop_pre_header
    _
  $region3: #{bottleneck_forward.6} parent=0 // loop_header
    %s10 = sphi 0, %s14
    %p11 = scmp.ge.s32.totalorder %s10, 4
    %s20 = sphi 0, %s22
    %s23 = sphi 0, %s20
    %s24 = sphi 0, %s23
    %s40 = sphi 0, %s24
    %s44 = sphi 0, %s44
    %s46 = sphi 0, %s44
    %s47 = sphi 0, %s46
    %s61 = sphi 0, %s47
    %s65 = sphi 0, %s65
    %s67 = sphi 0, %s65
    %s68 = sphi 0, %s67
    %s82 = sphi 0, %s68
    %s86 = sphi 0, %s86
    %s88 = sphi 0, %s86
    %s89 = sphi 0, %s88
    %s103 = sphi 0, %s89
    %s109 = sphi 0, %s111
    %s112 = sphi 0, %s109
    %s113 = sphi 0, %s112
    %s129 = sphi 0, %s113
  $region4: #{bottleneck_forward.6} parent=0 // loop_header_branch
    %13 = sbr.rel (%p11) target = $region8
  $region5: #{bottleneck_forward.6} parent=0 // loop_body
    %s15 = ssub.s32 %s10, 1
    %s16 = ssub.s32 %s10, 2
    %s17 = sadd.s32 %s10, 1
    %s18 = ssub.s32 %s10, %s17
    %p19 = scmp.eq.s32.totalorder %s18, 0
    %s21 = sadd.s32 %s20, 1
    %s22 = scalar_select %p19, %s20, %s21
    %p25 = pneg %p19
    %p26 = scmp.eq.s32.totalorder %s10, 1
    %p27 = por %p25, %p26
    %p28 = scmp.ne.s32.totalorder %s20, %s23
    %p29 = scmp.eq.s32.totalorder %s10, 0
    %p30 = por %p28, %p29
    %p31 = scmp.ne.s32.totalorder %s20, %s23
    %p32 = scmp.eq.s32.totalorder %s15, 1
    %p33 = por %p31, %p32
    %p34 = scmp.ne.s32.totalorder %s23, %s24
    %p35 = scmp.eq.s32.totalorder %s15, 0
    %p36 = por %p34, %p35
    %p37 = scmp.ne.s32.totalorder %s23, %s24
    %p38 = scmp.eq.s32.totalorder %s16, 1
    %p39 = por %p37, %p38
    %p41 = scmp.ne.s32.totalorder %s24, %s40
    %p42 = scmp.eq.s32.totalorder %s16, 0
    %p43 = por %p41, %p42
    %s45 = sadd.s32 %s44, 1
    %p48 = scmp.eq.s32.totalorder %s10, 1
    %p49 = scmp.ne.s32.totalorder %s44, %s46
    %p50 = scmp.eq.s32.totalorder %s10, 0
    %p51 = por %p49, %p50
    %p52 = scmp.ne.s32.totalorder %s44, %s46
    %p53 = scmp.eq.s32.totalorder %s15, 1
    %p54 = por %p52, %p53
    %p55 = scmp.ne.s32.totalorder %s46, %s47
    %p56 = scmp.eq.s32.totalorder %s15, 0
    %p57 = por %p55, %p56
    %p58 = scmp.ne.s32.totalorder %s46, %s47
    %p59 = scmp.eq.s32.totalorder %s16, 1
    %p60 = por %p58, %p59
    %p62 = scmp.ne.s32.totalorder %s47, %s61
    %p63 = scmp.eq.s32.totalorder %s16, 0
    %p64 = por %p62, %p63
    %s66 = sadd.s32 %s65, 1
    %p69 = scmp.eq.s32.totalorder %s10, 1
    %p70 = scmp.ne.s32.totalorder %s65, %s67
    %p71 = scmp.eq.s32.totalorder %s10, 0
    %p72 = por %p70, %p71
    %p73 = scmp.ne.s32.totalorder %s65, %s67
    %p74 = scmp.eq.s32.totalorder %s15, 1
    %p75 = por %p73, %p74
    %p76 = scmp.ne.s32.totalorder %s67, %s68
    %p77 = scmp.eq.s32.totalorder %s15, 0
    %p78 = por %p76, %p77
    %p79 = scmp.ne.s32.totalorder %s67, %s68
    %p80 = scmp.eq.s32.totalorder %s16, 1
    %p81 = por %p79, %p80
    %p83 = scmp.ne.s32.totalorder %s68, %s82
    %p84 = scmp.eq.s32.totalorder %s16, 0
    %p85 = por %p83, %p84
    %s87 = sadd.s32 %s86, 1
    %p90 = scmp.eq.s32.totalorder %s10, 1
    %p91 = scmp.ne.s32.totalorder %s86, %s88
    %p92 = scmp.eq.s32.totalorder %s10, 0
    %p93 = por %p91, %p92
    %p94 = scmp.ne.s32.totalorder %s86, %s88
    %p95 = scmp.eq.s32.totalorder %s15, 1
    %p96 = por %p94, %p95
    %p97 = scmp.ne.s32.totalorder %s88, %s89
    %p98 = scmp.eq.s32.totalorder %s15, 0
    %p99 = por %p97, %p98
    %p100 = scmp.ne.s32.totalorder %s88, %s89
    %p101 = scmp.eq.s32.totalorder %s16, 1
    %p102 = por %p100, %p101
    %p104 = scmp.ne.s32.totalorder %s89, %s103
    %p105 = scmp.eq.s32.totalorder %s16, 0
    %p106 = por %p104, %p105
    %s107 = ssub.s32 %s10, %s17
    %p108 = scmp.eq.s32.totalorder %s107, 0
    %s110 = sadd.s32 %s109, 1
    %s111 = scalar_select %p108, %s109, %s110
    %p114 = pneg %p108
    %p115 = scmp.eq.s32.totalorder %s10, 1
    %p116 = por %p114, %p115
    %p117 = scmp.ne.s32.totalorder %s109, %s112
    %p118 = scmp.eq.s32.totalorder %s10, 0
    %p119 = por %p117, %p118
    %p120 = scmp.ne.s32.totalorder %s109, %s112
    %p121 = scmp.eq.s32.totalorder %s15, 1
    %p122 = por %p120, %p121
    %p123 = scmp.ne.s32.totalorder %s112, %s113
    %p124 = scmp.eq.s32.totalorder %s15, 0
    %p125 = por %p123, %p124
    %p126 = scmp.ne.s32.totalorder %s112, %s113
    %p127 = scmp.eq.s32.totalorder %s16, 1
    %p128 = por %p126, %p127
    %p130 = scmp.ne.s32.totalorder %s113, %s129
    %p131 = scmp.eq.s32.totalorder %s16, 0
    %p132 = por %p130, %p131
    %p133 = scmp.le.s32.totalorder 1, %s10
    %p134 = scmp.lt.s32.totalorder %s10, 3
    %p135 = pnand %p133, %p134
    %p136 = pneg %p135
    // Predicated region
    $region9: #{bottleneck_forward.6} parent=5 // pred_check
      _
    $region10: #{bottleneck_forward.6} parent=5 // pred_check_branch
      %138 = sbr.rel (%p135) target = $region12
    $region11: #{bottleneck_forward.6} parent=5 // pred_region
      %s139 = ssub.s32 %s10, 1
      // Predicated region
      $region13: #{bottleneck_forward.6} parent=11 // pred_check
        %p140 = pneg %p57
      $region14: #{bottleneck_forward.6} parent=11 // pred_check_branch
        %142 = sbr.rel (%p140) target = $region16
      $region15: #{bottleneck_forward.6} parent=11 // pred_region
        _
      $region16: #{bottleneck_forward.6} parent=11 // pred_fallthru
        _
      // Predicated region
      $region17: #{bottleneck_forward.6} parent=11 // pred_check
        %p143 = pneg %p78
      $region18: #{bottleneck_forward.6} parent=11 // pred_check_branch
        %145 = sbr.rel (%p143) target = $region20
      $region19: #{bottleneck_forward.6} parent=11 // pred_region
        _
      $region20: #{bottleneck_forward.6} parent=11 // pred_fallthru
        _
      // Predicated region
      $region21: #{bottleneck_forward.6} parent=11 // pred_check
        %p146 = pneg %p99
      $region22: #{bottleneck_forward.6} parent=11 // pred_check_branch
        %148 = sbr.rel (%p146) target = $region24
      $region23: #{bottleneck_forward.6} parent=11 // pred_region
        _
      $region24: #{bottleneck_forward.6} parent=11 // pred_fallthru
        _
    $region12: #{bottleneck_forward.6} parent=5 // pred_fallthru
      _
    %p149 = scmp.lt.s32.totalorder %s10, 2
    // Predicated region
    $region25: #{bottleneck_forward.6} parent=5 // pred_check
      %p150 = pneg %p149
    $region26: #{bottleneck_forward.6} parent=5 // pred_check_branch
      %152 = sbr.rel (%p150) target = $region28
    $region27: #{bottleneck_forward.6} parent=5 // pred_region
      // Predicated region
      $region29: #{bottleneck_forward.6} parent=27 // pred_check
        %p153 = pneg %p30
      $region30: #{bottleneck_forward.6} parent=27 // pred_check_branch
        %155 = sbr.rel (%p153) target = $region32
      $region31: #{bottleneck_forward.6} parent=27 // pred_region
        %p156 = scmp.lt.s32.totalorder %s10, 1
        %s157 = scalar_select %p156, %s10, 1
        %s158 = smul.addr %s157, 32
        %s159 = smul.addr %s158, 8
        %s160 = scalar_lea.vmem %s0, %s159
      $region32: #{bottleneck_forward.6} parent=27 // pred_fallthru
        _
    $region28: #{bottleneck_forward.6} parent=5 // pred_fallthru
      _
    %p161 = scmp.le.s32.totalorder 1, %s10
    %p162 = scmp.lt.s32.totalorder %s10, 3
    %p163 = pnand %p161, %p162
    %p164 = pneg %p163
    // Predicated region
    $region33: #{bottleneck_forward.6} parent=5 // pred_check
      _
    $region34: #{bottleneck_forward.6} parent=5 // pred_check_branch
      %166 = sbr.rel (%p163) target = $region36
    $region35: #{bottleneck_forward.6} parent=5 // pred_region
      %s167 = ssub.s32 %s10, 1
      %p168 = scmp.lt.s32.totalorder %s15, 1
      %s169 = scalar_select %p168, %s15, 1
      %s170 = smul.addr %s169, 32
      %s171 = smul.addr %s170, 8
      %s172 = scalar_lea.vmem %s0, %s171
      %p173 = pneg %p36
      %p174 = pneg %p33
      %p175 = pneg %p57
      %p176 = pneg %p54
      %p177 = pneg %p78
      %p178 = pneg %p75
      %p179 = pneg %p99
      %p180 = pneg %p96
      %p181 = pneg %p125
      %p182 = pneg %p122
      %p183 = scmp.lt.s32.totalorder %s15, 1
      %s184 = scalar_select %p183, %s15, 1
      %s185 = smul.addr %s184, 2
      %s186 = scalar_lea.vmem %s4, %s185
      %p187 = scmp.lt.s32.totalorder %s15, 1
      %s188 = scalar_select %p187, %s15, 1
      %s189 = smul.addr %s188, 32
      %s190 = smul.addr %s189, 8
      %s191 = scalar_lea.vmem %s0, %s190
      %p192 = scmp.lt.s32.totalorder %s15, 1
      %s193 = scalar_select %p192, %s15, 1
      %s194 = smul.addr %s193, 2
      %s195 = scalar_lea.vmem %s4, %s194
      %v197 = vld [vmem:[%s191] sm:$0xff]
      %v198 = vld [vmem:[%s191 + $0x8] sm:$0xff]
      %v199 = vld [vmem:[%s191 + $0x10] sm:$0xff]
      %v200 = vld [vmem:[%s191 + $0x18] sm:$0xff]
      %v201 = vld [vmem:[%s191 + $0x20] sm:$0xff]
      %v202 = vld [vmem:[%s191 + $0x28] sm:$0xff]
      %v203 = vld [vmem:[%s191 + $0x30] sm:$0xff]
      %v204 = vld [vmem:[%s191 + $0x38] sm:$0xff]
      %v205 = vld [vmem:[%s191 + $0x40] sm:$0xff]
      %v206 = vld [vmem:[%s191 + $0x48] sm:$0xff]
      %v207 = vld [vmem:[%s191 + $0x50] sm:$0xff]
      %v208 = vld [vmem:[%s191 + $0x58] sm:$0xff]
      %v209 = vld [vmem:[%s191 + $0x60] sm:$0xff]
      %v210 = vld [vmem:[%s191 + $0x68] sm:$0xff]
      %v211 = vld [vmem:[%s191 + $0x70] sm:$0xff]
      %v212 = vld [vmem:[%s191 + $0x78] sm:$0xff]
      %v213 = vld [vmem:[%s191 + $0x80] sm:$0xff]
      %v214 = vld [vmem:[%s191 + $0x88] sm:$0xff]
      %v215 = vld [vmem:[%s191 + $0x90] sm:$0xff]
      %v216 = vld [vmem:[%s191 + $0x98] sm:$0xff]
      %v217 = vld [vmem:[%s191 + $0xa0] sm:$0xff]
      %v218 = vld [vmem:[%s191 + $0xa8] sm:$0xff]
      %v219 = vld [vmem:[%s191 + $0xb0] sm:$0xff]
      %v220 = vld [vmem:[%s191 + $0xb8] sm:$0xff]
      %v221 = vld [vmem:[%s191 + $0xc0] sm:$0xff]
      %v222 = vld [vmem:[%s191 + $0xc8] sm:$0xff]
      %v223 = vld [vmem:[%s191 + $0xd0] sm:$0xff]
      %v224 = vld [vmem:[%s191 + $0xd8] sm:$0xff]
      %v225 = vld [vmem:[%s191 + $0xe0] sm:$0xff]
      %v226 = vld [vmem:[%s191 + $0xe8] sm:$0xff]
      %v227 = vld [vmem:[%s191 + $0xf0] sm:$0xff]
      %v228 = vld [vmem:[%s191 + $0xf8] sm:$0xff]
      %v229 = vld [vmem:[%s1] sm:$0x1]
      %v231 = vlaneseq
      %v232 = vshrl.u32 %v231, 7
      %v233 = vsub.s32 0, %v232
      %v234 = vrot.slane %v229, %v233
      %v236 = vmul.f32 %v197, %v234
      %v237 = vmul.f32 %v198, %v234
      %v238 = vmul.f32 %v199, %v234
      %v239 = vmul.f32 %v200, %v234
      %v240 = vmul.f32 %v201, %v234
      %v241 = vmul.f32 %v202, %v234
      %v242 = vmul.f32 %v203, %v234
      %v243 = vmul.f32 %v204, %v234
      %v244 = vmul.f32 %v205, %v234
      %v245 = vmul.f32 %v206, %v234
      %v246 = vmul.f32 %v207, %v234
      %v247 = vmul.f32 %v208, %v234
      %v248 = vmul.f32 %v209, %v234
      %v249 = vmul.f32 %v210, %v234
      %v250 = vmul.f32 %v211, %v234
      %v251 = vmul.f32 %v212, %v234
      %v252 = vmul.f32 %v213, %v234
      %v253 = vmul.f32 %v214, %v234
      %v254 = vmul.f32 %v215, %v234
      %v255 = vmul.f32 %v216, %v234
      %v256 = vmul.f32 %v217, %v234
      %v257 = vmul.f32 %v218, %v234
      %v258 = vmul.f32 %v219, %v234
      %v259 = vmul.f32 %v220, %v234
      %v260 = vmul.f32 %v221, %v234
      %v261 = vmul.f32 %v222, %v234
      %v262 = vmul.f32 %v223, %v234
      %v263 = vmul.f32 %v224, %v234
      %v264 = vmul.f32 %v225, %v234
      %v265 = vmul.f32 %v226, %v234
      %v266 = vmul.f32 %v227, %v234
      %v267 = vmul.f32 %v228, %v234
      %v268 = vld [vmem:[%s2] sm:$0x1]
      %v270 = vlaneseq
      %v271 = vshrl.u32 %v270, 7
      %v272 = vsub.s32 0, %v271
      %v273 = vrot.slane %v268, %v272
      %v275 = vadd.f32 %v236, %v273
      %v276 = vadd.f32 %v237, %v273
      %v277 = vadd.f32 %v238, %v273
      %v278 = vadd.f32 %v239, %v273
      %v279 = vadd.f32 %v240, %v273
      %v280 = vadd.f32 %v241, %v273
      %v281 = vadd.f32 %v242, %v273
      %v282 = vadd.f32 %v243, %v273
      %v283 = vadd.f32 %v244, %v273
      %v284 = vadd.f32 %v245, %v273
      %v285 = vadd.f32 %v246, %v273
      %v286 = vadd.f32 %v247, %v273
      %v287 = vadd.f32 %v248, %v273
      %v288 = vadd.f32 %v249, %v273
      %v289 = vadd.f32 %v250, %v273
      %v290 = vadd.f32 %v251, %v273
      %v291 = vadd.f32 %v252, %v273
      %v292 = vadd.f32 %v253, %v273
      %v293 = vadd.f32 %v254, %v273
      %v294 = vadd.f32 %v255, %v273
      %v295 = vadd.f32 %v256, %v273
      %v296 = vadd.f32 %v257, %v273
      %v297 = vadd.f32 %v258, %v273
      %v298 = vadd.f32 %v259, %v273
      %v299 = vadd.f32 %v260, %v273
      %v300 = vadd.f32 %v261, %v273
      %v301 = vadd.f32 %v262, %v273
      %v302 = vadd.f32 %v263, %v273
      %v303 = vadd.f32 %v264, %v273
      %v304 = vadd.f32 %v265, %v273
      %v305 = vadd.f32 %v266, %v273
      %v306 = vadd.f32 %v267, %v273
      %v307 = vmax.f32 %v275, 0.0
      %v308 = vmax.f32 %v276, 0.0
      %v309 = vmax.f32 %v277, 0.0
      %v310 = vmax.f32 %v278, 0.0
      %v311 = vmax.f32 %v279, 0.0
      %v312 = vmax.f32 %v280, 0.0
      %v313 = vmax.f32 %v281, 0.0
      %v314 = vmax.f32 %v282, 0.0
      %v315 = vmax.f32 %v283, 0.0
      %v316 = vmax.f32 %v284, 0.0
      %v317 = vmax.f32 %v285, 0.0
      %v318 = vmax.f32 %v286, 0.0
      %v319 = vmax.f32 %v287, 0.0
      %v320 = vmax.f32 %v288, 0.0
      %v321 = vmax.f32 %v289, 0.0
      %v322 = vmax.f32 %v290, 0.0
      %v323 = vmax.f32 %v291, 0.0
      %v324 = vmax.f32 %v292, 0.0
      %v325 = vmax.f32 %v293, 0.0
      %v326 = vmax.f32 %v294, 0.0
      %v327 = vmax.f32 %v295, 0.0
      %v328 = vmax.f32 %v296, 0.0
      %v329 = vmax.f32 %v297, 0.0
      %v330 = vmax.f32 %v298, 0.0
      %v331 = vmax.f32 %v299, 0.0
      %v332 = vmax.f32 %v300, 0.0
      %v333 = vmax.f32 %v301, 0.0
      %v334 = vmax.f32 %v302, 0.0
      %v335 = vmax.f32 %v303, 0.0
      %v336 = vmax.f32 %v304, 0.0
      %v337 = vmax.f32 %v305, 0.0
      %v338 = vmax.f32 %v306, 0.0
      %v339 = vpack.c.bf16 %v308, %v307
      %v340 = vpack.c.bf16 %v310, %v309
      %v341 = vpack.c.bf16 %v312, %v311
      %v342 = vpack.c.bf16 %v314, %v313
      %v343 = vpack.c.bf16 %v316, %v315
      %v344 = vpack.c.bf16 %v318, %v317
      %v345 = vpack.c.bf16 %v320, %v319
      %v346 = vpack.c.bf16 %v322, %v321
      %v347 = vpack.c.bf16 %v324, %v323
      %v348 = vpack.c.bf16 %v326, %v325
      %v349 = vpack.c.bf16 %v328, %v327
      %v350 = vpack.c.bf16 %v330, %v329
      %v351 = vpack.c.bf16 %v332, %v331
      %v352 = vpack.c.bf16 %v334, %v333
      %v353 = vpack.c.bf16 %v336, %v335
      %v354 = vpack.c.bf16 %v338, %v337
      %v355 = vld [vmem:[%s3] sm:$0xf]
      %v356 = vld [vmem:[%s3 + $0x4] sm:$0xf]
      %v357 = vld [vmem:[%s3 + $0x8] sm:$0xf]
      %v358 = vld [vmem:[%s3 + $0xc] sm:$0xf]
      %v363 = vunpack.c.l.b16 %v355
      %v364 = vunpack.c.l.b16 %v356
      %v365 = vunpack.c.l.b16 %v357
      %v366 = vunpack.c.l.b16 %v358
      %v367 = vpack.c.b16 %v364, %v363
      %v368 = vpack.c.b16 %v366, %v365
      %vm371 = vcmask 261120
      %v373 = vsel %vm371, %v339, 0
      %v376 = vsel %vm371, %v340, 0
      %v379 = vsel %vm371, %v341, 0
      %v382 = vsel %vm371, %v342, 0
      %v385 = vsel %vm371, %v343, 0
      %v388 = vsel %vm371, %v344, 0
      %v391 = vsel %vm371, %v345, 0
      %v394 = vsel %vm371, %v346, 0
      %v397 = vsel %vm371, %v347, 0
      %v400 = vsel %vm371, %v348, 0
      %v403 = vsel %vm371, %v349, 0
      %v406 = vsel %vm371, %v350, 0
      %v409 = vsel %vm371, %v351, 0
      %v412 = vsel %vm371, %v352, 0
      %v415 = vsel %vm371, %v353, 0
      %v418 = vsel %vm371, %v354, 0
      %420 = vmatprep.subr.bf16.mxu0 0
      %421 = vmatpush1.bf16.msra.mxu0 %v367
      %422 = vmatprep.subr.bf16.mxu0 0
      %423 = vmatpush1.bf16.msra.mxu0 %v368
      %424 = vmatprep.subr.bf16.mxu0 0
      %425 = vmatpush1.bf16.msra.mxu0 0
      %426 = vmatprep.subr.bf16.mxu0 0
      %427 = vmatpush1.bf16.msra.mxu0 0
      %428 = vmatprep.subr.bf16.mxu0 0
      %429 = vmatpush1.bf16.msra.mxu0 0
      %430 = vmatprep.subr.bf16.mxu0 0
      %431 = vmatpush1.bf16.msra.mxu0 0
      %432 = vmatprep.subr.bf16.mxu0 0
      %433 = vmatpush1.bf16.msra.mxu0 0
      %434 = vmatprep.subr.bf16.mxu0 0
      %435 = vmatpush1.bf16.msra.mxu0 0
      %436 = vmatprep.subr.bf16.mxu0 0
      %437 = vmatpush1.bf16.msra.mxu0 0
      %438 = vmatprep.subr.bf16.mxu0 0
      %439 = vmatpush1.bf16.msra.mxu0 0
      %440 = vmatprep.subr.bf16.mxu0 0
      %441 = vmatpush1.bf16.msra.mxu0 0
      %442 = vmatprep.subr.bf16.mxu0 0
      %443 = vmatpush1.bf16.msra.mxu0 0
      %444 = vmatprep.subr.bf16.mxu0 0
      %445 = vmatpush1.bf16.msra.mxu0 0
      %446 = vmatprep.subr.bf16.mxu0 0
      %447 = vmatpush1.bf16.msra.mxu0 0
      %448 = vmatprep.subr.bf16.mxu0 0
      %449 = vmatpush1.bf16.msra.mxu0 0
      %450 = vmatprep.subr.bf16.mxu0 0
      %451 = vmatpush1.bf16.msra.mxu0 0
      %452 = vmatprep.mubr.bf16.mxu0 0
      %453 = vmatmul.mubr.bf16.gmra.mrb[0].mxu0 %v373
      %v454 = vpop.f32.mrb[0].mxu0
      %v455 = vadd.f32 0.0, %v454
      %v456 = vpop.f32.mrb[0].mxu0
      %v457 = vpop.f32.mrb[0].mxu0
      %v458 = vadd.f32 0.0, %v457
      %v459 = vpop.f32.mrb[0].mxu0
      %460 = vmatprep.mubr.bf16.mxu0 0
      %461 = vmatmul.mubr.bf16.gmra.mrb[0].mxu0 %v376
      %v462 = vpop.f32.mrb[0].mxu0
      %v463 = vadd.f32 0.0, %v462
      %v464 = vpop.f32.mrb[0].mxu0
      %v465 = vpop.f32.mrb[0].mxu0
      %v466 = vadd.f32 0.0, %v465
      %v467 = vpop.f32.mrb[0].mxu0
      %468 = vmatprep.mubr.bf16.mxu0 0
      %469 = vmatmul.mubr.bf16.gmra.mrb[0].mxu0 %v379
      %v470 = vpop.f32.mrb[0].mxu0
      %v471 = vadd.f32 0.0, %v470
      %v472 = vpop.f32.mrb[0].mxu0
      %v473 = vpop.f32.mrb[0].mxu0
      %v474 = vadd.f32 0.0, %v473
      %v475 = vpop.f32.mrb[0].mxu0
      %476 = vmatprep.mubr.bf16.mxu0 0
      %477 = vmatmul.mubr.bf16.gmra.mrb[0].mxu0 %v382
      %v478 = vpop.f32.mrb[0].mxu0
      %v479 = vadd.f32 0.0, %v478
      %v480 = vpop.f32.mrb[0].mxu0
      %v481 = vpop.f32.mrb[0].mxu0
      %v482 = vadd.f32 0.0, %v481
      %v483 = vpop.f32.mrb[0].mxu0
      %484 = vmatprep.mubr.bf16.mxu0 0
      %485 = vmatmul.mubr.bf16.gmra.mrb[0].mxu0 %v385
      %v486 = vpop.f32.mrb[0].mxu0
      %v487 = vadd.f32 0.0, %v486
      %v488 = vpop.f32.mrb[0].mxu0
      %v489 = vpop.f32.mrb[0].mxu0
      %v490 = vadd.f32 0.0, %v489
      %v491 = vpop.f32.mrb[0].mxu0
      %492 = vmatprep.mubr.bf16.mxu0 0
      %493 = vmatmul.mubr.bf16.gmra.mrb[0].mxu0 %v388
      %v494 = vpop.f32.mrb[0].mxu0
      %v495 = vadd.f32 0.0, %v494
      %v496 = vpop.f32.mrb[0].mxu0
      %v497 = vpop.f32.mrb[0].mxu0
      %v498 = vadd.f32 0.0, %v497
      %v499 = vpop.f32.mrb[0].mxu0
      %500 = vmatprep.mubr.bf16.mxu0 0
      %501 = vmatmul.mubr.bf16.gmra.mrb[0].mxu0 %v391
      %v502 = vpop.f32.mrb[0].mxu0
      %v503 = vadd.f32 0.0, %v502
      %v504 = vpop.f32.mrb[0].mxu0
      %v505 = vpop.f32.mrb[0].mxu0
      %v506 = vadd.f32 0.0, %v505
      %v507 = vpop.f32.mrb[0].mxu0
      %508 = vmatprep.mubr.bf16.mxu0 0
      %509 = vmatmul.mubr.bf16.gmra.mrb[0].mxu0 %v394
      %v510 = vpop.f32.mrb[0].mxu0
      %v511 = vadd.f32 0.0, %v510
      %v512 = vpop.f32.mrb[0].mxu0
      %v513 = vpop.f32.mrb[0].mxu0
      %v514 = vadd.f32 0.0, %v513
      %v515 = vpop.f32.mrb[0].mxu0
      %516 = vmatprep.mubr.bf16.mxu0 0
      %517 = vmatmul.mubr.bf16.gmra.mrb[0].mxu0 %v397
      %v518 = vpop.f32.mrb[0].mxu0
      %v519 = vadd.f32 0.0, %v518
      %v520 = vpop.f32.mrb[0].mxu0
      %v521 = vpop.f32.mrb[0].mxu0
      %v522 = vadd.f32 0.0, %v521
      %v523 = vpop.f32.mrb[0].mxu0
      %524 = vmatprep.mubr.bf16.mxu0 0
      %525 = vmatmul.mubr.bf16.gmra.mrb[0].mxu0 %v400
      %v526 = vpop.f32.mrb[0].mxu0
      %v527 = vadd.f32 0.0, %v526
      %v528 = vpop.f32.mrb[0].mxu0
      %v529 = vpop.f32.mrb[0].mxu0
      %v530 = vadd.f32 0.0, %v529
      %v531 = vpop.f32.mrb[0].mxu0
      %532 = vmatprep.mubr.bf16.mxu0 0
      %533 = vmatmul.mubr.bf16.gmra.mrb[0].mxu0 %v403
      %v534 = vpop.f32.mrb[0].mxu0
      %v535 = vadd.f32 0.0, %v534
      %v536 = vpop.f32.mrb[0].mxu0
      %v537 = vpop.f32.mrb[0].mxu0
      %v538 = vadd.f32 0.0, %v537
      %v539 = vpop.f32.mrb[0].mxu0
      %540 = vmatprep.mubr.bf16.mxu0 0
      %541 = vmatmul.mubr.bf16.gmra.mrb[0].mxu0 %v406
      %v542 = vpop.f32.mrb[0].mxu0
      %v543 = vadd.f32 0.0, %v542
      %v544 = vpop.f32.mrb[0].mxu0
      %v545 = vpop.f32.mrb[0].mxu0
      %v546 = vadd.f32 0.0, %v545
      %v547 = vpop.f32.mrb[0].mxu0
      %548 = vmatprep.mubr.bf16.mxu0 0
      %549 = vmatmul.mubr.bf16.gmra.mrb[0].mxu0 %v409
      %v550 = vpop.f32.mrb[0].mxu0
      %v551 = vadd.f32 0.0, %v550
      %v552 = vpop.f32.mrb[0].mxu0
      %v553 = vpop.f32.mrb[0].mxu0
      %v554 = vadd.f32 0.0, %v553
      %v555 = vpop.f32.mrb[0].mxu0
      %556 = vmatprep.mubr.bf16.mxu0 0
      %557 = vmatmul.mubr.bf16.gmra.mrb[0].mxu0 %v412
      %v558 = vpop.f32.mrb[0].mxu0
      %v559 = vadd.f32 0.0, %v558
      %v560 = vpop.f32.mrb[0].mxu0
      %v561 = vpop.f32.mrb[0].mxu0
      %v562 = vadd.f32 0.0, %v561
      %v563 = vpop.f32.mrb[0].mxu0
      %564 = vmatprep.mubr.bf16.mxu0 0
      %565 = vmatmul.mubr.bf16.gmra.mrb[0].mxu0 %v415
      %v566 = vpop.f32.mrb[0].mxu0
      %v567 = vadd.f32 0.0, %v566
      %v568 = vpop.f32.mrb[0].mxu0
      %v569 = vpop.f32.mrb[0].mxu0
      %v570 = vadd.f32 0.0, %v569
      %v571 = vpop.f32.mrb[0].mxu0
      %572 = vmatprep.mubr.bf16.mxu0 0
      %573 = vmatmul.mubr.bf16.gmra.mrb[0].mxu0 %v418
      %v574 = vpop.f32.mrb[0].mxu0
      %v575 = vadd.f32 0.0, %v574
      %v576 = vpop.f32.mrb[0].mxu0
      %v577 = vpop.f32.mrb[0].mxu0
      %v578 = vadd.f32 0.0, %v577
      %v579 = vpop.f32.mrb[0].mxu0
      %580 = vdwg.mxu0
      %v581 = vadd.f32 %v455, %v458
      %v582 = vadd.f32 %v581, %v463
      %v583 = vadd.f32 %v582, %v466
      %v584 = vadd.f32 %v583, %v471
      %v585 = vadd.f32 %v584, %v474
      %v586 = vadd.f32 %v585, %v479
      %v587 = vadd.f32 %v586, %v482
      %v588 = vadd.f32 %v587, %v487
      %v589 = vadd.f32 %v588, %v490
      %v590 = vadd.f32 %v589, %v495
      %v591 = vadd.f32 %v590, %v498
      %v592 = vadd.f32 %v591, %v503
      %v593 = vadd.f32 %v592, %v506
      %v594 = vadd.f32 %v593, %v511
      %v595 = vadd.f32 %v594, %v514
      %v596 = vadd.f32 %v595, %v519
      %v597 = vadd.f32 %v596, %v522
      %v598 = vadd.f32 %v597, %v527
      %v599 = vadd.f32 %v598, %v530
      %v600 = vadd.f32 %v599, %v535
      %v601 = vadd.f32 %v600, %v538
      %v602 = vadd.f32 %v601, %v543
      %v603 = vadd.f32 %v602, %v546
      %v604 = vadd.f32 %v603, %v551
      %v605 = vadd.f32 %v604, %v554
      %v606 = vadd.f32 %v605, %v559
      %v607 = vadd.f32 %v606, %v562
      %v608 = vadd.f32 %v607, %v567
      %v609 = vadd.f32 %v608, %v570
      %v610 = vadd.f32 %v609, %v575
      %v611 = vadd.f32 %v610, %v578
      %v612 = vrot.slane %v611, 4
      %v613 = vadd.f32 %v611, %v612
      %v614 = vrot.slane %v613, 2
      %v615 = vadd.f32 %v613, %v614
      %v616 = vrot.slane %v615, 1
      %v617 = vadd.f32 %v615, %v616
      %v618 = vmul.f32 %v455, %v455
      %v619 = vmul.f32 %v458, %v458
      %v620 = vmul.f32 %v463, %v463
      %v621 = vmul.f32 %v466, %v466
      %v622 = vmul.f32 %v471, %v471
      %v623 = vmul.f32 %v474, %v474
      %v624 = vmul.f32 %v479, %v479
      %v625 = vmul.f32 %v482, %v482
      %v626 = vmul.f32 %v487, %v487
      %v627 = vmul.f32 %v490, %v490
      %v628 = vmul.f32 %v495, %v495
      %v629 = vmul.f32 %v498, %v498
      %v630 = vmul.f32 %v503, %v503
      %v631 = vmul.f32 %v506, %v506
      %v632 = vmul.f32 %v511, %v511
      %v633 = vmul.f32 %v514, %v514
      %v634 = vmul.f32 %v519, %v519
      %v635 = vmul.f32 %v522, %v522
      %v636 = vmul.f32 %v527, %v527
      %v637 = vmul.f32 %v530, %v530
      %v638 = vmul.f32 %v535, %v535
      %v639 = vmul.f32 %v538, %v538
      %v640 = vmul.f32 %v543, %v543
      %v641 = vmul.f32 %v546, %v546
      %v642 = vmul.f32 %v551, %v551
      %v643 = vmul.f32 %v554, %v554
      %v644 = vmul.f32 %v559, %v559
      %v645 = vmul.f32 %v562, %v562
      %v646 = vmul.f32 %v567, %v567
      %v647 = vmul.f32 %v570, %v570
      %v648 = vmul.f32 %v575, %v575
      %v649 = vmul.f32 %v578, %v578
      %v650 = vadd.f32 %v618, %v619
      %v651 = vadd.f32 %v650, %v620
      %v652 = vadd.f32 %v651, %v621
      %v653 = vadd.f32 %v652, %v622
      %v654 = vadd.f32 %v653, %v623
      %v655 = vadd.f32 %v654, %v624
      %v656 = vadd.f32 %v655, %v625
      %v657 = vadd.f32 %v656, %v626
      %v658 = vadd.f32 %v657, %v627
      %v659 = vadd.f32 %v658, %v628
      %v660 = vadd.f32 %v659, %v629
      %v661 = vadd.f32 %v660, %v630
      %v662 = vadd.f32 %v661, %v631
      %v663 = vadd.f32 %v662, %v632
      %v664 = vadd.f32 %v663, %v633
      %v665 = vadd.f32 %v664, %v634
      %v666 = vadd.f32 %v665, %v635
      %v667 = vadd.f32 %v666, %v636
      %v668 = vadd.f32 %v667, %v637
      %v669 = vadd.f32 %v668, %v638
      %v670 = vadd.f32 %v669, %v639
      %v671 = vadd.f32 %v670, %v640
      %v672 = vadd.f32 %v671, %v641
      %v673 = vadd.f32 %v672, %v642
      %v674 = vadd.f32 %v673, %v643
      %v675 = vadd.f32 %v674, %v644
      %v676 = vadd.f32 %v675, %v645
      %v677 = vadd.f32 %v676, %v646
      %v678 = vadd.f32 %v677, %v647
      %v679 = vadd.f32 %v678, %v648
      %v680 = vadd.f32 %v679, %v649
      %v681 = vrot.slane %v680, 4
      %v682 = vadd.f32 %v680, %v681
      %v683 = vrot.slane %v682, 2
      %v684 = vadd.f32 %v682, %v683
      %v685 = vrot.slane %v684, 1
      %v686 = vadd.f32 %v684, %v685
      %vm687 = vcmask 1040384
      %v688 = vsel %vm687, %v617, %v686
      %689 = vst [vmem:[%s195] sm:$0x3] %v688
      %p690 = scmp.lt.s32.totalorder %s15, 1
      %s691 = scalar_select %p690, %s15, 1
      %s692 = smul.addr %s691, 2
      %s693 = scalar_lea.vmem %s4, %s692
      // Predicated region
      $region37: #{bottleneck_forward.6} parent=35 // pred_check
        %p694 = pneg %p122
      $region38: #{bottleneck_forward.6} parent=35 // pred_check_branch
        %696 = sbr.rel (%p694) target = $region40
      $region39: #{bottleneck_forward.6} parent=35 // pred_region
        _
      $region40: #{bottleneck_forward.6} parent=35 // pred_fallthru
        _
    $region36: #{bottleneck_forward.6} parent=5 // pred_fallthru
      _
    %p697 = scmp.le.s32.totalorder 2, %s10
    // Predicated region
    $region41: #{bottleneck_forward.6} parent=5 // pred_check
      %p698 = pneg %p697
    $region42: #{bottleneck_forward.6} parent=5 // pred_check_branch
      %700 = sbr.rel (%p698) target = $region44
    $region43: #{bottleneck_forward.6} parent=5 // pred_region
      %s701 = ssub.s32 %s10, 2
      // Predicated region
      $region45: #{bottleneck_forward.6} parent=43 // pred_check
        %p702 = pneg %p128
      $region46: #{bottleneck_forward.6} parent=43 // pred_check_branch
        %704 = sbr.rel (%p702) target = $region48
      $region47: #{bottleneck_forward.6} parent=43 // pred_region
        %p705 = scmp.lt.s32.totalorder %s16, 1
        %s706 = scalar_select %p705, %s16, 1
        %s707 = smul.addr %s706, 2
        %s708 = scalar_lea.vmem %s4, %s707
      $region48: #{bottleneck_forward.6} parent=43 // pred_fallthru
        _
    $region44: #{bottleneck_forward.6} parent=5 // pred_fallthru
      _
  $region6: #{bottleneck_forward.6} parent=0 // loop_footer
    %s14 = sadd.s32 1, %s10
  $region7: #{bottleneck_forward.6} parent=0 // loop_footer_branch
    %9 = sbr.rel target = $region3
  $region8: #{bottleneck_forward.6} parent=0 // loop_exit
    _

// kernel: bottleneck_forward.4
$region0: #{bottleneck_forward.4}
  #allocation0 [shape = 'u32[]', space=smem, size = 0x4, offset = 0x4, fixed_abs, tag = 'smem constant byte address 0x4 - core index']
  #allocation1 [shape = 'u32[144,128]{1,0:T(1,128)}', space=vmem, size = 0x12000, scoped, tag = 'internal scratch']
  %s0 = inlined_call_operand.hbm [shape: bf16[2,16,16,128], index: 0, kind: input, shape index: {}]
  %s1 = inlined_call_operand.vmem [shape: bf16[128,32], index: 1, kind: input, shape index: {}]
  %s2 = inlined_call_operand.vmem [shape: f32[2,16,16,32], index: 2, kind: output, shape index: {0}]
  %s3 = inlined_call_operand.vmem [shape: f32[2,2,32], index: 3, kind: output, shape index: {1}]
  %4 = xla_tuple %s2, %s3
  %s5 = sld [smem:[#allocation0]]
  $region53: #{bottleneck_forward.4} parent=0
    _
  %s7 = ssub.s32 1, %s5
  %s8 = scalar_select 0, %s7, %s5
  $region1: #{bottleneck_forward.4} parent=0
    #allocation2 [shape = 'u8[131072]{0}', space=vmem, size = 0x20000, scoped, tag = 'input window, operand 0']
    #allocation3 [shape = 's32[2]{0}', space=sflag, size = 0x8, scoped, tag = 'scoped memory for bottleneck_forward.4']
    %9 = vsyncpa [#allocation3], 0
    %s10 = scalar_lea.sflag [#allocation3], 1
    %11 = vsyncpa %s10, 0
    loop: start=0, step=1, limit=4
    $region2: #{bottleneck_forward.4} parent=1 // loop_pre_header
      _
    $region3: #{bottleneck_forward.4} parent=1 // loop_header
      %s13 = sphi 0, %s17
      %p14 = scmp.ge.s32.totalorder %s13, 4
      %s23 = sphi 0, %s25
      %s26 = sphi 0, %s23
      %s27 = sphi 0, %s26
      %s43 = sphi 0, %s27
      %s47 = sphi 0, %s47
      %s49 = sphi 0, %s47
      %s50 = sphi 0, %s49
      %s64 = sphi 0, %s50
      %s70 = sphi 0, %s72
      %s73 = sphi 0, %s70
      %s74 = sphi 0, %s73
      %s90 = sphi 0, %s74
      %s96 = sphi 0, %s98
      %s99 = sphi 0, %s96
      %s100 = sphi 0, %s99
      %s116 = sphi 0, %s100
    $region4: #{bottleneck_forward.4} parent=1 // loop_header_branch
      %16 = sbr.rel (%p14) target = $region8
    $region5: #{bottleneck_forward.4} parent=1 // loop_body
      %s18 = ssub.s32 %s13, 1
      %s19 = ssub.s32 %s13, 2
      %s20 = sadd.s32 %s13, 1
      %s21 = ssub.s32 %s13, %s20
      %p22 = scmp.eq.s32.totalorder %s21, 0
      %s24 = sadd.s32 %s23, 1
      %s25 = scalar_select %p22, %s23, %s24
      %p28 = pneg %p22
      %p29 = scmp.eq.s32.totalorder %s13, 1
      %p30 = por %p28, %p29
      %p31 = scmp.ne.s32.totalorder %s23, %s26
      %p32 = scmp.eq.s32.totalorder %s13, 0
      %p33 = por %p31, %p32
      %p34 = scmp.ne.s32.totalorder %s23, %s26
      %p35 = scmp.eq.s32.totalorder %s18, 1
      %p36 = por %p34, %p35
      %p37 = scmp.ne.s32.totalorder %s26, %s27
      %p38 = scmp.eq.s32.totalorder %s18, 0
      %p39 = por %p37, %p38
      %p40 = scmp.ne.s32.totalorder %s26, %s27
      %p41 = scmp.eq.s32.totalorder %s19, 1
      %p42 = por %p40, %p41
      %p44 = scmp.ne.s32.totalorder %s27, %s43
      %p45 = scmp.eq.s32.totalorder %s19, 0
      %p46 = por %p44, %p45
      %s48 = sadd.s32 %s47, 1
      %p51 = scmp.eq.s32.totalorder %s13, 1
      %p52 = scmp.ne.s32.totalorder %s47, %s49
      %p53 = scmp.eq.s32.totalorder %s13, 0
      %p54 = por %p52, %p53
      %p55 = scmp.ne.s32.totalorder %s47, %s49
      %p56 = scmp.eq.s32.totalorder %s18, 1
      %p57 = por %p55, %p56
      %p58 = scmp.ne.s32.totalorder %s49, %s50
      %p59 = scmp.eq.s32.totalorder %s18, 0
      %p60 = por %p58, %p59
      %p61 = scmp.ne.s32.totalorder %s49, %s50
      %p62 = scmp.eq.s32.totalorder %s19, 1
      %p63 = por %p61, %p62
      %p65 = scmp.ne.s32.totalorder %s50, %s64
      %p66 = scmp.eq.s32.totalorder %s19, 0
      %p67 = por %p65, %p66
      %s68 = ssub.s32 %s13, %s20
      %p69 = scmp.eq.s32.totalorder %s68, 0
      %s71 = sadd.s32 %s70, 1
      %s72 = scalar_select %p69, %s70, %s71
      %p75 = pneg %p69
      %p76 = scmp.eq.s32.totalorder %s13, 1
      %p77 = por %p75, %p76
      %p78 = scmp.ne.s32.totalorder %s70, %s73
      %p79 = scmp.eq.s32.totalorder %s13, 0
      %p80 = por %p78, %p79
      %p81 = scmp.ne.s32.totalorder %s70, %s73
      %p82 = scmp.eq.s32.totalorder %s18, 1
      %p83 = por %p81, %p82
      %p84 = scmp.ne.s32.totalorder %s73, %s74
      %p85 = scmp.eq.s32.totalorder %s18, 0
      %p86 = por %p84, %p85
      %p87 = scmp.ne.s32.totalorder %s73, %s74
      %p88 = scmp.eq.s32.totalorder %s19, 1
      %p89 = por %p87, %p88
      %p91 = scmp.ne.s32.totalorder %s74, %s90
      %p92 = scmp.eq.s32.totalorder %s19, 0
      %p93 = por %p91, %p92
      %s94 = ssub.s32 %s13, %s20
      %p95 = scmp.eq.s32.totalorder %s94, 0
      %s97 = sadd.s32 %s96, 1
      %s98 = scalar_select %p95, %s96, %s97
      %p101 = pneg %p95
      %p102 = scmp.eq.s32.totalorder %s13, 1
      %p103 = por %p101, %p102
      %p104 = scmp.ne.s32.totalorder %s96, %s99
      %p105 = scmp.eq.s32.totalorder %s13, 0
      %p106 = por %p104, %p105
      %p107 = scmp.ne.s32.totalorder %s96, %s99
      %p108 = scmp.eq.s32.totalorder %s18, 1
      %p109 = por %p107, %p108
      %p110 = scmp.ne.s32.totalorder %s99, %s100
      %p111 = scmp.eq.s32.totalorder %s18, 0
      %p112 = por %p110, %p111
      %p113 = scmp.ne.s32.totalorder %s99, %s100
      %p114 = scmp.eq.s32.totalorder %s19, 1
      %p115 = por %p113, %p114
      %p117 = scmp.ne.s32.totalorder %s100, %s116
      %p118 = scmp.eq.s32.totalorder %s19, 0
      %p119 = por %p117, %p118
      %p120 = scmp.le.s32.totalorder 1, %s13
      %p121 = scmp.lt.s32.totalorder %s13, 3
      %p122 = pnand %p120, %p121
      %p123 = pneg %p122
      // Predicated region
      $region9: #{bottleneck_forward.4} parent=5 // pred_check
        _
      $region10: #{bottleneck_forward.4} parent=5 // pred_check_branch
        %125 = sbr.rel (%p122) target = $region12
      $region11: #{bottleneck_forward.4} parent=5 // pred_region
        %s126 = ssub.s32 %s13, 1
        // Predicated region
        $region13: #{bottleneck_forward.4} parent=11 // pred_check
          %p127 = pneg %p60
        $region14: #{bottleneck_forward.4} parent=11 // pred_check_branch
          %129 = sbr.rel (%p127) target = $region16
        $region15: #{bottleneck_forward.4} parent=11 // pred_region
          _
        $region16: #{bottleneck_forward.4} parent=11 // pred_fallthru
          _
      $region12: #{bottleneck_forward.4} parent=5 // pred_fallthru
        _
      %p130 = scmp.lt.s32.totalorder %s13, 2
      // Predicated region
      $region17: #{bottleneck_forward.4} parent=5 // pred_check
        %p131 = pneg %p130
      $region18: #{bottleneck_forward.4} parent=5 // pred_check_branch
        %133 = sbr.rel (%p131) target = $region20
      $region19: #{bottleneck_forward.4} parent=5 // pred_region
        // Predicated region
        $region21: #{bottleneck_forward.4} parent=19 // pred_check
          %p134 = pneg %p33
        $region22: #{bottleneck_forward.4} parent=19 // pred_check_branch
          %136 = sbr.rel (%p134) target = $region24
        $region23: #{bottleneck_forward.4} parent=19 // pred_region
          %s137 = sand.u32 %s23, 1
          %s138 = scalar_lea.sflag [#allocation3], %s137
          %s139 = sand.u32 %s23, 1
          %s140 = smul.addr %s139, 128
          %s141 = scalar_lea.vmem [#allocation2], %s140
          %s143 = ssub.s32 2048, 2048
          %144 = vsyncadd %s138, %s143
          %s145 = smul.addr %s13, 32
          %s146 = smul.addr %s145, 64
          %s147 = scalar_lea.hbm %s0, %s146
          %s148 = sshll.u32 %s141, 4
          %s149 = int_to_ptr.vmem [resolvable:$true] %s148
          %154 = dma.hbm_to_vmem [thread:$0]  %s147, 2048, %s149, %s138, 64, 64, 4
        $region24: #{bottleneck_forward.4} parent=19 // pred_fallthru
          _
      $region20: #{bottleneck_forward.4} parent=5 // pred_fallthru
        _
      %p155 = scmp.le.s32.totalorder 1, %s13
      %p156 = scmp.lt.s32.totalorder %s13, 3
      %p157 = pnand %p155, %p156
      %p158 = pneg %p157
      // Predicated region
      $region25: #{bottleneck_forward.4} parent=5 // pred_check
        _
      $region26: #{bottleneck_forward.4} parent=5 // pred_check_branch
        %160 = sbr.rel (%p157) target = $region28
      $region27: #{bottleneck_forward.4} parent=5 // pred_region
        %s161 = ssub.s32 %s13, 1
        %s162 = sand.u32 %s26, 1
        %s163 = scalar_lea.sflag [#allocation3], %s162
        %s164 = sand.u32 %s26, 1
        %s165 = smul.addr %s164, 128
        %s166 = scalar_lea.vmem [#allocation2], %s165
        // Predicated region
        $region29: #{bottleneck_forward.4} parent=27 // pred_check
          %p167 = pneg %p39
        $region30: #{bottleneck_forward.4} parent=27 // pred_check_branch
          %169 = sbr.rel (%p167) target = $region32
        $region31: #{bottleneck_forward.4} parent=27 // pred_region
          %170 = dma.done %s163, 2048
        $region32: #{bottleneck_forward.4} parent=27 // pred_fallthru
          _
        %s171 = sand.u32 %s26, 1
        %s172 = scalar_lea.sflag [#allocation3], %s171
        %s173 = sand.u32 %s26, 1
        %s174 = smul.addr %s173, 128
        %s175 = scalar_lea.vmem [#allocation2], %s174
        %p176 = pneg %p39
        %p177 = pneg %p36
        %p178 = pneg %p60
        %p179 = pneg %p57
        %p180 = pneg %p86
        %p181 = pneg %p83
        %p182 = scmp.lt.s32.totalorder %s18, 1
        %s183 = scalar_select %p182, %s18, 1
        %s184 = smul.addr %s183, 32
        %s185 = smul.addr %s184, 8
        %s186 = scalar_lea.vmem %s2, %s185
        %p187 = pneg %p112
        %p188 = pneg %p109
        %p189 = scmp.lt.s32.totalorder %s18, 1
        %s190 = scalar_select %p189, %s18, 1
        %s191 = smul.addr %s190, 2
        %s192 = scalar_lea.vmem %s3, %s191
        %p193 = scmp.lt.s32.totalorder %s18, 1
        %s194 = scalar_select %p193, %s18, 1
        %s195 = smul.addr %s194, 32
        %s196 = smul.addr %s195, 8
        %s197 = scalar_lea.vmem %s2, %s196
        %p198 = scmp.lt.s32.totalorder %s18, 1
        %s199 = scalar_select %p198, %s18, 1
        %s200 = smul.addr %s199, 2
        %s201 = scalar_lea.vmem %s3, %s200
        %v203 = vld [vmem:[%s166] sm:$0xf]
        %v204 = vld [vmem:[%s166 + $0x4] sm:$0xf]
        %v205 = vld [vmem:[%s166 + $0x8] sm:$0xf]
        %v206 = vld [vmem:[%s166 + $0xc] sm:$0xf]
        %v207 = vld [vmem:[%s166 + $0x10] sm:$0xf]
        %v208 = vld [vmem:[%s166 + $0x14] sm:$0xf]
        %v209 = vld [vmem:[%s166 + $0x18] sm:$0xf]
        %v210 = vld [vmem:[%s166 + $0x1c] sm:$0xf]
        %v211 = vld [vmem:[%s166 + $0x20] sm:$0xf]
        %v212 = vld [vmem:[%s166 + $0x24] sm:$0xf]
        %v213 = vld [vmem:[%s166 + $0x28] sm:$0xf]
        %v214 = vld [vmem:[%s166 + $0x2c] sm:$0xf]
        %v215 = vld [vmem:[%s166 + $0x30] sm:$0xf]
        %v216 = vld [vmem:[%s166 + $0x34] sm:$0xf]
        %v217 = vld [vmem:[%s166 + $0x38] sm:$0xf]
        %v218 = vld [vmem:[%s166 + $0x3c] sm:$0xf]
        %v219 = vld [vmem:[%s166 + $0x40] sm:$0xf]
        %v220 = vld [vmem:[%s166 + $0x44] sm:$0xf]
        %v221 = vld [vmem:[%s166 + $0x48] sm:$0xf]
        %v222 = vld [vmem:[%s166 + $0x4c] sm:$0xf]
        %v223 = vld [vmem:[%s166 + $0x50] sm:$0xf]
        %v224 = vld [vmem:[%s166 + $0x54] sm:$0xf]
        %v225 = vld [vmem:[%s166 + $0x58] sm:$0xf]
        %v226 = vld [vmem:[%s166 + $0x5c] sm:$0xf]
        %v227 = vld [vmem:[%s166 + $0x60] sm:$0xf]
        %v228 = vld [vmem:[%s166 + $0x64] sm:$0xf]
        %v229 = vld [vmem:[%s166 + $0x68] sm:$0xf]
        %v230 = vld [vmem:[%s166 + $0x6c] sm:$0xf]
        %v231 = vld [vmem:[%s166 + $0x70] sm:$0xf]
        %v232 = vld [vmem:[%s166 + $0x74] sm:$0xf]
        %v233 = vld [vmem:[%s166 + $0x78] sm:$0xf]
        %v234 = vld [vmem:[%s166 + $0x7c] sm:$0xf]
        %v235 = vld [vmem:[%s1] sm:$0xf]
        %v236 = vld [vmem:[%s1 + $0x4] sm:$0xf]
        %v237 = vld [vmem:[%s1 + $0x8] sm:$0xf]
        %v238 = vld [vmem:[%s1 + $0xc] sm:$0xf]
        %v239 = vld [vmem:[%s1 + $0x10] sm:$0xf]
        %v240 = vld [vmem:[%s1 + $0x14] sm:$0xf]
        %v241 = vld [vmem:[%s1 + $0x18] sm:$0xf]
        %v242 = vld [vmem:[%s1 + $0x1c] sm:$0xf]
        %v243 = vld [vmem:[%s1 + $0x20] sm:$0xf]
        %v244 = vld [vmem:[%s1 + $0x24] sm:$0xf]
        %v245 = vld [vmem:[%s1 + $0x28] sm:$0xf]
        %v246 = vld [vmem:[%s1 + $0x2c] sm:$0xf]
        %v247 = vld [vmem:[%s1 + $0x30] sm:$0xf]
        %v248 = vld [vmem:[%s1 + $0x34] sm:$0xf]
        %v249 = vld [vmem:[%s1 + $0x38] sm:$0xf]
        %v250 = vld [vmem:[%s1 + $0x3c] sm:$0xf]
        %v283 = vunpack.c.l.b16 %v203
        %v284 = vunpack.c.l.b16 %v204
        %v285 = vunpack.c.l.b16 %v205
        %v286 = vunpack.c.l.b16 %v206
        %v287 = vunpack.c.l.b16 %v207
        %v288 = vunpack.c.l.b16 %v208
        %v289 = vunpack.c.l.b16 %v209
        %v290 = vunpack.c.l.b16 %v210
        %v291 = vunpack.c.l.b16 %v211
        %v292 = vunpack.c.l.b16 %v212
        %v293 = vunpack.c.l.b16 %v213
        %v294 = vunpack.c.l.b16 %v214
        %v295 = vunpack.c.l.b16 %v215
        %v296 = vunpack.c.l.b16 %v216
        %v297 = vunpack.c.l.b16 %v217
        %v298 = vunpack.c.l.b16 %v218
        %v299 = vunpack.c.l.b16 %v219
        %v300 = vunpack.c.l.b16 %v220
        %v301 = vunpack.c.l.b16 %v221
        %v302 = vunpack.c.l.b16 %v222
        %v303 = vunpack.c.l.b16 %v223
        %v304 = vunpack.c.l.b16 %v224
        %v305 = vunpack.c.l.b16 %v225
        %v306 = vunpack.c.l.b16 %v226
        %v307 = vunpack.c.l.b16 %v227
        %v308 = vunpack.c.l.b16 %v228
        %v309 = vunpack.c.l.b16 %v229
        %v310 = vunpack.c.l.b16 %v230
        %v311 = vunpack.c.l.b16 %v231
        %v312 = vunpack.c.l.b16 %v232
        %v313 = vunpack.c.l.b16 %v233
        %v314 = vunpack.c.l.b16 %v234
        %v315 = vpack.c.b16 %v284, %v283
        %v316 = vpack.c.b16 %v286, %v285
        %v317 = vpack.c.b16 %v288, %v287
        %v318 = vpack.c.b16 %v290, %v289
        %v319 = vpack.c.b16 %v292, %v291
        %v320 = vpack.c.b16 %v294, %v293
        %v321 = vpack.c.b16 %v296, %v295
        %v322 = vpack.c.b16 %v298, %v297
        %v323 = vpack.c.b16 %v300, %v299
        %v324 = vpack.c.b16 %v302, %v301
        %v325 = vpack.c.b16 %v304, %v303
        %v326 = vpack.c.b16 %v306, %v305
        %v327 = vpack.c.b16 %v308, %v307
        %v328 = vpack.c.b16 %v310, %v309
        %v329 = vpack.c.b16 %v312, %v311
        %v330 = vpack.c.b16 %v314, %v313
        %v363 = vunpack.c.l.b16 %v235
        %v364 = vunpack.c.l.b16 %v236
        %v365 = vunpack.c.l.b16 %v237
        %v366 = vunpack.c.l.b16 %v238
        %v367 = vunpack.c.l.b16 %v239
        %v368 = vunpack.c.l.b16 %v240
        %v369 = vunpack.c.l.b16 %v241
        %v370 = vunpack.c.l.b16 %v242
        %v371 = vunpack.c.l.b16 %v243
        %v372 = vunpack.c.l.b16 %v244
        %v373 = vunpack.c.l.b16 %v245
        %v374 = vunpack.c.l.b16 %v246
        %v375 = vunpack.c.l.b16 %v247
        %v376 = vunpack.c.l.b16 %v248
        %v377 = vunpack.c.l.b16 %v249
        %v378 = vunpack.c.l.b16 %v250
        %v379 = vpack.c.b16 %v364, %v363
        %v380 = vpack.c.b16 %v366, %v365
        %v381 = vpack.c.b16 %v368, %v367
        %v382 = vpack.c.b16 %v370, %v369
        %v383 = vpack.c.b16 %v372, %v371
        %v384 = vpack.c.b16 %v374, %v373
        %v385 = vpack.c.b16 %v376, %v375
        %v386 = vpack.c.b16 %v378, %v377
        %395 = vmatprep.subr.bf16.mxu0 0
        %396 = vmatpush1.bf16.msra.mxu0 %v379
        %397 = vmatprep.subr.bf16.mxu0 0
        %398 = vmatpush1.bf16.msra.mxu0 %v380
        %399 = vmatprep.subr.bf16.mxu0 0
        %400 = vmatpush1.bf16.msra.mxu0 %v381
        %401 = vmatprep.subr.bf16.mxu0 0
        %402 = vmatpush1.bf16.msra.mxu0 %v382
        %403 = vmatprep.subr.bf16.mxu0 0
        %404 = vmatpush1.bf16.msra.mxu0 %v383
        %405 = vmatprep.subr.bf16.mxu0 0
        %406 = vmatpush1.bf16.msra.mxu0 %v384
        %407 = vmatprep.subr.bf16.mxu0 0
        %408 = vmatpush1.bf16.msra.mxu0 %v385
        %409 = vmatprep.subr.bf16.mxu0 0
        %410 = vmatpush1.bf16.msra.mxu0 %v386
        %411 = vmatprep.subr.bf16.mxu0 0
        %412 = vmatpush1.bf16.msra.mxu0 0
        %413 = vmatprep.subr.bf16.mxu0 0
        %414 = vmatpush1.bf16.msra.mxu0 0
        %415 = vmatprep.subr.bf16.mxu0 0
        %416 = vmatpush1.bf16.msra.mxu0 0
        %417 = vmatprep.subr.bf16.mxu0 0
        %418 = vmatpush1.bf16.msra.mxu0 0
        %419 = vmatprep.subr.bf16.mxu0 0
        %420 = vmatpush1.bf16.msra.mxu0 0
        %421 = vmatprep.subr.bf16.mxu0 0
        %422 = vmatpush1.bf16.msra.mxu0 0
        %423 = vmatprep.subr.bf16.mxu0 0
        %424 = vmatpush1.bf16.msra.mxu0 0
        %425 = vmatprep.subr.bf16.mxu0 0
        %426 = vmatpush1.bf16.msra.mxu0 0
        %427 = vmatprep.mubr.bf16.mxu0 0
        %428 = vmatmul.mubr.bf16.gmra.mrb[0].mxu0 %v315
        %v429 = vpop.f32.mrb[0].mxu0
        %v430 = vadd.f32 0.0, %v429
        %v431 = vpop.f32.mrb[0].mxu0
        %v432 = vpop.f32.mrb[0].mxu0
        %v433 = vadd.f32 0.0, %v432
        %v434 = vpop.f32.mrb[0].mxu0
        %435 = vmatprep.mubr.bf16.mxu0 0
        %436 = vmatmul.mubr.bf16.gmra.mrb[0].mxu0 %v316
        %v437 = vpop.f32.mrb[0].mxu0
        %v438 = vadd.f32 0.0, %v437
        %v439 = vpop.f32.mrb[0].mxu0
        %v440 = vpop.f32.mrb[0].mxu0
        %v441 = vadd.f32 0.0, %v440
        %v442 = vpop.f32.mrb[0].mxu0
        %443 = vmatprep.mubr.bf16.mxu0 0
        %444 = vmatmul.mubr.bf16.gmra.mrb[0].mxu0 %v317
        %v445 = vpop.f32.mrb[0].mxu0
        %v446 = vadd.f32 0.0, %v445
        %v447 = vpop.f32.mrb[0].mxu0
        %v448 = vpop.f32.mrb[0].mxu0
        %v449 = vadd.f32 0.0, %v448
        %v450 = vpop.f32.mrb[0].mxu0
        %451 = vmatprep.mubr.bf16.mxu0 0
        %452 = vmatmul.mubr.bf16.gmra.mrb[0].mxu0 %v318
        %v453 = vpop.f32.mrb[0].mxu0
        %v454 = vadd.f32 0.0, %v453
        %v455 = vpop.f32.mrb[0].mxu0
        %v456 = vpop.f32.mrb[0].mxu0
        %v457 = vadd.f32 0.0, %v456
        %v458 = vpop.f32.mrb[0].mxu0
        %459 = vmatprep.mubr.bf16.mxu0 0
        %460 = vmatmul.mubr.bf16.gmra.mrb[0].mxu0 %v319
        %v461 = vpop.f32.mrb[0].mxu0
        %v462 = vadd.f32 0.0, %v461
        %v463 = vpop.f32.mrb[0].mxu0
        %v464 = vpop.f32.mrb[0].mxu0
        %v465 = vadd.f32 0.0, %v464
        %v466 = vpop.f32.mrb[0].mxu0
        %467 = vmatprep.mubr.bf16.mxu0 0
        %468 = vmatmul.mubr.bf16.gmra.mrb[0].mxu0 %v320
        %v469 = vpop.f32.mrb[0].mxu0
        %v470 = vadd.f32 0.0, %v469
        %v471 = vpop.f32.mrb[0].mxu0
        %v472 = vpop.f32.mrb[0].mxu0
        %v473 = vadd.f32 0.0, %v472
        %v474 = vpop.f32.mrb[0].mxu0
        %475 = vmatprep.mubr.bf16.mxu0 0
        %476 = vmatmul.mubr.bf16.gmra.mrb[0].mxu0 %v321
        %v477 = vpop.f32.mrb[0].mxu0
        %v478 = vadd.f32 0.0, %v477
        %v479 = vpop.f32.mrb[0].mxu0
        %v480 = vpop.f32.mrb[0].mxu0
        %v481 = vadd.f32 0.0, %v480
        %v482 = vpop.f32.mrb[0].mxu0
        %483 = vmatprep.mubr.bf16.mxu0 0
        %484 = vmatmul.mubr.bf16.gmra.mrb[0].mxu0 %v322
        %v485 = vpop.f32.mrb[0].mxu0
        %v486 = vadd.f32 0.0, %v485
        %v487 = vpop.f32.mrb[0].mxu0
        %v488 = vpop.f32.mrb[0].mxu0
        %v489 = vadd.f32 0.0, %v488
        %v490 = vpop.f32.mrb[0].mxu0
        %491 = vmatprep.mubr.bf16.mxu0 0
        %492 = vmatmul.mubr.bf16.gmra.mrb[0].mxu0 %v323
        %v493 = vpop.f32.mrb[0].mxu0
        %v494 = vadd.f32 0.0, %v493
        %v495 = vpop.f32.mrb[0].mxu0
        %v496 = vpop.f32.mrb[0].mxu0
        %v497 = vadd.f32 0.0, %v496
        %v498 = vpop.f32.mrb[0].mxu0
        %499 = vmatprep.mubr.bf16.mxu0 0
        %500 = vmatmul.mubr.bf16.gmra.mrb[0].mxu0 %v324
        %v501 = vpop.f32.mrb[0].mxu0
        %v502 = vadd.f32 0.0, %v501
        %v503 = vpop.f32.mrb[0].mxu0
        %v504 = vpop.f32.mrb[0].mxu0
        %v505 = vadd.f32 0.0, %v504
        %v506 = vpop.f32.mrb[0].mxu0
        %507 = vmatprep.mubr.bf16.mxu0 0
        %508 = vmatmul.mubr.bf16.gmra.mrb[0].mxu0 %v325
        %v509 = vpop.f32.mrb[0].mxu0
        %v510 = vadd.f32 0.0, %v509
        %v511 = vpop.f32.mrb[0].mxu0
        %v512 = vpop.f32.mrb[0].mxu0
        %v513 = vadd.f32 0.0, %v512
        %v514 = vpop.f32.mrb[0].mxu0
        %515 = vmatprep.mubr.bf16.mxu0 0
        %516 = vmatmul.mubr.bf16.gmra.mrb[0].mxu0 %v326
        %v517 = vpop.f32.mrb[0].mxu0
        %v518 = vadd.f32 0.0, %v517
        %v519 = vpop.f32.mrb[0].mxu0
        %v520 = vpop.f32.mrb[0].mxu0
        %v521 = vadd.f32 0.0, %v520
        %v522 = vpop.f32.mrb[0].mxu0
        %523 = vmatprep.mubr.bf16.mxu0 0
        %524 = vmatmul.mubr.bf16.gmra.mrb[0].mxu0 %v327
        %v525 = vpop.f32.mrb[0].mxu0
        %v526 = vadd.f32 0.0, %v525
        %v527 = vpop.f32.mrb[0].mxu0
        %v528 = vpop.f32.mrb[0].mxu0
        %v529 = vadd.f32 0.0, %v528
        %v530 = vpop.f32.mrb[0].mxu0
        %531 = vmatprep.mubr.bf16.mxu0 0
        %532 = vmatmul.mubr.bf16.gmra.mrb[0].mxu0 %v328
        %v533 = vpop.f32.mrb[0].mxu0
        %v534 = vadd.f32 0.0, %v533
        %v535 = vpop.f32.mrb[0].mxu0
        %v536 = vpop.f32.mrb[0].mxu0
        %v537 = vadd.f32 0.0, %v536
        %v538 = vpop.f32.mrb[0].mxu0
        %539 = vmatprep.mubr.bf16.mxu0 0
        %540 = vmatmul.mubr.bf16.gmra.mrb[0].mxu0 %v329
        %v541 = vpop.f32.mrb[0].mxu0
        %v542 = vadd.f32 0.0, %v541
        %v543 = vpop.f32.mrb[0].mxu0
        %v544 = vpop.f32.mrb[0].mxu0
        %v545 = vadd.f32 0.0, %v544
        %v546 = vpop.f32.mrb[0].mxu0
        %547 = vmatprep.mubr.bf16.mxu0 0
        %548 = vmatmul.mubr.bf16.gmra.mrb[0].mxu0 %v330
        %v549 = vpop.f32.mrb[0].mxu0
        %v550 = vadd.f32 0.0, %v549
        %v551 = vpop.f32.mrb[0].mxu0
        %v552 = vpop.f32.mrb[0].mxu0
        %v553 = vadd.f32 0.0, %v552
        %v554 = vpop.f32.mrb[0].mxu0
        %555 = vdwg.mxu0
        %vm556 = vcmask 261120
        %557 = vst.msk [vmem:[%s197] sm:$0xff] %vm556, %v430
        %558 = vst.msk [vmem:[%s197 + $0x8] sm:$0xff] %vm556, %v433
        %559 = vst.msk [vmem:[%s197 + $0x10] sm:$0xff] %vm556, %v438
        %560 = vst.msk [vmem:[%s197 + $0x18] sm:$0xff] %vm556, %v441
        %561 = vst.msk [vmem:[%s197 + $0x20] sm:$0xff] %vm556, %v446
        %562 = vst.msk [vmem:[%s197 + $0x28] sm:$0xff] %vm556, %v449
        %563 = vst.msk [vmem:[%s197 + $0x30] sm:$0xff] %vm556, %v454
        %564 = vst.msk [vmem:[%s197 + $0x38] sm:$0xff] %vm556, %v457
        %565 = vst.msk [vmem:[%s197 + $0x40] sm:$0xff] %vm556, %v462
        %566 = vst.msk [vmem:[%s197 + $0x48] sm:$0xff] %vm556, %v465
        %567 = vst.msk [vmem:[%s197 + $0x50] sm:$0xff] %vm556, %v470
        %568 = vst.msk [vmem:[%s197 + $0x58] sm:$0xff] %vm556, %v473
        %569 = vst.msk [vmem:[%s197 + $0x60] sm:$0xff] %vm556, %v478
        %570 = vst.msk [vmem:[%s197 + $0x68] sm:$0xff] %vm556, %v481
        %571 = vst.msk [vmem:[%s197 + $0x70] sm:$0xff] %vm556, %v486
        %572 = vst.msk [vmem:[%s197 + $0x78] sm:$0xff] %vm556, %v489
        %573 = vst.msk [vmem:[%s197 + $0x80] sm:$0xff] %vm556, %v494
        %574 = vst.msk [vmem:[%s197 + $0x88] sm:$0xff] %vm556, %v497
        %575 = vst.msk [vmem:[%s197 + $0x90] sm:$0xff] %vm556, %v502
        %576 = vst.msk [vmem:[%s197 + $0x98] sm:$0xff] %vm556, %v505
        %577 = vst.msk [vmem:[%s197 + $0xa0] sm:$0xff] %vm556, %v510
        %578 = vst.msk [vmem:[%s197 + $0xa8] sm:$0xff] %vm556, %v513
        %579 = vst.msk [vmem:[%s197 + $0xb0] sm:$0xff] %vm556, %v518
        %580 = vst.msk [vmem:[%s197 + $0xb8] sm:$0xff] %vm556, %v521
        %581 = vst.msk [vmem:[%s197 + $0xc0] sm:$0xff] %vm556, %v526
        %582 = vst.msk [vmem:[%s197 + $0xc8] sm:$0xff] %vm556, %v529
        %583 = vst.msk [vmem:[%s197 + $0xd0] sm:$0xff] %vm556, %v534
        %584 = vst.msk [vmem:[%s197 + $0xd8] sm:$0xff] %vm556, %v537
        %585 = vst.msk [vmem:[%s197 + $0xe0] sm:$0xff] %vm556, %v542
        %586 = vst.msk [vmem:[%s197 + $0xe8] sm:$0xff] %vm556, %v545
        %587 = vst.msk [vmem:[%s197 + $0xf0] sm:$0xff] %vm556, %v550
        %588 = vst.msk [vmem:[%s197 + $0xf8] sm:$0xff] %vm556, %v553
        %v589 = vsel %vm556, %v430, 0.0
        %v590 = vsel %vm556, %v433, 0.0
        %v591 = vadd.f32 %v589, %v590
        %v592 = vsel %vm556, %v438, 0.0
        %v593 = vadd.f32 %v591, %v592
        %v594 = vsel %vm556, %v441, 0.0
        %v595 = vadd.f32 %v593, %v594
        %v596 = vsel %vm556, %v446, 0.0
        %v597 = vadd.f32 %v595, %v596
        %v598 = vsel %vm556, %v449, 0.0
        %v599 = vadd.f32 %v597, %v598
        %v600 = vsel %vm556, %v454, 0.0
        %v601 = vadd.f32 %v599, %v600
        %v602 = vsel %vm556, %v457, 0.0
        %v603 = vadd.f32 %v601, %v602
        %v604 = vsel %vm556, %v462, 0.0
        %v605 = vadd.f32 %v603, %v604
        %v606 = vsel %vm556, %v465, 0.0
        %v607 = vadd.f32 %v605, %v606
        %v608 = vsel %vm556, %v470, 0.0
        %v609 = vadd.f32 %v607, %v608
        %v610 = vsel %vm556, %v473, 0.0
        %v611 = vadd.f32 %v609, %v610
        %v612 = vsel %vm556, %v478, 0.0
        %v613 = vadd.f32 %v611, %v612
        %v614 = vsel %vm556, %v481, 0.0
        %v615 = vadd.f32 %v613, %v614
        %v616 = vsel %vm556, %v486, 0.0
        %v617 = vadd.f32 %v615, %v616
        %v618 = vsel %vm556, %v489, 0.0
        %v619 = vadd.f32 %v617, %v618
        %v620 = vsel %vm556, %v494, 0.0
        %v621 = vadd.f32 %v619, %v620
        %v622 = vsel %vm556, %v497, 0.0
        %v623 = vadd.f32 %v621, %v622
        %v624 = vsel %vm556, %v502, 0.0
        %v625 = vadd.f32 %v623, %v624
        %v626 = vsel %vm556, %v505, 0.0
        %v627 = vadd.f32 %v625, %v626
        %v628 = vsel %vm556, %v510, 0.0
        %v629 = vadd.f32 %v627, %v628
        %v630 = vsel %vm556, %v513, 0.0
        %v631 = vadd.f32 %v629, %v630
        %v632 = vsel %vm556, %v518, 0.0
        %v633 = vadd.f32 %v631, %v632
        %v634 = vsel %vm556, %v521, 0.0
        %v635 = vadd.f32 %v633, %v634
        %v636 = vsel %vm556, %v526, 0.0
        %v637 = vadd.f32 %v635, %v636
        %v638 = vsel %vm556, %v529, 0.0
        %v639 = vadd.f32 %v637, %v638
        %v640 = vsel %vm556, %v534, 0.0
        %v641 = vadd.f32 %v639, %v640
        %v642 = vsel %vm556, %v537, 0.0
        %v643 = vadd.f32 %v641, %v642
        %v644 = vsel %vm556, %v542, 0.0
        %v645 = vadd.f32 %v643, %v644
        %v646 = vsel %vm556, %v545, 0.0
        %v647 = vadd.f32 %v645, %v646
        %v648 = vsel %vm556, %v550, 0.0
        %v649 = vadd.f32 %v647, %v648
        %v650 = vsel %vm556, %v553, 0.0
        %v651 = vadd.f32 %v649, %v650
        %v652 = vrot.slane %v651, 4
        %v653 = vadd.f32 %v651, %v652
        %v654 = vrot.slane %v653, 2
        %v655 = vadd.f32 %v653, %v654
        %v656 = vrot.slane %v655, 1
        %v657 = vadd.f32 %v655, %v656
        %v658 = vmul.f32 %v430, %v430
        %v659 = vmul.f32 %v433, %v433
        %v660 = vmul.f32 %v438, %v438
        %v661 = vmul.f32 %v441, %v441
        %v662 = vmul.f32 %v446, %v446
        %v663 = vmul.f32 %v449, %v449
        %v664 = vmul.f32 %v454, %v454
        %v665 = vmul.f32 %v457, %v457
        %v666 = vmul.f32 %v462, %v462
        %v667 = vmul.f32 %v465, %v465
        %v668 = vmul.f32 %v470, %v470
        %v669 = vmul.f32 %v473, %v473
        %v670 = vmul.f32 %v478, %v478
        %v671 = vmul.f32 %v481, %v481
        %v672 = vmul.f32 %v486, %v486
        %v673 = vmul.f32 %v489, %v489
        %v674 = vmul.f32 %v494, %v494
        %v675 = vmul.f32 %v497, %v497
        %v676 = vmul.f32 %v502, %v502
        %v677 = vmul.f32 %v505, %v505
        %v678 = vmul.f32 %v510, %v510
        %v679 = vmul.f32 %v513, %v513
        %v680 = vmul.f32 %v518, %v518
        %v681 = vmul.f32 %v521, %v521
        %v682 = vmul.f32 %v526, %v526
        %v683 = vmul.f32 %v529, %v529
        %v684 = vmul.f32 %v534, %v534
        %v685 = vmul.f32 %v537, %v537
        %v686 = vmul.f32 %v542, %v542
        %v687 = vmul.f32 %v545, %v545
        %v688 = vmul.f32 %v550, %v550
        %v689 = vmul.f32 %v553, %v553
        %v690 = vsel %vm556, %v658, 0.0
        %v691 = vsel %vm556, %v659, 0.0
        %v692 = vadd.f32 %v690, %v691
        %v693 = vsel %vm556, %v660, 0.0
        %v694 = vadd.f32 %v692, %v693
        %v695 = vsel %vm556, %v661, 0.0
        %v696 = vadd.f32 %v694, %v695
        %v697 = vsel %vm556, %v662, 0.0
        %v698 = vadd.f32 %v696, %v697
        %v699 = vsel %vm556, %v663, 0.0
        %v700 = vadd.f32 %v698, %v699
        %v701 = vsel %vm556, %v664, 0.0
        %v702 = vadd.f32 %v700, %v701
        %v703 = vsel %vm556, %v665, 0.0
        %v704 = vadd.f32 %v702, %v703
        %v705 = vsel %vm556, %v666, 0.0
        %v706 = vadd.f32 %v704, %v705
        %v707 = vsel %vm556, %v667, 0.0
        %v708 = vadd.f32 %v706, %v707
        %v709 = vsel %vm556, %v668, 0.0
        %v710 = vadd.f32 %v708, %v709
        %v711 = vsel %vm556, %v669, 0.0
        %v712 = vadd.f32 %v710, %v711
        %v713 = vsel %vm556, %v670, 0.0
        %v714 = vadd.f32 %v712, %v713
        %v715 = vsel %vm556, %v671, 0.0
        %v716 = vadd.f32 %v714, %v715
        %v717 = vsel %vm556, %v672, 0.0
        %v718 = vadd.f32 %v716, %v717
        %v719 = vsel %vm556, %v673, 0.0
        %v720 = vadd.f32 %v718, %v719
        %v721 = vsel %vm556, %v674, 0.0
        %v722 = vadd.f32 %v720, %v721
        %v723 = vsel %vm556, %v675, 0.0
        %v724 = vadd.f32 %v722, %v723
        %v725 = vsel %vm556, %v676, 0.0
        %v726 = vadd.f32 %v724, %v725
        %v727 = vsel %vm556, %v677, 0.0
        %v728 = vadd.f32 %v726, %v727
        %v729 = vsel %vm556, %v678, 0.0
        %v730 = vadd.f32 %v728, %v729
        %v731 = vsel %vm556, %v679, 0.0
        %v732 = vadd.f32 %v730, %v731
        %v733 = vsel %vm556, %v680, 0.0
        %v734 = vadd.f32 %v732, %v733
        %v735 = vsel %vm556, %v681, 0.0
        %v736 = vadd.f32 %v734, %v735
        %v737 = vsel %vm556, %v682, 0.0
        %v738 = vadd.f32 %v736, %v737
        %v739 = vsel %vm556, %v683, 0.0
        %v740 = vadd.f32 %v738, %v739
        %v741 = vsel %vm556, %v684, 0.0
        %v742 = vadd.f32 %v740, %v741
        %v743 = vsel %vm556, %v685, 0.0
        %v744 = vadd.f32 %v742, %v743
        %v745 = vsel %vm556, %v686, 0.0
        %v746 = vadd.f32 %v744, %v745
        %v747 = vsel %vm556, %v687, 0.0
        %v748 = vadd.f32 %v746, %v747
        %v749 = vsel %vm556, %v688, 0.0
        %v750 = vadd.f32 %v748, %v749
        %v751 = vsel %vm556, %v689, 0.0
        %v752 = vadd.f32 %v750, %v751
        %v753 = vrot.slane %v752, 4
        %v754 = vadd.f32 %v752, %v753
        %v755 = vrot.slane %v754, 2
        %v756 = vadd.f32 %v754, %v755
        %v757 = vrot.slane %v756, 1
        %v758 = vadd.f32 %v756, %v757
        %vm759 = vcmask 1040384
        %v760 = vsel %vm759, %v657, %v758
        %vm761 = vcmask 254976
        %762 = vst.msk [vmem:[%s201] sm:$0x3] %vm761, %v760
        %p763 = scmp.lt.s32.totalorder %s18, 1
        %s764 = scalar_select %p763, %s18, 1
        %s765 = smul.addr %s764, 32
        %s766 = smul.addr %s765, 8
        %s767 = scalar_lea.vmem %s2, %s766
        %p768 = scmp.lt.s32.totalorder %s18, 1
        %s769 = scalar_select %p768, %s18, 1
        %s770 = smul.addr %s769, 2
        %s771 = scalar_lea.vmem %s3, %s770
        // Predicated region
        $region33: #{bottleneck_forward.4} parent=27 // pred_check
          %p772 = pneg %p83
        $region34: #{bottleneck_forward.4} parent=27 // pred_check_branch
          %774 = sbr.rel (%p772) target = $region36
        $region35: #{bottleneck_forward.4} parent=27 // pred_region
          _
        $region36: #{bottleneck_forward.4} parent=27 // pred_fallthru
          _
        // Predicated region
        $region37: #{bottleneck_forward.4} parent=27 // pred_check
          %p775 = pneg %p109
        $region38: #{bottleneck_forward.4} parent=27 // pred_check_branch
          %777 = sbr.rel (%p775) target = $region40
        $region39: #{bottleneck_forward.4} parent=27 // pred_region
          _
        $region40: #{bottleneck_forward.4} parent=27 // pred_fallthru
          _
      $region28: #{bottleneck_forward.4} parent=5 // pred_fallthru
        _
      %p778 = scmp.le.s32.totalorder 2, %s13
      // Predicated region
      $region41: #{bottleneck_forward.4} parent=5 // pred_check
        %p779 = pneg %p778
      $region42: #{bottleneck_forward.4} parent=5 // pred_check_branch
        %781 = sbr.rel (%p779) target = $region44
      $region43: #{bottleneck_forward.4} parent=5 // pred_region
        %s782 = ssub.s32 %s13, 2
        // Predicated region
        $region45: #{bottleneck_forward.4} parent=43 // pred_check
          %p783 = pneg %p89
        $region46: #{bottleneck_forward.4} parent=43 // pred_check_branch
          %785 = sbr.rel (%p783) target = $region48
        $region47: #{bottleneck_forward.4} parent=43 // pred_region
          %p786 = scmp.lt.s32.totalorder %s19, 1
          %s787 = scalar_select %p786, %s19, 1
          %s788 = smul.addr %s787, 32
          %s789 = smul.addr %s788, 8
          %s790 = scalar_lea.vmem %s2, %s789
        $region48: #{bottleneck_forward.4} parent=43 // pred_fallthru
          _
        // Predicated region
        $region49: #{bottleneck_forward.4} parent=43 // pred_check
          %p791 = pneg %p115
        $region50: #{bottleneck_forward.4} parent=43 // pred_check_branch
          %793 = sbr.rel (%p791) target = $region52
        $region51: #{bottleneck_forward.4} parent=43 // pred_region
          %p794 = scmp.lt.s32.totalorder %s19, 1
          %s795 = scalar_select %p794, %s19, 1
          %s796 = smul.addr %s795, 2
          %s797 = scalar_lea.vmem %s3, %s796
        $region52: #{bottleneck_forward.4} parent=43 // pred_fallthru
          _
      $region44: #{bottleneck_forward.4} parent=5 // pred_fallthru
        _
    $region6: #{bottleneck_forward.4} parent=1 // loop_footer
      %s17 = sadd.s32 1, %s13
    $region7: #{bottleneck_forward.4} parent=1 // loop_footer_branch
      %12 = sbr.rel target = $region3
    $region8: #{bottleneck_forward.4} parent=1 // loop_exit
      _
    %798 = vsyncpa [#allocation3], 1
    %s799 = scalar_lea.sflag [#allocation3], 1
    %800 = vsyncpa %s799, 1

// kernel: bottleneck_forward.7
$region0: #{bottleneck_forward.7}
  #allocation0 [shape = 'u32[]', space=smem, size = 0x4, offset = 0x4, fixed_abs, tag = 'smem constant byte address 0x4 - core index']
  #allocation1 [shape = 'u32[144,128]{1,0:T(1,128)}', space=vmem, size = 0x12000, scoped, tag = 'internal scratch']
  %s0 = inlined_call_operand.vmem [shape: f32[2,16,16,32], index: 0, kind: input, shape index: {}]
  %s1 = inlined_call_operand.vmem [shape: bf16[2,16,16,128], index: 1, kind: input, shape index: {}]
  %s2 = inlined_call_operand.vmem [shape: f32[1,32], index: 2, kind: input, shape index: {}]
  %s3 = inlined_call_operand.vmem [shape: f32[1,32], index: 3, kind: input, shape index: {}]
  %s4 = inlined_call_operand.vmem [shape: f32[1,128], index: 4, kind: input, shape index: {}]
  %s5 = inlined_call_operand.vmem [shape: f32[1,128], index: 5, kind: input, shape index: {}]
  %s6 = inlined_call_operand.vmem [shape: bf16[32,128], index: 6, kind: input, shape index: {}]
  %s7 = inlined_call_operand.hbm [shape: bf16[2,16,16,128], index: 7, kind: output, shape index: {}]
  %s8 = sld [smem:[#allocation0]]
  $region61: #{bottleneck_forward.7} parent=0
    _
  %s10 = ssub.s32 1, %s8
  %s11 = scalar_select 0, %s10, %s8
  $region1: #{bottleneck_forward.7} parent=0
    #allocation2 [shape = 'u8[131072]{0}', space=vmem, size = 0x20000, scoped, tag = 'output window, operand 0']
    #allocation3 [shape = 's32[2]{0}', space=sflag, size = 0x8, scoped, tag = 'scoped memory for bottleneck_forward.7']
    %12 = vsyncpa [#allocation3], 0
    %s13 = scalar_lea.sflag [#allocation3], 1
    %14 = vsyncpa %s13, 0
    loop: start=0, step=1, limit=4
    $region2: #{bottleneck_forward.7} parent=1 // loop_pre_header
      _
    $region3: #{bottleneck_forward.7} parent=1 // loop_header
      %s16 = sphi 0, %s20
      %p17 = scmp.ge.s32.totalorder %s16, 4
      %s26 = sphi 0, %s28
      %s29 = sphi 0, %s26
      %s30 = sphi 0, %s29
      %s46 = sphi 0, %s30
      %s52 = sphi 0, %s54
      %s55 = sphi 0, %s52
      %s56 = sphi 0, %s55
      %s72 = sphi 0, %s56
      %s76 = sphi 0, %s76
      %s78 = sphi 0, %s76
      %s79 = sphi 0, %s78
      %s93 = sphi 0, %s79
      %s97 = sphi 0, %s97
      %s99 = sphi 0, %s97
      %s100 = sphi 0, %s99
      %s114 = sphi 0, %s100
      %s118 = sphi 0, %s118
      %s120 = sphi 0, %s118
      %s121 = sphi 0, %s120
      %s135 = sphi 0, %s121
      %s139 = sphi 0, %s139
      %s141 = sphi 0, %s139
      %s142 = sphi 0, %s141
      %s156 = sphi 0, %s142
      %s160 = sphi 0, %s160
      %s162 = sphi 0, %s160
      %s163 = sphi 0, %s162
      %s177 = sphi 0, %s163
      %s183 = sphi 0, %s185
      %s186 = sphi 0, %s183
      %s187 = sphi 0, %s186
      %s203 = sphi 0, %s187
    $region4: #{bottleneck_forward.7} parent=1 // loop_header_branch
      %19 = sbr.rel (%p17) target = $region8
    $region5: #{bottleneck_forward.7} parent=1 // loop_body
      %s21 = ssub.s32 %s16, 1
      %s22 = ssub.s32 %s16, 2
      %s23 = sadd.s32 %s16, 1
      %s24 = ssub.s32 %s16, %s23
      %p25 = scmp.eq.s32.totalorder %s24, 0
      %s27 = sadd.s32 %s26, 1
      %s28 = scalar_select %p25, %s26, %s27
      %p31 = pneg %p25
      %p32 = scmp.eq.s32.totalorder %s16, 1
      %p33 = por %p31, %p32
      %p34 = scmp.ne.s32.totalorder %s26, %s29
      %p35 = scmp.eq.s32.totalorder %s16, 0
      %p36 = por %p34, %p35
      %p37 = scmp.ne.s32.totalorder %s26, %s29
      %p38 = scmp.eq.s32.totalorder %s21, 1
      %p39 = por %p37, %p38
      %p40 = scmp.ne.s32.totalorder %s29, %s30
      %p41 = scmp.eq.s32.totalorder %s21, 0
      %p42 = por %p40, %p41
      %p43 = scmp.ne.s32.totalorder %s29, %s30
      %p44 = scmp.eq.s32.totalorder %s22, 1
      %p45 = por %p43, %p44
      %p47 = scmp.ne.s32.totalorder %s30, %s46
      %p48 = scmp.eq.s32.totalorder %s22, 0
      %p49 = por %p47, %p48
      %s50 = ssub.s32 %s16, %s23
      %p51 = scmp.eq.s32.totalorder %s50, 0
      %s53 = sadd.s32 %s52, 1
      %s54 = scalar_select %p51, %s52, %s53
      %p57 = pneg %p51
      %p58 = scmp.eq.s32.totalorder %s16, 1
      %p59 = por %p57, %p58
      %p60 = scmp.ne.s32.totalorder %s52, %s55
      %p61 = scmp.eq.s32.totalorder %s16, 0
      %p62 = por %p60, %p61
      %p63 = scmp.ne.s32.totalorder %s52, %s55
      %p64 = scmp.eq.s32.totalorder %s21, 1
      %p65 = por %p63, %p64
      %p66 = scmp.ne.s32.totalorder %s55, %s56
      %p67 = scmp.eq.s32.totalorder %s21, 0
      %p68 = por %p66, %p67
      %p69 = scmp.ne.s32.totalorder %s55, %s56
      %p70 = scmp.eq.s32.totalorder %s22, 1
      %p71 = por %p69, %p70
      %p73 = scmp.ne.s32.totalorder %s56, %s72
      %p74 = scmp.eq.s32.totalorder %s22, 0
      %p75 = por %p73, %p74
      %s77 = sadd.s32 %s76, 1
      %p80 = scmp.eq.s32.totalorder %s16, 1
      %p81 = scmp.ne.s32.totalorder %s76, %s78
      %p82 = scmp.eq.s32.totalorder %s16, 0
      %p83 = por %p81, %p82
      %p84 = scmp.ne.s32.totalorder %s76, %s78
      %p85 = scmp.eq.s32.totalorder %s21, 1
      %p86 = por %p84, %p85
      %p87 = scmp.ne.s32.totalorder %s78, %s79
      %p88 = scmp.eq.s32.totalorder %s21, 0
      %p89 = por %p87, %p88
      %p90 = scmp.ne.s32.totalorder %s78, %s79
      %p91 = scmp.eq.s32.totalorder %s22, 1
      %p92 = por %p90, %p91
      %p94 = scmp.ne.s32.totalorder %s79, %s93
      %p95 = scmp.eq.s32.totalorder %s22, 0
      %p96 = por %p94, %p95
      %s98 = sadd.s32 %s97, 1
      %p101 = scmp.eq.s32.totalorder %s16, 1
      %p102 = scmp.ne.s32.totalorder %s97, %s99
      %p103 = scmp.eq.s32.totalorder %s16, 0
      %p104 = por %p102, %p103
      %p105 = scmp.ne.s32.totalorder %s97, %s99
      %p106 = scmp.eq.s32.totalorder %s21, 1
      %p107 = por %p105, %p106
      %p108 = scmp.ne.s32.totalorder %s99, %s100
      %p109 = scmp.eq.s32.totalorder %s21, 0
      %p110 = por %p108, %p109
      %p111 = scmp.ne.s32.totalorder %s99, %s100
      %p112 = scmp.eq.s32.totalorder %s22, 1
      %p113 = por %p111, %p112
      %p115 = scmp.ne.s32.totalorder %s100, %s114
      %p116 = scmp.eq.s32.totalorder %s22, 0
      %p117 = por %p115, %p116
      %s119 = sadd.s32 %s118, 1
      %p122 = scmp.eq.s32.totalorder %s16, 1
      %p123 = scmp.ne.s32.totalorder %s118, %s120
      %p124 = scmp.eq.s32.totalorder %s16, 0
      %p125 = por %p123, %p124
      %p126 = scmp.ne.s32.totalorder %s118, %s120
      %p127 = scmp.eq.s32.totalorder %s21, 1
      %p128 = por %p126, %p127
      %p129 = scmp.ne.s32.totalorder %s120, %s121
      %p130 = scmp.eq.s32.totalorder %s21, 0
      %p131 = por %p129, %p130
      %p132 = scmp.ne.s32.totalorder %s120, %s121
      %p133 = scmp.eq.s32.totalorder %s22, 1
      %p134 = por %p132, %p133
      %p136 = scmp.ne.s32.totalorder %s121, %s135
      %p137 = scmp.eq.s32.totalorder %s22, 0
      %p138 = por %p136, %p137
      %s140 = sadd.s32 %s139, 1
      %p143 = scmp.eq.s32.totalorder %s16, 1
      %p144 = scmp.ne.s32.totalorder %s139, %s141
      %p145 = scmp.eq.s32.totalorder %s16, 0
      %p146 = por %p144, %p145
      %p147 = scmp.ne.s32.totalorder %s139, %s141
      %p148 = scmp.eq.s32.totalorder %s21, 1
      %p149 = por %p147, %p148
      %p150 = scmp.ne.s32.totalorder %s141, %s142
      %p151 = scmp.eq.s32.totalorder %s21, 0
      %p152 = por %p150, %p151
      %p153 = scmp.ne.s32.totalorder %s141, %s142
      %p154 = scmp.eq.s32.totalorder %s22, 1
      %p155 = por %p153, %p154
      %p157 = scmp.ne.s32.totalorder %s142, %s156
      %p158 = scmp.eq.s32.totalorder %s22, 0
      %p159 = por %p157, %p158
      %s161 = sadd.s32 %s160, 1
      %p164 = scmp.eq.s32.totalorder %s16, 1
      %p165 = scmp.ne.s32.totalorder %s160, %s162
      %p166 = scmp.eq.s32.totalorder %s16, 0
      %p167 = por %p165, %p166
      %p168 = scmp.ne.s32.totalorder %s160, %s162
      %p169 = scmp.eq.s32.totalorder %s21, 1
      %p170 = por %p168, %p169
      %p171 = scmp.ne.s32.totalorder %s162, %s163
      %p172 = scmp.eq.s32.totalorder %s21, 0
      %p173 = por %p171, %p172
      %p174 = scmp.ne.s32.totalorder %s162, %s163
      %p175 = scmp.eq.s32.totalorder %s22, 1
      %p176 = por %p174, %p175
      %p178 = scmp.ne.s32.totalorder %s163, %s177
      %p179 = scmp.eq.s32.totalorder %s22, 0
      %p180 = por %p178, %p179
      %s181 = ssub.s32 %s16, %s23
      %p182 = scmp.eq.s32.totalorder %s181, 0
      %s184 = sadd.s32 %s183, 1
      %s185 = scalar_select %p182, %s183, %s184
      %p188 = pneg %p182
      %p189 = scmp.eq.s32.totalorder %s16, 1
      %p190 = por %p188, %p189
      %p191 = scmp.ne.s32.totalorder %s183, %s186
      %p192 = scmp.eq.s32.totalorder %s16, 0
      %p193 = por %p191, %p192
      %p194 = scmp.ne.s32.totalorder %s183, %s186
      %p195 = scmp.eq.s32.totalorder %s21, 1
      %p196 = por %p194, %p195
      %p197 = scmp.ne.s32.totalorder %s186, %s187
      %p198 = scmp.eq.s32.totalorder %s21, 0
      %p199 = por %p197, %p198
      %p200 = scmp.ne.s32.totalorder %s186, %s187
      %p201 = scmp.eq.s32.totalorder %s22, 1
      %p202 = por %p200, %p201
      %p204 = scmp.ne.s32.totalorder %s187, %s203
      %p205 = scmp.eq.s32.totalorder %s22, 0
      %p206 = por %p204, %p205
      %p207 = scmp.le.s32.totalorder 1, %s16
      %p208 = scmp.lt.s32.totalorder %s16, 3
      %p209 = pnand %p207, %p208
      %p210 = pneg %p209
      // Predicated region
      $region9: #{bottleneck_forward.7} parent=5 // pred_check
        _
      $region10: #{bottleneck_forward.7} parent=5 // pred_check_branch
        %212 = sbr.rel (%p209) target = $region12
      $region11: #{bottleneck_forward.7} parent=5 // pred_region
        %s213 = ssub.s32 %s16, 1
        // Predicated region
        $region13: #{bottleneck_forward.7} parent=11 // pred_check
          %p214 = pneg %p89
        $region14: #{bottleneck_forward.7} parent=11 // pred_check_branch
          %216 = sbr.rel (%p214) target = $region16
        $region15: #{bottleneck_forward.7} parent=11 // pred_region
          _
        $region16: #{bottleneck_forward.7} parent=11 // pred_fallthru
          _
        // Predicated region
        $region17: #{bottleneck_forward.7} parent=11 // pred_check
          %p217 = pneg %p110
        $region18: #{bottleneck_forward.7} parent=11 // pred_check_branch
          %219 = sbr.rel (%p217) target = $region20
        $region19: #{bottleneck_forward.7} parent=11 // pred_region
          _
        $region20: #{bottleneck_forward.7} parent=11 // pred_fallthru
          _
        // Predicated region
        $region21: #{bottleneck_forward.7} parent=11 // pred_check
          %p220 = pneg %p131
        $region22: #{bottleneck_forward.7} parent=11 // pred_check_branch
          %222 = sbr.rel (%p220) target = $region24
        $region23: #{bottleneck_forward.7} parent=11 // pred_region
          _
        $region24: #{bottleneck_forward.7} parent=11 // pred_fallthru
          _
        // Predicated region
        $region25: #{bottleneck_forward.7} parent=11 // pred_check
          %p223 = pneg %p152
        $region26: #{bottleneck_forward.7} parent=11 // pred_check_branch
          %225 = sbr.rel (%p223) target = $region28
        $region27: #{bottleneck_forward.7} parent=11 // pred_region
          _
        $region28: #{bottleneck_forward.7} parent=11 // pred_fallthru
          _
        // Predicated region
        $region29: #{bottleneck_forward.7} parent=11 // pred_check
          %p226 = pneg %p173
        $region30: #{bottleneck_forward.7} parent=11 // pred_check_branch
          %228 = sbr.rel (%p226) target = $region32
        $region31: #{bottleneck_forward.7} parent=11 // pred_region
          _
        $region32: #{bottleneck_forward.7} parent=11 // pred_fallthru
          _
      $region12: #{bottleneck_forward.7} parent=5 // pred_fallthru
        _
      %p229 = scmp.lt.s32.totalorder %s16, 2
      // Predicated region
      $region33: #{bottleneck_forward.7} parent=5 // pred_check
        %p230 = pneg %p229
      $region34: #{bottleneck_forward.7} parent=5 // pred_check_branch
        %232 = sbr.rel (%p230) target = $region36
      $region35: #{bottleneck_forward.7} parent=5 // pred_region
        // Predicated region
        $region37: #{bottleneck_forward.7} parent=35 // pred_check
          %p233 = pneg %p36
        $region38: #{bottleneck_forward.7} parent=35 // pred_check_branch
          %235 = sbr.rel (%p233) target = $region40
        $region39: #{bottleneck_forward.7} parent=35 // pred_region
          %p236 = scmp.lt.s32.totalorder %s16, 1
          %s237 = scalar_select %p236, %s16, 1
          %s238 = smul.addr %s237, 32
          %s239 = smul.addr %s238, 8
          %s240 = scalar_lea.vmem %s0, %s239
        $region40: #{bottleneck_forward.7} parent=35 // pred_fallthru
          _
        // Predicated region
        $region41: #{bottleneck_forward.7} parent=35 // pred_check
          %p241 = pneg %p62
        $region42: #{bottleneck_forward.7} parent=35 // pred_check_branch
          %243 = sbr.rel (%p241) target = $region44
        $region43: #{bottleneck_forward.7} parent=35 // pred_region
          %p244 = scmp.lt.s32.totalorder %s16, 1
          %s245 = scalar_select %p244, %s16, 1
          %s246 = smul.addr %s245, 32
          %s247 = smul.addr %s246, 4
          %s248 = scalar_lea.vmem %s1, %s247
        $region44: #{bottleneck_forward.7} parent=35 // pred_fallthru
          _
      $region36: #{bottleneck_forward.7} parent=5 // pred_fallthru
        _
      %p249 = scmp.le.s32.totalorder 1, %s16
      %p250 = scmp.lt.s32.totalorder %s16, 3
      %p251 = pnand %p249, %p250
      %p252 = pneg %p251
      // Predicated region
      $region45: #{bottleneck_forward.7} parent=5 // pred_check
        _
      $region46: #{bottleneck_forward.7} parent=5 // pred_check_branch
        %254 = sbr.rel (%p251) target = $region48
      $region47: #{bottleneck_forward.7} parent=5 // pred_region
        %s255 = ssub.s32 %s16, 1
        %p256 = scmp.lt.s32.totalorder %s21, 1
        %s257 = scalar_select %p256, %s21, 1
        %s258 = smul.addr %s257, 32
        %s259 = smul.addr %s258, 8
        %s260 = scalar_lea.vmem %s0, %s259
        %p261 = pneg %p42
        %p262 = pneg %p39
        %p263 = scmp.lt.s32.totalorder %s21, 1
        %s264 = scalar_select %p263, %s21, 1
        %s265 = smul.addr %s264, 32
        %s266 = smul.addr %s265, 4
        %s267 = scalar_lea.vmem %s1, %s266
        %p268 = pneg %p68
        %p269 = pneg %p65
        %p270 = pneg %p89
        %p271 = pneg %p86
        %p272 = pneg %p110
        %p273 = pneg %p107
        %p274 = pneg %p131
        %p275 = pneg %p128
        %p276 = pneg %p152
        %p277 = pneg %p149
        %p278 = pneg %p173
        %p279 = pneg %p170
        %p280 = pneg %p199
        %p281 = pneg %p196
        %s282 = sand.u32 %s186, 1
        %s283 = scalar_lea.sflag [#allocation3], %s282
        %s284 = sand.u32 %s186, 1
        %s285 = smul.addr %s284, 128
        %s286 = scalar_lea.vmem [#allocation2], %s285
        %p287 = scmp.lt.s32.totalorder %s21, 1
        %s288 = scalar_select %p287, %s21, 1
        %s289 = smul.addr %s288, 32
        %s290 = smul.addr %s289, 8
        %s291 = scalar_lea.vmem %s0, %s290
        %p292 = scmp.lt.s32.totalorder %s21, 1
        %s293 = scalar_select %p292, %s21, 1
        %s294 = smul.addr %s293, 32
        %s295 = smul.addr %s294, 4
        %s296 = scalar_lea.vmem %s1, %s295
        %v298 = vld [vmem:[%s291] sm:$0xff]
        %v299 = vld [vmem:[%s291 + $0x8] sm:$0xff]
        %v300 = vld [vmem:[%s291 + $0x10] sm:$0xff]
        %v301 = vld [vmem:[%s291 + $0x18] sm:$0xff]
        %v302 = vld [vmem:[%s291 + $0x20] sm:$0xff]
        %v303 = vld [vmem:[%s291 + $0x28] sm:$0xff]
        %v304 = vld [vmem:[%s291 + $0x30] sm:$0xff]
        %v305 = vld [vmem:[%s291 + $0x38] sm:$0xff]
        %v306 = vld [vmem:[%s291 + $0x40] sm:$0xff]
        %v307 = vld [vmem:[%s291 + $0x48] sm:$0xff]
        %v308 = vld [vmem:[%s291 + $0x50] sm:$0xff]
        %v309 = vld [vmem:[%s291 + $0x58] sm:$0xff]
        %v310 = vld [vmem:[%s291 + $0x60] sm:$0xff]
        %v311 = vld [vmem:[%s291 + $0x68] sm:$0xff]
        %v312 = vld [vmem:[%s291 + $0x70] sm:$0xff]
        %v313 = vld [vmem:[%s291 + $0x78] sm:$0xff]
        %v314 = vld [vmem:[%s291 + $0x80] sm:$0xff]
        %v315 = vld [vmem:[%s291 + $0x88] sm:$0xff]
        %v316 = vld [vmem:[%s291 + $0x90] sm:$0xff]
        %v317 = vld [vmem:[%s291 + $0x98] sm:$0xff]
        %v318 = vld [vmem:[%s291 + $0xa0] sm:$0xff]
        %v319 = vld [vmem:[%s291 + $0xa8] sm:$0xff]
        %v320 = vld [vmem:[%s291 + $0xb0] sm:$0xff]
        %v321 = vld [vmem:[%s291 + $0xb8] sm:$0xff]
        %v322 = vld [vmem:[%s291 + $0xc0] sm:$0xff]
        %v323 = vld [vmem:[%s291 + $0xc8] sm:$0xff]
        %v324 = vld [vmem:[%s291 + $0xd0] sm:$0xff]
        %v325 = vld [vmem:[%s291 + $0xd8] sm:$0xff]
        %v326 = vld [vmem:[%s291 + $0xe0] sm:$0xff]
        %v327 = vld [vmem:[%s291 + $0xe8] sm:$0xff]
        %v328 = vld [vmem:[%s291 + $0xf0] sm:$0xff]
        %v329 = vld [vmem:[%s291 + $0xf8] sm:$0xff]
        %v330 = vld [vmem:[%s2] sm:$0x1]
        %v332 = vlaneseq
        %v333 = vshrl.u32 %v332, 7
        %v334 = vsub.s32 0, %v333
        %v335 = vrot.slane %v330, %v334
        %v337 = vmul.f32 %v298, %v335
        %v338 = vmul.f32 %v299, %v335
        %v339 = vmul.f32 %v300, %v335
        %v340 = vmul.f32 %v301, %v335
        %v341 = vmul.f32 %v302, %v335
        %v342 = vmul.f32 %v303, %v335
        %v343 = vmul.f32 %v304, %v335
        %v344 = vmul.f32 %v305, %v335
        %v345 = vmul.f32 %v306, %v335
        %v346 = vmul.f32 %v307, %v335
        %v347 = vmul.f32 %v308, %v335
        %v348 = vmul.f32 %v309, %v335
        %v349 = vmul.f32 %v310, %v335
        %v350 = vmul.f32 %v311, %v335
        %v351 = vmul.f32 %v312, %v335
        %v352 = vmul.f32 %v313, %v335
        %v353 = vmul.f32 %v314, %v335
        %v354 = vmul.f32 %v315, %v335
        %v355 = vmul.f32 %v316, %v335
        %v356 = vmul.f32 %v317, %v335
        %v357 = vmul.f32 %v318, %v335
        %v358 = vmul.f32 %v319, %v335
        %v359 = vmul.f32 %v320, %v335
        %v360 = vmul.f32 %v321, %v335
        %v361 = vmul.f32 %v322, %v335
        %v362 = vmul.f32 %v323, %v335
        %v363 = vmul.f32 %v324, %v335
        %v364 = vmul.f32 %v325, %v335
        %v365 = vmul.f32 %v326, %v335
        %v366 = vmul.f32 %v327, %v335
        %v367 = vmul.f32 %v328, %v335
        %v368 = vmul.f32 %v329, %v335
        %v369 = vld [vmem:[%s3] sm:$0x1]
        %v371 = vlaneseq
        %v372 = vshrl.u32 %v371, 7
        %v373 = vsub.s32 0, %v372
        %v374 = vrot.slane %v369, %v373
        %v376 = vadd.f32 %v337, %v374
        %v377 = vadd.f32 %v338, %v374
        %v378 = vadd.f32 %v339, %v374
        %v379 = vadd.f32 %v340, %v374
        %v380 = vadd.f32 %v341, %v374
        %v381 = vadd.f32 %v342, %v374
        %v382 = vadd.f32 %v343, %v374
        %v383 = vadd.f32 %v344, %v374
        %v384 = vadd.f32 %v345, %v374
        %v385 = vadd.f32 %v346, %v374
        %v386 = vadd.f32 %v347, %v374
        %v387 = vadd.f32 %v348, %v374
        %v388 = vadd.f32 %v349, %v374
        %v389 = vadd.f32 %v350, %v374
        %v390 = vadd.f32 %v351, %v374
        %v391 = vadd.f32 %v352, %v374
        %v392 = vadd.f32 %v353, %v374
        %v393 = vadd.f32 %v354, %v374
        %v394 = vadd.f32 %v355, %v374
        %v395 = vadd.f32 %v356, %v374
        %v396 = vadd.f32 %v357, %v374
        %v397 = vadd.f32 %v358, %v374
        %v398 = vadd.f32 %v359, %v374
        %v399 = vadd.f32 %v360, %v374
        %v400 = vadd.f32 %v361, %v374
        %v401 = vadd.f32 %v362, %v374
        %v402 = vadd.f32 %v363, %v374
        %v403 = vadd.f32 %v364, %v374
        %v404 = vadd.f32 %v365, %v374
        %v405 = vadd.f32 %v366, %v374
        %v406 = vadd.f32 %v367, %v374
        %v407 = vadd.f32 %v368, %v374
        %v408 = vmax.f32 %v376, 0.0
        %v409 = vmax.f32 %v377, 0.0
        %v410 = vmax.f32 %v378, 0.0
        %v411 = vmax.f32 %v379, 0.0
        %v412 = vmax.f32 %v380, 0.0
        %v413 = vmax.f32 %v381, 0.0
        %v414 = vmax.f32 %v382, 0.0
        %v415 = vmax.f32 %v383, 0.0
        %v416 = vmax.f32 %v384, 0.0
        %v417 = vmax.f32 %v385, 0.0
        %v418 = vmax.f32 %v386, 0.0
        %v419 = vmax.f32 %v387, 0.0
        %v420 = vmax.f32 %v388, 0.0
        %v421 = vmax.f32 %v389, 0.0
        %v422 = vmax.f32 %v390, 0.0
        %v423 = vmax.f32 %v391, 0.0
        %v424 = vmax.f32 %v392, 0.0
        %v425 = vmax.f32 %v393, 0.0
        %v426 = vmax.f32 %v394, 0.0
        %v427 = vmax.f32 %v395, 0.0
        %v428 = vmax.f32 %v396, 0.0
        %v429 = vmax.f32 %v397, 0.0
        %v430 = vmax.f32 %v398, 0.0
        %v431 = vmax.f32 %v399, 0.0
        %v432 = vmax.f32 %v400, 0.0
        %v433 = vmax.f32 %v401, 0.0
        %v434 = vmax.f32 %v402, 0.0
        %v435 = vmax.f32 %v403, 0.0
        %v436 = vmax.f32 %v404, 0.0
        %v437 = vmax.f32 %v405, 0.0
        %v438 = vmax.f32 %v406, 0.0
        %v439 = vmax.f32 %v407, 0.0
        %v440 = vpack.c.bf16 %v409, %v408
        %v441 = vpack.c.bf16 %v411, %v410
        %v442 = vpack.c.bf16 %v413, %v412
        %v443 = vpack.c.bf16 %v415, %v414
        %v444 = vpack.c.bf16 %v417, %v416
        %v445 = vpack.c.bf16 %v419, %v418
        %v446 = vpack.c.bf16 %v421, %v420
        %v447 = vpack.c.bf16 %v423, %v422
        %v448 = vpack.c.bf16 %v425, %v424
        %v449 = vpack.c.bf16 %v427, %v426
        %v450 = vpack.c.bf16 %v429, %v428
        %v451 = vpack.c.bf16 %v431, %v430
        %v452 = vpack.c.bf16 %v433, %v432
        %v453 = vpack.c.bf16 %v435, %v434
        %v454 = vpack.c.bf16 %v437, %v436
        %v455 = vpack.c.bf16 %v439, %v438
        %v456 = vld [vmem:[%s6] sm:$0xf]
        %v457 = vld [vmem:[%s6 + $0x4] sm:$0xf]
        %v458 = vld [vmem:[%s6 + $0x8] sm:$0xf]
        %v459 = vld [vmem:[%s6 + $0xc] sm:$0xf]
        %v464 = vunpack.c.l.b16 %v456
        %v465 = vunpack.c.l.b16 %v457
        %v466 = vunpack.c.l.b16 %v458
        %v467 = vunpack.c.l.b16 %v459
        %v468 = vpack.c.b16 %v465, %v464
        %v469 = vpack.c.b16 %v467, %v466
        %vm472 = vcmask 261120
        %v474 = vsel %vm472, %v440, 0
        %v477 = vsel %vm472, %v441, 0
        %v480 = vsel %vm472, %v442, 0
        %v483 = vsel %vm472, %v443, 0
        %v486 = vsel %vm472, %v444, 0
        %v489 = vsel %vm472, %v445, 0
        %v492 = vsel %vm472, %v446, 0
        %v495 = vsel %vm472, %v447, 0
        %v498 = vsel %vm472, %v448, 0
        %v501 = vsel %vm472, %v449, 0
        %v504 = vsel %vm472, %v450, 0
        %v507 = vsel %vm472, %v451, 0
        %v510 = vsel %vm472, %v452, 0
        %v513 = vsel %vm472, %v453, 0
        %v516 = vsel %vm472, %v454, 0
        %v519 = vsel %vm472, %v455, 0
        %521 = vmatprep.subr.bf16.mxu0 0
        %522 = vmatpush1.bf16.msra.mxu0 %v468
        %523 = vmatprep.subr.bf16.mxu0 0
        %524 = vmatpush1.bf16.msra.mxu0 %v469
        %525 = vmatprep.subr.bf16.mxu0 0
        %526 = vmatpush1.bf16.msra.mxu0 0
        %527 = vmatprep.subr.bf16.mxu0 0
        %528 = vmatpush1.bf16.msra.mxu0 0
        %529 = vmatprep.subr.bf16.mxu0 0
        %530 = vmatpush1.bf16.msra.mxu0 0
        %531 = vmatprep.subr.bf16.mxu0 0
        %532 = vmatpush1.bf16.msra.mxu0 0
        %533 = vmatprep.subr.bf16.mxu0 0
        %534 = vmatpush1.bf16.msra.mxu0 0
        %535 = vmatprep.subr.bf16.mxu0 0
        %536 = vmatpush1.bf16.msra.mxu0 0
        %537 = vmatprep.subr.bf16.mxu0 0
        %538 = vmatpush1.bf16.msra.mxu0 0
        %539 = vmatprep.subr.bf16.mxu0 0
        %540 = vmatpush1.bf16.msra.mxu0 0
        %541 = vmatprep.subr.bf16.mxu0 0
        %542 = vmatpush1.bf16.msra.mxu0 0
        %543 = vmatprep.subr.bf16.mxu0 0
        %544 = vmatpush1.bf16.msra.mxu0 0
        %545 = vmatprep.subr.bf16.mxu0 0
        %546 = vmatpush1.bf16.msra.mxu0 0
        %547 = vmatprep.subr.bf16.mxu0 0
        %548 = vmatpush1.bf16.msra.mxu0 0
        %549 = vmatprep.subr.bf16.mxu0 0
        %550 = vmatpush1.bf16.msra.mxu0 0
        %551 = vmatprep.subr.bf16.mxu0 0
        %552 = vmatpush1.bf16.msra.mxu0 0
        %553 = vmatprep.mubr.bf16.mxu0 0
        %554 = vmatmul.mubr.bf16.gmra.mrb[0].mxu0 %v474
        %v555 = vpop.f32.mrb[0].mxu0
        %v556 = vadd.f32 0.0, %v555
        %v557 = vpop.f32.mrb[0].mxu0
        %v558 = vpop.f32.mrb[0].mxu0
        %v559 = vadd.f32 0.0, %v558
        %v560 = vpop.f32.mrb[0].mxu0
        %561 = vmatprep.mubr.bf16.mxu0 0
        %562 = vmatmul.mubr.bf16.gmra.mrb[0].mxu0 %v477
        %v563 = vpop.f32.mrb[0].mxu0
        %v564 = vadd.f32 0.0, %v563
        %v565 = vpop.f32.mrb[0].mxu0
        %v566 = vpop.f32.mrb[0].mxu0
        %v567 = vadd.f32 0.0, %v566
        %v568 = vpop.f32.mrb[0].mxu0
        %569 = vmatprep.mubr.bf16.mxu0 0
        %570 = vmatmul.mubr.bf16.gmra.mrb[0].mxu0 %v480
        %v571 = vpop.f32.mrb[0].mxu0
        %v572 = vadd.f32 0.0, %v571
        %v573 = vpop.f32.mrb[0].mxu0
        %v574 = vpop.f32.mrb[0].mxu0
        %v575 = vadd.f32 0.0, %v574
        %v576 = vpop.f32.mrb[0].mxu0
        %577 = vmatprep.mubr.bf16.mxu0 0
        %578 = vmatmul.mubr.bf16.gmra.mrb[0].mxu0 %v483
        %v579 = vpop.f32.mrb[0].mxu0
        %v580 = vadd.f32 0.0, %v579
        %v581 = vpop.f32.mrb[0].mxu0
        %v582 = vpop.f32.mrb[0].mxu0
        %v583 = vadd.f32 0.0, %v582
        %v584 = vpop.f32.mrb[0].mxu0
        %585 = vmatprep.mubr.bf16.mxu0 0
        %586 = vmatmul.mubr.bf16.gmra.mrb[0].mxu0 %v486
        %v587 = vpop.f32.mrb[0].mxu0
        %v588 = vadd.f32 0.0, %v587
        %v589 = vpop.f32.mrb[0].mxu0
        %v590 = vpop.f32.mrb[0].mxu0
        %v591 = vadd.f32 0.0, %v590
        %v592 = vpop.f32.mrb[0].mxu0
        %593 = vmatprep.mubr.bf16.mxu0 0
        %594 = vmatmul.mubr.bf16.gmra.mrb[0].mxu0 %v489
        %v595 = vpop.f32.mrb[0].mxu0
        %v596 = vadd.f32 0.0, %v595
        %v597 = vpop.f32.mrb[0].mxu0
        %v598 = vpop.f32.mrb[0].mxu0
        %v599 = vadd.f32 0.0, %v598
        %v600 = vpop.f32.mrb[0].mxu0
        %601 = vmatprep.mubr.bf16.mxu0 0
        %602 = vmatmul.mubr.bf16.gmra.mrb[0].mxu0 %v492
        %v603 = vpop.f32.mrb[0].mxu0
        %v604 = vadd.f32 0.0, %v603
        %v605 = vpop.f32.mrb[0].mxu0
        %v606 = vpop.f32.mrb[0].mxu0
        %v607 = vadd.f32 0.0, %v606
        %v608 = vpop.f32.mrb[0].mxu0
        %609 = vmatprep.mubr.bf16.mxu0 0
        %610 = vmatmul.mubr.bf16.gmra.mrb[0].mxu0 %v495
        %v611 = vpop.f32.mrb[0].mxu0
        %v612 = vadd.f32 0.0, %v611
        %v613 = vpop.f32.mrb[0].mxu0
        %v614 = vpop.f32.mrb[0].mxu0
        %v615 = vadd.f32 0.0, %v614
        %v616 = vpop.f32.mrb[0].mxu0
        %617 = vmatprep.mubr.bf16.mxu0 0
        %618 = vmatmul.mubr.bf16.gmra.mrb[0].mxu0 %v498
        %v619 = vpop.f32.mrb[0].mxu0
        %v620 = vadd.f32 0.0, %v619
        %v621 = vpop.f32.mrb[0].mxu0
        %v622 = vpop.f32.mrb[0].mxu0
        %v623 = vadd.f32 0.0, %v622
        %v624 = vpop.f32.mrb[0].mxu0
        %625 = vmatprep.mubr.bf16.mxu0 0
        %626 = vmatmul.mubr.bf16.gmra.mrb[0].mxu0 %v501
        %v627 = vpop.f32.mrb[0].mxu0
        %v628 = vadd.f32 0.0, %v627
        %v629 = vpop.f32.mrb[0].mxu0
        %v630 = vpop.f32.mrb[0].mxu0
        %v631 = vadd.f32 0.0, %v630
        %v632 = vpop.f32.mrb[0].mxu0
        %633 = vmatprep.mubr.bf16.mxu0 0
        %634 = vmatmul.mubr.bf16.gmra.mrb[0].mxu0 %v504
        %v635 = vpop.f32.mrb[0].mxu0
        %v636 = vadd.f32 0.0, %v635
        %v637 = vpop.f32.mrb[0].mxu0
        %v638 = vpop.f32.mrb[0].mxu0
        %v639 = vadd.f32 0.0, %v638
        %v640 = vpop.f32.mrb[0].mxu0
        %641 = vmatprep.mubr.bf16.mxu0 0
        %642 = vmatmul.mubr.bf16.gmra.mrb[0].mxu0 %v507
        %v643 = vpop.f32.mrb[0].mxu0
        %v644 = vadd.f32 0.0, %v643
        %v645 = vpop.f32.mrb[0].mxu0
        %v646 = vpop.f32.mrb[0].mxu0
        %v647 = vadd.f32 0.0, %v646
        %v648 = vpop.f32.mrb[0].mxu0
        %649 = vmatprep.mubr.bf16.mxu0 0
        %650 = vmatmul.mubr.bf16.gmra.mrb[0].mxu0 %v510
        %v651 = vpop.f32.mrb[0].mxu0
        %v652 = vadd.f32 0.0, %v651
        %v653 = vpop.f32.mrb[0].mxu0
        %v654 = vpop.f32.mrb[0].mxu0
        %v655 = vadd.f32 0.0, %v654
        %v656 = vpop.f32.mrb[0].mxu0
        %657 = vmatprep.mubr.bf16.mxu0 0
        %658 = vmatmul.mubr.bf16.gmra.mrb[0].mxu0 %v513
        %v659 = vpop.f32.mrb[0].mxu0
        %v660 = vadd.f32 0.0, %v659
        %v661 = vpop.f32.mrb[0].mxu0
        %v662 = vpop.f32.mrb[0].mxu0
        %v663 = vadd.f32 0.0, %v662
        %v664 = vpop.f32.mrb[0].mxu0
        %665 = vmatprep.mubr.bf16.mxu0 0
        %666 = vmatmul.mubr.bf16.gmra.mrb[0].mxu0 %v516
        %v667 = vpop.f32.mrb[0].mxu0
        %v668 = vadd.f32 0.0, %v667
        %v669 = vpop.f32.mrb[0].mxu0
        %v670 = vpop.f32.mrb[0].mxu0
        %v671 = vadd.f32 0.0, %v670
        %v672 = vpop.f32.mrb[0].mxu0
        %673 = vmatprep.mubr.bf16.mxu0 0
        %674 = vmatmul.mubr.bf16.gmra.mrb[0].mxu0 %v519
        %v675 = vpop.f32.mrb[0].mxu0
        %v676 = vadd.f32 0.0, %v675
        %v677 = vpop.f32.mrb[0].mxu0
        %v678 = vpop.f32.mrb[0].mxu0
        %v679 = vadd.f32 0.0, %v678
        %v680 = vpop.f32.mrb[0].mxu0
        %681 = vdwg.mxu0
        %v682 = vld [vmem:[%s4] sm:$0x1]
        %v684 = vlaneseq
        %v685 = vshrl.u32 %v684, 7
        %v686 = vsub.s32 0, %v685
        %v687 = vrot.slane %v682, %v686
        %v689 = vmul.f32 %v556, %v687
        %v690 = vmul.f32 %v559, %v687
        %v691 = vmul.f32 %v564, %v687
        %v692 = vmul.f32 %v567, %v687
        %v693 = vmul.f32 %v572, %v687
        %v694 = vmul.f32 %v575, %v687
        %v695 = vmul.f32 %v580, %v687
        %v696 = vmul.f32 %v583, %v687
        %v697 = vmul.f32 %v588, %v687
        %v698 = vmul.f32 %v591, %v687
        %v699 = vmul.f32 %v596, %v687
        %v700 = vmul.f32 %v599, %v687
        %v701 = vmul.f32 %v604, %v687
        %v702 = vmul.f32 %v607, %v687
        %v703 = vmul.f32 %v612, %v687
        %v704 = vmul.f32 %v615, %v687
        %v705 = vmul.f32 %v620, %v687
        %v706 = vmul.f32 %v623, %v687
        %v707 = vmul.f32 %v628, %v687
        %v708 = vmul.f32 %v631, %v687
        %v709 = vmul.f32 %v636, %v687
        %v710 = vmul.f32 %v639, %v687
        %v711 = vmul.f32 %v644, %v687
        %v712 = vmul.f32 %v647, %v687
        %v713 = vmul.f32 %v652, %v687
        %v714 = vmul.f32 %v655, %v687
        %v715 = vmul.f32 %v660, %v687
        %v716 = vmul.f32 %v663, %v687
        %v717 = vmul.f32 %v668, %v687
        %v718 = vmul.f32 %v671, %v687
        %v719 = vmul.f32 %v676, %v687
        %v720 = vmul.f32 %v679, %v687
        %v721 = vld [vmem:[%s5] sm:$0x1]
        %v723 = vlaneseq
        %v724 = vshrl.u32 %v723, 7
        %v725 = vsub.s32 0, %v724
        %v726 = vrot.slane %v721, %v725
        %v728 = vadd.f32 %v689, %v726
        %v729 = vadd.f32 %v690, %v726
        %v730 = vadd.f32 %v691, %v726
        %v731 = vadd.f32 %v692, %v726
        %v732 = vadd.f32 %v693, %v726
        %v733 = vadd.f32 %v694, %v726
        %v734 = vadd.f32 %v695, %v726
        %v735 = vadd.f32 %v696, %v726
        %v736 = vadd.f32 %v697, %v726
        %v737 = vadd.f32 %v698, %v726
        %v738 = vadd.f32 %v699, %v726
        %v739 = vadd.f32 %v700, %v726
        %v740 = vadd.f32 %v701, %v726
        %v741 = vadd.f32 %v702, %v726
        %v742 = vadd.f32 %v703, %v726
        %v743 = vadd.f32 %v704, %v726
        %v744 = vadd.f32 %v705, %v726
        %v745 = vadd.f32 %v706, %v726
        %v746 = vadd.f32 %v707, %v726
        %v747 = vadd.f32 %v708, %v726
        %v748 = vadd.f32 %v709, %v726
        %v749 = vadd.f32 %v710, %v726
        %v750 = vadd.f32 %v711, %v726
        %v751 = vadd.f32 %v712, %v726
        %v752 = vadd.f32 %v713, %v726
        %v753 = vadd.f32 %v714, %v726
        %v754 = vadd.f32 %v715, %v726
        %v755 = vadd.f32 %v716, %v726
        %v756 = vadd.f32 %v717, %v726
        %v757 = vadd.f32 %v718, %v726
        %v758 = vadd.f32 %v719, %v726
        %v759 = vadd.f32 %v720, %v726
        %v760 = vld [vmem:[%s296] sm:$0xf]
        %v761 = vld [vmem:[%s296 + $0x4] sm:$0xf]
        %v762 = vld [vmem:[%s296 + $0x8] sm:$0xf]
        %v763 = vld [vmem:[%s296 + $0xc] sm:$0xf]
        %v764 = vld [vmem:[%s296 + $0x10] sm:$0xf]
        %v765 = vld [vmem:[%s296 + $0x14] sm:$0xf]
        %v766 = vld [vmem:[%s296 + $0x18] sm:$0xf]
        %v767 = vld [vmem:[%s296 + $0x1c] sm:$0xf]
        %v768 = vld [vmem:[%s296 + $0x20] sm:$0xf]
        %v769 = vld [vmem:[%s296 + $0x24] sm:$0xf]
        %v770 = vld [vmem:[%s296 + $0x28] sm:$0xf]
        %v771 = vld [vmem:[%s296 + $0x2c] sm:$0xf]
        %v772 = vld [vmem:[%s296 + $0x30] sm:$0xf]
        %v773 = vld [vmem:[%s296 + $0x34] sm:$0xf]
        %v774 = vld [vmem:[%s296 + $0x38] sm:$0xf]
        %v775 = vld [vmem:[%s296 + $0x3c] sm:$0xf]
        %v776 = vld [vmem:[%s296 + $0x40] sm:$0xf]
        %v777 = vld [vmem:[%s296 + $0x44] sm:$0xf]
        %v778 = vld [vmem:[%s296 + $0x48] sm:$0xf]
        %v779 = vld [vmem:[%s296 + $0x4c] sm:$0xf]
        %v780 = vld [vmem:[%s296 + $0x50] sm:$0xf]
        %v781 = vld [vmem:[%s296 + $0x54] sm:$0xf]
        %v782 = vld [vmem:[%s296 + $0x58] sm:$0xf]
        %v783 = vld [vmem:[%s296 + $0x5c] sm:$0xf]
        %v784 = vld [vmem:[%s296 + $0x60] sm:$0xf]
        %v785 = vld [vmem:[%s296 + $0x64] sm:$0xf]
        %v786 = vld [vmem:[%s296 + $0x68] sm:$0xf]
        %v787 = vld [vmem:[%s296 + $0x6c] sm:$0xf]
        %v788 = vld [vmem:[%s296 + $0x70] sm:$0xf]
        %v789 = vld [vmem:[%s296 + $0x74] sm:$0xf]
        %v790 = vld [vmem:[%s296 + $0x78] sm:$0xf]
        %v791 = vld [vmem:[%s296 + $0x7c] sm:$0xf]
        %v792 = vunpack.c.l.bf16 %v760
        %v793 = vunpack.c.l.bf16 %v761
        %v794 = vunpack.c.l.bf16 %v762
        %v795 = vunpack.c.l.bf16 %v763
        %v796 = vunpack.c.l.bf16 %v764
        %v797 = vunpack.c.l.bf16 %v765
        %v798 = vunpack.c.l.bf16 %v766
        %v799 = vunpack.c.l.bf16 %v767
        %v800 = vunpack.c.l.bf16 %v768
        %v801 = vunpack.c.l.bf16 %v769
        %v802 = vunpack.c.l.bf16 %v770
        %v803 = vunpack.c.l.bf16 %v771
        %v804 = vunpack.c.l.bf16 %v772
        %v805 = vunpack.c.l.bf16 %v773
        %v806 = vunpack.c.l.bf16 %v774
        %v807 = vunpack.c.l.bf16 %v775
        %v808 = vunpack.c.l.bf16 %v776
        %v809 = vunpack.c.l.bf16 %v777
        %v810 = vunpack.c.l.bf16 %v778
        %v811 = vunpack.c.l.bf16 %v779
        %v812 = vunpack.c.l.bf16 %v780
        %v813 = vunpack.c.l.bf16 %v781
        %v814 = vunpack.c.l.bf16 %v782
        %v815 = vunpack.c.l.bf16 %v783
        %v816 = vunpack.c.l.bf16 %v784
        %v817 = vunpack.c.l.bf16 %v785
        %v818 = vunpack.c.l.bf16 %v786
        %v819 = vunpack.c.l.bf16 %v787
        %v820 = vunpack.c.l.bf16 %v788
        %v821 = vunpack.c.l.bf16 %v789
        %v822 = vunpack.c.l.bf16 %v790
        %v823 = vunpack.c.l.bf16 %v791
        %v824 = vadd.f32 %v728, %v792
        %v825 = vadd.f32 %v729, %v793
        %v826 = vadd.f32 %v730, %v794
        %v827 = vadd.f32 %v731, %v795
        %v828 = vadd.f32 %v732, %v796
        %v829 = vadd.f32 %v733, %v797
        %v830 = vadd.f32 %v734, %v798
        %v831 = vadd.f32 %v735, %v799
        %v832 = vadd.f32 %v736, %v800
        %v833 = vadd.f32 %v737, %v801
        %v834 = vadd.f32 %v738, %v802
        %v835 = vadd.f32 %v739, %v803
        %v836 = vadd.f32 %v740, %v804
        %v837 = vadd.f32 %v741, %v805
        %v838 = vadd.f32 %v742, %v806
        %v839 = vadd.f32 %v743, %v807
        %v840 = vadd.f32 %v744, %v808
        %v841 = vadd.f32 %v745, %v809
        %v842 = vadd.f32 %v746, %v810
        %v843 = vadd.f32 %v747, %v811
        %v844 = vadd.f32 %v748, %v812
        %v845 = vadd.f32 %v749, %v813
        %v846 = vadd.f32 %v750, %v814
        %v847 = vadd.f32 %v751, %v815
        %v848 = vadd.f32 %v752, %v816
        %v849 = vadd.f32 %v753, %v817
        %v850 = vadd.f32 %v754, %v818
        %v851 = vadd.f32 %v755, %v819
        %v852 = vadd.f32 %v756, %v820
        %v853 = vadd.f32 %v757, %v821
        %v854 = vadd.f32 %v758, %v822
        %v855 = vadd.f32 %v759, %v823
        %v856 = vmax.f32 %v824, 0.0
        %v857 = vmax.f32 %v825, 0.0
        %v858 = vmax.f32 %v826, 0.0
        %v859 = vmax.f32 %v827, 0.0
        %v860 = vmax.f32 %v828, 0.0
        %v861 = vmax.f32 %v829, 0.0
        %v862 = vmax.f32 %v830, 0.0
        %v863 = vmax.f32 %v831, 0.0
        %v864 = vmax.f32 %v832, 0.0
        %v865 = vmax.f32 %v833, 0.0
        %v866 = vmax.f32 %v834, 0.0
        %v867 = vmax.f32 %v835, 0.0
        %v868 = vmax.f32 %v836, 0.0
        %v869 = vmax.f32 %v837, 0.0
        %v870 = vmax.f32 %v838, 0.0
        %v871 = vmax.f32 %v839, 0.0
        %v872 = vmax.f32 %v840, 0.0
        %v873 = vmax.f32 %v841, 0.0
        %v874 = vmax.f32 %v842, 0.0
        %v875 = vmax.f32 %v843, 0.0
        %v876 = vmax.f32 %v844, 0.0
        %v877 = vmax.f32 %v845, 0.0
        %v878 = vmax.f32 %v846, 0.0
        %v879 = vmax.f32 %v847, 0.0
        %v880 = vmax.f32 %v848, 0.0
        %v881 = vmax.f32 %v849, 0.0
        %v882 = vmax.f32 %v850, 0.0
        %v883 = vmax.f32 %v851, 0.0
        %v884 = vmax.f32 %v852, 0.0
        %v885 = vmax.f32 %v853, 0.0
        %v886 = vmax.f32 %v854, 0.0
        %v887 = vmax.f32 %v855, 0.0
        %v888 = vpack.c.bf16 %v857, %v856
        %v889 = vpack.c.bf16 %v859, %v858
        %v890 = vpack.c.bf16 %v861, %v860
        %v891 = vpack.c.bf16 %v863, %v862
        %v892 = vpack.c.bf16 %v865, %v864
        %v893 = vpack.c.bf16 %v867, %v866
        %v894 = vpack.c.bf16 %v869, %v868
        %v895 = vpack.c.bf16 %v871, %v870
        %v896 = vpack.c.bf16 %v873, %v872
        %v897 = vpack.c.bf16 %v875, %v874
        %v898 = vpack.c.bf16 %v877, %v876
        %v899 = vpack.c.bf16 %v879, %v878
        %v900 = vpack.c.bf16 %v881, %v880
        %v901 = vpack.c.bf16 %v883, %v882
        %v902 = vpack.c.bf16 %v885, %v884
        %v903 = vpack.c.bf16 %v887, %v886
        %v920 = vunpack.c.l.b16 %v888
        %v921 = vunpack.c.h.b16 %v888
        %v922 = vunpack.c.l.b16 %v889
        %v923 = vunpack.c.h.b16 %v889
        %v924 = vunpack.c.l.b16 %v890
        %v925 = vunpack.c.h.b16 %v890
        %v926 = vunpack.c.l.b16 %v891
        %v927 = vunpack.c.h.b16 %v891
        %v928 = vunpack.c.l.b16 %v892
        %v929 = vunpack.c.h.b16 %v892
        %v930 = vunpack.c.l.b16 %v893
        %v931 = vunpack.c.h.b16 %v893
        %v932 = vunpack.c.l.b16 %v894
        %v933 = vunpack.c.h.b16 %v894
        %v934 = vunpack.c.l.b16 %v895
        %v935 = vunpack.c.h.b16 %v895
        %v936 = vunpack.c.l.b16 %v896
        %v937 = vunpack.c.h.b16 %v896
        %v938 = vunpack.c.l.b16 %v897
        %v939 = vunpack.c.h.b16 %v897
        %v940 = vunpack.c.l.b16 %v898
        %v941 = vunpack.c.h.b16 %v898
        %v942 = vunpack.c.l.b16 %v899
        %v943 = vunpack.c.h.b16 %v899
        %v944 = vunpack.c.l.b16 %v900
        %v945 = vunpack.c.h.b16 %v900
        %v946 = vunpack.c.l.b16 %v901
        %v947 = vunpack.c.h.b16 %v901
        %v948 = vunpack.c.l.b16 %v902
        %v949 = vunpack.c.h.b16 %v902
        %v950 = vunpack.c.l.b16 %v903
        %v951 = vunpack.c.h.b16 %v903
        %v952 = vpack.c.b16 %v920, %v920
        %v953 = vpack.c.b16 %v921, %v921
        %v954 = vpack.c.b16 %v922, %v922
        %v955 = vpack.c.b16 %v923, %v923
        %v956 = vpack.c.b16 %v924, %v924
        %v957 = vpack.c.b16 %v925, %v925
        %v958 = vpack.c.b16 %v926, %v926
        %v959 = vpack.c.b16 %v927, %v927
        %v960 = vpack.c.b16 %v928, %v928
        %v961 = vpack.c.b16 %v929, %v929
        %v962 = vpack.c.b16 %v930, %v930
        %v963 = vpack.c.b16 %v931, %v931
        %v964 = vpack.c.b16 %v932, %v932
        %v965 = vpack.c.b16 %v933, %v933
        %v966 = vpack.c.b16 %v934, %v934
        %v967 = vpack.c.b16 %v935, %v935
        %v968 = vpack.c.b16 %v936, %v936
        %v969 = vpack.c.b16 %v937, %v937
        %v970 = vpack.c.b16 %v938, %v938
        %v971 = vpack.c.b16 %v939, %v939
        %v972 = vpack.c.b16 %v940, %v940
        %v973 = vpack.c.b16 %v941, %v941
        %v974 = vpack.c.b16 %v942, %v942
        %v975 = vpack.c.b16 %v943, %v943
        %v976 = vpack.c.b16 %v944, %v944
        %v977 = vpack.c.b16 %v945, %v945
        %v978 = vpack.c.b16 %v946, %v946
        %v979 = vpack.c.b16 %v947, %v947
        %v980 = vpack.c.b16 %v948, %v948
        %v981 = vpack.c.b16 %v949, %v949
        %v982 = vpack.c.b16 %v950, %v950
        %v983 = vpack.c.b16 %v951, %v951
        %1016 = vst [vmem:[%s286] sm:$0xf] %v952
        %1017 = vst [vmem:[%s286 + $0x4] sm:$0xf] %v953
        %1018 = vst [vmem:[%s286 + $0x8] sm:$0xf] %v954
        %1019 = vst [vmem:[%s286 + $0xc] sm:$0xf] %v955
        %1020 = vst [vmem:[%s286 + $0x10] sm:$0xf] %v956
        %1021 = vst [vmem:[%s286 + $0x14] sm:$0xf] %v957
        %1022 = vst [vmem:[%s286 + $0x18] sm:$0xf] %v958
        %1023 = vst [vmem:[%s286 + $0x1c] sm:$0xf] %v959
        %1024 = vst [vmem:[%s286 + $0x20] sm:$0xf] %v960
        %1025 = vst [vmem:[%s286 + $0x24] sm:$0xf] %v961
        %1026 = vst [vmem:[%s286 + $0x28] sm:$0xf] %v962
        %1027 = vst [vmem:[%s286 + $0x2c] sm:$0xf] %v963
        %1028 = vst [vmem:[%s286 + $0x30] sm:$0xf] %v964
        %1029 = vst [vmem:[%s286 + $0x34] sm:$0xf] %v965
        %1030 = vst [vmem:[%s286 + $0x38] sm:$0xf] %v966
        %1031 = vst [vmem:[%s286 + $0x3c] sm:$0xf] %v967
        %1032 = vst [vmem:[%s286 + $0x40] sm:$0xf] %v968
        %1033 = vst [vmem:[%s286 + $0x44] sm:$0xf] %v969
        %1034 = vst [vmem:[%s286 + $0x48] sm:$0xf] %v970
        %1035 = vst [vmem:[%s286 + $0x4c] sm:$0xf] %v971
        %1036 = vst [vmem:[%s286 + $0x50] sm:$0xf] %v972
        %1037 = vst [vmem:[%s286 + $0x54] sm:$0xf] %v973
        %1038 = vst [vmem:[%s286 + $0x58] sm:$0xf] %v974
        %1039 = vst [vmem:[%s286 + $0x5c] sm:$0xf] %v975
        %1040 = vst [vmem:[%s286 + $0x60] sm:$0xf] %v976
        %1041 = vst [vmem:[%s286 + $0x64] sm:$0xf] %v977
        %1042 = vst [vmem:[%s286 + $0x68] sm:$0xf] %v978
        %1043 = vst [vmem:[%s286 + $0x6c] sm:$0xf] %v979
        %1044 = vst [vmem:[%s286 + $0x70] sm:$0xf] %v980
        %1045 = vst [vmem:[%s286 + $0x74] sm:$0xf] %v981
        %1046 = vst [vmem:[%s286 + $0x78] sm:$0xf] %v982
        %1047 = vst [vmem:[%s286 + $0x7c] sm:$0xf] %v983
        %s1048 = sand.u32 %s186, 1
        %s1049 = scalar_lea.sflag [#allocation3], %s1048
        %s1050 = sand.u32 %s186, 1
        %s1051 = smul.addr %s1050, 128
        %s1052 = scalar_lea.vmem [#allocation2], %s1051
        // Predicated region
        $region49: #{bottleneck_forward.7} parent=47 // pred_check
          %p1053 = pneg %p196
        $region50: #{bottleneck_forward.7} parent=47 // pred_check_branch
          %1055 = sbr.rel (%p1053) target = $region52
        $region51: #{bottleneck_forward.7} parent=47 // pred_region
          %s1057 = ssub.s32 2048, 2048
          %1058 = vsyncadd %s1049, %s1057
          %s1059 = smul.addr %s21, 32
          %s1060 = smul.addr %s1059, 64
          %s1061 = scalar_lea.hbm %s7, %s1060
          %s1062 = sshll.u32 %s1052, 4
          %s1063 = int_to_ptr.vmem [resolvable:$true] %s1062
          %1068 = dma.vmem_to_hbm [thread:$0]  %s1063, 2048, %s1061, %s1049, 64, 64, 4
        $region52: #{bottleneck_forward.7} parent=47 // pred_fallthru
          _
      $region48: #{bottleneck_forward.7} parent=5 // pred_fallthru
        _
      %p1069 = scmp.le.s32.totalorder 2, %s16
      // Predicated region
      $region53: #{bottleneck_forward.7} parent=5 // pred_check
        %p1070 = pneg %p1069
      $region54: #{bottleneck_forward.7} parent=5 // pred_check_branch
        %1072 = sbr.rel (%p1070) target = $region56
      $region55: #{bottleneck_forward.7} parent=5 // pred_region
        %s1073 = ssub.s32 %s16, 2
        // Predicated region
        $region57: #{bottleneck_forward.7} parent=55 // pred_check
          %p1074 = pneg %p202
        $region58: #{bottleneck_forward.7} parent=55 // pred_check_branch
          %1076 = sbr.rel (%p1074) target = $region60
        $region59: #{bottleneck_forward.7} parent=55 // pred_region
          %s1077 = sand.u32 %s187, 1
          %s1078 = scalar_lea.sflag [#allocation3], %s1077
          %s1079 = sand.u32 %s187, 1
          %s1080 = smul.addr %s1079, 128
          %s1081 = scalar_lea.vmem [#allocation2], %s1080
          %1082 = dma.done %s1078, 2048
        $region60: #{bottleneck_forward.7} parent=55 // pred_fallthru
          _
      $region56: #{bottleneck_forward.7} parent=5 // pred_fallthru
        _
    $region6: #{bottleneck_forward.7} parent=1 // loop_footer
      %s20 = sadd.s32 1, %s16
    $region7: #{bottleneck_forward.7} parent=1 // loop_footer_branch
      %15 = sbr.rel target = $region3
    $region8: #{bottleneck_forward.7} parent=1 // loop_exit
      _
    %1083 = vsyncpa [#allocation3], 1
    %s1084 = scalar_lea.sflag [#allocation3], 1
    %1085 = vsyncpa %s1084, 1

// kernel: bottleneck_forward.5
$region0: #{bottleneck_forward.5}
  #allocation0 [shape = 'u32[]', space=smem, size = 0x4, offset = 0x4, fixed_abs, tag = 'smem constant byte address 0x4 - core index']
  #allocation1 [shape = 'u32[144,128]{1,0:T(1,128)}', space=vmem, size = 0x12000, scoped, tag = 'internal scratch']
  #allocation2 [shape = 'bf16[290,32]{1,0:T(8,128)(2,1)}', space=vmem, size = 0x12800, scoped, tag = 'scratch operand']
  %s0 = inlined_call_operand.vmem [shape: f32[2,16,16,32], index: 0, kind: input, shape index: {}]
  %s1 = inlined_call_operand.vmem [shape: f32[1,32], index: 1, kind: input, shape index: {}]
  %s2 = inlined_call_operand.vmem [shape: f32[1,32], index: 2, kind: input, shape index: {}]
  %s3 = inlined_call_operand.vmem [shape: bf16[9,32,32], index: 3, kind: input, shape index: {}]
  %s4 = inlined_call_operand.vmem [shape: f32[2,16,16,32], index: 4, kind: output, shape index: {0}]
  %s5 = inlined_call_operand.vmem [shape: f32[2,2,32], index: 5, kind: output, shape index: {1}]
  %6 = xla_tuple %s4, %s5
  %s7 = sld [smem:[#allocation0]]
  $region57: #{bottleneck_forward.5} parent=0
    _
  %s9 = ssub.s32 1, %s7
  %s10 = scalar_select 0, %s9, %s7
  loop: start=0, step=1, limit=4
  $region2: #{bottleneck_forward.5} parent=0 // loop_pre_header
    _
  $region3: #{bottleneck_forward.5} parent=0 // loop_header
    %s12 = sphi 0, %s16
    %p13 = scmp.ge.s32.totalorder %s12, 4
    %s22 = sphi 0, %s24
    %s25 = sphi 0, %s22
    %s26 = sphi 0, %s25
    %s42 = sphi 0, %s26
    %s46 = sphi 0, %s46
    %s48 = sphi 0, %s46
    %s49 = sphi 0, %s48
    %s63 = sphi 0, %s49
    %s67 = sphi 0, %s67
    %s69 = sphi 0, %s67
    %s70 = sphi 0, %s69
    %s84 = sphi 0, %s70
    %s88 = sphi 0, %s88
    %s90 = sphi 0, %s88
    %s91 = sphi 0, %s90
    %s105 = sphi 0, %s91
    %s111 = sphi 0, %s113
    %s114 = sphi 0, %s111
    %s115 = sphi 0, %s114
    %s131 = sphi 0, %s115
    %s137 = sphi 0, %s139
    %s140 = sphi 0, %s137
    %s141 = sphi 0, %s140
    %s157 = sphi 0, %s141
  $region4: #{bottleneck_forward.5} parent=0 // loop_header_branch
    %15 = sbr.rel (%p13) target = $region8
  $region5: #{bottleneck_forward.5} parent=0 // loop_body
    %s17 = ssub.s32 %s12, 1
    %s18 = ssub.s32 %s12, 2
    %s19 = sadd.s32 %s12, 1
    %s20 = ssub.s32 %s12, %s19
    %p21 = scmp.eq.s32.totalorder %s20, 0
    %s23 = sadd.s32 %s22, 1
    %s24 = scalar_select %p21, %s22, %s23
    %p27 = pneg %p21
    %p28 = scmp.eq.s32.totalorder %s12, 1
    %p29 = por %p27, %p28
    %p30 = scmp.ne.s32.totalorder %s22, %s25
    %p31 = scmp.eq.s32.totalorder %s12, 0
    %p32 = por %p30, %p31
    %p33 = scmp.ne.s32.totalorder %s22, %s25
    %p34 = scmp.eq.s32.totalorder %s17, 1
    %p35 = por %p33, %p34
    %p36 = scmp.ne.s32.totalorder %s25, %s26
    %p37 = scmp.eq.s32.totalorder %s17, 0
    %p38 = por %p36, %p37
    %p39 = scmp.ne.s32.totalorder %s25, %s26
    %p40 = scmp.eq.s32.totalorder %s18, 1
    %p41 = por %p39, %p40
    %p43 = scmp.ne.s32.totalorder %s26, %s42
    %p44 = scmp.eq.s32.totalorder %s18, 0
    %p45 = por %p43, %p44
    %s47 = sadd.s32 %s46, 1
    %p50 = scmp.eq.s32.totalorder %s12, 1
    %p51 = scmp.ne.s32.totalorder %s46, %s48
    %p52 = scmp.eq.s32.totalorder %s12, 0
    %p53 = por %p51, %p52
    %p54 = scmp.ne.s32.totalorder %s46, %s48
    %p55 = scmp.eq.s32.totalorder %s17, 1
    %p56 = por %p54, %p55
    %p57 = scmp.ne.s32.totalorder %s48, %s49
    %p58 = scmp.eq.s32.totalorder %s17, 0
    %p59 = por %p57, %p58
    %p60 = scmp.ne.s32.totalorder %s48, %s49
    %p61 = scmp.eq.s32.totalorder %s18, 1
    %p62 = por %p60, %p61
    %p64 = scmp.ne.s32.totalorder %s49, %s63
    %p65 = scmp.eq.s32.totalorder %s18, 0
    %p66 = por %p64, %p65
    %s68 = sadd.s32 %s67, 1
    %p71 = scmp.eq.s32.totalorder %s12, 1
    %p72 = scmp.ne.s32.totalorder %s67, %s69
    %p73 = scmp.eq.s32.totalorder %s12, 0
    %p74 = por %p72, %p73
    %p75 = scmp.ne.s32.totalorder %s67, %s69
    %p76 = scmp.eq.s32.totalorder %s17, 1
    %p77 = por %p75, %p76
    %p78 = scmp.ne.s32.totalorder %s69, %s70
    %p79 = scmp.eq.s32.totalorder %s17, 0
    %p80 = por %p78, %p79
    %p81 = scmp.ne.s32.totalorder %s69, %s70
    %p82 = scmp.eq.s32.totalorder %s18, 1
    %p83 = por %p81, %p82
    %p85 = scmp.ne.s32.totalorder %s70, %s84
    %p86 = scmp.eq.s32.totalorder %s18, 0
    %p87 = por %p85, %p86
    %s89 = sadd.s32 %s88, 1
    %p92 = scmp.eq.s32.totalorder %s12, 1
    %p93 = scmp.ne.s32.totalorder %s88, %s90
    %p94 = scmp.eq.s32.totalorder %s12, 0
    %p95 = por %p93, %p94
    %p96 = scmp.ne.s32.totalorder %s88, %s90
    %p97 = scmp.eq.s32.totalorder %s17, 1
    %p98 = por %p96, %p97
    %p99 = scmp.ne.s32.totalorder %s90, %s91
    %p100 = scmp.eq.s32.totalorder %s17, 0
    %p101 = por %p99, %p100
    %p102 = scmp.ne.s32.totalorder %s90, %s91
    %p103 = scmp.eq.s32.totalorder %s18, 1
    %p104 = por %p102, %p103
    %p106 = scmp.ne.s32.totalorder %s91, %s105
    %p107 = scmp.eq.s32.totalorder %s18, 0
    %p108 = por %p106, %p107
    %s109 = ssub.s32 %s12, %s19
    %p110 = scmp.eq.s32.totalorder %s109, 0
    %s112 = sadd.s32 %s111, 1
    %s113 = scalar_select %p110, %s111, %s112
    %p116 = pneg %p110
    %p117 = scmp.eq.s32.totalorder %s12, 1
    %p118 = por %p116, %p117
    %p119 = scmp.ne.s32.totalorder %s111, %s114
    %p120 = scmp.eq.s32.totalorder %s12, 0
    %p121 = por %p119, %p120
    %p122 = scmp.ne.s32.totalorder %s111, %s114
    %p123 = scmp.eq.s32.totalorder %s17, 1
    %p124 = por %p122, %p123
    %p125 = scmp.ne.s32.totalorder %s114, %s115
    %p126 = scmp.eq.s32.totalorder %s17, 0
    %p127 = por %p125, %p126
    %p128 = scmp.ne.s32.totalorder %s114, %s115
    %p129 = scmp.eq.s32.totalorder %s18, 1
    %p130 = por %p128, %p129
    %p132 = scmp.ne.s32.totalorder %s115, %s131
    %p133 = scmp.eq.s32.totalorder %s18, 0
    %p134 = por %p132, %p133
    %s135 = ssub.s32 %s12, %s19
    %p136 = scmp.eq.s32.totalorder %s135, 0
    %s138 = sadd.s32 %s137, 1
    %s139 = scalar_select %p136, %s137, %s138
    %p142 = pneg %p136
    %p143 = scmp.eq.s32.totalorder %s12, 1
    %p144 = por %p142, %p143
    %p145 = scmp.ne.s32.totalorder %s137, %s140
    %p146 = scmp.eq.s32.totalorder %s12, 0
    %p147 = por %p145, %p146
    %p148 = scmp.ne.s32.totalorder %s137, %s140
    %p149 = scmp.eq.s32.totalorder %s17, 1
    %p150 = por %p148, %p149
    %p151 = scmp.ne.s32.totalorder %s140, %s141
    %p152 = scmp.eq.s32.totalorder %s17, 0
    %p153 = por %p151, %p152
    %p154 = scmp.ne.s32.totalorder %s140, %s141
    %p155 = scmp.eq.s32.totalorder %s18, 1
    %p156 = por %p154, %p155
    %p158 = scmp.ne.s32.totalorder %s141, %s157
    %p159 = scmp.eq.s32.totalorder %s18, 0
    %p160 = por %p158, %p159
    %p161 = scmp.le.s32.totalorder 1, %s12
    %p162 = scmp.lt.s32.totalorder %s12, 3
    %p163 = pnand %p161, %p162
    %p164 = pneg %p163
    // Predicated region
    $region9: #{bottleneck_forward.5} parent=5 // pred_check
      _
    $region10: #{bottleneck_forward.5} parent=5 // pred_check_branch
      %166 = sbr.rel (%p163) target = $region12
    $region11: #{bottleneck_forward.5} parent=5 // pred_region
      %s167 = ssub.s32 %s12, 1
      // Predicated region
      $region13: #{bottleneck_forward.5} parent=11 // pred_check
        %p168 = pneg %p59
      $region14: #{bottleneck_forward.5} parent=11 // pred_check_branch
        %170 = sbr.rel (%p168) target = $region16
      $region15: #{bottleneck_forward.5} parent=11 // pred_region
        _
      $region16: #{bottleneck_forward.5} parent=11 // pred_fallthru
        _
      // Predicated region
      $region17: #{bottleneck_forward.5} parent=11 // pred_check
        %p171 = pneg %p80
      $region18: #{bottleneck_forward.5} parent=11 // pred_check_branch
        %173 = sbr.rel (%p171) target = $region20
      $region19: #{bottleneck_forward.5} parent=11 // pred_region
        _
      $region20: #{bottleneck_forward.5} parent=11 // pred_fallthru
        _
      // Predicated region
      $region21: #{bottleneck_forward.5} parent=11 // pred_check
        %p174 = pneg %p101
      $region22: #{bottleneck_forward.5} parent=11 // pred_check_branch
        %176 = sbr.rel (%p174) target = $region24
      $region23: #{bottleneck_forward.5} parent=11 // pred_region
        _
      $region24: #{bottleneck_forward.5} parent=11 // pred_fallthru
        _
    $region12: #{bottleneck_forward.5} parent=5 // pred_fallthru
      _
    %p177 = scmp.lt.s32.totalorder %s12, 2
    // Predicated region
    $region25: #{bottleneck_forward.5} parent=5 // pred_check
      %p178 = pneg %p177
    $region26: #{bottleneck_forward.5} parent=5 // pred_check_branch
      %180 = sbr.rel (%p178) target = $region28
    $region27: #{bottleneck_forward.5} parent=5 // pred_region
      // Predicated region
      $region29: #{bottleneck_forward.5} parent=27 // pred_check
        %p181 = pneg %p32
      $region30: #{bottleneck_forward.5} parent=27 // pred_check_branch
        %183 = sbr.rel (%p181) target = $region32
      $region31: #{bottleneck_forward.5} parent=27 // pred_region
        %p184 = scmp.lt.s32.totalorder %s12, 1
        %s185 = scalar_select %p184, %s12, 1
        %s186 = smul.addr %s185, 32
        %s187 = smul.addr %s186, 8
        %s188 = scalar_lea.vmem %s0, %s187
      $region32: #{bottleneck_forward.5} parent=27 // pred_fallthru
        _
    $region28: #{bottleneck_forward.5} parent=5 // pred_fallthru
      _
    %p189 = scmp.le.s32.totalorder 1, %s12
    %p190 = scmp.lt.s32.totalorder %s12, 3
    %p191 = pnand %p189, %p190
    %p192 = pneg %p191
    // Predicated region
    $region33: #{bottleneck_forward.5} parent=5 // pred_check
      _
    $region34: #{bottleneck_forward.5} parent=5 // pred_check_branch
      %194 = sbr.rel (%p191) target = $region36
    $region35: #{bottleneck_forward.5} parent=5 // pred_region
      %s195 = ssub.s32 %s12, 1
      %p196 = scmp.lt.s32.totalorder %s17, 1
      %s197 = scalar_select %p196, %s17, 1
      %s198 = smul.addr %s197, 32
      %s199 = smul.addr %s198, 8
      %s200 = scalar_lea.vmem %s0, %s199
      %p201 = pneg %p38
      %p202 = pneg %p35
      %p203 = pneg %p59
      %p204 = pneg %p56
      %p205 = pneg %p80
      %p206 = pneg %p77
      %p207 = pneg %p101
      %p208 = pneg %p98
      %p209 = pneg %p127
      %p210 = pneg %p124
      %p211 = scmp.lt.s32.totalorder %s17, 1
      %s212 = scalar_select %p211, %s17, 1
      %s213 = smul.addr %s212, 32
      %s214 = smul.addr %s213, 8
      %s215 = scalar_lea.vmem %s4, %s214
      %p216 = pneg %p153
      %p217 = pneg %p150
      %p218 = scmp.lt.s32.totalorder %s17, 1
      %s219 = scalar_select %p218, %s17, 1
      %s220 = smul.addr %s219, 2
      %s221 = scalar_lea.vmem %s5, %s220
      %p222 = scmp.lt.s32.totalorder %s17, 1
      %s223 = scalar_select %p222, %s17, 1
      %s224 = smul.addr %s223, 32
      %s225 = smul.addr %s224, 8
      %s226 = scalar_lea.vmem %s0, %s225
      %p227 = scmp.lt.s32.totalorder %s17, 1
      %s228 = scalar_select %p227, %s17, 1
      %s229 = smul.addr %s228, 32
      %s230 = smul.addr %s229, 8
      %s231 = scalar_lea.vmem %s4, %s230
      %p232 = scmp.lt.s32.totalorder %s17, 1
      %s233 = scalar_select %p232, %s17, 1
      %s234 = smul.addr %s233, 2
      %s235 = scalar_lea.vmem %s5, %s234
      %v239 = vld [vmem:[%s226] sm:$0xff]
      %v240 = vld [vmem:[%s226 + $0x8] sm:$0xff]
      %v241 = vld [vmem:[%s226 + $0x10] sm:$0xff]
      %v242 = vld [vmem:[%s226 + $0x18] sm:$0xff]
      %v243 = vld [vmem:[%s226 + $0x20] sm:$0xff]
      %v244 = vld [vmem:[%s226 + $0x28] sm:$0xff]
      %v245 = vld [vmem:[%s226 + $0x30] sm:$0xff]
      %v246 = vld [vmem:[%s226 + $0x38] sm:$0xff]
      %v247 = vld [vmem:[%s226 + $0x40] sm:$0xff]
      %v248 = vld [vmem:[%s226 + $0x48] sm:$0xff]
      %v249 = vld [vmem:[%s226 + $0x50] sm:$0xff]
      %v250 = vld [vmem:[%s226 + $0x58] sm:$0xff]
      %v251 = vld [vmem:[%s226 + $0x60] sm:$0xff]
      %v252 = vld [vmem:[%s226 + $0x68] sm:$0xff]
      %v253 = vld [vmem:[%s226 + $0x70] sm:$0xff]
      %v254 = vld [vmem:[%s226 + $0x78] sm:$0xff]
      %v255 = vld [vmem:[%s226 + $0x80] sm:$0xff]
      %v256 = vld [vmem:[%s226 + $0x88] sm:$0xff]
      %v257 = vld [vmem:[%s226 + $0x90] sm:$0xff]
      %v258 = vld [vmem:[%s226 + $0x98] sm:$0xff]
      %v259 = vld [vmem:[%s226 + $0xa0] sm:$0xff]
      %v260 = vld [vmem:[%s226 + $0xa8] sm:$0xff]
      %v261 = vld [vmem:[%s226 + $0xb0] sm:$0xff]
      %v262 = vld [vmem:[%s226 + $0xb8] sm:$0xff]
      %v263 = vld [vmem:[%s226 + $0xc0] sm:$0xff]
      %v264 = vld [vmem:[%s226 + $0xc8] sm:$0xff]
      %v265 = vld [vmem:[%s226 + $0xd0] sm:$0xff]
      %v266 = vld [vmem:[%s226 + $0xd8] sm:$0xff]
      %v267 = vld [vmem:[%s226 + $0xe0] sm:$0xff]
      %v268 = vld [vmem:[%s226 + $0xe8] sm:$0xff]
      %v269 = vld [vmem:[%s226 + $0xf0] sm:$0xff]
      %v270 = vld [vmem:[%s226 + $0xf8] sm:$0xff]
      %v271 = vld [vmem:[%s1] sm:$0x1]
      %v273 = vlaneseq
      %v274 = vshrl.u32 %v273, 7
      %v275 = vsub.s32 0, %v274
      %v276 = vrot.slane %v271, %v275
      %v278 = vmul.f32 %v239, %v276
      %v279 = vmul.f32 %v240, %v276
      %v280 = vmul.f32 %v241, %v276
      %v281 = vmul.f32 %v242, %v276
      %v282 = vmul.f32 %v243, %v276
      %v283 = vmul.f32 %v244, %v276
      %v284 = vmul.f32 %v245, %v276
      %v285 = vmul.f32 %v246, %v276
      %v286 = vmul.f32 %v247, %v276
      %v287 = vmul.f32 %v248, %v276
      %v288 = vmul.f32 %v249, %v276
      %v289 = vmul.f32 %v250, %v276
      %v290 = vmul.f32 %v251, %v276
      %v291 = vmul.f32 %v252, %v276
      %v292 = vmul.f32 %v253, %v276
      %v293 = vmul.f32 %v254, %v276
      %v294 = vmul.f32 %v255, %v276
      %v295 = vmul.f32 %v256, %v276
      %v296 = vmul.f32 %v257, %v276
      %v297 = vmul.f32 %v258, %v276
      %v298 = vmul.f32 %v259, %v276
      %v299 = vmul.f32 %v260, %v276
      %v300 = vmul.f32 %v261, %v276
      %v301 = vmul.f32 %v262, %v276
      %v302 = vmul.f32 %v263, %v276
      %v303 = vmul.f32 %v264, %v276
      %v304 = vmul.f32 %v265, %v276
      %v305 = vmul.f32 %v266, %v276
      %v306 = vmul.f32 %v267, %v276
      %v307 = vmul.f32 %v268, %v276
      %v308 = vmul.f32 %v269, %v276
      %v309 = vmul.f32 %v270, %v276
      %v310 = vld [vmem:[%s2] sm:$0x1]
      %v312 = vlaneseq
      %v313 = vshrl.u32 %v312, 7
      %v314 = vsub.s32 0, %v313
      %v315 = vrot.slane %v310, %v314
      %v317 = vadd.f32 %v278, %v315
      %v318 = vadd.f32 %v279, %v315
      %v319 = vadd.f32 %v280, %v315
      %v320 = vadd.f32 %v281, %v315
      %v321 = vadd.f32 %v282, %v315
      %v322 = vadd.f32 %v283, %v315
      %v323 = vadd.f32 %v284, %v315
      %v324 = vadd.f32 %v285, %v315
      %v325 = vadd.f32 %v286, %v315
      %v326 = vadd.f32 %v287, %v315
      %v327 = vadd.f32 %v288, %v315
      %v328 = vadd.f32 %v289, %v315
      %v329 = vadd.f32 %v290, %v315
      %v330 = vadd.f32 %v291, %v315
      %v331 = vadd.f32 %v292, %v315
      %v332 = vadd.f32 %v293, %v315
      %v333 = vadd.f32 %v294, %v315
      %v334 = vadd.f32 %v295, %v315
      %v335 = vadd.f32 %v296, %v315
      %v336 = vadd.f32 %v297, %v315
      %v337 = vadd.f32 %v298, %v315
      %v338 = vadd.f32 %v299, %v315
      %v339 = vadd.f32 %v300, %v315
      %v340 = vadd.f32 %v301, %v315
      %v341 = vadd.f32 %v302, %v315
      %v342 = vadd.f32 %v303, %v315
      %v343 = vadd.f32 %v304, %v315
      %v344 = vadd.f32 %v305, %v315
      %v345 = vadd.f32 %v306, %v315
      %v346 = vadd.f32 %v307, %v315
      %v347 = vadd.f32 %v308, %v315
      %v348 = vadd.f32 %v309, %v315
      %v349 = vmax.f32 %v317, 0.0
      %v350 = vmax.f32 %v318, 0.0
      %v351 = vmax.f32 %v319, 0.0
      %v352 = vmax.f32 %v320, 0.0
      %v353 = vmax.f32 %v321, 0.0
      %v354 = vmax.f32 %v322, 0.0
      %v355 = vmax.f32 %v323, 0.0
      %v356 = vmax.f32 %v324, 0.0
      %v357 = vmax.f32 %v325, 0.0
      %v358 = vmax.f32 %v326, 0.0
      %v359 = vmax.f32 %v327, 0.0
      %v360 = vmax.f32 %v328, 0.0
      %v361 = vmax.f32 %v329, 0.0
      %v362 = vmax.f32 %v330, 0.0
      %v363 = vmax.f32 %v331, 0.0
      %v364 = vmax.f32 %v332, 0.0
      %v365 = vmax.f32 %v333, 0.0
      %v366 = vmax.f32 %v334, 0.0
      %v367 = vmax.f32 %v335, 0.0
      %v368 = vmax.f32 %v336, 0.0
      %v369 = vmax.f32 %v337, 0.0
      %v370 = vmax.f32 %v338, 0.0
      %v371 = vmax.f32 %v339, 0.0
      %v372 = vmax.f32 %v340, 0.0
      %v373 = vmax.f32 %v341, 0.0
      %v374 = vmax.f32 %v342, 0.0
      %v375 = vmax.f32 %v343, 0.0
      %v376 = vmax.f32 %v344, 0.0
      %v377 = vmax.f32 %v345, 0.0
      %v378 = vmax.f32 %v346, 0.0
      %v379 = vmax.f32 %v347, 0.0
      %v380 = vmax.f32 %v348, 0.0
      %v381 = vpack.c.bf16 %v350, %v349
      %v382 = vpack.c.bf16 %v352, %v351
      %v383 = vpack.c.bf16 %v354, %v353
      %v384 = vpack.c.bf16 %v356, %v355
      %v385 = vpack.c.bf16 %v358, %v357
      %v386 = vpack.c.bf16 %v360, %v359
      %v387 = vpack.c.bf16 %v362, %v361
      %v388 = vpack.c.bf16 %v364, %v363
      %v389 = vpack.c.bf16 %v366, %v365
      %v390 = vpack.c.bf16 %v368, %v367
      %v391 = vpack.c.bf16 %v370, %v369
      %v392 = vpack.c.bf16 %v372, %v371
      %v393 = vpack.c.bf16 %v374, %v373
      %v394 = vpack.c.bf16 %v376, %v375
      %v395 = vpack.c.bf16 %v378, %v377
      %v396 = vpack.c.bf16 %v380, %v379
      %vm397 = vcmask 257024
      %398 = vst.msk [vmem:[#allocation2] sm:$0xf] %vm397, 0
      %399 = vst.msk [vmem:[#allocation2 + $0x4] sm:$0xf] %vm397, 0
      %vm400 = vcmask 253952
      %vm401 = vsmask.f32 256
      %vm402 = vmand %vm400, %vm401
      %v403 = vld [vmem:[#allocation2 + $0x8] sm:$0x1]
      %v404 = vsel %vm402, 0, %v403
      %405 = vst [vmem:[#allocation2 + $0x8] sm:$0x1] %v404
      %vm406 = vcmask 257024
      %vm407 = vsmask.f32 7938
      %vm408 = vmand %vm406, %vm407
      %v409 = vld [vmem:[#allocation2 + $0x88] sm:$0xf]
      %v410 = vsel %vm408, 0, %v409
      %411 = vst [vmem:[#allocation2 + $0x88] sm:$0xf] %v410
      %412 = vst.msk [vmem:[#allocation2 + $0x8c] sm:$0xf] %vm397, 0
      %vm413 = vcmask 253952
      %414 = vst.msk [vmem:[#allocation2 + $0x90] sm:$0x1] %vm413, 0
      %v431 = vunpack.c.l.b16 %v381
      %v432 = vunpack.c.h.b16 %v381
      %v433 = vunpack.c.l.b16 %v382
      %v434 = vunpack.c.h.b16 %v382
      %v435 = vunpack.c.l.b16 %v383
      %v436 = vunpack.c.h.b16 %v383
      %v437 = vunpack.c.l.b16 %v384
      %v438 = vunpack.c.h.b16 %v384
      %v439 = vunpack.c.l.b16 %v385
      %v440 = vunpack.c.h.b16 %v385
      %v441 = vunpack.c.l.b16 %v386
      %v442 = vunpack.c.h.b16 %v386
      %v443 = vunpack.c.l.b16 %v387
      %v444 = vunpack.c.h.b16 %v387
      %v445 = vunpack.c.l.b16 %v388
      %v446 = vunpack.c.h.b16 %v388
      %v447 = vunpack.c.l.b16 %v389
      %v448 = vunpack.c.h.b16 %v389
      %v449 = vunpack.c.l.b16 %v390
      %v450 = vunpack.c.h.b16 %v390
      %v451 = vunpack.c.l.b16 %v391
      %v452 = vunpack.c.h.b16 %v391
      %v453 = vunpack.c.l.b16 %v392
      %v454 = vunpack.c.h.b16 %v392
      %v455 = vunpack.c.l.b16 %v393
      %v456 = vunpack.c.h.b16 %v393
      %v457 = vunpack.c.l.b16 %v394
      %v458 = vunpack.c.h.b16 %v394
      %v459 = vunpack.c.l.b16 %v395
      %v460 = vunpack.c.h.b16 %v395
      %v461 = vunpack.c.l.b16 %v396
      %v462 = vunpack.c.h.b16 %v396
      %v463 = vpack.c.b16 %v431, %v431
      %v464 = vpack.c.b16 %v432, %v432
      %v465 = vpack.c.b16 %v433, %v433
      %v466 = vpack.c.b16 %v434, %v434
      %v467 = vpack.c.b16 %v435, %v435
      %v468 = vpack.c.b16 %v436, %v436
      %v469 = vpack.c.b16 %v437, %v437
      %v470 = vpack.c.b16 %v438, %v438
      %v471 = vpack.c.b16 %v439, %v439
      %v472 = vpack.c.b16 %v440, %v440
      %v473 = vpack.c.b16 %v441, %v441
      %v474 = vpack.c.b16 %v442, %v442
      %v475 = vpack.c.b16 %v443, %v443
      %v476 = vpack.c.b16 %v444, %v444
      %v477 = vpack.c.b16 %v445, %v445
      %v478 = vpack.c.b16 %v446, %v446
      %v479 = vpack.c.b16 %v447, %v447
      %v480 = vpack.c.b16 %v448, %v448
      %v481 = vpack.c.b16 %v449, %v449
      %v482 = vpack.c.b16 %v450, %v450
      %v483 = vpack.c.b16 %v451, %v451
      %v484 = vpack.c.b16 %v452, %v452
      %v485 = vpack.c.b16 %v453, %v453
      %v486 = vpack.c.b16 %v454, %v454
      %v487 = vpack.c.b16 %v455, %v455
      %v488 = vpack.c.b16 %v456, %v456
      %v489 = vpack.c.b16 %v457, %v457
      %v490 = vpack.c.b16 %v458, %v458
      %v491 = vpack.c.b16 %v459, %v459
      %v492 = vpack.c.b16 %v460, %v460
      %v493 = vpack.c.b16 %v461, %v461
      %v494 = vpack.c.b16 %v462, %v462
      %vm495 = vsmask.f32 4368
      %vm496 = vmor %vm401, %vm495
      %v498 = vshrl.u32 %v463, 16
      %v500 = vrot.slane %v498, 7
      %v501 = vshll.u32 %v463, 16
      %v503 = vor.u32 %v500, %v501
      %v504 = vrot.slane %v500, 4
      %v506 = vshrl.u32 %v464, 16
      %v508 = vrot.slane %v506, 7
      %v509 = vshll.u32 %v464, 16
      %v511 = vor.u32 %v508, %v509
      %v512 = vsel %vm496, %v504, %v511
      %v513 = vrot.slane %v508, 4
      %v515 = vshrl.u32 %v465, 16
      %v517 = vrot.slane %v515, 7
      %v518 = vshll.u32 %v465, 16
      %v520 = vor.u32 %v517, %v518
      %v521 = vsel %vm496, %v513, %v520
      %v522 = vrot.slane %v517, 4
      %v524 = vshrl.u32 %v466, 16
      %v526 = vrot.slane %v524, 7
      %v527 = vshll.u32 %v466, 16
      %v529 = vor.u32 %v526, %v527
      %v530 = vsel %vm496, %v522, %v529
      %v531 = vrot.slane %v526, 4
      %v533 = vshrl.u32 %v467, 16
      %v535 = vrot.slane %v533, 7
      %v536 = vshll.u32 %v467, 16
      %v538 = vor.u32 %v535, %v536
      %v539 = vsel %vm496, %v531, %v538
      %v540 = vrot.slane %v535, 4
      %v542 = vshrl.u32 %v468, 16
      %v544 = vrot.slane %v542, 7
      %v545 = vshll.u32 %v468, 16
      %v547 = vor.u32 %v544, %v545
      %v548 = vsel %vm496, %v540, %v547
      %v549 = vrot.slane %v544, 4
      %v551 = vshrl.u32 %v469, 16
      %v553 = vrot.slane %v551, 7
      %v554 = vshll.u32 %v469, 16
      %v556 = vor.u32 %v553, %v554
      %v557 = vsel %vm496, %v549, %v556
      %v558 = vrot.slane %v553, 4
      %v560 = vshrl.u32 %v470, 16
      %v562 = vrot.slane %v560, 7
      %v563 = vshll.u32 %v470, 16
      %v565 = vor.u32 %v562, %v563
      %v566 = vsel %vm496, %v558, %v565
      %v567 = vrot.slane %v562, 4
      %v569 = vshrl.u32 %v471, 16
      %v571 = vrot.slane %v569, 7
      %v572 = vshll.u32 %v471, 16
      %v574 = vor.u32 %v571, %v572
      %v575 = vsel %vm496, %v567, %v574
      %v576 = vrot.slane %v571, 4
      %v578 = vshrl.u32 %v472, 16
      %v580 = vrot.slane %v578, 7
      %v581 = vshll.u32 %v472, 16
      %v583 = vor.u32 %v580, %v581
      %v584 = vsel %vm496, %v576, %v583
      %v585 = vrot.slane %v580, 4
      %v587 = vshrl.u32 %v473, 16
      %v589 = vrot.slane %v587, 7
      %v590 = vshll.u32 %v473, 16
      %v592 = vor.u32 %v589, %v590
      %v593 = vsel %vm496, %v585, %v592
      %v594 = vrot.slane %v589, 4
      %v596 = vshrl.u32 %v474, 16
      %v598 = vrot.slane %v596, 7
      %v599 = vshll.u32 %v474, 16
      %v601 = vor.u32 %v598, %v599
      %v602 = vsel %vm496, %v594, %v601
      %v603 = vrot.slane %v598, 4
      %v605 = vshrl.u32 %v475, 16
      %v607 = vrot.slane %v605, 7
      %v608 = vshll.u32 %v475, 16
      %v610 = vor.u32 %v607, %v608
      %v611 = vsel %vm496, %v603, %v610
      %v612 = vrot.slane %v607, 4
      %v614 = vshrl.u32 %v476, 16
      %v616 = vrot.slane %v614, 7
      %v617 = vshll.u32 %v476, 16
      %v619 = vor.u32 %v616, %v617
      %v620 = vsel %vm496, %v612, %v619
      %v621 = vrot.slane %v616, 4
      %v623 = vshrl.u32 %v477, 16
      %v625 = vrot.slane %v623, 7
      %v626 = vshll.u32 %v477, 16
      %v628 = vor.u32 %v625, %v626
      %v629 = vsel %vm496, %v621, %v628
      %v630 = vrot.slane %v625, 4
      %v632 = vshrl.u32 %v478, 16
      %v634 = vrot.slane %v632, 7
      %v635 = vshll.u32 %v478, 16
      %v637 = vor.u32 %v634, %v635
      %v638 = vsel %vm496, %v630, %v637
      %v639 = vrot.slane %v634, 4
      %v641 = vshrl.u32 %v479, 16
      %v643 = vrot.slane %v641, 7
      %v644 = vshll.u32 %v479, 16
      %v646 = vor.u32 %v643, %v644
      %v647 = vsel %vm496, %v639, %v646
      %v648 = vrot.slane %v643, 4
      %v650 = vshrl.u32 %v480, 16
      %v652 = vrot.slane %v650, 7
      %v653 = vshll.u32 %v480, 16
      %v655 = vor.u32 %v652, %v653
      %v656 = vsel %vm496, %v648, %v655
      %v657 = vrot.slane %v652, 4
      %v659 = vshrl.u32 %v481, 16
      %v661 = vrot.slane %v659, 7
      %v662 = vshll.u32 %v481, 16
      %v664 = vor.u32 %v661, %v662
      %v665 = vsel %vm496, %v657, %v664
      %v666 = vrot.slane %v661, 4
      %v668 = vshrl.u32 %v482, 16
      %v670 = vrot.slane %v668, 7
      %v671 = vshll.u32 %v482, 16
      %v673 = vor.u32 %v670, %v671
      %v674 = vsel %vm496, %v666, %v673
      %v675 = vrot.slane %v670, 4
      %v677 = vshrl.u32 %v483, 16
      %v679 = vrot.slane %v677, 7
      %v680 = vshll.u32 %v483, 16
      %v682 = vor.u32 %v679, %v680
      %v683 = vsel %vm496, %v675, %v682
      %v684 = vrot.slane %v679, 4
      %v686 = vshrl.u32 %v484, 16
      %v688 = vrot.slane %v686, 7
      %v689 = vshll.u32 %v484, 16
      %v691 = vor.u32 %v688, %v689
      %v692 = vsel %vm496, %v684, %v691
      %v693 = vrot.slane %v688, 4
      %v695 = vshrl.u32 %v485, 16
      %v697 = vrot.slane %v695, 7
      %v698 = vshll.u32 %v485, 16
      %v700 = vor.u32 %v697, %v698
      %v701 = vsel %vm496, %v693, %v700
      %v702 = vrot.slane %v697, 4
      %v704 = vshrl.u32 %v486, 16
      %v706 = vrot.slane %v704, 7
      %v707 = vshll.u32 %v486, 16
      %v709 = vor.u32 %v706, %v707
      %v710 = vsel %vm496, %v702, %v709
      %v711 = vrot.slane %v706, 4
      %v713 = vshrl.u32 %v487, 16
      %v715 = vrot.slane %v713, 7
      %v716 = vshll.u32 %v487, 16
      %v718 = vor.u32 %v715, %v716
      %v719 = vsel %vm496, %v711, %v718
      %v720 = vrot.slane %v715, 4
      %v722 = vshrl.u32 %v488, 16
      %v724 = vrot.slane %v722, 7
      %v725 = vshll.u32 %v488, 16
      %v727 = vor.u32 %v724, %v725
      %v728 = vsel %vm496, %v720, %v727
      %v729 = vrot.slane %v724, 4
      %v731 = vshrl.u32 %v489, 16
      %v733 = vrot.slane %v731, 7
      %v734 = vshll.u32 %v489, 16
      %v736 = vor.u32 %v733, %v734
      %v737 = vsel %vm496, %v729, %v736
      %v738 = vrot.slane %v733, 4
      %v740 = vshrl.u32 %v490, 16
      %v742 = vrot.slane %v740, 7
      %v743 = vshll.u32 %v490, 16
      %v745 = vor.u32 %v742, %v743
      %v746 = vsel %vm496, %v738, %v745
      %v747 = vrot.slane %v742, 4
      %v749 = vshrl.u32 %v491, 16
      %v751 = vrot.slane %v749, 7
      %v752 = vshll.u32 %v491, 16
      %v754 = vor.u32 %v751, %v752
      %v755 = vsel %vm496, %v747, %v754
      %v756 = vrot.slane %v751, 4
      %v758 = vshrl.u32 %v492, 16
      %v760 = vrot.slane %v758, 7
      %v761 = vshll.u32 %v492, 16
      %v763 = vor.u32 %v760, %v761
      %v764 = vsel %vm496, %v756, %v763
      %v765 = vrot.slane %v760, 4
      %v767 = vshrl.u32 %v493, 16
      %v769 = vrot.slane %v767, 7
      %v770 = vshll.u32 %v493, 16
      %v772 = vor.u32 %v769, %v770
      %v773 = vsel %vm496, %v765, %v772
      %v774 = vrot.slane %v769, 4
      %v776 = vshrl.u32 %v494, 16
      %v778 = vrot.slane %v776, 7
      %v779 = vshll.u32 %v494, 16
      %v781 = vor.u32 %v778, %v779
      %v782 = vsel %vm496, %v774, %v781
      %v783 = vrot.slane %v778, 4
      %v817 = vld [vmem:[#allocation2 + $0x8] sm:$0xf]
      %v818 = vsel %vm408, %v503, %v817
      %819 = vst [vmem:[#allocation2 + $0x8] sm:$0xf] %v818
      %820 = vst.msk [vmem:[#allocation2 + $0xc] sm:$0xf] %vm397, %v512
      %821 = vst.msk [vmem:[#allocation2 + $0x10] sm:$0xf] %vm397, %v521
      %822 = vst.msk [vmem:[#allocation2 + $0x14] sm:$0xf] %vm397, %v530
      %823 = vst.msk [vmem:[#allocation2 + $0x18] sm:$0xf] %vm397, %v539
      %824 = vst.msk [vmem:[#allocation2 + $0x1c] sm:$0xf] %vm397, %v548
      %825 = vst.msk [vmem:[#allocation2 + $0x20] sm:$0xf] %vm397, %v557
      %826 = vst.msk [vmem:[#allocation2 + $0x24] sm:$0xf] %vm397, %v566
      %827 = vst.msk [vmem:[#allocation2 + $0x28] sm:$0xf] %vm397, %v575
      %828 = vst.msk [vmem:[#allocation2 + $0x2c] sm:$0xf] %vm397, %v584
      %829 = vst.msk [vmem:[#allocation2 + $0x30] sm:$0xf] %vm397, %v593
      %830 = vst.msk [vmem:[#allocation2 + $0x34] sm:$0xf] %vm397, %v602
      %831 = vst.msk [vmem:[#allocation2 + $0x38] sm:$0xf] %vm397, %v611
      %832 = vst.msk [vmem:[#allocation2 + $0x3c] sm:$0xf] %vm397, %v620
      %833 = vst.msk [vmem:[#allocation2 + $0x40] sm:$0xf] %vm397, %v629
      %834 = vst.msk [vmem:[#allocation2 + $0x44] sm:$0xf] %vm397, %v638
      %835 = vst.msk [vmem:[#allocation2 + $0x48] sm:$0xf] %vm397, %v647
      %836 = vst.msk [vmem:[#allocation2 + $0x4c] sm:$0xf] %vm397, %v656
      %837 = vst.msk [vmem:[#allocation2 + $0x50] sm:$0xf] %vm397, %v665
      %838 = vst.msk [vmem:[#allocation2 + $0x54] sm:$0xf] %vm397, %v674
      %839 = vst.msk [vmem:[#allocation2 + $0x58] sm:$0xf] %vm397, %v683
      %840 = vst.msk [vmem:[#allocation2 + $0x5c] sm:$0xf] %vm397, %v692
      %841 = vst.msk [vmem:[#allocation2 + $0x60] sm:$0xf] %vm397, %v701
      %842 = vst.msk [vmem:[#allocation2 + $0x64] sm:$0xf] %vm397, %v710
      %843 = vst.msk [vmem:[#allocation2 + $0x68] sm:$0xf] %vm397, %v719
      %844 = vst.msk [vmem:[#allocation2 + $0x6c] sm:$0xf] %vm397, %v728
      %845 = vst.msk [vmem:[#allocation2 + $0x70] sm:$0xf] %vm397, %v737
      %846 = vst.msk [vmem:[#allocation2 + $0x74] sm:$0xf] %vm397, %v746
      %847 = vst.msk [vmem:[#allocation2 + $0x78] sm:$0xf] %vm397, %v755
      %848 = vst.msk [vmem:[#allocation2 + $0x7c] sm:$0xf] %vm397, %v764
      %849 = vst.msk [vmem:[#allocation2 + $0x80] sm:$0xf] %vm397, %v773
      %850 = vst.msk [vmem:[#allocation2 + $0x84] sm:$0xf] %vm397, %v782
      %v851 = vld [vmem:[#allocation2 + $0x88] sm:$0x1]
      %v852 = vsel %vm402, %v783, %v851
      %853 = vst [vmem:[#allocation2 + $0x88] sm:$0x1] %v852
      %v854 = vlaneseq
      %v855 = vshrl.u32 %v854, 7
      %v856 = vadd.s32 %v855, 8
      %v857 = vadd.s32 %v855, 16
      %v858 = vadd.s32 %v855, 24
      %v859 = vadd.s32 %v855, 32
      %v860 = vadd.s32 %v855, 40
      %v861 = vadd.s32 %v855, 48
      %v862 = vadd.s32 %v855, 56
      %v863 = vadd.s32 %v855, 64
      %v864 = vadd.s32 %v855, 72
      %v865 = vadd.s32 %v855, 80
      %v866 = vadd.s32 %v855, 88
      %v867 = vadd.s32 %v855, 96
      %v868 = vadd.s32 %v855, 104
      %v869 = vadd.s32 %v855, 112
      %v870 = vadd.s32 %v855, 120
      %v871 = vadd.s32 %v855, 128
      %v872 = vadd.s32 %v855, 136
      %v873 = vadd.s32 %v855, 144
      %v874 = vadd.s32 %v855, 152
      %v875 = vadd.s32 %v855, 160
      %v876 = vadd.s32 %v855, 168
      %v877 = vadd.s32 %v855, 176
      %v878 = vadd.s32 %v855, 184
      %v879 = vadd.s32 %v855, 192
      %v880 = vadd.s32 %v855, 200
      %v881 = vadd.s32 %v855, 208
      %v882 = vadd.s32 %v855, 216
      %v883 = vadd.s32 %v855, 224
      %v884 = vadd.s32 %v855, 232
      %v885 = vadd.s32 %v855, 240
      %v886 = vadd.s32 %v855, 248
      %vm887 = vcmp.lt.s32.totalorder %v855, 0
      %v888 = vsub.s32 0, %v855
      %v889 = vsel %vm887, %v888, %v855
      %v890 = vshrl.u32 %v889, 4
      %v891 = vand.u32 %v889, 15
      %v892 = vsub.s32 0, %v891
      %v893 = vsel %vm887, %v892, %v891
      %vm894 = vcmp.lt.s32.totalorder %v856, 0
      %v895 = vsub.s32 0, %v856
      %v896 = vsel %vm894, %v895, %v856
      %v897 = vshrl.u32 %v896, 4
      %v898 = vand.u32 %v896, 15
      %v899 = vsub.s32 0, %v898
      %v900 = vsel %vm894, %v899, %v898
      %vm901 = vcmp.lt.s32.totalorder %v857, 0
      %v902 = vsub.s32 0, %v857
      %v903 = vsel %vm901, %v902, %v857
      %v904 = vshrl.u32 %v903, 4
      %v905 = vand.u32 %v903, 15
      %v906 = vsub.s32 0, %v905
      %v907 = vsel %vm901, %v906, %v905
      %vm908 = vcmp.lt.s32.totalorder %v858, 0
      %v909 = vsub.s32 0, %v858
      %v910 = vsel %vm908, %v909, %v858
      %v911 = vshrl.u32 %v910, 4
      %v912 = vand.u32 %v910, 15
      %v913 = vsub.s32 0, %v912
      %v914 = vsel %vm908, %v913, %v912
      %vm915 = vcmp.lt.s32.totalorder %v859, 0
      %v916 = vsub.s32 0, %v859
      %v917 = vsel %vm915, %v916, %v859
      %v918 = vshrl.u32 %v917, 4
      %v919 = vand.u32 %v917, 15
      %v920 = vsub.s32 0, %v919
      %v921 = vsel %vm915, %v920, %v919
      %vm922 = vcmp.lt.s32.totalorder %v860, 0
      %v923 = vsub.s32 0, %v860
      %v924 = vsel %vm922, %v923, %v860
      %v925 = vshrl.u32 %v924, 4
      %v926 = vand.u32 %v924, 15
      %v927 = vsub.s32 0, %v926
      %v928 = vsel %vm922, %v927, %v926
      %vm929 = vcmp.lt.s32.totalorder %v861, 0
      %v930 = vsub.s32 0, %v861
      %v931 = vsel %vm929, %v930, %v861
      %v932 = vshrl.u32 %v931, 4
      %v933 = vand.u32 %v931, 15
      %v934 = vsub.s32 0, %v933
      %v935 = vsel %vm929, %v934, %v933
      %vm936 = vcmp.lt.s32.totalorder %v862, 0
      %v937 = vsub.s32 0, %v862
      %v938 = vsel %vm936, %v937, %v862
      %v939 = vshrl.u32 %v938, 4
      %v940 = vand.u32 %v938, 15
      %v941 = vsub.s32 0, %v940
      %v942 = vsel %vm936, %v941, %v940
      %vm943 = vcmp.lt.s32.totalorder %v863, 0
      %v944 = vsub.s32 0, %v863
      %v945 = vsel %vm943, %v944, %v863
      %v946 = vshrl.u32 %v945, 4
      %v947 = vand.u32 %v945, 15
      %v948 = vsub.s32 0, %v947
      %v949 = vsel %vm943, %v948, %v947
      %vm950 = vcmp.lt.s32.totalorder %v864, 0
      %v951 = vsub.s32 0, %v864
      %v952 = vsel %vm950, %v951, %v864
      %v953 = vshrl.u32 %v952, 4
      %v954 = vand.u32 %v952, 15
      %v955 = vsub.s32 0, %v954
      %v956 = vsel %vm950, %v955, %v954
      %vm957 = vcmp.lt.s32.totalorder %v865, 0
      %v958 = vsub.s32 0, %v865
      %v959 = vsel %vm957, %v958, %v865
      %v960 = vshrl.u32 %v959, 4
      %v961 = vand.u32 %v959, 15
      %v962 = vsub.s32 0, %v961
      %v963 = vsel %vm957, %v962, %v961
      %vm964 = vcmp.lt.s32.totalorder %v866, 0
      %v965 = vsub.s32 0, %v866
      %v966 = vsel %vm964, %v965, %v866
      %v967 = vshrl.u32 %v966, 4
      %v968 = vand.u32 %v966, 15
      %v969 = vsub.s32 0, %v968
      %v970 = vsel %vm964, %v969, %v968
      %vm971 = vcmp.lt.s32.totalorder %v867, 0
      %v972 = vsub.s32 0, %v867
      %v973 = vsel %vm971, %v972, %v867
      %v974 = vshrl.u32 %v973, 4
      %v975 = vand.u32 %v973, 15
      %v976 = vsub.s32 0, %v975
      %v977 = vsel %vm971, %v976, %v975
      %vm978 = vcmp.lt.s32.totalorder %v868, 0
      %v979 = vsub.s32 0, %v868
      %v980 = vsel %vm978, %v979, %v868
      %v981 = vshrl.u32 %v980, 4
      %v982 = vand.u32 %v980, 15
      %v983 = vsub.s32 0, %v982
      %v984 = vsel %vm978, %v983, %v982
      %vm985 = vcmp.lt.s32.totalorder %v869, 0
      %v986 = vsub.s32 0, %v869
      %v987 = vsel %vm985, %v986, %v869
      %v988 = vshrl.u32 %v987, 4
      %v989 = vand.u32 %v987, 15
      %v990 = vsub.s32 0, %v989
      %v991 = vsel %vm985, %v990, %v989
      %vm992 = vcmp.lt.s32.totalorder %v870, 0
      %v993 = vsub.s32 0, %v870
      %v994 = vsel %vm992, %v993, %v870
      %v995 = vshrl.u32 %v994, 4
      %v996 = vand.u32 %v994, 15
      %v997 = vsub.s32 0, %v996
      %v998 = vsel %vm992, %v997, %v996
      %vm999 = vcmp.lt.s32.totalorder %v871, 0
      %v1000 = vsub.s32 0, %v871
      %v1001 = vsel %vm999, %v1000, %v871
      %v1002 = vshrl.u32 %v1001, 4
      %v1003 = vand.u32 %v1001, 15
      %v1004 = vsub.s32 0, %v1003
      %v1005 = vsel %vm999, %v1004, %v1003
      %vm1006 = vcmp.lt.s32.totalorder %v872, 0
      %v1007 = vsub.s32 0, %v872
      %v1008 = vsel %vm1006, %v1007, %v872
      %v1009 = vshrl.u32 %v1008, 4
      %v1010 = vand.u32 %v1008, 15
      %v1011 = vsub.s32 0, %v1010
      %v1012 = vsel %vm1006, %v1011, %v1010
      %vm1013 = vcmp.lt.s32.totalorder %v873, 0
      %v1014 = vsub.s32 0, %v873
      %v1015 = vsel %vm1013, %v1014, %v873
      %v1016 = vshrl.u32 %v1015, 4
      %v1017 = vand.u32 %v1015, 15
      %v1018 = vsub.s32 0, %v1017
      %v1019 = vsel %vm1013, %v1018, %v1017
      %vm1020 = vcmp.lt.s32.totalorder %v874, 0
      %v1021 = vsub.s32 0, %v874
      %v1022 = vsel %vm1020, %v1021, %v874
      %v1023 = vshrl.u32 %v1022, 4
      %v1024 = vand.u32 %v1022, 15
      %v1025 = vsub.s32 0, %v1024
      %v1026 = vsel %vm1020, %v1025, %v1024
      %vm1027 = vcmp.lt.s32.totalorder %v875, 0
      %v1028 = vsub.s32 0, %v875
      %v1029 = vsel %vm1027, %v1028, %v875
      %v1030 = vshrl.u32 %v1029, 4
      %v1031 = vand.u32 %v1029, 15
      %v1032 = vsub.s32 0, %v1031
      %v1033 = vsel %vm1027, %v1032, %v1031
      %vm1034 = vcmp.lt.s32.totalorder %v876, 0
      %v1035 = vsub.s32 0, %v876
      %v1036 = vsel %vm1034, %v1035, %v876
      %v1037 = vshrl.u32 %v1036, 4
      %v1038 = vand.u32 %v1036, 15
      %v1039 = vsub.s32 0, %v1038
      %v1040 = vsel %vm1034, %v1039, %v1038
      %vm1041 = vcmp.lt.s32.totalorder %v877, 0
      %v1042 = vsub.s32 0, %v877
      %v1043 = vsel %vm1041, %v1042, %v877
      %v1044 = vshrl.u32 %v1043, 4
      %v1045 = vand.u32 %v1043, 15
      %v1046 = vsub.s32 0, %v1045
      %v1047 = vsel %vm1041, %v1046, %v1045
      %vm1048 = vcmp.lt.s32.totalorder %v878, 0
      %v1049 = vsub.s32 0, %v878
      %v1050 = vsel %vm1048, %v1049, %v878
      %v1051 = vshrl.u32 %v1050, 4
      %v1052 = vand.u32 %v1050, 15
      %v1053 = vsub.s32 0, %v1052
      %v1054 = vsel %vm1048, %v1053, %v1052
      %vm1055 = vcmp.lt.s32.totalorder %v879, 0
      %v1056 = vsub.s32 0, %v879
      %v1057 = vsel %vm1055, %v1056, %v879
      %v1058 = vshrl.u32 %v1057, 4
      %v1059 = vand.u32 %v1057, 15
      %v1060 = vsub.s32 0, %v1059
      %v1061 = vsel %vm1055, %v1060, %v1059
      %vm1062 = vcmp.lt.s32.totalorder %v880, 0
      %v1063 = vsub.s32 0, %v880
      %v1064 = vsel %vm1062, %v1063, %v880
      %v1065 = vshrl.u32 %v1064, 4
      %v1066 = vand.u32 %v1064, 15
      %v1067 = vsub.s32 0, %v1066
      %v1068 = vsel %vm1062, %v1067, %v1066
      %vm1069 = vcmp.lt.s32.totalorder %v881, 0
      %v1070 = vsub.s32 0, %v881
      %v1071 = vsel %vm1069, %v1070, %v881
      %v1072 = vshrl.u32 %v1071, 4
      %v1073 = vand.u32 %v1071, 15
      %v1074 = vsub.s32 0, %v1073
      %v1075 = vsel %vm1069, %v1074, %v1073
      %vm1076 = vcmp.lt.s32.totalorder %v882, 0
      %v1077 = vsub.s32 0, %v882
      %v1078 = vsel %vm1076, %v1077, %v882
      %v1079 = vshrl.u32 %v1078, 4
      %v1080 = vand.u32 %v1078, 15
      %v1081 = vsub.s32 0, %v1080
      %v1082 = vsel %vm1076, %v1081, %v1080
      %vm1083 = vcmp.lt.s32.totalorder %v883, 0
      %v1084 = vsub.s32 0, %v883
      %v1085 = vsel %vm1083, %v1084, %v883
      %v1086 = vshrl.u32 %v1085, 4
      %v1087 = vand.u32 %v1085, 15
      %v1088 = vsub.s32 0, %v1087
      %v1089 = vsel %vm1083, %v1088, %v1087
      %vm1090 = vcmp.lt.s32.totalorder %v884, 0
      %v1091 = vsub.s32 0, %v884
      %v1092 = vsel %vm1090, %v1091, %v884
      %v1093 = vshrl.u32 %v1092, 4
      %v1094 = vand.u32 %v1092, 15
      %v1095 = vsub.s32 0, %v1094
      %v1096 = vsel %vm1090, %v1095, %v1094
      %vm1097 = vcmp.lt.s32.totalorder %v885, 0
      %v1098 = vsub.s32 0, %v885
      %v1099 = vsel %vm1097, %v1098, %v885
      %v1100 = vshrl.u32 %v1099, 4
      %v1101 = vand.u32 %v1099, 15
      %v1102 = vsub.s32 0, %v1101
      %v1103 = vsel %vm1097, %v1102, %v1101
      %vm1104 = vcmp.lt.s32.totalorder %v886, 0
      %v1105 = vsub.s32 0, %v886
      %v1106 = vsel %vm1104, %v1105, %v886
      %v1107 = vshrl.u32 %v1106, 4
      %v1108 = vand.u32 %v1106, 15
      %v1109 = vsub.s32 0, %v1108
      %v1110 = vsel %vm1104, %v1109, %v1108
      %vm1111 = vcmp.ne.s32.totalorder %v893, 0
      %vm1112 = vcmp.ne.s32.totalorder %v900, 0
      %vm1113 = vcmp.ne.s32.totalorder %v907, 0
      %vm1114 = vcmp.ne.s32.totalorder %v914, 0
      %vm1115 = vcmp.ne.s32.totalorder %v921, 0
      %vm1116 = vcmp.ne.s32.totalorder %v928, 0
      %vm1117 = vcmp.ne.s32.totalorder %v935, 0
      %vm1118 = vcmp.ne.s32.totalorder %v942, 0
      %vm1119 = vcmp.ne.s32.totalorder %v949, 0
      %vm1120 = vcmp.ne.s32.totalorder %v956, 0
      %vm1121 = vcmp.ne.s32.totalorder %v963, 0
      %vm1122 = vcmp.ne.s32.totalorder %v970, 0
      %vm1123 = vcmp.ne.s32.totalorder %v977, 0
      %vm1124 = vcmp.ne.s32.totalorder %v984, 0
      %vm1125 = vcmp.ne.s32.totalorder %v991, 0
      %vm1126 = vcmp.ne.s32.totalorder %v998, 0
      %vm1127 = vcmp.ne.s32.totalorder %v1005, 0
      %vm1128 = vcmp.ne.s32.totalorder %v1012, 0
      %vm1129 = vcmp.ne.s32.totalorder %v1019, 0
      %vm1130 = vcmp.ne.s32.totalorder %v1026, 0
      %vm1131 = vcmp.ne.s32.totalorder %v1033, 0
      %vm1132 = vcmp.ne.s32.totalorder %v1040, 0
      %vm1133 = vcmp.ne.s32.totalorder %v1047, 0
      %vm1134 = vcmp.ne.s32.totalorder %v1054, 0
      %vm1135 = vcmp.ne.s32.totalorder %v1061, 0
      %vm1136 = vcmp.ne.s32.totalorder %v1068, 0
      %vm1137 = vcmp.ne.s32.totalorder %v1075, 0
      %vm1138 = vcmp.ne.s32.totalorder %v1082, 0
      %vm1139 = vcmp.ne.s32.totalorder %v1089, 0
      %vm1140 = vcmp.ne.s32.totalorder %v1096, 0
      %vm1141 = vcmp.ne.s32.totalorder %v1103, 0
      %vm1142 = vcmp.ne.s32.totalorder %v1110, 0
      %vm1143 = vcmp.lt.s32.totalorder %v893, 0
      %vm1144 = vcmp.lt.s32.totalorder %v900, 0
      %vm1145 = vcmp.lt.s32.totalorder %v907, 0
      %vm1146 = vcmp.lt.s32.totalorder %v914, 0
      %vm1147 = vcmp.lt.s32.totalorder %v921, 0
      %vm1148 = vcmp.lt.s32.totalorder %v928, 0
      %vm1149 = vcmp.lt.s32.totalorder %v935, 0
      %vm1150 = vcmp.lt.s32.totalorder %v942, 0
      %vm1151 = vcmp.lt.s32.totalorder %v949, 0
      %vm1152 = vcmp.lt.s32.totalorder %v956, 0
      %vm1153 = vcmp.lt.s32.totalorder %v963, 0
      %vm1154 = vcmp.lt.s32.totalorder %v970, 0
      %vm1155 = vcmp.lt.s32.totalorder %v977, 0
      %vm1156 = vcmp.lt.s32.totalorder %v984, 0
      %vm1157 = vcmp.lt.s32.totalorder %v991, 0
      %vm1158 = vcmp.lt.s32.totalorder %v998, 0
      %vm1159 = vcmp.lt.s32.totalorder %v1005, 0
      %vm1160 = vcmp.lt.s32.totalorder %v1012, 0
      %vm1161 = vcmp.lt.s32.totalorder %v1019, 0
      %vm1162 = vcmp.lt.s32.totalorder %v1026, 0
      %vm1163 = vcmp.lt.s32.totalorder %v1033, 0
      %vm1164 = vcmp.lt.s32.totalorder %v1040, 0
      %vm1165 = vcmp.lt.s32.totalorder %v1047, 0
      %vm1166 = vcmp.lt.s32.totalorder %v1054, 0
      %vm1167 = vcmp.lt.s32.totalorder %v1061, 0
      %vm1168 = vcmp.lt.s32.totalorder %v1068, 0
      %vm1169 = vcmp.lt.s32.totalorder %v1075, 0
      %vm1170 = vcmp.lt.s32.totalorder %v1082, 0
      %vm1171 = vcmp.lt.s32.totalorder %v1089, 0
      %vm1172 = vcmp.lt.s32.totalorder %v1096, 0
      %vm1173 = vcmp.lt.s32.totalorder %v1103, 0
      %vm1174 = vcmp.lt.s32.totalorder %v1110, 0
      %vm1175 = vmand %vm1143, %vm1111
      %vm1176 = vmand %vm1144, %vm1112
      %vm1177 = vmand %vm1145, %vm1113
      %vm1178 = vmand %vm1146, %vm1114
      %vm1179 = vmand %vm1147, %vm1115
      %vm1180 = vmand %vm1148, %vm1116
      %vm1181 = vmand %vm1149, %vm1117
      %vm1182 = vmand %vm1150, %vm1118
      %vm1183 = vmand %vm1151, %vm1119
      %vm1184 = vmand %vm1152, %vm1120
      %vm1185 = vmand %vm1153, %vm1121
      %vm1186 = vmand %vm1154, %vm1122
      %vm1187 = vmand %vm1155, %vm1123
      %vm1188 = vmand %vm1156, %vm1124
      %vm1189 = vmand %vm1157, %vm1125
      %vm1190 = vmand %vm1158, %vm1126
      %vm1191 = vmand %vm1159, %vm1127
      %vm1192 = vmand %vm1160, %vm1128
      %vm1193 = vmand %vm1161, %vm1129
      %vm1194 = vmand %vm1162, %vm1130
      %vm1195 = vmand %vm1163, %vm1131
      %vm1196 = vmand %vm1164, %vm1132
      %vm1197 = vmand %vm1165, %vm1133
      %vm1198 = vmand %vm1166, %vm1134
      %vm1199 = vmand %vm1167, %vm1135
      %vm1200 = vmand %vm1168, %vm1136
      %vm1201 = vmand %vm1169, %vm1137
      %vm1202 = vmand %vm1170, %vm1138
      %vm1203 = vmand %vm1171, %vm1139
      %vm1204 = vmand %vm1172, %vm1140
      %vm1205 = vmand %vm1173, %vm1141
      %vm1206 = vmand %vm1174, %vm1142
      %v1207 = vadd.s32 %v893, 16
      %v1208 = vadd.s32 %v900, 16
      %v1209 = vadd.s32 %v907, 16
      %v1210 = vadd.s32 %v914, 16
      %v1211 = vadd.s32 %v921, 16
      %v1212 = vadd.s32 %v928, 16
      %v1213 = vadd.s32 %v935, 16
      %v1214 = vadd.s32 %v942, 16
      %v1215 = vadd.s32 %v949, 16
      %v1216 = vadd.s32 %v956, 16
      %v1217 = vadd.s32 %v963, 16
      %v1218 = vadd.s32 %v970, 16
      %v1219 = vadd.s32 %v977, 16
      %v1220 = vadd.s32 %v984, 16
      %v1221 = vadd.s32 %v991, 16
      %v1222 = vadd.s32 %v998, 16
      %v1223 = vadd.s32 %v1005, 16
      %v1224 = vadd.s32 %v1012, 16
      %v1225 = vadd.s32 %v1019, 16
      %v1226 = vadd.s32 %v1026, 16
      %v1227 = vadd.s32 %v1033, 16
      %v1228 = vadd.s32 %v1040, 16
      %v1229 = vadd.s32 %v1047, 16
      %v1230 = vadd.s32 %v1054, 16
      %v1231 = vadd.s32 %v1061, 16
      %v1232 = vadd.s32 %v1068, 16
      %v1233 = vadd.s32 %v1075, 16
      %v1234 = vadd.s32 %v1082, 16
      %v1235 = vadd.s32 %v1089, 16
      %v1236 = vadd.s32 %v1096, 16
      %v1237 = vadd.s32 %v1103, 16
      %v1238 = vadd.s32 %v1110, 16
      %v1239 = vsel %vm1175, %v1207, %v893
      %v1240 = vsel %vm1176, %v1208, %v900
      %v1241 = vsel %vm1177, %v1209, %v907
      %v1242 = vsel %vm1178, %v1210, %v914
      %v1243 = vsel %vm1179, %v1211, %v921
      %v1244 = vsel %vm1180, %v1212, %v928
      %v1245 = vsel %vm1181, %v1213, %v935
      %v1246 = vsel %vm1182, %v1214, %v942
      %v1247 = vsel %vm1183, %v1215, %v949
      %v1248 = vsel %vm1184, %v1216, %v956
      %v1249 = vsel %vm1185, %v1217, %v963
      %v1250 = vsel %vm1186, %v1218, %v970
      %v1251 = vsel %vm1187, %v1219, %v977
      %v1252 = vsel %vm1188, %v1220, %v984
      %v1253 = vsel %vm1189, %v1221, %v991
      %v1254 = vsel %vm1190, %v1222, %v998
      %v1255 = vsel %vm1191, %v1223, %v1005
      %v1256 = vsel %vm1192, %v1224, %v1012
      %v1257 = vsel %vm1193, %v1225, %v1019
      %v1258 = vsel %vm1194, %v1226, %v1026
      %v1259 = vsel %vm1195, %v1227, %v1033
      %v1260 = vsel %vm1196, %v1228, %v1040
      %v1261 = vsel %vm1197, %v1229, %v1047
      %v1262 = vsel %vm1198, %v1230, %v1054
      %v1263 = vsel %vm1199, %v1231, %v1061
      %v1264 = vsel %vm1200, %v1232, %v1068
      %v1265 = vsel %vm1201, %v1233, %v1075
      %v1266 = vsel %vm1202, %v1234, %v1082
      %v1267 = vsel %vm1203, %v1235, %v1089
      %v1268 = vsel %vm1204, %v1236, %v1096
      %v1269 = vsel %vm1205, %v1237, %v1103
      %v1270 = vsel %vm1206, %v1238, %v1110
      %v1271 = vld [vmem:[#allocation2] sm:$0xf]
      %v1272 = vld [vmem:[#allocation2 + $0x4] sm:$0xf]
      %v1273 = vld [vmem:[#allocation2 + $0x8] sm:$0xf]
      %v1274 = vld [vmem:[#allocation2 + $0xc] sm:$0xf]
      %v1275 = vld [vmem:[#allocation2 + $0x10] sm:$0xf]
      %v1276 = vld [vmem:[#allocation2 + $0x14] sm:$0xf]
      %v1277 = vld [vmem:[#allocation2 + $0x18] sm:$0xf]
      %v1278 = vld [vmem:[#allocation2 + $0x1c] sm:$0xf]
      %v1279 = vld [vmem:[#allocation2 + $0x20] sm:$0xf]
      %v1280 = vld [vmem:[#allocation2 + $0x24] sm:$0xf]
      %v1281 = vld [vmem:[#allocation2 + $0x28] sm:$0xf]
      %v1282 = vld [vmem:[#allocation2 + $0x2c] sm:$0xf]
      %v1283 = vld [vmem:[#allocation2 + $0x30] sm:$0xf]
      %v1284 = vld [vmem:[#allocation2 + $0x34] sm:$0xf]
      %v1285 = vld [vmem:[#allocation2 + $0x38] sm:$0xf]
      %v1286 = vld [vmem:[#allocation2 + $0x3c] sm:$0xf]
      %v1287 = vld [vmem:[#allocation2 + $0x40] sm:$0xf]
      %v1288 = vld [vmem:[#allocation2 + $0x44] sm:$0xf]
      %v1289 = vld [vmem:[#allocation2 + $0x48] sm:$0xf]
      %v1290 = vld [vmem:[#allocation2 + $0x4c] sm:$0xf]
      %v1291 = vld [vmem:[#allocation2 + $0x50] sm:$0xf]
      %v1292 = vld [vmem:[#allocation2 + $0x54] sm:$0xf]
      %v1293 = vld [vmem:[#allocation2 + $0x58] sm:$0xf]
      %v1294 = vld [vmem:[#allocation2 + $0x5c] sm:$0xf]
      %v1295 = vld [vmem:[#allocation2 + $0x60] sm:$0xf]
      %v1296 = vld [vmem:[#allocation2 + $0x64] sm:$0xf]
      %v1297 = vld [vmem:[#allocation2 + $0x68] sm:$0xf]
      %v1298 = vld [vmem:[#allocation2 + $0x6c] sm:$0xf]
      %v1299 = vld [vmem:[#allocation2 + $0x70] sm:$0xf]
      %v1300 = vld [vmem:[#allocation2 + $0x74] sm:$0xf]
      %v1301 = vld [vmem:[#allocation2 + $0x78] sm:$0xf]
      %v1302 = vld [vmem:[#allocation2 + $0x7c] sm:$0xf]
      %vm1303 = vcmp.ge.s32.totalorder %v1239, 1
      %vm1304 = vcmp.ge.s32.totalorder %v1240, 1
      %vm1305 = vcmp.ge.s32.totalorder %v1241, 1
      %vm1306 = vcmp.ge.s32.totalorder %v1242, 1
      %vm1307 = vcmp.ge.s32.totalorder %v1243, 1
      %vm1308 = vcmp.ge.s32.totalorder %v1244, 1
      %vm1309 = vcmp.ge.s32.totalorder %v1245, 1
      %vm1310 = vcmp.ge.s32.totalorder %v1246, 1
      %vm1311 = vcmp.ge.s32.totalorder %v1247, 1
      %vm1312 = vcmp.ge.s32.totalorder %v1248, 1
      %vm1313 = vcmp.ge.s32.totalorder %v1249, 1
      %vm1314 = vcmp.ge.s32.totalorder %v1250, 1
      %vm1315 = vcmp.ge.s32.totalorder %v1251, 1
      %vm1316 = vcmp.ge.s32.totalorder %v1252, 1
      %vm1317 = vcmp.ge.s32.totalorder %v1253, 1
      %vm1318 = vcmp.ge.s32.totalorder %v1254, 1
      %vm1319 = vcmp.ge.s32.totalorder %v1255, 1
      %vm1320 = vcmp.ge.s32.totalorder %v1256, 1
      %vm1321 = vcmp.ge.s32.totalorder %v1257, 1
      %vm1322 = vcmp.ge.s32.totalorder %v1258, 1
      %vm1323 = vcmp.ge.s32.totalorder %v1259, 1
      %vm1324 = vcmp.ge.s32.totalorder %v1260, 1
      %vm1325 = vcmp.ge.s32.totalorder %v1261, 1
      %vm1326 = vcmp.ge.s32.totalorder %v1262, 1
      %vm1327 = vcmp.ge.s32.totalorder %v1263, 1
      %vm1328 = vcmp.ge.s32.totalorder %v1264, 1
      %vm1329 = vcmp.ge.s32.totalorder %v1265, 1
      %vm1330 = vcmp.ge.s32.totalorder %v1266, 1
      %vm1331 = vcmp.ge.s32.totalorder %v1267, 1
      %vm1332 = vcmp.ge.s32.totalorder %v1268, 1
      %vm1333 = vcmp.ge.s32.totalorder %v1269, 1
      %vm1334 = vcmp.ge.s32.totalorder %v1270, 1
      %v1335 = vsel %vm1303, 1, 0
      %v1336 = vsel %vm1304, 1, 0
      %v1337 = vsel %vm1305, 1, 0
      %v1338 = vsel %vm1306, 1, 0
      %v1339 = vsel %vm1307, 1, 0
      %v1340 = vsel %vm1308, 1, 0
      %v1341 = vsel %vm1309, 1, 0
      %v1342 = vsel %vm1310, 1, 0
      %v1343 = vsel %vm1311, 1, 0
      %v1344 = vsel %vm1312, 1, 0
      %v1345 = vsel %vm1313, 1, 0
      %v1346 = vsel %vm1314, 1, 0
      %v1347 = vsel %vm1315, 1, 0
      %v1348 = vsel %vm1316, 1, 0
      %v1349 = vsel %vm1317, 1, 0
      %v1350 = vsel %vm1318, 1, 0
      %v1351 = vsel %vm1319, 1, 0
      %v1352 = vsel %vm1320, 1, 0
      %v1353 = vsel %vm1321, 1, 0
      %v1354 = vsel %vm1322, 1, 0
      %v1355 = vsel %vm1323, 1, 0
      %v1356 = vsel %vm1324, 1, 0
      %v1357 = vsel %vm1325, 1, 0
      %v1358 = vsel %vm1326, 1, 0
      %v1359 = vsel %vm1327, 1, 0
      %v1360 = vsel %vm1328, 1, 0
      %v1361 = vsel %vm1329, 1, 0
      %v1362 = vsel %vm1330, 1, 0
      %v1363 = vsel %vm1331, 1, 0
      %v1364 = vsel %vm1332, 1, 0
      %v1365 = vsel %vm1333, 1, 0
      %v1366 = vsel %vm1334, 1, 0
      %vm1367 = vcmp.eq.s32.totalorder %v1335, 1
      %vm1368 = vcmp.eq.s32.totalorder %v1336, 1
      %vm1369 = vcmp.eq.s32.totalorder %v1337, 1
      %vm1370 = vcmp.eq.s32.totalorder %v1338, 1
      %vm1371 = vcmp.eq.s32.totalorder %v1339, 1
      %vm1372 = vcmp.eq.s32.totalorder %v1340, 1
      %vm1373 = vcmp.eq.s32.totalorder %v1341, 1
      %vm1374 = vcmp.eq.s32.totalorder %v1342, 1
      %vm1375 = vcmp.eq.s32.totalorder %v1343, 1
      %vm1376 = vcmp.eq.s32.totalorder %v1344, 1
      %vm1377 = vcmp.eq.s32.totalorder %v1345, 1
      %vm1378 = vcmp.eq.s32.totalorder %v1346, 1
      %vm1379 = vcmp.eq.s32.totalorder %v1347, 1
      %vm1380 = vcmp.eq.s32.totalorder %v1348, 1
      %vm1381 = vcmp.eq.s32.totalorder %v1349, 1
      %vm1382 = vcmp.eq.s32.totalorder %v1350, 1
      %vm1383 = vcmp.eq.s32.totalorder %v1351, 1
      %vm1384 = vcmp.eq.s32.totalorder %v1352, 1
      %vm1385 = vcmp.eq.s32.totalorder %v1353, 1
      %vm1386 = vcmp.eq.s32.totalorder %v1354, 1
      %vm1387 = vcmp.eq.s32.totalorder %v1355, 1
      %vm1388 = vcmp.eq.s32.totalorder %v1356, 1
      %vm1389 = vcmp.eq.s32.totalorder %v1357, 1
      %vm1390 = vcmp.eq.s32.totalorder %v1358, 1
      %vm1391 = vcmp.eq.s32.totalorder %v1359, 1
      %vm1392 = vcmp.eq.s32.totalorder %v1360, 1
      %vm1393 = vcmp.eq.s32.totalorder %v1361, 1
      %vm1394 = vcmp.eq.s32.totalorder %v1362, 1
      %vm1395 = vcmp.eq.s32.totalorder %v1363, 1
      %vm1396 = vcmp.eq.s32.totalorder %v1364, 1
      %vm1397 = vcmp.eq.s32.totalorder %v1365, 1
      %vm1398 = vcmp.eq.s32.totalorder %v1366, 1
      %vm1399 = vmpackc.low %vm1367, %vm1367
      %vm1400 = vmpackc.low %vm1368, %vm1368
      %vm1401 = vmpackc.low %vm1369, %vm1369
      %vm1402 = vmpackc.low %vm1370, %vm1370
      %vm1403 = vmpackc.low %vm1371, %vm1371
      %vm1404 = vmpackc.low %vm1372, %vm1372
      %vm1405 = vmpackc.low %vm1373, %vm1373
      %vm1406 = vmpackc.low %vm1374, %vm1374
      %vm1407 = vmpackc.low %vm1375, %vm1375
      %vm1408 = vmpackc.low %vm1376, %vm1376
      %vm1409 = vmpackc.low %vm1377, %vm1377
      %vm1410 = vmpackc.low %vm1378, %vm1378
      %vm1411 = vmpackc.low %vm1379, %vm1379
      %vm1412 = vmpackc.low %vm1380, %vm1380
      %vm1413 = vmpackc.low %vm1381, %vm1381
      %vm1414 = vmpackc.low %vm1382, %vm1382
      %vm1415 = vmpackc.low %vm1383, %vm1383
      %vm1416 = vmpackc.low %vm1384, %vm1384
      %vm1417 = vmpackc.low %vm1385, %vm1385
      %vm1418 = vmpackc.low %vm1386, %vm1386
      %vm1419 = vmpackc.low %vm1387, %vm1387
      %vm1420 = vmpackc.low %vm1388, %vm1388
      %vm1421 = vmpackc.low %vm1389, %vm1389
      %vm1422 = vmpackc.low %vm1390, %vm1390
      %vm1423 = vmpackc.low %vm1391, %vm1391
      %vm1424 = vmpackc.low %vm1392, %vm1392
      %vm1425 = vmpackc.low %vm1393, %vm1393
      %vm1426 = vmpackc.low %vm1394, %vm1394
      %vm1427 = vmpackc.low %vm1395, %vm1395
      %vm1428 = vmpackc.low %vm1396, %vm1396
      %vm1429 = vmpackc.low %vm1397, %vm1397
      %vm1430 = vmpackc.low %vm1398, %vm1398
      %v1431 = vsel %vm1399, %v1271, 0
      %v1432 = vsel %vm1400, %v1272, 0
      %v1433 = vsel %vm1401, %v1273, 0
      %v1434 = vsel %vm1402, %v1274, 0
      %v1435 = vsel %vm1403, %v1275, 0
      %v1436 = vsel %vm1404, %v1276, 0
      %v1437 = vsel %vm1405, %v1277, 0
      %v1438 = vsel %vm1406, %v1278, 0
      %v1439 = vsel %vm1407, %v1279, 0
      %v1440 = vsel %vm1408, %v1280, 0
      %v1441 = vsel %vm1409, %v1281, 0
      %v1442 = vsel %vm1410, %v1282, 0
      %v1443 = vsel %vm1411, %v1283, 0
      %v1444 = vsel %vm1412, %v1284, 0
      %v1445 = vsel %vm1413, %v1285, 0
      %v1446 = vsel %vm1414, %v1286, 0
      %v1447 = vsel %vm1415, %v1287, 0
      %v1448 = vsel %vm1416, %v1288, 0
      %v1449 = vsel %vm1417, %v1289, 0
      %v1450 = vsel %vm1418, %v1290, 0
      %v1451 = vsel %vm1419, %v1291, 0
      %v1452 = vsel %vm1420, %v1292, 0
      %v1453 = vsel %vm1421, %v1293, 0
      %v1454 = vsel %vm1422, %v1294, 0
      %v1455 = vsel %vm1423, %v1295, 0
      %v1456 = vsel %vm1424, %v1296, 0
      %v1457 = vsel %vm1425, %v1297, 0
      %v1458 = vsel %vm1426, %v1298, 0
      %v1459 = vsel %vm1427, %v1299, 0
      %v1460 = vsel %vm1428, %v1300, 0
      %v1461 = vsel %vm1429, %v1301, 0
      %v1462 = vsel %vm1430, %v1302, 0
      %v1463 = vld [vmem:[%s3] sm:$0xf]
      %v1464 = vld [vmem:[%s3 + $0x4] sm:$0xf]
      %v1465 = vld [vmem:[%s3 + $0x8] sm:$0xf]
      %v1466 = vld [vmem:[%s3 + $0xc] sm:$0xf]
      %v1467 = vld [vmem:[#allocation2 + $0x80] sm:$0x1]
      %s1468 = scalar_lea.vmem %s3, 16
      %v1469 = vld [vmem:[%s1468] sm:$0xf]
      %v1470 = vld [vmem:[%s1468 + $0x4] sm:$0xf]
      %v1471 = vld [vmem:[%s1468 + $0x8] sm:$0xf]
      %v1472 = vld [vmem:[%s1468 + $0xc] sm:$0xf]
      %v1506 = vunpack.c.l.b16 %v1271
      %v1507 = vunpack.c.l.b16 %v1272
      %v1508 = vunpack.c.l.b16 %v1273
      %v1509 = vunpack.c.l.b16 %v1274
      %v1510 = vunpack.c.l.b16 %v1275
      %v1511 = vunpack.c.l.b16 %v1276
      %v1512 = vunpack.c.l.b16 %v1277
      %v1513 = vunpack.c.l.b16 %v1278
      %v1514 = vunpack.c.l.b16 %v1279
      %v1515 = vunpack.c.l.b16 %v1280
      %v1516 = vunpack.c.l.b16 %v1281
      %v1517 = vunpack.c.l.b16 %v1282
      %v1518 = vunpack.c.l.b16 %v1283
      %v1519 = vunpack.c.l.b16 %v1284
      %v1520 = vunpack.c.l.b16 %v1285
      %v1521 = vunpack.c.l.b16 %v1286
      %v1522 = vunpack.c.l.b16 %v1287
      %v1523 = vunpack.c.l.b16 %v1288
      %v1524 = vunpack.c.l.b16 %v1289
      %v1525 = vunpack.c.l.b16 %v1290
      %v1526 = vunpack.c.l.b16 %v1291
      %v1527 = vunpack.c.l.b16 %v1292
      %v1528 = vunpack.c.l.b16 %v1293
      %v1529 = vunpack.c.l.b16 %v1294
      %v1530 = vunpack.c.l.b16 %v1295
      %v1531 = vunpack.c.l.b16 %v1296
      %v1532 = vunpack.c.l.b16 %v1297
      %v1533 = vunpack.c.l.b16 %v1298
      %v1534 = vunpack.c.l.b16 %v1299
      %v1535 = vunpack.c.l.b16 %v1300
      %v1536 = vunpack.c.l.b16 %v1301
      %v1537 = vunpack.c.l.b16 %v1302
      %v1538 = vunpack.c.l.b16 %v1467
      %v1539 = vpack.c.b16 %v1507, %v1506
      %v1540 = vpack.c.b16 %v1509, %v1508
      %v1541 = vpack.c.b16 %v1511, %v1510
      %v1542 = vpack.c.b16 %v1513, %v1512
      %v1543 = vpack.c.b16 %v1515, %v1514
      %v1544 = vpack.c.b16 %v1517, %v1516
      %v1545 = vpack.c.b16 %v1519, %v1518
      %v1546 = vpack.c.b16 %v1521, %v1520
      %v1547 = vpack.c.b16 %v1523, %v1522
      %v1548 = vpack.c.b16 %v1525, %v1524
      %v1549 = vpack.c.b16 %v1527, %v1526
      %v1550 = vpack.c.b16 %v1529, %v1528
      %v1551 = vpack.c.b16 %v1531, %v1530
      %v1552 = vpack.c.b16 %v1533, %v1532
      %v1553 = vpack.c.b16 %v1535, %v1534
      %v1554 = vpack.c.b16 %v1537, %v1536
      %v1555 = vpack.c.b16 %v1538, %v1538
      %vm1556 = vsmask.f32 7424
      %v1558 = vshrl.u32 %v1539, 16
      %v1560 = vshll.u32 %v1539, 16
      %v1562 = vrot.slane %v1560, 1
      %v1563 = vor.u32 %v1558, %v1562
      %v1565 = vshll.u32 %v1540, 16
      %v1567 = vrot.slane %v1565, 1
      %v1568 = vsel %vm1556, %v1563, %v1567
      %v1569 = vshrl.u32 %v1540, 16
      %v1571 = vor.u32 %v1569, %v1567
      %v1573 = vshll.u32 %v1541, 16
      %v1575 = vrot.slane %v1573, 1
      %v1576 = vsel %vm1556, %v1571, %v1575
      %v1577 = vshrl.u32 %v1541, 16
      %v1579 = vor.u32 %v1577, %v1575
      %v1581 = vshll.u32 %v1542, 16
      %v1583 = vrot.slane %v1581, 1
      %v1584 = vsel %vm1556, %v1579, %v1583
      %v1585 = vshrl.u32 %v1542, 16
      %v1587 = vor.u32 %v1585, %v1583
      %v1589 = vshll.u32 %v1543, 16
      %v1591 = vrot.slane %v1589, 1
      %v1592 = vsel %vm1556, %v1587, %v1591
      %v1593 = vshrl.u32 %v1543, 16
      %v1595 = vor.u32 %v1593, %v1591
      %v1597 = vshll.u32 %v1544, 16
      %v1599 = vrot.slane %v1597, 1
      %v1600 = vsel %vm1556, %v1595, %v1599
      %v1601 = vshrl.u32 %v1544, 16
      %v1603 = vor.u32 %v1601, %v1599
      %v1605 = vshll.u32 %v1545, 16
      %v1607 = vrot.slane %v1605, 1
      %v1608 = vsel %vm1556, %v1603, %v1607
      %v1609 = vshrl.u32 %v1545, 16
      %v1611 = vor.u32 %v1609, %v1607
      %v1613 = vshll.u32 %v1546, 16
      %v1615 = vrot.slane %v1613, 1
      %v1616 = vsel %vm1556, %v1611, %v1615
      %v1617 = vshrl.u32 %v1546, 16
      %v1619 = vor.u32 %v1617, %v1615
      %v1621 = vshll.u32 %v1547, 16
      %v1623 = vrot.slane %v1621, 1
      %v1624 = vsel %vm1556, %v1619, %v1623
      %v1625 = vshrl.u32 %v1547, 16
      %v1627 = vor.u32 %v1625, %v1623
      %v1629 = vshll.u32 %v1548, 16
      %v1631 = vrot.slane %v1629, 1
      %v1632 = vsel %vm1556, %v1627, %v1631
      %v1633 = vshrl.u32 %v1548, 16
      %v1635 = vor.u32 %v1633, %v1631
      %v1637 = vshll.u32 %v1549, 16
      %v1639 = vrot.slane %v1637, 1
      %v1640 = vsel %vm1556, %v1635, %v1639
      %v1641 = vshrl.u32 %v1549, 16
      %v1643 = vor.u32 %v1641, %v1639
      %v1645 = vshll.u32 %v1550, 16
      %v1647 = vrot.slane %v1645, 1
      %v1648 = vsel %vm1556, %v1643, %v1647
      %v1649 = vshrl.u32 %v1550, 16
      %v1651 = vor.u32 %v1649, %v1647
      %v1653 = vshll.u32 %v1551, 16
      %v1655 = vrot.slane %v1653, 1
      %v1656 = vsel %vm1556, %v1651, %v1655
      %v1657 = vshrl.u32 %v1551, 16
      %v1659 = vor.u32 %v1657, %v1655
      %v1661 = vshll.u32 %v1552, 16
      %v1663 = vrot.slane %v1661, 1
      %v1664 = vsel %vm1556, %v1659, %v1663
      %v1665 = vshrl.u32 %v1552, 16
      %v1667 = vor.u32 %v1665, %v1663
      %v1669 = vshll.u32 %v1553, 16
      %v1671 = vrot.slane %v1669, 1
      %v1672 = vsel %vm1556, %v1667, %v1671
      %v1673 = vshrl.u32 %v1553, 16
      %v1675 = vor.u32 %v1673, %v1671
      %v1677 = vshll.u32 %v1554, 16
      %v1679 = vrot.slane %v1677, 1
      %v1680 = vsel %vm1556, %v1675, %v1679
      %v1681 = vshrl.u32 %v1554, 16
      %v1683 = vor.u32 %v1681, %v1679
      %v1685 = vshll.u32 %v1555, 16
      %v1687 = vrot.slane %v1685, 1
      %v1688 = vsel %vm1556, %v1683, %v1687
      %v1693 = vunpack.c.l.b16 %v1469
      %v1694 = vunpack.c.l.b16 %v1470
      %v1695 = vunpack.c.l.b16 %v1471
      %v1696 = vunpack.c.l.b16 %v1472
      %v1697 = vpack.c.b16 %v1694, %v1693
      %v1698 = vpack.c.b16 %v1696, %v1695
      %vm1701 = vcmask 261120
      %v1703 = vsel %vm1701, %v1568, 0
      %v1706 = vsel %vm1701, %v1576, 0
      %v1709 = vsel %vm1701, %v1584, 0
      %v1712 = vsel %vm1701, %v1592, 0
      %v1715 = vsel %vm1701, %v1600, 0
      %v1718 = vsel %vm1701, %v1608, 0
      %v1721 = vsel %vm1701, %v1616, 0
      %v1724 = vsel %vm1701, %v1624, 0
      %v1727 = vsel %vm1701, %v1632, 0
      %v1730 = vsel %vm1701, %v1640, 0
      %v1733 = vsel %vm1701, %v1648, 0
      %v1736 = vsel %vm1701, %v1656, 0
      %v1739 = vsel %vm1701, %v1664, 0
      %v1742 = vsel %vm1701, %v1672, 0
      %v1745 = vsel %vm1701, %v1680, 0
      %v1748 = vsel %vm1701, %v1688, 0
      %1750 = vmatprep.subr.bf16.mxu0 0
      %1751 = vmatpush1.bf16.msra.mxu0 %v1697
      %1752 = vmatprep.subr.bf16.mxu0 0
      %1753 = vmatpush1.bf16.msra.mxu0 %v1698
      %1754 = vmatprep.subr.bf16.mxu0 0
      %1755 = vmatpush1.bf16.msra.mxu0 0
      %1756 = vmatprep.subr.bf16.mxu0 0
      %1757 = vmatpush1.bf16.msra.mxu0 0
      %1758 = vmatprep.subr.bf16.mxu0 0
      %1759 = vmatpush1.bf16.msra.mxu0 0
      %1760 = vmatprep.subr.bf16.mxu0 0
      %1761 = vmatpush1.bf16.msra.mxu0 0
      %1762 = vmatprep.subr.bf16.mxu0 0
      %1763 = vmatpush1.bf16.msra.mxu0 0
      %1764 = vmatprep.subr.bf16.mxu0 0
      %1765 = vmatpush1.bf16.msra.mxu0 0
      %1766 = vmatprep.subr.bf16.mxu0 0
      %1767 = vmatpush1.bf16.msra.mxu0 0
      %1768 = vmatprep.subr.bf16.mxu0 0
      %1769 = vmatpush1.bf16.msra.mxu0 0
      %1770 = vmatprep.subr.bf16.mxu0 0
      %1771 = vmatpush1.bf16.msra.mxu0 0
      %1772 = vmatprep.subr.bf16.mxu0 0
      %1773 = vmatpush1.bf16.msra.mxu0 0
      %1774 = vmatprep.subr.bf16.mxu0 0
      %1775 = vmatpush1.bf16.msra.mxu0 0
      %1776 = vmatprep.subr.bf16.mxu0 0
      %1777 = vmatpush1.bf16.msra.mxu0 0
      %1778 = vmatprep.subr.bf16.mxu0 0
      %1779 = vmatpush1.bf16.msra.mxu0 0
      %1780 = vmatprep.subr.bf16.mxu0 0
      %1781 = vmatpush1.bf16.msra.mxu0 0
      %1782 = vmatprep.mubr.bf16.mxu0 0
      %1783 = vmatmul.mubr.bf16.gmra.mrb[0].mxu0 %v1703
      %v1784 = vpop.f32.mrb[0].mxu0
      %v1785 = vadd.f32 0.0, %v1784
      %v1786 = vpop.f32.mrb[0].mxu0
      %v1787 = vpop.f32.mrb[0].mxu0
      %v1788 = vadd.f32 0.0, %v1787
      %v1789 = vpop.f32.mrb[0].mxu0
      %1790 = vmatprep.mubr.bf16.mxu0 0
      %1791 = vmatmul.mubr.bf16.gmra.mrb[0].mxu0 %v1706
      %v1792 = vpop.f32.mrb[0].mxu0
      %v1793 = vadd.f32 0.0, %v1792
      %v1794 = vpop.f32.mrb[0].mxu0
      %v1795 = vpop.f32.mrb[0].mxu0
      %v1796 = vadd.f32 0.0, %v1795
      %v1797 = vpop.f32.mrb[0].mxu0
      %1798 = vmatprep.mubr.bf16.mxu0 0
      %1799 = vmatmul.mubr.bf16.gmra.mrb[0].mxu0 %v1709
      %v1800 = vpop.f32.mrb[0].mxu0
      %v1801 = vadd.f32 0.0, %v1800
      %v1802 = vpop.f32.mrb[0].mxu0
      %v1803 = vpop.f32.mrb[0].mxu0
      %v1804 = vadd.f32 0.0, %v1803
      %v1805 = vpop.f32.mrb[0].mxu0
      %1806 = vmatprep.mubr.bf16.mxu0 0
      %1807 = vmatmul.mubr.bf16.gmra.mrb[0].mxu0 %v1712
      %v1808 = vpop.f32.mrb[0].mxu0
      %v1809 = vadd.f32 0.0, %v1808
      %v1810 = vpop.f32.mrb[0].mxu0
      %v1811 = vpop.f32.mrb[0].mxu0
      %v1812 = vadd.f32 0.0, %v1811
      %v1813 = vpop.f32.mrb[0].mxu0
      %1814 = vmatprep.mubr.bf16.mxu0 0
      %1815 = vmatmul.mubr.bf16.gmra.mrb[0].mxu0 %v1715
      %v1816 = vpop.f32.mrb[0].mxu0
      %v1817 = vadd.f32 0.0, %v1816
      %v1818 = vpop.f32.mrb[0].mxu0
      %v1819 = vpop.f32.mrb[0].mxu0
      %v1820 = vadd.f32 0.0, %v1819
      %v1821 = vpop.f32.mrb[0].mxu0
      %1822 = vmatprep.mubr.bf16.mxu0 0
      %1823 = vmatmul.mubr.bf16.gmra.mrb[0].mxu0 %v1718
      %v1824 = vpop.f32.mrb[0].mxu0
      %v1825 = vadd.f32 0.0, %v1824
      %v1826 = vpop.f32.mrb[0].mxu0
      %v1827 = vpop.f32.mrb[0].mxu0
      %v1828 = vadd.f32 0.0, %v1827
      %v1829 = vpop.f32.mrb[0].mxu0
      %1830 = vmatprep.mubr.bf16.mxu0 0
      %1831 = vmatmul.mubr.bf16.gmra.mrb[0].mxu0 %v1721
      %v1832 = vpop.f32.mrb[0].mxu0
      %v1833 = vadd.f32 0.0, %v1832
      %v1834 = vpop.f32.mrb[0].mxu0
      %v1835 = vpop.f32.mrb[0].mxu0
      %v1836 = vadd.f32 0.0, %v1835
      %v1837 = vpop.f32.mrb[0].mxu0
      %1838 = vmatprep.mubr.bf16.mxu0 0
      %1839 = vmatmul.mubr.bf16.gmra.mrb[0].mxu0 %v1724
      %v1840 = vpop.f32.mrb[0].mxu0
      %v1841 = vadd.f32 0.0, %v1840
      %v1842 = vpop.f32.mrb[0].mxu0
      %v1843 = vpop.f32.mrb[0].mxu0
      %v1844 = vadd.f32 0.0, %v1843
      %v1845 = vpop.f32.mrb[0].mxu0
      %1846 = vmatprep.mubr.bf16.mxu0 0
      %1847 = vmatmul.mubr.bf16.gmra.mrb[0].mxu0 %v1727
      %v1848 = vpop.f32.mrb[0].mxu0
      %v1849 = vadd.f32 0.0, %v1848
      %v1850 = vpop.f32.mrb[0].mxu0
      %v1851 = vpop.f32.mrb[0].mxu0
      %v1852 = vadd.f32 0.0, %v1851
      %v1853 = vpop.f32.mrb[0].mxu0
      %1854 = vmatprep.mubr.bf16.mxu0 0
      %1855 = vmatmul.mubr.bf16.gmra.mrb[0].mxu0 %v1730
      %v1856 = vpop.f32.mrb[0].mxu0
      %v1857 = vadd.f32 0.0, %v1856
      %v1858 = vpop.f32.mrb[0].mxu0
      %v1859 = vpop.f32.mrb[0].mxu0
      %v1860 = vadd.f32 0.0, %v1859
      %v1861 = vpop.f32.mrb[0].mxu0
      %1862 = vmatprep.mubr.bf16.mxu0 0
      %1863 = vmatmul.mubr.bf16.gmra.mrb[0].mxu0 %v1733
      %v1864 = vpop.f32.mrb[0].mxu0
      %v1865 = vadd.f32 0.0, %v1864
      %v1866 = vpop.f32.mrb[0].mxu0
      %v1867 = vpop.f32.mrb[0].mxu0
      %v1868 = vadd.f32 0.0, %v1867
      %v1869 = vpop.f32.mrb[0].mxu0
      %1870 = vmatprep.mubr.bf16.mxu0 0
      %1871 = vmatmul.mubr.bf16.gmra.mrb[0].mxu0 %v1736
      %v1872 = vpop.f32.mrb[0].mxu0
      %v1873 = vadd.f32 0.0, %v1872
      %v1874 = vpop.f32.mrb[0].mxu0
      %v1875 = vpop.f32.mrb[0].mxu0
      %v1876 = vadd.f32 0.0, %v1875
      %v1877 = vpop.f32.mrb[0].mxu0
      %1878 = vmatprep.mubr.bf16.mxu0 0
      %1879 = vmatmul.mubr.bf16.gmra.mrb[0].mxu0 %v1739
      %v1880 = vpop.f32.mrb[0].mxu0
      %v1881 = vadd.f32 0.0, %v1880
      %v1882 = vpop.f32.mrb[0].mxu0
      %v1883 = vpop.f32.mrb[0].mxu0
      %v1884 = vadd.f32 0.0, %v1883
      %v1885 = vpop.f32.mrb[0].mxu0
      %1886 = vmatprep.mubr.bf16.mxu0 0
      %1887 = vmatmul.mubr.bf16.gmra.mrb[0].mxu0 %v1742
      %v1888 = vpop.f32.mrb[0].mxu0
      %v1889 = vadd.f32 0.0, %v1888
      %v1890 = vpop.f32.mrb[0].mxu0
      %v1891 = vpop.f32.mrb[0].mxu0
      %v1892 = vadd.f32 0.0, %v1891
      %v1893 = vpop.f32.mrb[0].mxu0
      %1894 = vmatprep.mubr.bf16.mxu0 0
      %1895 = vmatmul.mubr.bf16.gmra.mrb[0].mxu0 %v1745
      %v1896 = vpop.f32.mrb[0].mxu0
      %v1897 = vadd.f32 0.0, %v1896
      %v1898 = vpop.f32.mrb[0].mxu0
      %v1899 = vpop.f32.mrb[0].mxu0
      %v1900 = vadd.f32 0.0, %v1899
      %v1901 = vpop.f32.mrb[0].mxu0
      %1902 = vmatprep.mubr.bf16.mxu0 0
      %1903 = vmatmul.mubr.bf16.gmra.mrb[0].mxu0 %v1748
      %v1904 = vpop.f32.mrb[0].mxu0
      %v1905 = vadd.f32 0.0, %v1904
      %v1906 = vpop.f32.mrb[0].mxu0
      %v1907 = vpop.f32.mrb[0].mxu0
      %v1908 = vadd.f32 0.0, %v1907
      %v1909 = vpop.f32.mrb[0].mxu0
      %1910 = vdwg.mxu0
      %v1943 = vunpack.c.l.b16 %v1431
      %v1944 = vunpack.c.l.b16 %v1432
      %v1945 = vunpack.c.l.b16 %v1433
      %v1946 = vunpack.c.l.b16 %v1434
      %v1947 = vunpack.c.l.b16 %v1435
      %v1948 = vunpack.c.l.b16 %v1436
      %v1949 = vunpack.c.l.b16 %v1437
      %v1950 = vunpack.c.l.b16 %v1438
      %v1951 = vunpack.c.l.b16 %v1439
      %v1952 = vunpack.c.l.b16 %v1440
      %v1953 = vunpack.c.l.b16 %v1441
      %v1954 = vunpack.c.l.b16 %v1442
      %v1955 = vunpack.c.l.b16 %v1443
      %v1956 = vunpack.c.l.b16 %v1444
      %v1957 = vunpack.c.l.b16 %v1445
      %v1958 = vunpack.c.l.b16 %v1446
      %v1959 = vunpack.c.l.b16 %v1447
      %v1960 = vunpack.c.l.b16 %v1448
      %v1961 = vunpack.c.l.b16 %v1449
      %v1962 = vunpack.c.l.b16 %v1450
      %v1963 = vunpack.c.l.b16 %v1451
      %v1964 = vunpack.c.l.b16 %v1452
      %v1965 = vunpack.c.l.b16 %v1453
      %v1966 = vunpack.c.l.b16 %v1454
      %v1967 = vunpack.c.l.b16 %v1455
      %v1968 = vunpack.c.l.b16 %v1456
      %v1969 = vunpack.c.l.b16 %v1457
      %v1970 = vunpack.c.l.b16 %v1458
      %v1971 = vunpack.c.l.b16 %v1459
      %v1972 = vunpack.c.l.b16 %v1460
      %v1973 = vunpack.c.l.b16 %v1461
      %v1974 = vunpack.c.l.b16 %v1462
      %v1975 = vpack.c.b16 %v1944, %v1943
      %v1976 = vpack.c.b16 %v1946, %v1945
      %v1977 = vpack.c.b16 %v1948, %v1947
      %v1978 = vpack.c.b16 %v1950, %v1949
      %v1979 = vpack.c.b16 %v1952, %v1951
      %v1980 = vpack.c.b16 %v1954, %v1953
      %v1981 = vpack.c.b16 %v1956, %v1955
      %v1982 = vpack.c.b16 %v1958, %v1957
      %v1983 = vpack.c.b16 %v1960, %v1959
      %v1984 = vpack.c.b16 %v1962, %v1961
      %v1985 = vpack.c.b16 %v1964, %v1963
      %v1986 = vpack.c.b16 %v1966, %v1965
      %v1987 = vpack.c.b16 %v1968, %v1967
      %v1988 = vpack.c.b16 %v1970, %v1969
      %v1989 = vpack.c.b16 %v1972, %v1971
      %v1990 = vpack.c.b16 %v1974, %v1973
      %v1995 = vunpack.c.l.b16 %v1463
      %v1996 = vunpack.c.l.b16 %v1464
      %v1997 = vunpack.c.l.b16 %v1465
      %v1998 = vunpack.c.l.b16 %v1466
      %v1999 = vpack.c.b16 %v1996, %v1995
      %v2000 = vpack.c.b16 %v1998, %v1997
      %v2004 = vsel %vm1701, %v1975, 0
      %v2007 = vsel %vm1701, %v1976, 0
      %v2010 = vsel %vm1701, %v1977, 0
      %v2013 = vsel %vm1701, %v1978, 0
      %v2016 = vsel %vm1701, %v1979, 0
      %v2019 = vsel %vm1701, %v1980, 0
      %v2022 = vsel %vm1701, %v1981, 0
      %v2025 = vsel %vm1701, %v1982, 0
      %v2028 = vsel %vm1701, %v1983, 0
      %v2031 = vsel %vm1701, %v1984, 0
      %v2034 = vsel %vm1701, %v1985, 0
      %v2037 = vsel %vm1701, %v1986, 0
      %v2040 = vsel %vm1701, %v1987, 0
      %v2043 = vsel %vm1701, %v1988, 0
      %v2046 = vsel %vm1701, %v1989, 0
      %v2049 = vsel %vm1701, %v1990, 0
      %2051 = vmatprep.subr.bf16.mxu0 0
      %2052 = vmatpush1.bf16.msra.mxu0 %v1999
      %2053 = vmatprep.subr.bf16.mxu0 0
      %2054 = vmatpush1.bf16.msra.mxu0 %v2000
      %2055 = vmatprep.subr.bf16.mxu0 0
      %2056 = vmatpush1.bf16.msra.mxu0 0
      %2057 = vmatprep.subr.bf16.mxu0 0
      %2058 = vmatpush1.bf16.msra.mxu0 0
      %2059 = vmatprep.subr.bf16.mxu0 0
      %2060 = vmatpush1.bf16.msra.mxu0 0
      %2061 = vmatprep.subr.bf16.mxu0 0
      %2062 = vmatpush1.bf16.msra.mxu0 0
      %2063 = vmatprep.subr.bf16.mxu0 0
      %2064 = vmatpush1.bf16.msra.mxu0 0
      %2065 = vmatprep.subr.bf16.mxu0 0
      %2066 = vmatpush1.bf16.msra.mxu0 0
      %2067 = vmatprep.subr.bf16.mxu0 0
      %2068 = vmatpush1.bf16.msra.mxu0 0
      %2069 = vmatprep.subr.bf16.mxu0 0
      %2070 = vmatpush1.bf16.msra.mxu0 0
      %2071 = vmatprep.subr.bf16.mxu0 0
      %2072 = vmatpush1.bf16.msra.mxu0 0
      %2073 = vmatprep.subr.bf16.mxu0 0
      %2074 = vmatpush1.bf16.msra.mxu0 0
      %2075 = vmatprep.subr.bf16.mxu0 0
      %2076 = vmatpush1.bf16.msra.mxu0 0
      %2077 = vmatprep.subr.bf16.mxu0 0
      %2078 = vmatpush1.bf16.msra.mxu0 0
      %2079 = vmatprep.subr.bf16.mxu0 0
      %2080 = vmatpush1.bf16.msra.mxu0 0
      %2081 = vmatprep.subr.bf16.mxu0 0
      %2082 = vmatpush1.bf16.msra.mxu0 0
      %2083 = vmatprep.mubr.bf16.mxu0 0
      %2084 = vmatmul.mubr.bf16.gmra.mrb[0].mxu0 %v2004
      %v2085 = vpop.f32.mrb[0].mxu0
      %v2086 = vadd.f32 %v1785, %v2085
      %v2087 = vpop.f32.mrb[0].mxu0
      %v2088 = vpop.f32.mrb[0].mxu0
      %v2089 = vadd.f32 %v1788, %v2088
      %v2090 = vpop.f32.mrb[0].mxu0
      %2091 = vmatprep.mubr.bf16.mxu0 0
      %2092 = vmatmul.mubr.bf16.gmra.mrb[0].mxu0 %v2007
      %v2093 = vpop.f32.mrb[0].mxu0
      %v2094 = vadd.f32 %v1793, %v2093
      %v2095 = vpop.f32.mrb[0].mxu0
      %v2096 = vpop.f32.mrb[0].mxu0
      %v2097 = vadd.f32 %v1796, %v2096
      %v2098 = vpop.f32.mrb[0].mxu0
      %2099 = vmatprep.mubr.bf16.mxu0 0
      %2100 = vmatmul.mubr.bf16.gmra.mrb[0].mxu0 %v2010
      %v2101 = vpop.f32.mrb[0].mxu0
      %v2102 = vadd.f32 %v1801, %v2101
      %v2103 = vpop.f32.mrb[0].mxu0
      %v2104 = vpop.f32.mrb[0].mxu0
      %v2105 = vadd.f32 %v1804, %v2104
      %v2106 = vpop.f32.mrb[0].mxu0
      %2107 = vmatprep.mubr.bf16.mxu0 0
      %2108 = vmatmul.mubr.bf16.gmra.mrb[0].mxu0 %v2013
      %v2109 = vpop.f32.mrb[0].mxu0
      %v2110 = vadd.f32 %v1809, %v2109
      %v2111 = vpop.f32.mrb[0].mxu0
      %v2112 = vpop.f32.mrb[0].mxu0
      %v2113 = vadd.f32 %v1812, %v2112
      %v2114 = vpop.f32.mrb[0].mxu0
      %2115 = vmatprep.mubr.bf16.mxu0 0
      %2116 = vmatmul.mubr.bf16.gmra.mrb[0].mxu0 %v2016
      %v2117 = vpop.f32.mrb[0].mxu0
      %v2118 = vadd.f32 %v1817, %v2117
      %v2119 = vpop.f32.mrb[0].mxu0
      %v2120 = vpop.f32.mrb[0].mxu0
      %v2121 = vadd.f32 %v1820, %v2120
      %v2122 = vpop.f32.mrb[0].mxu0
      %2123 = vmatprep.mubr.bf16.mxu0 0
      %2124 = vmatmul.mubr.bf16.gmra.mrb[0].mxu0 %v2019
      %v2125 = vpop.f32.mrb[0].mxu0
      %v2126 = vadd.f32 %v1825, %v2125
      %v2127 = vpop.f32.mrb[0].mxu0
      %v2128 = vpop.f32.mrb[0].mxu0
      %v2129 = vadd.f32 %v1828, %v2128
      %v2130 = vpop.f32.mrb[0].mxu0
      %2131 = vmatprep.mubr.bf16.mxu0 0
      %2132 = vmatmul.mubr.bf16.gmra.mrb[0].mxu0 %v2022
      %v2133 = vpop.f32.mrb[0].mxu0
      %v2134 = vadd.f32 %v1833, %v2133
      %v2135 = vpop.f32.mrb[0].mxu0
      %v2136 = vpop.f32.mrb[0].mxu0
      %v2137 = vadd.f32 %v1836, %v2136
      %v2138 = vpop.f32.mrb[0].mxu0
      %2139 = vmatprep.mubr.bf16.mxu0 0
      %2140 = vmatmul.mubr.bf16.gmra.mrb[0].mxu0 %v2025
      %v2141 = vpop.f32.mrb[0].mxu0
      %v2142 = vadd.f32 %v1841, %v2141
      %v2143 = vpop.f32.mrb[0].mxu0
      %v2144 = vpop.f32.mrb[0].mxu0
      %v2145 = vadd.f32 %v1844, %v2144
      %v2146 = vpop.f32.mrb[0].mxu0
      %2147 = vmatprep.mubr.bf16.mxu0 0
      %2148 = vmatmul.mubr.bf16.gmra.mrb[0].mxu0 %v2028
      %v2149 = vpop.f32.mrb[0].mxu0
      %v2150 = vadd.f32 %v1849, %v2149
      %v2151 = vpop.f32.mrb[0].mxu0
      %v2152 = vpop.f32.mrb[0].mxu0
      %v2153 = vadd.f32 %v1852, %v2152
      %v2154 = vpop.f32.mrb[0].mxu0
      %2155 = vmatprep.mubr.bf16.mxu0 0
      %2156 = vmatmul.mubr.bf16.gmra.mrb[0].mxu0 %v2031
      %v2157 = vpop.f32.mrb[0].mxu0
      %v2158 = vadd.f32 %v1857, %v2157
      %v2159 = vpop.f32.mrb[0].mxu0
      %v2160 = vpop.f32.mrb[0].mxu0
      %v2161 = vadd.f32 %v1860, %v2160
      %v2162 = vpop.f32.mrb[0].mxu0
      %2163 = vmatprep.mubr.bf16.mxu0 0
      %2164 = vmatmul.mubr.bf16.gmra.mrb[0].mxu0 %v2034
      %v2165 = vpop.f32.mrb[0].mxu0
      %v2166 = vadd.f32 %v1865, %v2165
      %v2167 = vpop.f32.mrb[0].mxu0
      %v2168 = vpop.f32.mrb[0].mxu0
      %v2169 = vadd.f32 %v1868, %v2168
      %v2170 = vpop.f32.mrb[0].mxu0
      %2171 = vmatprep.mubr.bf16.mxu0 0
      %2172 = vmatmul.mubr.bf16.gmra.mrb[0].mxu0 %v2037
      %v2173 = vpop.f32.mrb[0].mxu0
      %v2174 = vadd.f32 %v1873, %v2173
      %v2175 = vpop.f32.mrb[0].mxu0
      %v2176 = vpop.f32.mrb[0].mxu0
      %v2177 = vadd.f32 %v1876, %v2176
      %v2178 = vpop.f32.mrb[0].mxu0
      %2179 = vmatprep.mubr.bf16.mxu0 0
      %2180 = vmatmul.mubr.bf16.gmra.mrb[0].mxu0 %v2040
      %v2181 = vpop.f32.mrb[0].mxu0
      %v2182 = vadd.f32 %v1881, %v2181
      %v2183 = vpop.f32.mrb[0].mxu0
      %v2184 = vpop.f32.mrb[0].mxu0
      %v2185 = vadd.f32 %v1884, %v2184
      %v2186 = vpop.f32.mrb[0].mxu0
      %2187 = vmatprep.mubr.bf16.mxu0 0
      %2188 = vmatmul.mubr.bf16.gmra.mrb[0].mxu0 %v2043
      %v2189 = vpop.f32.mrb[0].mxu0
      %v2190 = vadd.f32 %v1889, %v2189
      %v2191 = vpop.f32.mrb[0].mxu0
      %v2192 = vpop.f32.mrb[0].mxu0
      %v2193 = vadd.f32 %v1892, %v2192
      %v2194 = vpop.f32.mrb[0].mxu0
      %2195 = vmatprep.mubr.bf16.mxu0 0
      %2196 = vmatmul.mubr.bf16.gmra.mrb[0].mxu0 %v2046
      %v2197 = vpop.f32.mrb[0].mxu0
      %v2198 = vadd.f32 %v1897, %v2197
      %v2199 = vpop.f32.mrb[0].mxu0
      %v2200 = vpop.f32.mrb[0].mxu0
      %v2201 = vadd.f32 %v1900, %v2200
      %v2202 = vpop.f32.mrb[0].mxu0
      %2203 = vmatprep.mubr.bf16.mxu0 0
      %2204 = vmatmul.mubr.bf16.gmra.mrb[0].mxu0 %v2049
      %v2205 = vpop.f32.mrb[0].mxu0
      %v2206 = vadd.f32 %v1905, %v2205
      %v2207 = vpop.f32.mrb[0].mxu0
      %v2208 = vpop.f32.mrb[0].mxu0
      %v2209 = vadd.f32 %v1908, %v2208
      %v2210 = vpop.f32.mrb[0].mxu0
      %2211 = vdwg.mxu0
      %v2212 = vld [vmem:[#allocation2] sm:$0xe]
      %vm2213 = vcmp.lt.s32.totalorder %v1239, 15
      %vm2214 = vcmp.lt.s32.totalorder %v1240, 15
      %vm2215 = vcmp.lt.s32.totalorder %v1241, 15
      %vm2216 = vcmp.lt.s32.totalorder %v1242, 15
      %vm2217 = vcmp.lt.s32.totalorder %v1243, 15
      %vm2218 = vcmp.lt.s32.totalorder %v1244, 15
      %vm2219 = vcmp.lt.s32.totalorder %v1245, 15
      %vm2220 = vcmp.lt.s32.totalorder %v1246, 15
      %vm2221 = vcmp.lt.s32.totalorder %v1247, 15
      %vm2222 = vcmp.lt.s32.totalorder %v1248, 15
      %vm2223 = vcmp.lt.s32.totalorder %v1249, 15
      %vm2224 = vcmp.lt.s32.totalorder %v1250, 15
      %vm2225 = vcmp.lt.s32.totalorder %v1251, 15
      %vm2226 = vcmp.lt.s32.totalorder %v1252, 15
      %vm2227 = vcmp.lt.s32.totalorder %v1253, 15
      %vm2228 = vcmp.lt.s32.totalorder %v1254, 15
      %vm2229 = vcmp.lt.s32.totalorder %v1255, 15
      %vm2230 = vcmp.lt.s32.totalorder %v1256, 15
      %vm2231 = vcmp.lt.s32.totalorder %v1257, 15
      %vm2232 = vcmp.lt.s32.totalorder %v1258, 15
      %vm2233 = vcmp.lt.s32.totalorder %v1259, 15
      %vm2234 = vcmp.lt.s32.totalorder %v1260, 15
      %vm2235 = vcmp.lt.s32.totalorder %v1261, 15
      %vm2236 = vcmp.lt.s32.totalorder %v1262, 15
      %vm2237 = vcmp.lt.s32.totalorder %v1263, 15
      %vm2238 = vcmp.lt.s32.totalorder %v1264, 15
      %vm2239 = vcmp.lt.s32.totalorder %v1265, 15
      %vm2240 = vcmp.lt.s32.totalorder %v1266, 15
      %vm2241 = vcmp.lt.s32.totalorder %v1267, 15
      %vm2242 = vcmp.lt.s32.totalorder %v1268, 15
      %vm2243 = vcmp.lt.s32.totalorder %v1269, 15
      %vm2244 = vcmp.lt.s32.totalorder %v1270, 15
      %v2245 = vsel %vm2213, 1, 0
      %v2246 = vsel %vm2214, 1, 0
      %v2247 = vsel %vm2215, 1, 0
      %v2248 = vsel %vm2216, 1, 0
      %v2249 = vsel %vm2217, 1, 0
      %v2250 = vsel %vm2218, 1, 0
      %v2251 = vsel %vm2219, 1, 0
      %v2252 = vsel %vm2220, 1, 0
      %v2253 = vsel %vm2221, 1, 0
      %v2254 = vsel %vm2222, 1, 0
      %v2255 = vsel %vm2223, 1, 0
      %v2256 = vsel %vm2224, 1, 0
      %v2257 = vsel %vm2225, 1, 0
      %v2258 = vsel %vm2226, 1, 0
      %v2259 = vsel %vm2227, 1, 0
      %v2260 = vsel %vm2228, 1, 0
      %v2261 = vsel %vm2229, 1, 0
      %v2262 = vsel %vm2230, 1, 0
      %v2263 = vsel %vm2231, 1, 0
      %v2264 = vsel %vm2232, 1, 0
      %v2265 = vsel %vm2233, 1, 0
      %v2266 = vsel %vm2234, 1, 0
      %v2267 = vsel %vm2235, 1, 0
      %v2268 = vsel %vm2236, 1, 0
      %v2269 = vsel %vm2237, 1, 0
      %v2270 = vsel %vm2238, 1, 0
      %v2271 = vsel %vm2239, 1, 0
      %v2272 = vsel %vm2240, 1, 0
      %v2273 = vsel %vm2241, 1, 0
      %v2274 = vsel %vm2242, 1, 0
      %v2275 = vsel %vm2243, 1, 0
      %v2276 = vsel %vm2244, 1, 0
      %vm2277 = vcmp.eq.s32.totalorder %v2245, 1
      %vm2278 = vcmp.eq.s32.totalorder %v2246, 1
      %vm2279 = vcmp.eq.s32.totalorder %v2247, 1
      %vm2280 = vcmp.eq.s32.totalorder %v2248, 1
      %vm2281 = vcmp.eq.s32.totalorder %v2249, 1
      %vm2282 = vcmp.eq.s32.totalorder %v2250, 1
      %vm2283 = vcmp.eq.s32.totalorder %v2251, 1
      %vm2284 = vcmp.eq.s32.totalorder %v2252, 1
      %vm2285 = vcmp.eq.s32.totalorder %v2253, 1
      %vm2286 = vcmp.eq.s32.totalorder %v2254, 1
      %vm2287 = vcmp.eq.s32.totalorder %v2255, 1
      %vm2288 = vcmp.eq.s32.totalorder %v2256, 1
      %vm2289 = vcmp.eq.s32.totalorder %v2257, 1
      %vm2290 = vcmp.eq.s32.totalorder %v2258, 1
      %vm2291 = vcmp.eq.s32.totalorder %v2259, 1
      %vm2292 = vcmp.eq.s32.totalorder %v2260, 1
      %vm2293 = vcmp.eq.s32.totalorder %v2261, 1
      %vm2294 = vcmp.eq.s32.totalorder %v2262, 1
      %vm2295 = vcmp.eq.s32.totalorder %v2263, 1
      %vm2296 = vcmp.eq.s32.totalorder %v2264, 1
      %vm2297 = vcmp.eq.s32.totalorder %v2265, 1
      %vm2298 = vcmp.eq.s32.totalorder %v2266, 1
      %vm2299 = vcmp.eq.s32.totalorder %v2267, 1
      %vm2300 = vcmp.eq.s32.totalorder %v2268, 1
      %vm2301 = vcmp.eq.s32.totalorder %v2269, 1
      %vm2302 = vcmp.eq.s32.totalorder %v2270, 1
      %vm2303 = vcmp.eq.s32.totalorder %v2271, 1
      %vm2304 = vcmp.eq.s32.totalorder %v2272, 1
      %vm2305 = vcmp.eq.s32.totalorder %v2273, 1
      %vm2306 = vcmp.eq.s32.totalorder %v2274, 1
      %vm2307 = vcmp.eq.s32.totalorder %v2275, 1
      %vm2308 = vcmp.eq.s32.totalorder %v2276, 1
      %vm2309 = vmpackc.low %vm2277, %vm2277
      %vm2310 = vmpackc.low %vm2278, %vm2278
      %vm2311 = vmpackc.low %vm2279, %vm2279
      %vm2312 = vmpackc.low %vm2280, %vm2280
      %vm2313 = vmpackc.low %vm2281, %vm2281
      %vm2314 = vmpackc.low %vm2282, %vm2282
      %vm2315 = vmpackc.low %vm2283, %vm2283
      %vm2316 = vmpackc.low %vm2284, %vm2284
      %vm2317 = vmpackc.low %vm2285, %vm2285
      %vm2318 = vmpackc.low %vm2286, %vm2286
      %vm2319 = vmpackc.low %vm2287, %vm2287
      %vm2320 = vmpackc.low %vm2288, %vm2288
      %vm2321 = vmpackc.low %vm2289, %vm2289
      %vm2322 = vmpackc.low %vm2290, %vm2290
      %vm2323 = vmpackc.low %vm2291, %vm2291
      %vm2324 = vmpackc.low %vm2292, %vm2292
      %vm2325 = vmpackc.low %vm2293, %vm2293
      %vm2326 = vmpackc.low %vm2294, %vm2294
      %vm2327 = vmpackc.low %vm2295, %vm2295
      %vm2328 = vmpackc.low %vm2296, %vm2296
      %vm2329 = vmpackc.low %vm2297, %vm2297
      %vm2330 = vmpackc.low %vm2298, %vm2298
      %vm2331 = vmpackc.low %vm2299, %vm2299
      %vm2332 = vmpackc.low %vm2300, %vm2300
      %vm2333 = vmpackc.low %vm2301, %vm2301
      %vm2334 = vmpackc.low %vm2302, %vm2302
      %vm2335 = vmpackc.low %vm2303, %vm2303
      %vm2336 = vmpackc.low %vm2304, %vm2304
      %vm2337 = vmpackc.low %vm2305, %vm2305
      %vm2338 = vmpackc.low %vm2306, %vm2306
      %vm2339 = vmpackc.low %vm2307, %vm2307
      %vm2340 = vmpackc.low %vm2308, %vm2308
      %v2341 = vsel %vm2309, 65537, 0
      %v2342 = vsel %vm2310, 65537, 0
      %v2343 = vsel %vm2311, 65537, 0
      %v2344 = vsel %vm2312, 65537, 0
      %v2345 = vsel %vm2313, 65537, 0
      %v2346 = vsel %vm2314, 65537, 0
      %v2347 = vsel %vm2315, 65537, 0
      %v2348 = vsel %vm2316, 65537, 0
      %v2349 = vsel %vm2317, 65537, 0
      %v2350 = vsel %vm2318, 65537, 0
      %v2351 = vsel %vm2319, 65537, 0
      %v2352 = vsel %vm2320, 65537, 0
      %v2353 = vsel %vm2321, 65537, 0
      %v2354 = vsel %vm2322, 65537, 0
      %v2355 = vsel %vm2323, 65537, 0
      %v2356 = vsel %vm2324, 65537, 0
      %v2357 = vsel %vm2325, 65537, 0
      %v2358 = vsel %vm2326, 65537, 0
      %v2359 = vsel %vm2327, 65537, 0
      %v2360 = vsel %vm2328, 65537, 0
      %v2361 = vsel %vm2329, 65537, 0
      %v2362 = vsel %vm2330, 65537, 0
      %v2363 = vsel %vm2331, 65537, 0
      %v2364 = vsel %vm2332, 65537, 0
      %v2365 = vsel %vm2333, 65537, 0
      %v2366 = vsel %vm2334, 65537, 0
      %v2367 = vsel %vm2335, 65537, 0
      %v2368 = vsel %vm2336, 65537, 0
      %v2369 = vsel %vm2337, 65537, 0
      %v2370 = vsel %vm2338, 65537, 0
      %v2371 = vsel %vm2339, 65537, 0
      %v2372 = vsel %vm2340, 65537, 0
      %vm2373 = vcmask 1040384
      %vm2374 = vcmask 1044484
      %vm2375 = vmor %vm2373, %vm2374
      %v2376 = vrot.slane %v2341, 7
      %v2377 = vrot.slane %v2376, 4
      %v2378 = vrot.slane %v2342, 7
      %v2379 = vsel %vm2375, %v2377, %v2378
      %v2380 = vrot.slane %v2378, 4
      %v2381 = vrot.slane %v2343, 7
      %v2382 = vsel %vm2375, %v2380, %v2381
      %v2383 = vrot.slane %v2381, 4
      %v2384 = vrot.slane %v2344, 7
      %v2385 = vsel %vm2375, %v2383, %v2384
      %v2386 = vrot.slane %v2384, 4
      %v2387 = vrot.slane %v2345, 7
      %v2388 = vsel %vm2375, %v2386, %v2387
      %v2389 = vrot.slane %v2387, 4
      %v2390 = vrot.slane %v2346, 7
      %v2391 = vsel %vm2375, %v2389, %v2390
      %v2392 = vrot.slane %v2390, 4
      %v2393 = vrot.slane %v2347, 7
      %v2394 = vsel %vm2375, %v2392, %v2393
      %v2395 = vrot.slane %v2393, 4
      %v2396 = vrot.slane %v2348, 7
      %v2397 = vsel %vm2375, %v2395, %v2396
      %v2398 = vrot.slane %v2396, 4
      %v2399 = vrot.slane %v2349, 7
      %v2400 = vsel %vm2375, %v2398, %v2399
      %v2401 = vrot.slane %v2399, 4
      %v2402 = vrot.slane %v2350, 7
      %v2403 = vsel %vm2375, %v2401, %v2402
      %v2404 = vrot.slane %v2402, 4
      %v2405 = vrot.slane %v2351, 7
      %v2406 = vsel %vm2375, %v2404, %v2405
      %v2407 = vrot.slane %v2405, 4
      %v2408 = vrot.slane %v2352, 7
      %v2409 = vsel %vm2375, %v2407, %v2408
      %v2410 = vrot.slane %v2408, 4
      %v2411 = vrot.slane %v2353, 7
      %v2412 = vsel %vm2375, %v2410, %v2411
      %v2413 = vrot.slane %v2411, 4
      %v2414 = vrot.slane %v2354, 7
      %v2415 = vsel %vm2375, %v2413, %v2414
      %v2416 = vrot.slane %v2414, 4
      %v2417 = vrot.slane %v2355, 7
      %v2418 = vsel %vm2375, %v2416, %v2417
      %v2419 = vrot.slane %v2417, 4
      %v2420 = vrot.slane %v2356, 7
      %v2421 = vsel %vm2375, %v2419, %v2420
      %v2422 = vrot.slane %v2420, 4
      %v2423 = vrot.slane %v2357, 7
      %v2424 = vsel %vm2375, %v2422, %v2423
      %v2425 = vrot.slane %v2423, 4
      %v2426 = vrot.slane %v2358, 7
      %v2427 = vsel %vm2375, %v2425, %v2426
      %v2428 = vrot.slane %v2426, 4
      %v2429 = vrot.slane %v2359, 7
      %v2430 = vsel %vm2375, %v2428, %v2429
      %v2431 = vrot.slane %v2429, 4
      %v2432 = vrot.slane %v2360, 7
      %v2433 = vsel %vm2375, %v2431, %v2432
      %v2434 = vrot.slane %v2432, 4
      %v2435 = vrot.slane %v2361, 7
      %v2436 = vsel %vm2375, %v2434, %v2435
      %v2437 = vrot.slane %v2435, 4
      %v2438 = vrot.slane %v2362, 7
      %v2439 = vsel %vm2375, %v2437, %v2438
      %v2440 = vrot.slane %v2438, 4
      %v2441 = vrot.slane %v2363, 7
      %v2442 = vsel %vm2375, %v2440, %v2441
      %v2443 = vrot.slane %v2441, 4
      %v2444 = vrot.slane %v2364, 7
      %v2445 = vsel %vm2375, %v2443, %v2444
      %v2446 = vrot.slane %v2444, 4
      %v2447 = vrot.slane %v2365, 7
      %v2448 = vsel %vm2375, %v2446, %v2447
      %v2449 = vrot.slane %v2447, 4
      %v2450 = vrot.slane %v2366, 7
      %v2451 = vsel %vm2375, %v2449, %v2450
      %v2452 = vrot.slane %v2450, 4
      %v2453 = vrot.slane %v2367, 7
      %v2454 = vsel %vm2375, %v2452, %v2453
      %v2455 = vrot.slane %v2453, 4
      %v2456 = vrot.slane %v2368, 7
      %v2457 = vsel %vm2375, %v2455, %v2456
      %v2458 = vrot.slane %v2456, 4
      %v2459 = vrot.slane %v2369, 7
      %v2460 = vsel %vm2375, %v2458, %v2459
      %v2461 = vrot.slane %v2459, 4
      %v2462 = vrot.slane %v2370, 7
      %v2463 = vsel %vm2375, %v2461, %v2462
      %v2464 = vrot.slane %v2462, 4
      %v2465 = vrot.slane %v2371, 7
      %v2466 = vsel %vm2375, %v2464, %v2465
      %v2467 = vrot.slane %v2465, 4
      %v2468 = vrot.slane %v2372, 7
      %v2469 = vsel %vm2375, %v2467, %v2468
      %v2470 = vrot.slane %v2468, 4
      %vm2471 = vcmp.ne.s16.totalorder %v2376, 0
      %vm2472 = vcmp.ne.s16.totalorder %v2379, 0
      %vm2473 = vcmp.ne.s16.totalorder %v2382, 0
      %vm2474 = vcmp.ne.s16.totalorder %v2385, 0
      %vm2475 = vcmp.ne.s16.totalorder %v2388, 0
      %vm2476 = vcmp.ne.s16.totalorder %v2391, 0
      %vm2477 = vcmp.ne.s16.totalorder %v2394, 0
      %vm2478 = vcmp.ne.s16.totalorder %v2397, 0
      %vm2479 = vcmp.ne.s16.totalorder %v2400, 0
      %vm2480 = vcmp.ne.s16.totalorder %v2403, 0
      %vm2481 = vcmp.ne.s16.totalorder %v2406, 0
      %vm2482 = vcmp.ne.s16.totalorder %v2409, 0
      %vm2483 = vcmp.ne.s16.totalorder %v2412, 0
      %vm2484 = vcmp.ne.s16.totalorder %v2415, 0
      %vm2485 = vcmp.ne.s16.totalorder %v2418, 0
      %vm2486 = vcmp.ne.s16.totalorder %v2421, 0
      %vm2487 = vcmp.ne.s16.totalorder %v2424, 0
      %vm2488 = vcmp.ne.s16.totalorder %v2427, 0
      %vm2489 = vcmp.ne.s16.totalorder %v2430, 0
      %vm2490 = vcmp.ne.s16.totalorder %v2433, 0
      %vm2491 = vcmp.ne.s16.totalorder %v2436, 0
      %vm2492 = vcmp.ne.s16.totalorder %v2439, 0
      %vm2493 = vcmp.ne.s16.totalorder %v2442, 0
      %vm2494 = vcmp.ne.s16.totalorder %v2445, 0
      %vm2495 = vcmp.ne.s16.totalorder %v2448, 0
      %vm2496 = vcmp.ne.s16.totalorder %v2451, 0
      %vm2497 = vcmp.ne.s16.totalorder %v2454, 0
      %vm2498 = vcmp.ne.s16.totalorder %v2457, 0
      %vm2499 = vcmp.ne.s16.totalorder %v2460, 0
      %vm2500 = vcmp.ne.s16.totalorder %v2463, 0
      %vm2501 = vcmp.ne.s16.totalorder %v2466, 0
      %vm2502 = vcmp.ne.s16.totalorder %v2469, 0
      %vm2503 = vcmp.ne.s16.totalorder %v2470, 0
      %v2504 = vsel %vm2471, %v2212, 0
      %v2505 = vsel %vm2472, %v1272, 0
      %v2506 = vsel %vm2473, %v1273, 0
      %v2507 = vsel %vm2474, %v1274, 0
      %v2508 = vsel %vm2475, %v1275, 0
      %v2509 = vsel %vm2476, %v1276, 0
      %v2510 = vsel %vm2477, %v1277, 0
      %v2511 = vsel %vm2478, %v1278, 0
      %v2512 = vsel %vm2479, %v1279, 0
      %v2513 = vsel %vm2480, %v1280, 0
      %v2514 = vsel %vm2481, %v1281, 0
      %v2515 = vsel %vm2482, %v1282, 0
      %v2516 = vsel %vm2483, %v1283, 0
      %v2517 = vsel %vm2484, %v1284, 0
      %v2518 = vsel %vm2485, %v1285, 0
      %v2519 = vsel %vm2486, %v1286, 0
      %v2520 = vsel %vm2487, %v1287, 0
      %v2521 = vsel %vm2488, %v1288, 0
      %v2522 = vsel %vm2489, %v1289, 0
      %v2523 = vsel %vm2490, %v1290, 0
      %v2524 = vsel %vm2491, %v1291, 0
      %v2525 = vsel %vm2492, %v1292, 0
      %v2526 = vsel %vm2493, %v1293, 0
      %v2527 = vsel %vm2494, %v1294, 0
      %v2528 = vsel %vm2495, %v1295, 0
      %v2529 = vsel %vm2496, %v1296, 0
      %v2530 = vsel %vm2497, %v1297, 0
      %v2531 = vsel %vm2498, %v1298, 0
      %v2532 = vsel %vm2499, %v1299, 0
      %v2533 = vsel %vm2500, %v1300, 0
      %v2534 = vsel %vm2501, %v1301, 0
      %v2535 = vsel %vm2502, %v1302, 0
      %v2536 = vsel %vm2503, %v1467, 0
      %s2537 = scalar_lea.vmem %s3, 32
      %v2538 = vld [vmem:[%s2537] sm:$0xf]
      %v2539 = vld [vmem:[%s2537 + $0x4] sm:$0xf]
      %v2540 = vld [vmem:[%s2537 + $0x8] sm:$0xf]
      %v2541 = vld [vmem:[%s2537 + $0xc] sm:$0xf]
      %v2575 = vunpack.c.l.b16 %v2504
      %v2576 = vunpack.c.l.b16 %v2505
      %v2577 = vunpack.c.l.b16 %v2506
      %v2578 = vunpack.c.l.b16 %v2507
      %v2579 = vunpack.c.l.b16 %v2508
      %v2580 = vunpack.c.l.b16 %v2509
      %v2581 = vunpack.c.l.b16 %v2510
      %v2582 = vunpack.c.l.b16 %v2511
      %v2583 = vunpack.c.l.b16 %v2512
      %v2584 = vunpack.c.l.b16 %v2513
      %v2585 = vunpack.c.l.b16 %v2514
      %v2586 = vunpack.c.l.b16 %v2515
      %v2587 = vunpack.c.l.b16 %v2516
      %v2588 = vunpack.c.l.b16 %v2517
      %v2589 = vunpack.c.l.b16 %v2518
      %v2590 = vunpack.c.l.b16 %v2519
      %v2591 = vunpack.c.l.b16 %v2520
      %v2592 = vunpack.c.l.b16 %v2521
      %v2593 = vunpack.c.l.b16 %v2522
      %v2594 = vunpack.c.l.b16 %v2523
      %v2595 = vunpack.c.l.b16 %v2524
      %v2596 = vunpack.c.l.b16 %v2525
      %v2597 = vunpack.c.l.b16 %v2526
      %v2598 = vunpack.c.l.b16 %v2527
      %v2599 = vunpack.c.l.b16 %v2528
      %v2600 = vunpack.c.l.b16 %v2529
      %v2601 = vunpack.c.l.b16 %v2530
      %v2602 = vunpack.c.l.b16 %v2531
      %v2603 = vunpack.c.l.b16 %v2532
      %v2604 = vunpack.c.l.b16 %v2533
      %v2605 = vunpack.c.l.b16 %v2534
      %v2606 = vunpack.c.l.b16 %v2535
      %v2607 = vunpack.c.l.b16 %v2536
      %v2608 = vpack.c.b16 %v2576, %v2575
      %v2609 = vpack.c.b16 %v2578, %v2577
      %v2610 = vpack.c.b16 %v2580, %v2579
      %v2611 = vpack.c.b16 %v2582, %v2581
      %v2612 = vpack.c.b16 %v2584, %v2583
      %v2613 = vpack.c.b16 %v2586, %v2585
      %v2614 = vpack.c.b16 %v2588, %v2587
      %v2615 = vpack.c.b16 %v2590, %v2589
      %v2616 = vpack.c.b16 %v2592, %v2591
      %v2617 = vpack.c.b16 %v2594, %v2593
      %v2618 = vpack.c.b16 %v2596, %v2595
      %v2619 = vpack.c.b16 %v2598, %v2597
      %v2620 = vpack.c.b16 %v2600, %v2599
      %v2621 = vpack.c.b16 %v2602, %v2601
      %v2622 = vpack.c.b16 %v2604, %v2603
      %v2623 = vpack.c.b16 %v2606, %v2605
      %v2624 = vpack.c.b16 %v2607, %v2607
      %vm2625 = vcmask 1046528
      %v2626 = vrot.slane %v2608, 1
      %v2627 = vrot.slane %v2609, 1
      %v2628 = vsel %vm2625, %v2626, %v2627
      %v2629 = vrot.slane %v2610, 1
      %v2630 = vsel %vm2625, %v2627, %v2629
      %v2631 = vrot.slane %v2611, 1
      %v2632 = vsel %vm2625, %v2629, %v2631
      %v2633 = vrot.slane %v2612, 1
      %v2634 = vsel %vm2625, %v2631, %v2633
      %v2635 = vrot.slane %v2613, 1
      %v2636 = vsel %vm2625, %v2633, %v2635
      %v2637 = vrot.slane %v2614, 1
      %v2638 = vsel %vm2625, %v2635, %v2637
      %v2639 = vrot.slane %v2615, 1
      %v2640 = vsel %vm2625, %v2637, %v2639
      %v2641 = vrot.slane %v2616, 1
      %v2642 = vsel %vm2625, %v2639, %v2641
      %v2643 = vrot.slane %v2617, 1
      %v2644 = vsel %vm2625, %v2641, %v2643
      %v2645 = vrot.slane %v2618, 1
      %v2646 = vsel %vm2625, %v2643, %v2645
      %v2647 = vrot.slane %v2619, 1
      %v2648 = vsel %vm2625, %v2645, %v2647
      %v2649 = vrot.slane %v2620, 1
      %v2650 = vsel %vm2625, %v2647, %v2649
      %v2651 = vrot.slane %v2621, 1
      %v2652 = vsel %vm2625, %v2649, %v2651
      %v2653 = vrot.slane %v2622, 1
      %v2654 = vsel %vm2625, %v2651, %v2653
      %v2655 = vrot.slane %v2623, 1
      %v2656 = vsel %vm2625, %v2653, %v2655
      %v2657 = vrot.slane %v2624, 1
      %v2658 = vsel %vm2625, %v2655, %v2657
      %v2663 = vunpack.c.l.b16 %v2538
      %v2664 = vunpack.c.l.b16 %v2539
      %v2665 = vunpack.c.l.b16 %v2540
      %v2666 = vunpack.c.l.b16 %v2541
      %v2667 = vpack.c.b16 %v2664, %v2663
      %v2668 = vpack.c.b16 %v2666, %v2665
      %v2672 = vsel %vm1701, %v2628, 0
      %v2675 = vsel %vm1701, %v2630, 0
      %v2678 = vsel %vm1701, %v2632, 0
      %v2681 = vsel %vm1701, %v2634, 0
      %v2684 = vsel %vm1701, %v2636, 0
      %v2687 = vsel %vm1701, %v2638, 0
      %v2690 = vsel %vm1701, %v2640, 0
      %v2693 = vsel %vm1701, %v2642, 0
      %v2696 = vsel %vm1701, %v2644, 0
      %v2699 = vsel %vm1701, %v2646, 0
      %v2702 = vsel %vm1701, %v2648, 0
      %v2705 = vsel %vm1701, %v2650, 0
      %v2708 = vsel %vm1701, %v2652, 0
      %v2711 = vsel %vm1701, %v2654, 0
      %v2714 = vsel %vm1701, %v2656, 0
      %v2717 = vsel %vm1701, %v2658, 0
      %2719 = vmatprep.subr.bf16.mxu0 0
      %2720 = vmatpush1.bf16.msra.mxu0 %v2667
      %2721 = vmatprep.subr.bf16.mxu0 0
      %2722 = vmatpush1.bf16.msra.mxu0 %v2668
      %2723 = vmatprep.subr.bf16.mxu0 0
      %2724 = vmatpush1.bf16.msra.mxu0 0
      %2725 = vmatprep.subr.bf16.mxu0 0
      %2726 = vmatpush1.bf16.msra.mxu0 0
      %2727 = vmatprep.subr.bf16.mxu0 0
      %2728 = vmatpush1.bf16.msra.mxu0 0
      %2729 = vmatprep.subr.bf16.mxu0 0
      %2730 = vmatpush1.bf16.msra.mxu0 0
      %2731 = vmatprep.subr.bf16.mxu0 0
      %2732 = vmatpush1.bf16.msra.mxu0 0
      %2733 = vmatprep.subr.bf16.mxu0 0
      %2734 = vmatpush1.bf16.msra.mxu0 0
      %2735 = vmatprep.subr.bf16.mxu0 0
      %2736 = vmatpush1.bf16.msra.mxu0 0
      %2737 = vmatprep.subr.bf16.mxu0 0
      %2738 = vmatpush1.bf16.msra.mxu0 0
      %2739 = vmatprep.subr.bf16.mxu0 0
      %2740 = vmatpush1.bf16.msra.mxu0 0
      %2741 = vmatprep.subr.bf16.mxu0 0
      %2742 = vmatpush1.bf16.msra.mxu0 0
      %2743 = vmatprep.subr.bf16.mxu0 0
      %2744 = vmatpush1.bf16.msra.mxu0 0
      %2745 = vmatprep.subr.bf16.mxu0 0
      %2746 = vmatpush1.bf16.msra.mxu0 0
      %2747 = vmatprep.subr.bf16.mxu0 0
      %2748 = vmatpush1.bf16.msra.mxu0 0
      %2749 = vmatprep.subr.bf16.mxu0 0
      %2750 = vmatpush1.bf16.msra.mxu0 0
      %2751 = vmatprep.mubr.bf16.mxu0 0
      %2752 = vmatmul.mubr.bf16.gmra.mrb[0].mxu0 %v2672
      %v2753 = vpop.f32.mrb[0].mxu0
      %v2754 = vadd.f32 0.0, %v2753
      %v2755 = vpop.f32.mrb[0].mxu0
      %v2756 = vpop.f32.mrb[0].mxu0
      %v2757 = vadd.f32 0.0, %v2756
      %v2758 = vpop.f32.mrb[0].mxu0
      %2759 = vmatprep.mubr.bf16.mxu0 0
      %2760 = vmatmul.mubr.bf16.gmra.mrb[0].mxu0 %v2675
      %v2761 = vpop.f32.mrb[0].mxu0
      %v2762 = vadd.f32 0.0, %v2761
      %v2763 = vpop.f32.mrb[0].mxu0
      %v2764 = vpop.f32.mrb[0].mxu0
      %v2765 = vadd.f32 0.0, %v2764
      %v2766 = vpop.f32.mrb[0].mxu0
      %2767 = vmatprep.mubr.bf16.mxu0 0
      %2768 = vmatmul.mubr.bf16.gmra.mrb[0].mxu0 %v2678
      %v2769 = vpop.f32.mrb[0].mxu0
      %v2770 = vadd.f32 0.0, %v2769
      %v2771 = vpop.f32.mrb[0].mxu0
      %v2772 = vpop.f32.mrb[0].mxu0
      %v2773 = vadd.f32 0.0, %v2772
      %v2774 = vpop.f32.mrb[0].mxu0
      %2775 = vmatprep.mubr.bf16.mxu0 0
      %2776 = vmatmul.mubr.bf16.gmra.mrb[0].mxu0 %v2681
      %v2777 = vpop.f32.mrb[0].mxu0
      %v2778 = vadd.f32 0.0, %v2777
      %v2779 = vpop.f32.mrb[0].mxu0
      %v2780 = vpop.f32.mrb[0].mxu0
      %v2781 = vadd.f32 0.0, %v2780
      %v2782 = vpop.f32.mrb[0].mxu0
      %2783 = vmatprep.mubr.bf16.mxu0 0
      %2784 = vmatmul.mubr.bf16.gmra.mrb[0].mxu0 %v2684
      %v2785 = vpop.f32.mrb[0].mxu0
      %v2786 = vadd.f32 0.0, %v2785
      %v2787 = vpop.f32.mrb[0].mxu0
      %v2788 = vpop.f32.mrb[0].mxu0
      %v2789 = vadd.f32 0.0, %v2788
      %v2790 = vpop.f32.mrb[0].mxu0
      %2791 = vmatprep.mubr.bf16.mxu0 0
      %2792 = vmatmul.mubr.bf16.gmra.mrb[0].mxu0 %v2687
      %v2793 = vpop.f32.mrb[0].mxu0
      %v2794 = vadd.f32 0.0, %v2793
      %v2795 = vpop.f32.mrb[0].mxu0
      %v2796 = vpop.f32.mrb[0].mxu0
      %v2797 = vadd.f32 0.0, %v2796
      %v2798 = vpop.f32.mrb[0].mxu0
      %2799 = vmatprep.mubr.bf16.mxu0 0
      %2800 = vmatmul.mubr.bf16.gmra.mrb[0].mxu0 %v2690
      %v2801 = vpop.f32.mrb[0].mxu0
      %v2802 = vadd.f32 0.0, %v2801
      %v2803 = vpop.f32.mrb[0].mxu0
      %v2804 = vpop.f32.mrb[0].mxu0
      %v2805 = vadd.f32 0.0, %v2804
      %v2806 = vpop.f32.mrb[0].mxu0
      %2807 = vmatprep.mubr.bf16.mxu0 0
      %2808 = vmatmul.mubr.bf16.gmra.mrb[0].mxu0 %v2693
      %v2809 = vpop.f32.mrb[0].mxu0
      %v2810 = vadd.f32 0.0, %v2809
      %v2811 = vpop.f32.mrb[0].mxu0
      %v2812 = vpop.f32.mrb[0].mxu0
      %v2813 = vadd.f32 0.0, %v2812
      %v2814 = vpop.f32.mrb[0].mxu0
      %2815 = vmatprep.mubr.bf16.mxu0 0
      %2816 = vmatmul.mubr.bf16.gmra.mrb[0].mxu0 %v2696
      %v2817 = vpop.f32.mrb[0].mxu0
      %v2818 = vadd.f32 0.0, %v2817
      %v2819 = vpop.f32.mrb[0].mxu0
      %v2820 = vpop.f32.mrb[0].mxu0
      %v2821 = vadd.f32 0.0, %v2820
      %v2822 = vpop.f32.mrb[0].mxu0
      %2823 = vmatprep.mubr.bf16.mxu0 0
      %2824 = vmatmul.mubr.bf16.gmra.mrb[0].mxu0 %v2699
      %v2825 = vpop.f32.mrb[0].mxu0
      %v2826 = vadd.f32 0.0, %v2825
      %v2827 = vpop.f32.mrb[0].mxu0
      %v2828 = vpop.f32.mrb[0].mxu0
      %v2829 = vadd.f32 0.0, %v2828
      %v2830 = vpop.f32.mrb[0].mxu0
      %2831 = vmatprep.mubr.bf16.mxu0 0
      %2832 = vmatmul.mubr.bf16.gmra.mrb[0].mxu0 %v2702
      %v2833 = vpop.f32.mrb[0].mxu0
      %v2834 = vadd.f32 0.0, %v2833
      %v2835 = vpop.f32.mrb[0].mxu0
      %v2836 = vpop.f32.mrb[0].mxu0
      %v2837 = vadd.f32 0.0, %v2836
      %v2838 = vpop.f32.mrb[0].mxu0
      %2839 = vmatprep.mubr.bf16.mxu0 0
      %2840 = vmatmul.mubr.bf16.gmra.mrb[0].mxu0 %v2705
      %v2841 = vpop.f32.mrb[0].mxu0
      %v2842 = vadd.f32 0.0, %v2841
      %v2843 = vpop.f32.mrb[0].mxu0
      %v2844 = vpop.f32.mrb[0].mxu0
      %v2845 = vadd.f32 0.0, %v2844
      %v2846 = vpop.f32.mrb[0].mxu0
      %2847 = vmatprep.mubr.bf16.mxu0 0
      %2848 = vmatmul.mubr.bf16.gmra.mrb[0].mxu0 %v2708
      %v2849 = vpop.f32.mrb[0].mxu0
      %v2850 = vadd.f32 0.0, %v2849
      %v2851 = vpop.f32.mrb[0].mxu0
      %v2852 = vpop.f32.mrb[0].mxu0
      %v2853 = vadd.f32 0.0, %v2852
      %v2854 = vpop.f32.mrb[0].mxu0
      %2855 = vmatprep.mubr.bf16.mxu0 0
      %2856 = vmatmul.mubr.bf16.gmra.mrb[0].mxu0 %v2711
      %v2857 = vpop.f32.mrb[0].mxu0
      %v2858 = vadd.f32 0.0, %v2857
      %v2859 = vpop.f32.mrb[0].mxu0
      %v2860 = vpop.f32.mrb[0].mxu0
      %v2861 = vadd.f32 0.0, %v2860
      %v2862 = vpop.f32.mrb[0].mxu0
      %2863 = vmatprep.mubr.bf16.mxu0 0
      %2864 = vmatmul.mubr.bf16.gmra.mrb[0].mxu0 %v2714
      %v2865 = vpop.f32.mrb[0].mxu0
      %v2866 = vadd.f32 0.0, %v2865
      %v2867 = vpop.f32.mrb[0].mxu0
      %v2868 = vpop.f32.mrb[0].mxu0
      %v2869 = vadd.f32 0.0, %v2868
      %v2870 = vpop.f32.mrb[0].mxu0
      %2871 = vmatprep.mubr.bf16.mxu0 0
      %2872 = vmatmul.mubr.bf16.gmra.mrb[0].mxu0 %v2717
      %v2873 = vpop.f32.mrb[0].mxu0
      %v2874 = vadd.f32 0.0, %v2873
      %v2875 = vpop.f32.mrb[0].mxu0
      %v2876 = vpop.f32.mrb[0].mxu0
      %v2877 = vadd.f32 0.0, %v2876
      %v2878 = vpop.f32.mrb[0].mxu0
      %2879 = vdwg.mxu0
      %v2880 = vadd.f32 %v2086, %v2754
      %v2881 = vadd.f32 %v2089, %v2757
      %v2882 = vadd.f32 %v2094, %v2762
      %v2883 = vadd.f32 %v2097, %v2765
      %v2884 = vadd.f32 %v2102, %v2770
      %v2885 = vadd.f32 %v2105, %v2773
      %v2886 = vadd.f32 %v2110, %v2778
      %v2887 = vadd.f32 %v2113, %v2781
      %v2888 = vadd.f32 %v2118, %v2786
      %v2889 = vadd.f32 %v2121, %v2789
      %v2890 = vadd.f32 %v2126, %v2794
      %v2891 = vadd.f32 %v2129, %v2797
      %v2892 = vadd.f32 %v2134, %v2802
      %v2893 = vadd.f32 %v2137, %v2805
      %v2894 = vadd.f32 %v2142, %v2810
      %v2895 = vadd.f32 %v2145, %v2813
      %v2896 = vadd.f32 %v2150, %v2818
      %v2897 = vadd.f32 %v2153, %v2821
      %v2898 = vadd.f32 %v2158, %v2826
      %v2899 = vadd.f32 %v2161, %v2829
      %v2900 = vadd.f32 %v2166, %v2834
      %v2901 = vadd.f32 %v2169, %v2837
      %v2902 = vadd.f32 %v2174, %v2842
      %v2903 = vadd.f32 %v2177, %v2845
      %v2904 = vadd.f32 %v2182, %v2850
      %v2905 = vadd.f32 %v2185, %v2853
      %v2906 = vadd.f32 %v2190, %v2858
      %v2907 = vadd.f32 %v2193, %v2861
      %v2908 = vadd.f32 %v2198, %v2866
      %v2909 = vadd.f32 %v2201, %v2869
      %v2910 = vadd.f32 %v2206, %v2874
      %v2911 = vadd.f32 %v2209, %v2877
      %v2912 = vld [vmem:[#allocation2 + $0x8] sm:$0xf]
      %v2913 = vld [vmem:[#allocation2 + $0xc] sm:$0xf]
      %v2914 = vld [vmem:[#allocation2 + $0x10] sm:$0xf]
      %v2915 = vld [vmem:[#allocation2 + $0x14] sm:$0xf]
      %v2916 = vld [vmem:[#allocation2 + $0x18] sm:$0xf]
      %v2917 = vld [vmem:[#allocation2 + $0x1c] sm:$0xf]
      %v2918 = vld [vmem:[#allocation2 + $0x20] sm:$0xf]
      %v2919 = vld [vmem:[#allocation2 + $0x24] sm:$0xf]
      %v2920 = vld [vmem:[#allocation2 + $0x28] sm:$0xf]
      %v2921 = vld [vmem:[#allocation2 + $0x2c] sm:$0xf]
      %v2922 = vld [vmem:[#allocation2 + $0x30] sm:$0xf]
      %v2923 = vld [vmem:[#allocation2 + $0x34] sm:$0xf]
      %v2924 = vld [vmem:[#allocation2 + $0x38] sm:$0xf]
      %v2925 = vld [vmem:[#allocation2 + $0x3c] sm:$0xf]
      %v2926 = vld [vmem:[#allocation2 + $0x40] sm:$0xf]
      %v2927 = vld [vmem:[#allocation2 + $0x44] sm:$0xf]
      %v2928 = vld [vmem:[#allocation2 + $0x48] sm:$0xf]
      %v2929 = vld [vmem:[#allocation2 + $0x4c] sm:$0xf]
      %v2930 = vld [vmem:[#allocation2 + $0x50] sm:$0xf]
      %v2931 = vld [vmem:[#allocation2 + $0x54] sm:$0xf]
      %v2932 = vld [vmem:[#allocation2 + $0x58] sm:$0xf]
      %v2933 = vld [vmem:[#allocation2 + $0x5c] sm:$0xf]
      %v2934 = vld [vmem:[#allocation2 + $0x60] sm:$0xf]
      %v2935 = vld [vmem:[#allocation2 + $0x64] sm:$0xf]
      %v2936 = vld [vmem:[#allocation2 + $0x68] sm:$0xf]
      %v2937 = vld [vmem:[#allocation2 + $0x6c] sm:$0xf]
      %v2938 = vld [vmem:[#allocation2 + $0x70] sm:$0xf]
      %v2939 = vld [vmem:[#allocation2 + $0x74] sm:$0xf]
      %v2940 = vld [vmem:[#allocation2 + $0x78] sm:$0xf]
      %v2941 = vld [vmem:[#allocation2 + $0x7c] sm:$0xf]
      %v2942 = vld [vmem:[#allocation2 + $0x80] sm:$0xf]
      %v2943 = vld [vmem:[#allocation2 + $0x84] sm:$0xf]
      %v2944 = vsel %vm1399, %v2912, 0
      %v2945 = vsel %vm1400, %v2913, 0
      %v2946 = vsel %vm1401, %v2914, 0
      %v2947 = vsel %vm1402, %v2915, 0
      %v2948 = vsel %vm1403, %v2916, 0
      %v2949 = vsel %vm1404, %v2917, 0
      %v2950 = vsel %vm1405, %v2918, 0
      %v2951 = vsel %vm1406, %v2919, 0
      %v2952 = vsel %vm1407, %v2920, 0
      %v2953 = vsel %vm1408, %v2921, 0
      %v2954 = vsel %vm1409, %v2922, 0
      %v2955 = vsel %vm1410, %v2923, 0
      %v2956 = vsel %vm1411, %v2924, 0
      %v2957 = vsel %vm1412, %v2925, 0
      %v2958 = vsel %vm1413, %v2926, 0
      %v2959 = vsel %vm1414, %v2927, 0
      %v2960 = vsel %vm1415, %v2928, 0
      %v2961 = vsel %vm1416, %v2929, 0
      %v2962 = vsel %vm1417, %v2930, 0
      %v2963 = vsel %vm1418, %v2931, 0
      %v2964 = vsel %vm1419, %v2932, 0
      %v2965 = vsel %vm1420, %v2933, 0
      %v2966 = vsel %vm1421, %v2934, 0
      %v2967 = vsel %vm1422, %v2935, 0
      %v2968 = vsel %vm1423, %v2936, 0
      %v2969 = vsel %vm1424, %v2937, 0
      %v2970 = vsel %vm1425, %v2938, 0
      %v2971 = vsel %vm1426, %v2939, 0
      %v2972 = vsel %vm1427, %v2940, 0
      %v2973 = vsel %vm1428, %v2941, 0
      %v2974 = vsel %vm1429, %v2942, 0
      %v2975 = vsel %vm1430, %v2943, 0
      %s2976 = scalar_lea.vmem %s3, 48
      %v2977 = vld [vmem:[%s2976] sm:$0xf]
      %v2978 = vld [vmem:[%s2976 + $0x4] sm:$0xf]
      %v2979 = vld [vmem:[%s2976 + $0x8] sm:$0xf]
      %v2980 = vld [vmem:[%s2976 + $0xc] sm:$0xf]
      %v3013 = vunpack.c.l.b16 %v2944
      %v3014 = vunpack.c.l.b16 %v2945
      %v3015 = vunpack.c.l.b16 %v2946
      %v3016 = vunpack.c.l.b16 %v2947
      %v3017 = vunpack.c.l.b16 %v2948
      %v3018 = vunpack.c.l.b16 %v2949
      %v3019 = vunpack.c.l.b16 %v2950
      %v3020 = vunpack.c.l.b16 %v2951
      %v3021 = vunpack.c.l.b16 %v2952
      %v3022 = vunpack.c.l.b16 %v2953
      %v3023 = vunpack.c.l.b16 %v2954
      %v3024 = vunpack.c.l.b16 %v2955
      %v3025 = vunpack.c.l.b16 %v2956
      %v3026 = vunpack.c.l.b16 %v2957
      %v3027 = vunpack.c.l.b16 %v2958
      %v3028 = vunpack.c.l.b16 %v2959
      %v3029 = vunpack.c.l.b16 %v2960
      %v3030 = vunpack.c.l.b16 %v2961
      %v3031 = vunpack.c.l.b16 %v2962
      %v3032 = vunpack.c.l.b16 %v2963
      %v3033 = vunpack.c.l.b16 %v2964
      %v3034 = vunpack.c.l.b16 %v2965
      %v3035 = vunpack.c.l.b16 %v2966
      %v3036 = vunpack.c.l.b16 %v2967
      %v3037 = vunpack.c.l.b16 %v2968
      %v3038 = vunpack.c.l.b16 %v2969
      %v3039 = vunpack.c.l.b16 %v2970
      %v3040 = vunpack.c.l.b16 %v2971
      %v3041 = vunpack.c.l.b16 %v2972
      %v3042 = vunpack.c.l.b16 %v2973
      %v3043 = vunpack.c.l.b16 %v2974
      %v3044 = vunpack.c.l.b16 %v2975
      %v3045 = vpack.c.b16 %v3014, %v3013
      %v3046 = vpack.c.b16 %v3016, %v3015
      %v3047 = vpack.c.b16 %v3018, %v3017
      %v3048 = vpack.c.b16 %v3020, %v3019
      %v3049 = vpack.c.b16 %v3022, %v3021
      %v3050 = vpack.c.b16 %v3024, %v3023
      %v3051 = vpack.c.b16 %v3026, %v3025
      %v3052 = vpack.c.b16 %v3028, %v3027
      %v3053 = vpack.c.b16 %v3030, %v3029
      %v3054 = vpack.c.b16 %v3032, %v3031
      %v3055 = vpack.c.b16 %v3034, %v3033
      %v3056 = vpack.c.b16 %v3036, %v3035
      %v3057 = vpack.c.b16 %v3038, %v3037
      %v3058 = vpack.c.b16 %v3040, %v3039
      %v3059 = vpack.c.b16 %v3042, %v3041
      %v3060 = vpack.c.b16 %v3044, %v3043
      %v3065 = vunpack.c.l.b16 %v2977
      %v3066 = vunpack.c.l.b16 %v2978
      %v3067 = vunpack.c.l.b16 %v2979
      %v3068 = vunpack.c.l.b16 %v2980
      %v3069 = vpack.c.b16 %v3066, %v3065
      %v3070 = vpack.c.b16 %v3068, %v3067
      %v3074 = vsel %vm1701, %v3045, 0
      %v3077 = vsel %vm1701, %v3046, 0
      %v3080 = vsel %vm1701, %v3047, 0
      %v3083 = vsel %vm1701, %v3048, 0
      %v3086 = vsel %vm1701, %v3049, 0
      %v3089 = vsel %vm1701, %v3050, 0
      %v3092 = vsel %vm1701, %v3051, 0
      %v3095 = vsel %vm1701, %v3052, 0
      %v3098 = vsel %vm1701, %v3053, 0
      %v3101 = vsel %vm1701, %v3054, 0
      %v3104 = vsel %vm1701, %v3055, 0
      %v3107 = vsel %vm1701, %v3056, 0
      %v3110 = vsel %vm1701, %v3057, 0
      %v3113 = vsel %vm1701, %v3058, 0
      %v3116 = vsel %vm1701, %v3059, 0
      %v3119 = vsel %vm1701, %v3060, 0
      %3121 = vmatprep.subr.bf16.mxu0 0
      %3122 = vmatpush1.bf16.msra.mxu0 %v3069
      %3123 = vmatprep.subr.bf16.mxu0 0
      %3124 = vmatpush1.bf16.msra.mxu0 %v3070
      %3125 = vmatprep.subr.bf16.mxu0 0
      %3126 = vmatpush1.bf16.msra.mxu0 0
      %3127 = vmatprep.subr.bf16.mxu0 0
      %3128 = vmatpush1.bf16.msra.mxu0 0
      %3129 = vmatprep.subr.bf16.mxu0 0
      %3130 = vmatpush1.bf16.msra.mxu0 0
      %3131 = vmatprep.subr.bf16.mxu0 0
      %3132 = vmatpush1.bf16.msra.mxu0 0
      %3133 = vmatprep.subr.bf16.mxu0 0
      %3134 = vmatpush1.bf16.msra.mxu0 0
      %3135 = vmatprep.subr.bf16.mxu0 0
      %3136 = vmatpush1.bf16.msra.mxu0 0
      %3137 = vmatprep.subr.bf16.mxu0 0
      %3138 = vmatpush1.bf16.msra.mxu0 0
      %3139 = vmatprep.subr.bf16.mxu0 0
      %3140 = vmatpush1.bf16.msra.mxu0 0
      %3141 = vmatprep.subr.bf16.mxu0 0
      %3142 = vmatpush1.bf16.msra.mxu0 0
      %3143 = vmatprep.subr.bf16.mxu0 0
      %3144 = vmatpush1.bf16.msra.mxu0 0
      %3145 = vmatprep.subr.bf16.mxu0 0
      %3146 = vmatpush1.bf16.msra.mxu0 0
      %3147 = vmatprep.subr.bf16.mxu0 0
      %3148 = vmatpush1.bf16.msra.mxu0 0
      %3149 = vmatprep.subr.bf16.mxu0 0
      %3150 = vmatpush1.bf16.msra.mxu0 0
      %3151 = vmatprep.subr.bf16.mxu0 0
      %3152 = vmatpush1.bf16.msra.mxu0 0
      %3153 = vmatprep.mubr.bf16.mxu0 0
      %3154 = vmatmul.mubr.bf16.gmra.mrb[0].mxu0 %v3074
      %v3155 = vpop.f32.mrb[0].mxu0
      %v3156 = vadd.f32 0.0, %v3155
      %v3157 = vpop.f32.mrb[0].mxu0
      %v3158 = vpop.f32.mrb[0].mxu0
      %v3159 = vadd.f32 0.0, %v3158
      %v3160 = vpop.f32.mrb[0].mxu0
      %3161 = vmatprep.mubr.bf16.mxu0 0
      %3162 = vmatmul.mubr.bf16.gmra.mrb[0].mxu0 %v3077
      %v3163 = vpop.f32.mrb[0].mxu0
      %v3164 = vadd.f32 0.0, %v3163
      %v3165 = vpop.f32.mrb[0].mxu0
      %v3166 = vpop.f32.mrb[0].mxu0
      %v3167 = vadd.f32 0.0, %v3166
      %v3168 = vpop.f32.mrb[0].mxu0
      %3169 = vmatprep.mubr.bf16.mxu0 0
      %3170 = vmatmul.mubr.bf16.gmra.mrb[0].mxu0 %v3080
      %v3171 = vpop.f32.mrb[0].mxu0
      %v3172 = vadd.f32 0.0, %v3171
      %v3173 = vpop.f32.mrb[0].mxu0
      %v3174 = vpop.f32.mrb[0].mxu0
      %v3175 = vadd.f32 0.0, %v3174
      %v3176 = vpop.f32.mrb[0].mxu0
      %3177 = vmatprep.mubr.bf16.mxu0 0
      %3178 = vmatmul.mubr.bf16.gmra.mrb[0].mxu0 %v3083
      %v3179 = vpop.f32.mrb[0].mxu0
      %v3180 = vadd.f32 0.0, %v3179
      %v3181 = vpop.f32.mrb[0].mxu0
      %v3182 = vpop.f32.mrb[0].mxu0
      %v3183 = vadd.f32 0.0, %v3182
      %v3184 = vpop.f32.mrb[0].mxu0
      %3185 = vmatprep.mubr.bf16.mxu0 0
      %3186 = vmatmul.mubr.bf16.gmra.mrb[0].mxu0 %v3086
      %v3187 = vpop.f32.mrb[0].mxu0
      %v3188 = vadd.f32 0.0, %v3187
      %v3189 = vpop.f32.mrb[0].mxu0
      %v3190 = vpop.f32.mrb[0].mxu0
      %v3191 = vadd.f32 0.0, %v3190
      %v3192 = vpop.f32.mrb[0].mxu0
      %3193 = vmatprep.mubr.bf16.mxu0 0
      %3194 = vmatmul.mubr.bf16.gmra.mrb[0].mxu0 %v3089
      %v3195 = vpop.f32.mrb[0].mxu0
      %v3196 = vadd.f32 0.0, %v3195
      %v3197 = vpop.f32.mrb[0].mxu0
      %v3198 = vpop.f32.mrb[0].mxu0
      %v3199 = vadd.f32 0.0, %v3198
      %v3200 = vpop.f32.mrb[0].mxu0
      %3201 = vmatprep.mubr.bf16.mxu0 0
      %3202 = vmatmul.mubr.bf16.gmra.mrb[0].mxu0 %v3092
      %v3203 = vpop.f32.mrb[0].mxu0
      %v3204 = vadd.f32 0.0, %v3203
      %v3205 = vpop.f32.mrb[0].mxu0
      %v3206 = vpop.f32.mrb[0].mxu0
      %v3207 = vadd.f32 0.0, %v3206
      %v3208 = vpop.f32.mrb[0].mxu0
      %3209 = vmatprep.mubr.bf16.mxu0 0
      %3210 = vmatmul.mubr.bf16.gmra.mrb[0].mxu0 %v3095
      %v3211 = vpop.f32.mrb[0].mxu0
      %v3212 = vadd.f32 0.0, %v3211
      %v3213 = vpop.f32.mrb[0].mxu0
      %v3214 = vpop.f32.mrb[0].mxu0
      %v3215 = vadd.f32 0.0, %v3214
      %v3216 = vpop.f32.mrb[0].mxu0
      %3217 = vmatprep.mubr.bf16.mxu0 0
      %3218 = vmatmul.mubr.bf16.gmra.mrb[0].mxu0 %v3098
      %v3219 = vpop.f32.mrb[0].mxu0
      %v3220 = vadd.f32 0.0, %v3219
      %v3221 = vpop.f32.mrb[0].mxu0
      %v3222 = vpop.f32.mrb[0].mxu0
      %v3223 = vadd.f32 0.0, %v3222
      %v3224 = vpop.f32.mrb[0].mxu0
      %3225 = vmatprep.mubr.bf16.mxu0 0
      %3226 = vmatmul.mubr.bf16.gmra.mrb[0].mxu0 %v3101
      %v3227 = vpop.f32.mrb[0].mxu0
      %v3228 = vadd.f32 0.0, %v3227
      %v3229 = vpop.f32.mrb[0].mxu0
      %v3230 = vpop.f32.mrb[0].mxu0
      %v3231 = vadd.f32 0.0, %v3230
      %v3232 = vpop.f32.mrb[0].mxu0
      %3233 = vmatprep.mubr.bf16.mxu0 0
      %3234 = vmatmul.mubr.bf16.gmra.mrb[0].mxu0 %v3104
      %v3235 = vpop.f32.mrb[0].mxu0
      %v3236 = vadd.f32 0.0, %v3235
      %v3237 = vpop.f32.mrb[0].mxu0
      %v3238 = vpop.f32.mrb[0].mxu0
      %v3239 = vadd.f32 0.0, %v3238
      %v3240 = vpop.f32.mrb[0].mxu0
      %3241 = vmatprep.mubr.bf16.mxu0 0
      %3242 = vmatmul.mubr.bf16.gmra.mrb[0].mxu0 %v3107
      %v3243 = vpop.f32.mrb[0].mxu0
      %v3244 = vadd.f32 0.0, %v3243
      %v3245 = vpop.f32.mrb[0].mxu0
      %v3246 = vpop.f32.mrb[0].mxu0
      %v3247 = vadd.f32 0.0, %v3246
      %v3248 = vpop.f32.mrb[0].mxu0
      %3249 = vmatprep.mubr.bf16.mxu0 0
      %3250 = vmatmul.mubr.bf16.gmra.mrb[0].mxu0 %v3110
      %v3251 = vpop.f32.mrb[0].mxu0
      %v3252 = vadd.f32 0.0, %v3251
      %v3253 = vpop.f32.mrb[0].mxu0
      %v3254 = vpop.f32.mrb[0].mxu0
      %v3255 = vadd.f32 0.0, %v3254
      %v3256 = vpop.f32.mrb[0].mxu0
      %3257 = vmatprep.mubr.bf16.mxu0 0
      %3258 = vmatmul.mubr.bf16.gmra.mrb[0].mxu0 %v3113
      %v3259 = vpop.f32.mrb[0].mxu0
      %v3260 = vadd.f32 0.0, %v3259
      %v3261 = vpop.f32.mrb[0].mxu0
      %v3262 = vpop.f32.mrb[0].mxu0
      %v3263 = vadd.f32 0.0, %v3262
      %v3264 = vpop.f32.mrb[0].mxu0
      %3265 = vmatprep.mubr.bf16.mxu0 0
      %3266 = vmatmul.mubr.bf16.gmra.mrb[0].mxu0 %v3116
      %v3267 = vpop.f32.mrb[0].mxu0
      %v3268 = vadd.f32 0.0, %v3267
      %v3269 = vpop.f32.mrb[0].mxu0
      %v3270 = vpop.f32.mrb[0].mxu0
      %v3271 = vadd.f32 0.0, %v3270
      %v3272 = vpop.f32.mrb[0].mxu0
      %3273 = vmatprep.mubr.bf16.mxu0 0
      %3274 = vmatmul.mubr.bf16.gmra.mrb[0].mxu0 %v3119
      %v3275 = vpop.f32.mrb[0].mxu0
      %v3276 = vadd.f32 0.0, %v3275
      %v3277 = vpop.f32.mrb[0].mxu0
      %v3278 = vpop.f32.mrb[0].mxu0
      %v3279 = vadd.f32 0.0, %v3278
      %v3280 = vpop.f32.mrb[0].mxu0
      %3281 = vdwg.mxu0
      %v3282 = vadd.f32 %v2880, %v3156
      %v3283 = vadd.f32 %v2881, %v3159
      %v3284 = vadd.f32 %v2882, %v3164
      %v3285 = vadd.f32 %v2883, %v3167
      %v3286 = vadd.f32 %v2884, %v3172
      %v3287 = vadd.f32 %v2885, %v3175
      %v3288 = vadd.f32 %v2886, %v3180
      %v3289 = vadd.f32 %v2887, %v3183
      %v3290 = vadd.f32 %v2888, %v3188
      %v3291 = vadd.f32 %v2889, %v3191
      %v3292 = vadd.f32 %v2890, %v3196
      %v3293 = vadd.f32 %v2891, %v3199
      %v3294 = vadd.f32 %v2892, %v3204
      %v3295 = vadd.f32 %v2893, %v3207
      %v3296 = vadd.f32 %v2894, %v3212
      %v3297 = vadd.f32 %v2895, %v3215
      %v3298 = vadd.f32 %v2896, %v3220
      %v3299 = vadd.f32 %v2897, %v3223
      %v3300 = vadd.f32 %v2898, %v3228
      %v3301 = vadd.f32 %v2899, %v3231
      %v3302 = vadd.f32 %v2900, %v3236
      %v3303 = vadd.f32 %v2901, %v3239
      %v3304 = vadd.f32 %v2902, %v3244
      %v3305 = vadd.f32 %v2903, %v3247
      %v3306 = vadd.f32 %v2904, %v3252
      %v3307 = vadd.f32 %v2905, %v3255
      %v3308 = vadd.f32 %v2906, %v3260
      %v3309 = vadd.f32 %v2907, %v3263
      %v3310 = vadd.f32 %v2908, %v3268
      %v3311 = vadd.f32 %v2909, %v3271
      %v3312 = vadd.f32 %v2910, %v3276
      %v3313 = vadd.f32 %v2911, %v3279
      %v3314 = vld [vmem:[#allocation2 + $0x8] sm:$0xf]
      %v3315 = vld [vmem:[#allocation2 + $0xc] sm:$0xf]
      %v3316 = vld [vmem:[#allocation2 + $0x10] sm:$0xf]
      %v3317 = vld [vmem:[#allocation2 + $0x14] sm:$0xf]
      %v3318 = vld [vmem:[#allocation2 + $0x18] sm:$0xf]
      %v3319 = vld [vmem:[#allocation2 + $0x1c] sm:$0xf]
      %v3320 = vld [vmem:[#allocation2 + $0x20] sm:$0xf]
      %v3321 = vld [vmem:[#allocation2 + $0x24] sm:$0xf]
      %v3322 = vld [vmem:[#allocation2 + $0x28] sm:$0xf]
      %v3323 = vld [vmem:[#allocation2 + $0x2c] sm:$0xf]
      %v3324 = vld [vmem:[#allocation2 + $0x30] sm:$0xf]
      %v3325 = vld [vmem:[#allocation2 + $0x34] sm:$0xf]
      %v3326 = vld [vmem:[#allocation2 + $0x38] sm:$0xf]
      %v3327 = vld [vmem:[#allocation2 + $0x3c] sm:$0xf]
      %v3328 = vld [vmem:[#allocation2 + $0x40] sm:$0xf]
      %v3329 = vld [vmem:[#allocation2 + $0x44] sm:$0xf]
      %v3330 = vld [vmem:[#allocation2 + $0x48] sm:$0xf]
      %v3331 = vld [vmem:[#allocation2 + $0x4c] sm:$0xf]
      %v3332 = vld [vmem:[#allocation2 + $0x50] sm:$0xf]
      %v3333 = vld [vmem:[#allocation2 + $0x54] sm:$0xf]
      %v3334 = vld [vmem:[#allocation2 + $0x58] sm:$0xf]
      %v3335 = vld [vmem:[#allocation2 + $0x5c] sm:$0xf]
      %v3336 = vld [vmem:[#allocation2 + $0x60] sm:$0xf]
      %v3337 = vld [vmem:[#allocation2 + $0x64] sm:$0xf]
      %v3338 = vld [vmem:[#allocation2 + $0x68] sm:$0xf]
      %v3339 = vld [vmem:[#allocation2 + $0x6c] sm:$0xf]
      %v3340 = vld [vmem:[#allocation2 + $0x70] sm:$0xf]
      %v3341 = vld [vmem:[#allocation2 + $0x74] sm:$0xf]
      %v3342 = vld [vmem:[#allocation2 + $0x78] sm:$0xf]
      %v3343 = vld [vmem:[#allocation2 + $0x7c] sm:$0xf]
      %v3344 = vld [vmem:[#allocation2 + $0x80] sm:$0xf]
      %v3345 = vld [vmem:[#allocation2 + $0x84] sm:$0xf]
      %v3346 = vld [vmem:[#allocation2 + $0x88] sm:$0x1]
      %s3347 = scalar_lea.vmem %s3, 64
      %v3348 = vld [vmem:[%s3347] sm:$0xf]
      %v3349 = vld [vmem:[%s3347 + $0x4] sm:$0xf]
      %v3350 = vld [vmem:[%s3347 + $0x8] sm:$0xf]
      %v3351 = vld [vmem:[%s3347 + $0xc] sm:$0xf]
      %v3385 = vunpack.c.l.b16 %v3314
      %v3386 = vunpack.c.l.b16 %v3315
      %v3387 = vunpack.c.l.b16 %v3316
      %v3388 = vunpack.c.l.b16 %v3317
      %v3389 = vunpack.c.l.b16 %v3318
      %v3390 = vunpack.c.l.b16 %v3319
      %v3391 = vunpack.c.l.b16 %v3320
      %v3392 = vunpack.c.l.b16 %v3321
      %v3393 = vunpack.c.l.b16 %v3322
      %v3394 = vunpack.c.l.b16 %v3323
      %v3395 = vunpack.c.l.b16 %v3324
      %v3396 = vunpack.c.l.b16 %v3325
      %v3397 = vunpack.c.l.b16 %v3326
      %v3398 = vunpack.c.l.b16 %v3327
      %v3399 = vunpack.c.l.b16 %v3328
      %v3400 = vunpack.c.l.b16 %v3329
      %v3401 = vunpack.c.l.b16 %v3330
      %v3402 = vunpack.c.l.b16 %v3331
      %v3403 = vunpack.c.l.b16 %v3332
      %v3404 = vunpack.c.l.b16 %v3333
      %v3405 = vunpack.c.l.b16 %v3334
      %v3406 = vunpack.c.l.b16 %v3335
      %v3407 = vunpack.c.l.b16 %v3336
      %v3408 = vunpack.c.l.b16 %v3337
      %v3409 = vunpack.c.l.b16 %v3338
      %v3410 = vunpack.c.l.b16 %v3339
      %v3411 = vunpack.c.l.b16 %v3340
      %v3412 = vunpack.c.l.b16 %v3341
      %v3413 = vunpack.c.l.b16 %v3342
      %v3414 = vunpack.c.l.b16 %v3343
      %v3415 = vunpack.c.l.b16 %v3344
      %v3416 = vunpack.c.l.b16 %v3345
      %v3417 = vunpack.c.l.b16 %v3346
      %v3418 = vpack.c.b16 %v3386, %v3385
      %v3419 = vpack.c.b16 %v3388, %v3387
      %v3420 = vpack.c.b16 %v3390, %v3389
      %v3421 = vpack.c.b16 %v3392, %v3391
      %v3422 = vpack.c.b16 %v3394, %v3393
      %v3423 = vpack.c.b16 %v3396, %v3395
      %v3424 = vpack.c.b16 %v3398, %v3397
      %v3425 = vpack.c.b16 %v3400, %v3399
      %v3426 = vpack.c.b16 %v3402, %v3401
      %v3427 = vpack.c.b16 %v3404, %v3403
      %v3428 = vpack.c.b16 %v3406, %v3405
      %v3429 = vpack.c.b16 %v3408, %v3407
      %v3430 = vpack.c.b16 %v3410, %v3409
      %v3431 = vpack.c.b16 %v3412, %v3411
      %v3432 = vpack.c.b16 %v3414, %v3413
      %v3433 = vpack.c.b16 %v3416, %v3415
      %v3434 = vpack.c.b16 %v3417, %v3417
      %v3436 = vshrl.u32 %v3418, 16
      %v3438 = vshll.u32 %v3418, 16
      %v3440 = vrot.slane %v3438, 1
      %v3441 = vor.u32 %v3436, %v3440
      %v3443 = vshll.u32 %v3419, 16
      %v3445 = vrot.slane %v3443, 1
      %v3446 = vsel %vm1556, %v3441, %v3445
      %v3447 = vshrl.u32 %v3419, 16
      %v3449 = vor.u32 %v3447, %v3445
      %v3451 = vshll.u32 %v3420, 16
      %v3453 = vrot.slane %v3451, 1
      %v3454 = vsel %vm1556, %v3449, %v3453
      %v3455 = vshrl.u32 %v3420, 16
      %v3457 = vor.u32 %v3455, %v3453
      %v3459 = vshll.u32 %v3421, 16
      %v3461 = vrot.slane %v3459, 1
      %v3462 = vsel %vm1556, %v3457, %v3461
      %v3463 = vshrl.u32 %v3421, 16
      %v3465 = vor.u32 %v3463, %v3461
      %v3467 = vshll.u32 %v3422, 16
      %v3469 = vrot.slane %v3467, 1
      %v3470 = vsel %vm1556, %v3465, %v3469
      %v3471 = vshrl.u32 %v3422, 16
      %v3473 = vor.u32 %v3471, %v3469
      %v3475 = vshll.u32 %v3423, 16
      %v3477 = vrot.slane %v3475, 1
      %v3478 = vsel %vm1556, %v3473, %v3477
      %v3479 = vshrl.u32 %v3423, 16
      %v3481 = vor.u32 %v3479, %v3477
      %v3483 = vshll.u32 %v3424, 16
      %v3485 = vrot.slane %v3483, 1
      %v3486 = vsel %vm1556, %v3481, %v3485
      %v3487 = vshrl.u32 %v3424, 16
      %v3489 = vor.u32 %v3487, %v3485
      %v3491 = vshll.u32 %v3425, 16
      %v3493 = vrot.slane %v3491, 1
      %v3494 = vsel %vm1556, %v3489, %v3493
      %v3495 = vshrl.u32 %v3425, 16
      %v3497 = vor.u32 %v3495, %v3493
      %v3499 = vshll.u32 %v3426, 16
      %v3501 = vrot.slane %v3499, 1
      %v3502 = vsel %vm1556, %v3497, %v3501
      %v3503 = vshrl.u32 %v3426, 16
      %v3505 = vor.u32 %v3503, %v3501
      %v3507 = vshll.u32 %v3427, 16
      %v3509 = vrot.slane %v3507, 1
      %v3510 = vsel %vm1556, %v3505, %v3509
      %v3511 = vshrl.u32 %v3427, 16
      %v3513 = vor.u32 %v3511, %v3509
      %v3515 = vshll.u32 %v3428, 16
      %v3517 = vrot.slane %v3515, 1
      %v3518 = vsel %vm1556, %v3513, %v3517
      %v3519 = vshrl.u32 %v3428, 16
      %v3521 = vor.u32 %v3519, %v3517
      %v3523 = vshll.u32 %v3429, 16
      %v3525 = vrot.slane %v3523, 1
      %v3526 = vsel %vm1556, %v3521, %v3525
      %v3527 = vshrl.u32 %v3429, 16
      %v3529 = vor.u32 %v3527, %v3525
      %v3531 = vshll.u32 %v3430, 16
      %v3533 = vrot.slane %v3531, 1
      %v3534 = vsel %vm1556, %v3529, %v3533
      %v3535 = vshrl.u32 %v3430, 16
      %v3537 = vor.u32 %v3535, %v3533
      %v3539 = vshll.u32 %v3431, 16
      %v3541 = vrot.slane %v3539, 1
      %v3542 = vsel %vm1556, %v3537, %v3541
      %v3543 = vshrl.u32 %v3431, 16
      %v3545 = vor.u32 %v3543, %v3541
      %v3547 = vshll.u32 %v3432, 16
      %v3549 = vrot.slane %v3547, 1
      %v3550 = vsel %vm1556, %v3545, %v3549
      %v3551 = vshrl.u32 %v3432, 16
      %v3553 = vor.u32 %v3551, %v3549
      %v3555 = vshll.u32 %v3433, 16
      %v3557 = vrot.slane %v3555, 1
      %v3558 = vsel %vm1556, %v3553, %v3557
      %v3559 = vshrl.u32 %v3433, 16
      %v3561 = vor.u32 %v3559, %v3557
      %v3563 = vshll.u32 %v3434, 16
      %v3565 = vrot.slane %v3563, 1
      %v3566 = vsel %vm1556, %v3561, %v3565
      %v3571 = vunpack.c.l.b16 %v3348
      %v3572 = vunpack.c.l.b16 %v3349
      %v3573 = vunpack.c.l.b16 %v3350
      %v3574 = vunpack.c.l.b16 %v3351
      %v3575 = vpack.c.b16 %v3572, %v3571
      %v3576 = vpack.c.b16 %v3574, %v3573
      %v3580 = vsel %vm1701, %v3446, 0
      %v3583 = vsel %vm1701, %v3454, 0
      %v3586 = vsel %vm1701, %v3462, 0
      %v3589 = vsel %vm1701, %v3470, 0
      %v3592 = vsel %vm1701, %v3478, 0
      %v3595 = vsel %vm1701, %v3486, 0
      %v3598 = vsel %vm1701, %v3494, 0
      %v3601 = vsel %vm1701, %v3502, 0
      %v3604 = vsel %vm1701, %v3510, 0
      %v3607 = vsel %vm1701, %v3518, 0
      %v3610 = vsel %vm1701, %v3526, 0
      %v3613 = vsel %vm1701, %v3534, 0
      %v3616 = vsel %vm1701, %v3542, 0
      %v3619 = vsel %vm1701, %v3550, 0
      %v3622 = vsel %vm1701, %v3558, 0
      %v3625 = vsel %vm1701, %v3566, 0
      %3627 = vmatprep.subr.bf16.mxu0 0
      %3628 = vmatpush1.bf16.msra.mxu0 %v3575
      %3629 = vmatprep.subr.bf16.mxu0 0
      %3630 = vmatpush1.bf16.msra.mxu0 %v3576
      %3631 = vmatprep.subr.bf16.mxu0 0
      %3632 = vmatpush1.bf16.msra.mxu0 0
      %3633 = vmatprep.subr.bf16.mxu0 0
      %3634 = vmatpush1.bf16.msra.mxu0 0
      %3635 = vmatprep.subr.bf16.mxu0 0
      %3636 = vmatpush1.bf16.msra.mxu0 0
      %3637 = vmatprep.subr.bf16.mxu0 0
      %3638 = vmatpush1.bf16.msra.mxu0 0
      %3639 = vmatprep.subr.bf16.mxu0 0
      %3640 = vmatpush1.bf16.msra.mxu0 0
      %3641 = vmatprep.subr.bf16.mxu0 0
      %3642 = vmatpush1.bf16.msra.mxu0 0
      %3643 = vmatprep.subr.bf16.mxu0 0
      %3644 = vmatpush1.bf16.msra.mxu0 0
      %3645 = vmatprep.subr.bf16.mxu0 0
      %3646 = vmatpush1.bf16.msra.mxu0 0
      %3647 = vmatprep.subr.bf16.mxu0 0
      %3648 = vmatpush1.bf16.msra.mxu0 0
      %3649 = vmatprep.subr.bf16.mxu0 0
      %3650 = vmatpush1.bf16.msra.mxu0 0
      %3651 = vmatprep.subr.bf16.mxu0 0
      %3652 = vmatpush1.bf16.msra.mxu0 0
      %3653 = vmatprep.subr.bf16.mxu0 0
      %3654 = vmatpush1.bf16.msra.mxu0 0
      %3655 = vmatprep.subr.bf16.mxu0 0
      %3656 = vmatpush1.bf16.msra.mxu0 0
      %3657 = vmatprep.subr.bf16.mxu0 0
      %3658 = vmatpush1.bf16.msra.mxu0 0
      %3659 = vmatprep.mubr.bf16.mxu0 0
      %3660 = vmatmul.mubr.bf16.gmra.mrb[0].mxu0 %v3580
      %v3661 = vpop.f32.mrb[0].mxu0
      %v3662 = vadd.f32 0.0, %v3661
      %v3663 = vpop.f32.mrb[0].mxu0
      %v3664 = vpop.f32.mrb[0].mxu0
      %v3665 = vadd.f32 0.0, %v3664
      %v3666 = vpop.f32.mrb[0].mxu0
      %3667 = vmatprep.mubr.bf16.mxu0 0
      %3668 = vmatmul.mubr.bf16.gmra.mrb[0].mxu0 %v3583
      %v3669 = vpop.f32.mrb[0].mxu0
      %v3670 = vadd.f32 0.0, %v3669
      %v3671 = vpop.f32.mrb[0].mxu0
      %v3672 = vpop.f32.mrb[0].mxu0
      %v3673 = vadd.f32 0.0, %v3672
      %v3674 = vpop.f32.mrb[0].mxu0
      %3675 = vmatprep.mubr.bf16.mxu0 0
      %3676 = vmatmul.mubr.bf16.gmra.mrb[0].mxu0 %v3586
      %v3677 = vpop.f32.mrb[0].mxu0
      %v3678 = vadd.f32 0.0, %v3677
      %v3679 = vpop.f32.mrb[0].mxu0
      %v3680 = vpop.f32.mrb[0].mxu0
      %v3681 = vadd.f32 0.0, %v3680
      %v3682 = vpop.f32.mrb[0].mxu0
      %3683 = vmatprep.mubr.bf16.mxu0 0
      %3684 = vmatmul.mubr.bf16.gmra.mrb[0].mxu0 %v3589
      %v3685 = vpop.f32.mrb[0].mxu0
      %v3686 = vadd.f32 0.0, %v3685
      %v3687 = vpop.f32.mrb[0].mxu0
      %v3688 = vpop.f32.mrb[0].mxu0
      %v3689 = vadd.f32 0.0, %v3688
      %v3690 = vpop.f32.mrb[0].mxu0
      %3691 = vmatprep.mubr.bf16.mxu0 0
      %3692 = vmatmul.mubr.bf16.gmra.mrb[0].mxu0 %v3592
      %v3693 = vpop.f32.mrb[0].mxu0
      %v3694 = vadd.f32 0.0, %v3693
      %v3695 = vpop.f32.mrb[0].mxu0
      %v3696 = vpop.f32.mrb[0].mxu0
      %v3697 = vadd.f32 0.0, %v3696
      %v3698 = vpop.f32.mrb[0].mxu0
      %3699 = vmatprep.mubr.bf16.mxu0 0
      %3700 = vmatmul.mubr.bf16.gmra.mrb[0].mxu0 %v3595
      %v3701 = vpop.f32.mrb[0].mxu0
      %v3702 = vadd.f32 0.0, %v3701
      %v3703 = vpop.f32.mrb[0].mxu0
      %v3704 = vpop.f32.mrb[0].mxu0
      %v3705 = vadd.f32 0.0, %v3704
      %v3706 = vpop.f32.mrb[0].mxu0
      %3707 = vmatprep.mubr.bf16.mxu0 0
      %3708 = vmatmul.mubr.bf16.gmra.mrb[0].mxu0 %v3598
      %v3709 = vpop.f32.mrb[0].mxu0
      %v3710 = vadd.f32 0.0, %v3709
      %v3711 = vpop.f32.mrb[0].mxu0
      %v3712 = vpop.f32.mrb[0].mxu0
      %v3713 = vadd.f32 0.0, %v3712
      %v3714 = vpop.f32.mrb[0].mxu0
      %3715 = vmatprep.mubr.bf16.mxu0 0
      %3716 = vmatmul.mubr.bf16.gmra.mrb[0].mxu0 %v3601
      %v3717 = vpop.f32.mrb[0].mxu0
      %v3718 = vadd.f32 0.0, %v3717
      %v3719 = vpop.f32.mrb[0].mxu0
      %v3720 = vpop.f32.mrb[0].mxu0
      %v3721 = vadd.f32 0.0, %v3720
      %v3722 = vpop.f32.mrb[0].mxu0
      %3723 = vmatprep.mubr.bf16.mxu0 0
      %3724 = vmatmul.mubr.bf16.gmra.mrb[0].mxu0 %v3604
      %v3725 = vpop.f32.mrb[0].mxu0
      %v3726 = vadd.f32 0.0, %v3725
      %v3727 = vpop.f32.mrb[0].mxu0
      %v3728 = vpop.f32.mrb[0].mxu0
      %v3729 = vadd.f32 0.0, %v3728
      %v3730 = vpop.f32.mrb[0].mxu0
      %3731 = vmatprep.mubr.bf16.mxu0 0
      %3732 = vmatmul.mubr.bf16.gmra.mrb[0].mxu0 %v3607
      %v3733 = vpop.f32.mrb[0].mxu0
      %v3734 = vadd.f32 0.0, %v3733
      %v3735 = vpop.f32.mrb[0].mxu0
      %v3736 = vpop.f32.mrb[0].mxu0
      %v3737 = vadd.f32 0.0, %v3736
      %v3738 = vpop.f32.mrb[0].mxu0
      %3739 = vmatprep.mubr.bf16.mxu0 0
      %3740 = vmatmul.mubr.bf16.gmra.mrb[0].mxu0 %v3610
      %v3741 = vpop.f32.mrb[0].mxu0
      %v3742 = vadd.f32 0.0, %v3741
      %v3743 = vpop.f32.mrb[0].mxu0
      %v3744 = vpop.f32.mrb[0].mxu0
      %v3745 = vadd.f32 0.0, %v3744
      %v3746 = vpop.f32.mrb[0].mxu0
      %3747 = vmatprep.mubr.bf16.mxu0 0
      %3748 = vmatmul.mubr.bf16.gmra.mrb[0].mxu0 %v3613
      %v3749 = vpop.f32.mrb[0].mxu0
      %v3750 = vadd.f32 0.0, %v3749
      %v3751 = vpop.f32.mrb[0].mxu0
      %v3752 = vpop.f32.mrb[0].mxu0
      %v3753 = vadd.f32 0.0, %v3752
      %v3754 = vpop.f32.mrb[0].mxu0
      %3755 = vmatprep.mubr.bf16.mxu0 0
      %3756 = vmatmul.mubr.bf16.gmra.mrb[0].mxu0 %v3616
      %v3757 = vpop.f32.mrb[0].mxu0
      %v3758 = vadd.f32 0.0, %v3757
      %v3759 = vpop.f32.mrb[0].mxu0
      %v3760 = vpop.f32.mrb[0].mxu0
      %v3761 = vadd.f32 0.0, %v3760
      %v3762 = vpop.f32.mrb[0].mxu0
      %3763 = vmatprep.mubr.bf16.mxu0 0
      %3764 = vmatmul.mubr.bf16.gmra.mrb[0].mxu0 %v3619
      %v3765 = vpop.f32.mrb[0].mxu0
      %v3766 = vadd.f32 0.0, %v3765
      %v3767 = vpop.f32.mrb[0].mxu0
      %v3768 = vpop.f32.mrb[0].mxu0
      %v3769 = vadd.f32 0.0, %v3768
      %v3770 = vpop.f32.mrb[0].mxu0
      %3771 = vmatprep.mubr.bf16.mxu0 0
      %3772 = vmatmul.mubr.bf16.gmra.mrb[0].mxu0 %v3622
      %v3773 = vpop.f32.mrb[0].mxu0
      %v3774 = vadd.f32 0.0, %v3773
      %v3775 = vpop.f32.mrb[0].mxu0
      %v3776 = vpop.f32.mrb[0].mxu0
      %v3777 = vadd.f32 0.0, %v3776
      %v3778 = vpop.f32.mrb[0].mxu0
      %3779 = vmatprep.mubr.bf16.mxu0 0
      %3780 = vmatmul.mubr.bf16.gmra.mrb[0].mxu0 %v3625
      %v3781 = vpop.f32.mrb[0].mxu0
      %v3782 = vadd.f32 0.0, %v3781
      %v3783 = vpop.f32.mrb[0].mxu0
      %v3784 = vpop.f32.mrb[0].mxu0
      %v3785 = vadd.f32 0.0, %v3784
      %v3786 = vpop.f32.mrb[0].mxu0
      %3787 = vdwg.mxu0
      %v3788 = vadd.f32 %v3282, %v3662
      %v3789 = vadd.f32 %v3283, %v3665
      %v3790 = vadd.f32 %v3284, %v3670
      %v3791 = vadd.f32 %v3285, %v3673
      %v3792 = vadd.f32 %v3286, %v3678
      %v3793 = vadd.f32 %v3287, %v3681
      %v3794 = vadd.f32 %v3288, %v3686
      %v3795 = vadd.f32 %v3289, %v3689
      %v3796 = vadd.f32 %v3290, %v3694
      %v3797 = vadd.f32 %v3291, %v3697
      %v3798 = vadd.f32 %v3292, %v3702
      %v3799 = vadd.f32 %v3293, %v3705
      %v3800 = vadd.f32 %v3294, %v3710
      %v3801 = vadd.f32 %v3295, %v3713
      %v3802 = vadd.f32 %v3296, %v3718
      %v3803 = vadd.f32 %v3297, %v3721
      %v3804 = vadd.f32 %v3298, %v3726
      %v3805 = vadd.f32 %v3299, %v3729
      %v3806 = vadd.f32 %v3300, %v3734
      %v3807 = vadd.f32 %v3301, %v3737
      %v3808 = vadd.f32 %v3302, %v3742
      %v3809 = vadd.f32 %v3303, %v3745
      %v3810 = vadd.f32 %v3304, %v3750
      %v3811 = vadd.f32 %v3305, %v3753
      %v3812 = vadd.f32 %v3306, %v3758
      %v3813 = vadd.f32 %v3307, %v3761
      %v3814 = vadd.f32 %v3308, %v3766
      %v3815 = vadd.f32 %v3309, %v3769
      %v3816 = vadd.f32 %v3310, %v3774
      %v3817 = vadd.f32 %v3311, %v3777
      %v3818 = vadd.f32 %v3312, %v3782
      %v3819 = vadd.f32 %v3313, %v3785
      %v3820 = vld [vmem:[#allocation2 + $0x8] sm:$0xe]
      %v3821 = vsel %vm2471, %v3820, 0
      %v3822 = vsel %vm2472, %v3315, 0
      %v3823 = vsel %vm2473, %v3316, 0
      %v3824 = vsel %vm2474, %v3317, 0
      %v3825 = vsel %vm2475, %v3318, 0
      %v3826 = vsel %vm2476, %v3319, 0
      %v3827 = vsel %vm2477, %v3320, 0
      %v3828 = vsel %vm2478, %v3321, 0
      %v3829 = vsel %vm2479, %v3322, 0
      %v3830 = vsel %vm2480, %v3323, 0
      %v3831 = vsel %vm2481, %v3324, 0
      %v3832 = vsel %vm2482, %v3325, 0
      %v3833 = vsel %vm2483, %v3326, 0
      %v3834 = vsel %vm2484, %v3327, 0
      %v3835 = vsel %vm2485, %v3328, 0
      %v3836 = vsel %vm2486, %v3329, 0
      %v3837 = vsel %vm2487, %v3330, 0
      %v3838 = vsel %vm2488, %v3331, 0
      %v3839 = vsel %vm2489, %v3332, 0
      %v3840 = vsel %vm2490, %v3333, 0
      %v3841 = vsel %vm2491, %v3334, 0
      %v3842 = vsel %vm2492, %v3335, 0
      %v3843 = vsel %vm2493, %v3336, 0
      %v3844 = vsel %vm2494, %v3337, 0
      %v3845 = vsel %vm2495, %v3338, 0
      %v3846 = vsel %vm2496, %v3339, 0
      %v3847 = vsel %vm2497, %v3340, 0
      %v3848 = vsel %vm2498, %v3341, 0
      %v3849 = vsel %vm2499, %v3342, 0
      %v3850 = vsel %vm2500, %v3343, 0
      %v3851 = vsel %vm2501, %v3344, 0
      %v3852 = vsel %vm2502, %v3345, 0
      %v3853 = vsel %vm2503, %v3346, 0
      %s3854 = scalar_lea.vmem %s3, 80
      %v3855 = vld [vmem:[%s3854] sm:$0xf]
      %v3856 = vld [vmem:[%s3854 + $0x4] sm:$0xf]
      %v3857 = vld [vmem:[%s3854 + $0x8] sm:$0xf]
      %v3858 = vld [vmem:[%s3854 + $0xc] sm:$0xf]
      %v3892 = vunpack.c.l.b16 %v3821
      %v3893 = vunpack.c.l.b16 %v3822
      %v3894 = vunpack.c.l.b16 %v3823
      %v3895 = vunpack.c.l.b16 %v3824
      %v3896 = vunpack.c.l.b16 %v3825
      %v3897 = vunpack.c.l.b16 %v3826
      %v3898 = vunpack.c.l.b16 %v3827
      %v3899 = vunpack.c.l.b16 %v3828
      %v3900 = vunpack.c.l.b16 %v3829
      %v3901 = vunpack.c.l.b16 %v3830
      %v3902 = vunpack.c.l.b16 %v3831
      %v3903 = vunpack.c.l.b16 %v3832
      %v3904 = vunpack.c.l.b16 %v3833
      %v3905 = vunpack.c.l.b16 %v3834
      %v3906 = vunpack.c.l.b16 %v3835
      %v3907 = vunpack.c.l.b16 %v3836
      %v3908 = vunpack.c.l.b16 %v3837
      %v3909 = vunpack.c.l.b16 %v3838
      %v3910 = vunpack.c.l.b16 %v3839
      %v3911 = vunpack.c.l.b16 %v3840
      %v3912 = vunpack.c.l.b16 %v3841
      %v3913 = vunpack.c.l.b16 %v3842
      %v3914 = vunpack.c.l.b16 %v3843
      %v3915 = vunpack.c.l.b16 %v3844
      %v3916 = vunpack.c.l.b16 %v3845
      %v3917 = vunpack.c.l.b16 %v3846
      %v3918 = vunpack.c.l.b16 %v3847
      %v3919 = vunpack.c.l.b16 %v3848
      %v3920 = vunpack.c.l.b16 %v3849
      %v3921 = vunpack.c.l.b16 %v3850
      %v3922 = vunpack.c.l.b16 %v3851
      %v3923 = vunpack.c.l.b16 %v3852
      %v3924 = vunpack.c.l.b16 %v3853
      %v3925 = vpack.c.b16 %v3893, %v3892
      %v3926 = vpack.c.b16 %v3895, %v3894
      %v3927 = vpack.c.b16 %v3897, %v3896
      %v3928 = vpack.c.b16 %v3899, %v3898
      %v3929 = vpack.c.b16 %v3901, %v3900
      %v3930 = vpack.c.b16 %v3903, %v3902
      %v3931 = vpack.c.b16 %v3905, %v3904
      %v3932 = vpack.c.b16 %v3907, %v3906
      %v3933 = vpack.c.b16 %v3909, %v3908
      %v3934 = vpack.c.b16 %v3911, %v3910
      %v3935 = vpack.c.b16 %v3913, %v3912
      %v3936 = vpack.c.b16 %v3915, %v3914
      %v3937 = vpack.c.b16 %v3917, %v3916
      %v3938 = vpack.c.b16 %v3919, %v3918
      %v3939 = vpack.c.b16 %v3921, %v3920
      %v3940 = vpack.c.b16 %v3923, %v3922
      %v3941 = vpack.c.b16 %v3924, %v3924
      %v3942 = vrot.slane %v3925, 1
      %v3943 = vrot.slane %v3926, 1
      %v3944 = vsel %vm2625, %v3942, %v3943
      %v3945 = vrot.slane %v3927, 1
      %v3946 = vsel %vm2625, %v3943, %v3945
      %v3947 = vrot.slane %v3928, 1
      %v3948 = vsel %vm2625, %v3945, %v3947
      %v3949 = vrot.slane %v3929, 1
      %v3950 = vsel %vm2625, %v3947, %v3949
      %v3951 = vrot.slane %v3930, 1
      %v3952 = vsel %vm2625, %v3949, %v3951
      %v3953 = vrot.slane %v3931, 1
      %v3954 = vsel %vm2625, %v3951, %v3953
      %v3955 = vrot.slane %v3932, 1
      %v3956 = vsel %vm2625, %v3953, %v3955
      %v3957 = vrot.slane %v3933, 1
      %v3958 = vsel %vm2625, %v3955, %v3957
      %v3959 = vrot.slane %v3934, 1
      %v3960 = vsel %vm2625, %v3957, %v3959
      %v3961 = vrot.slane %v3935, 1
      %v3962 = vsel %vm2625, %v3959, %v3961
      %v3963 = vrot.slane %v3936, 1
      %v3964 = vsel %vm2625, %v3961, %v3963
      %v3965 = vrot.slane %v3937, 1
      %v3966 = vsel %vm2625, %v3963, %v3965
      %v3967 = vrot.slane %v3938, 1
      %v3968 = vsel %vm2625, %v3965, %v3967
      %v3969 = vrot.slane %v3939, 1
      %v3970 = vsel %vm2625, %v3967, %v3969
      %v3971 = vrot.slane %v3940, 1
      %v3972 = vsel %vm2625, %v3969, %v3971
      %v3973 = vrot.slane %v3941, 1
      %v3974 = vsel %vm2625, %v3971, %v3973
      %v3979 = vunpack.c.l.b16 %v3855
      %v3980 = vunpack.c.l.b16 %v3856
      %v3981 = vunpack.c.l.b16 %v3857
      %v3982 = vunpack.c.l.b16 %v3858
      %v3983 = vpack.c.b16 %v3980, %v3979
      %v3984 = vpack.c.b16 %v3982, %v3981
      %v3988 = vsel %vm1701, %v3944, 0
      %v3991 = vsel %vm1701, %v3946, 0
      %v3994 = vsel %vm1701, %v3948, 0
      %v3997 = vsel %vm1701, %v3950, 0
      %v4000 = vsel %vm1701, %v3952, 0
      %v4003 = vsel %vm1701, %v3954, 0
      %v4006 = vsel %vm1701, %v3956, 0
      %v4009 = vsel %vm1701, %v3958, 0
      %v4012 = vsel %vm1701, %v3960, 0
      %v4015 = vsel %vm1701, %v3962, 0
      %v4018 = vsel %vm1701, %v3964, 0
      %v4021 = vsel %vm1701, %v3966, 0
      %v4024 = vsel %vm1701, %v3968, 0
      %v4027 = vsel %vm1701, %v3970, 0
      %v4030 = vsel %vm1701, %v3972, 0
      %v4033 = vsel %vm1701, %v3974, 0
      %4035 = vmatprep.subr.bf16.mxu0 0
      %4036 = vmatpush1.bf16.msra.mxu0 %v3983
      %4037 = vmatprep.subr.bf16.mxu0 0
      %4038 = vmatpush1.bf16.msra.mxu0 %v3984
      %4039 = vmatprep.subr.bf16.mxu0 0
      %4040 = vmatpush1.bf16.msra.mxu0 0
      %4041 = vmatprep.subr.bf16.mxu0 0
      %4042 = vmatpush1.bf16.msra.mxu0 0
      %4043 = vmatprep.subr.bf16.mxu0 0
      %4044 = vmatpush1.bf16.msra.mxu0 0
      %4045 = vmatprep.subr.bf16.mxu0 0
      %4046 = vmatpush1.bf16.msra.mxu0 0
      %4047 = vmatprep.subr.bf16.mxu0 0
      %4048 = vmatpush1.bf16.msra.mxu0 0
      %4049 = vmatprep.subr.bf16.mxu0 0
      %4050 = vmatpush1.bf16.msra.mxu0 0
      %4051 = vmatprep.subr.bf16.mxu0 0
      %4052 = vmatpush1.bf16.msra.mxu0 0
      %4053 = vmatprep.subr.bf16.mxu0 0
      %4054 = vmatpush1.bf16.msra.mxu0 0
      %4055 = vmatprep.subr.bf16.mxu0 0
      %4056 = vmatpush1.bf16.msra.mxu0 0
      %4057 = vmatprep.subr.bf16.mxu0 0
      %4058 = vmatpush1.bf16.msra.mxu0 0
      %4059 = vmatprep.subr.bf16.mxu0 0
      %4060 = vmatpush1.bf16.msra.mxu0 0
      %4061 = vmatprep.subr.bf16.mxu0 0
      %4062 = vmatpush1.bf16.msra.mxu0 0
      %4063 = vmatprep.subr.bf16.mxu0 0
      %4064 = vmatpush1.bf16.msra.mxu0 0
      %4065 = vmatprep.subr.bf16.mxu0 0
      %4066 = vmatpush1.bf16.msra.mxu0 0
      %4067 = vmatprep.mubr.bf16.mxu0 0
      %4068 = vmatmul.mubr.bf16.gmra.mrb[0].mxu0 %v3988
      %v4069 = vpop.f32.mrb[0].mxu0
      %v4070 = vadd.f32 0.0, %v4069
      %v4071 = vpop.f32.mrb[0].mxu0
      %v4072 = vpop.f32.mrb[0].mxu0
      %v4073 = vadd.f32 0.0, %v4072
      %v4074 = vpop.f32.mrb[0].mxu0
      %4075 = vmatprep.mubr.bf16.mxu0 0
      %4076 = vmatmul.mubr.bf16.gmra.mrb[0].mxu0 %v3991
      %v4077 = vpop.f32.mrb[0].mxu0
      %v4078 = vadd.f32 0.0, %v4077
      %v4079 = vpop.f32.mrb[0].mxu0
      %v4080 = vpop.f32.mrb[0].mxu0
      %v4081 = vadd.f32 0.0, %v4080
      %v4082 = vpop.f32.mrb[0].mxu0
      %4083 = vmatprep.mubr.bf16.mxu0 0
      %4084 = vmatmul.mubr.bf16.gmra.mrb[0].mxu0 %v3994
      %v4085 = vpop.f32.mrb[0].mxu0
      %v4086 = vadd.f32 0.0, %v4085
      %v4087 = vpop.f32.mrb[0].mxu0
      %v4088 = vpop.f32.mrb[0].mxu0
      %v4089 = vadd.f32 0.0, %v4088
      %v4090 = vpop.f32.mrb[0].mxu0
      %4091 = vmatprep.mubr.bf16.mxu0 0
      %4092 = vmatmul.mubr.bf16.gmra.mrb[0].mxu0 %v3997
      %v4093 = vpop.f32.mrb[0].mxu0
      %v4094 = vadd.f32 0.0, %v4093
      %v4095 = vpop.f32.mrb[0].mxu0
      %v4096 = vpop.f32.mrb[0].mxu0
      %v4097 = vadd.f32 0.0, %v4096
      %v4098 = vpop.f32.mrb[0].mxu0
      %4099 = vmatprep.mubr.bf16.mxu0 0
      %4100 = vmatmul.mubr.bf16.gmra.mrb[0].mxu0 %v4000
      %v4101 = vpop.f32.mrb[0].mxu0
      %v4102 = vadd.f32 0.0, %v4101
      %v4103 = vpop.f32.mrb[0].mxu0
      %v4104 = vpop.f32.mrb[0].mxu0
      %v4105 = vadd.f32 0.0, %v4104
      %v4106 = vpop.f32.mrb[0].mxu0
      %4107 = vmatprep.mubr.bf16.mxu0 0
      %4108 = vmatmul.mubr.bf16.gmra.mrb[0].mxu0 %v4003
      %v4109 = vpop.f32.mrb[0].mxu0
      %v4110 = vadd.f32 0.0, %v4109
      %v4111 = vpop.f32.mrb[0].mxu0
      %v4112 = vpop.f32.mrb[0].mxu0
      %v4113 = vadd.f32 0.0, %v4112
      %v4114 = vpop.f32.mrb[0].mxu0
      %4115 = vmatprep.mubr.bf16.mxu0 0
      %4116 = vmatmul.mubr.bf16.gmra.mrb[0].mxu0 %v4006
      %v4117 = vpop.f32.mrb[0].mxu0
      %v4118 = vadd.f32 0.0, %v4117
      %v4119 = vpop.f32.mrb[0].mxu0
      %v4120 = vpop.f32.mrb[0].mxu0
      %v4121 = vadd.f32 0.0, %v4120
      %v4122 = vpop.f32.mrb[0].mxu0
      %4123 = vmatprep.mubr.bf16.mxu0 0
      %4124 = vmatmul.mubr.bf16.gmra.mrb[0].mxu0 %v4009
      %v4125 = vpop.f32.mrb[0].mxu0
      %v4126 = vadd.f32 0.0, %v4125
      %v4127 = vpop.f32.mrb[0].mxu0
      %v4128 = vpop.f32.mrb[0].mxu0
      %v4129 = vadd.f32 0.0, %v4128
      %v4130 = vpop.f32.mrb[0].mxu0
      %4131 = vmatprep.mubr.bf16.mxu0 0
      %4132 = vmatmul.mubr.bf16.gmra.mrb[0].mxu0 %v4012
      %v4133 = vpop.f32.mrb[0].mxu0
      %v4134 = vadd.f32 0.0, %v4133
      %v4135 = vpop.f32.mrb[0].mxu0
      %v4136 = vpop.f32.mrb[0].mxu0
      %v4137 = vadd.f32 0.0, %v4136
      %v4138 = vpop.f32.mrb[0].mxu0
      %4139 = vmatprep.mubr.bf16.mxu0 0
      %4140 = vmatmul.mubr.bf16.gmra.mrb[0].mxu0 %v4015
      %v4141 = vpop.f32.mrb[0].mxu0
      %v4142 = vadd.f32 0.0, %v4141
      %v4143 = vpop.f32.mrb[0].mxu0
      %v4144 = vpop.f32.mrb[0].mxu0
      %v4145 = vadd.f32 0.0, %v4144
      %v4146 = vpop.f32.mrb[0].mxu0
      %4147 = vmatprep.mubr.bf16.mxu0 0
      %4148 = vmatmul.mubr.bf16.gmra.mrb[0].mxu0 %v4018
      %v4149 = vpop.f32.mrb[0].mxu0
      %v4150 = vadd.f32 0.0, %v4149
      %v4151 = vpop.f32.mrb[0].mxu0
      %v4152 = vpop.f32.mrb[0].mxu0
      %v4153 = vadd.f32 0.0, %v4152
      %v4154 = vpop.f32.mrb[0].mxu0
      %4155 = vmatprep.mubr.bf16.mxu0 0
      %4156 = vmatmul.mubr.bf16.gmra.mrb[0].mxu0 %v4021
      %v4157 = vpop.f32.mrb[0].mxu0
      %v4158 = vadd.f32 0.0, %v4157
      %v4159 = vpop.f32.mrb[0].mxu0
      %v4160 = vpop.f32.mrb[0].mxu0
      %v4161 = vadd.f32 0.0, %v4160
      %v4162 = vpop.f32.mrb[0].mxu0
      %4163 = vmatprep.mubr.bf16.mxu0 0
      %4164 = vmatmul.mubr.bf16.gmra.mrb[0].mxu0 %v4024
      %v4165 = vpop.f32.mrb[0].mxu0
      %v4166 = vadd.f32 0.0, %v4165
      %v4167 = vpop.f32.mrb[0].mxu0
      %v4168 = vpop.f32.mrb[0].mxu0
      %v4169 = vadd.f32 0.0, %v4168
      %v4170 = vpop.f32.mrb[0].mxu0
      %4171 = vmatprep.mubr.bf16.mxu0 0
      %4172 = vmatmul.mubr.bf16.gmra.mrb[0].mxu0 %v4027
      %v4173 = vpop.f32.mrb[0].mxu0
      %v4174 = vadd.f32 0.0, %v4173
      %v4175 = vpop.f32.mrb[0].mxu0
      %v4176 = vpop.f32.mrb[0].mxu0
      %v4177 = vadd.f32 0.0, %v4176
      %v4178 = vpop.f32.mrb[0].mxu0
      %4179 = vmatprep.mubr.bf16.mxu0 0
      %4180 = vmatmul.mubr.bf16.gmra.mrb[0].mxu0 %v4030
      %v4181 = vpop.f32.mrb[0].mxu0
      %v4182 = vadd.f32 0.0, %v4181
      %v4183 = vpop.f32.mrb[0].mxu0
      %v4184 = vpop.f32.mrb[0].mxu0
      %v4185 = vadd.f32 0.0, %v4184
      %v4186 = vpop.f32.mrb[0].mxu0
      %4187 = vmatprep.mubr.bf16.mxu0 0
      %4188 = vmatmul.mubr.bf16.gmra.mrb[0].mxu0 %v4033
      %v4189 = vpop.f32.mrb[0].mxu0
      %v4190 = vadd.f32 0.0, %v4189
      %v4191 = vpop.f32.mrb[0].mxu0
      %v4192 = vpop.f32.mrb[0].mxu0
      %v4193 = vadd.f32 0.0, %v4192
      %v4194 = vpop.f32.mrb[0].mxu0
      %4195 = vdwg.mxu0
      %v4196 = vadd.f32 %v3788, %v4070
      %v4197 = vadd.f32 %v3789, %v4073
      %v4198 = vadd.f32 %v3790, %v4078
      %v4199 = vadd.f32 %v3791, %v4081
      %v4200 = vadd.f32 %v3792, %v4086
      %v4201 = vadd.f32 %v3793, %v4089
      %v4202 = vadd.f32 %v3794, %v4094
      %v4203 = vadd.f32 %v3795, %v4097
      %v4204 = vadd.f32 %v3796, %v4102
      %v4205 = vadd.f32 %v3797, %v4105
      %v4206 = vadd.f32 %v3798, %v4110
      %v4207 = vadd.f32 %v3799, %v4113
      %v4208 = vadd.f32 %v3800, %v4118
      %v4209 = vadd.f32 %v3801, %v4121
      %v4210 = vadd.f32 %v3802, %v4126
      %v4211 = vadd.f32 %v3803, %v4129
      %v4212 = vadd.f32 %v3804, %v4134
      %v4213 = vadd.f32 %v3805, %v4137
      %v4214 = vadd.f32 %v3806, %v4142
      %v4215 = vadd.f32 %v3807, %v4145
      %v4216 = vadd.f32 %v3808, %v4150
      %v4217 = vadd.f32 %v3809, %v4153
      %v4218 = vadd.f32 %v3810, %v4158
      %v4219 = vadd.f32 %v3811, %v4161
      %v4220 = vadd.f32 %v3812, %v4166
      %v4221 = vadd.f32 %v3813, %v4169
      %v4222 = vadd.f32 %v3814, %v4174
      %v4223 = vadd.f32 %v3815, %v4177
      %v4224 = vadd.f32 %v3816, %v4182
      %v4225 = vadd.f32 %v3817, %v4185
      %v4226 = vadd.f32 %v3818, %v4190
      %v4227 = vadd.f32 %v3819, %v4193
      %v4228 = vld [vmem:[#allocation2 + $0x10] sm:$0xf]
      %v4229 = vld [vmem:[#allocation2 + $0x14] sm:$0xf]
      %v4230 = vld [vmem:[#allocation2 + $0x18] sm:$0xf]
      %v4231 = vld [vmem:[#allocation2 + $0x1c] sm:$0xf]
      %v4232 = vld [vmem:[#allocation2 + $0x20] sm:$0xf]
      %v4233 = vld [vmem:[#allocation2 + $0x24] sm:$0xf]
      %v4234 = vld [vmem:[#allocation2 + $0x28] sm:$0xf]
      %v4235 = vld [vmem:[#allocation2 + $0x2c] sm:$0xf]
      %v4236 = vld [vmem:[#allocation2 + $0x30] sm:$0xf]
      %v4237 = vld [vmem:[#allocation2 + $0x34] sm:$0xf]
      %v4238 = vld [vmem:[#allocation2 + $0x38] sm:$0xf]
      %v4239 = vld [vmem:[#allocation2 + $0x3c] sm:$0xf]
      %v4240 = vld [vmem:[#allocation2 + $0x40] sm:$0xf]
      %v4241 = vld [vmem:[#allocation2 + $0x44] sm:$0xf]
      %v4242 = vld [vmem:[#allocation2 + $0x48] sm:$0xf]
      %v4243 = vld [vmem:[#allocation2 + $0x4c] sm:$0xf]
      %v4244 = vld [vmem:[#allocation2 + $0x50] sm:$0xf]
      %v4245 = vld [vmem:[#allocation2 + $0x54] sm:$0xf]
      %v4246 = vld [vmem:[#allocation2 + $0x58] sm:$0xf]
      %v4247 = vld [vmem:[#allocation2 + $0x5c] sm:$0xf]
      %v4248 = vld [vmem:[#allocation2 + $0x60] sm:$0xf]
      %v4249 = vld [vmem:[#allocation2 + $0x64] sm:$0xf]
      %v4250 = vld [vmem:[#allocation2 + $0x68] sm:$0xf]
      %v4251 = vld [vmem:[#allocation2 + $0x6c] sm:$0xf]
      %v4252 = vld [vmem:[#allocation2 + $0x70] sm:$0xf]
      %v4253 = vld [vmem:[#allocation2 + $0x74] sm:$0xf]
      %v4254 = vld [vmem:[#allocation2 + $0x78] sm:$0xf]
      %v4255 = vld [vmem:[#allocation2 + $0x7c] sm:$0xf]
      %v4256 = vld [vmem:[#allocation2 + $0x80] sm:$0xf]
      %v4257 = vld [vmem:[#allocation2 + $0x84] sm:$0xf]
      %v4258 = vld [vmem:[#allocation2 + $0x88] sm:$0xf]
      %v4259 = vld [vmem:[#allocation2 + $0x8c] sm:$0xf]
      %v4260 = vsel %vm1399, %v4228, 0
      %v4261 = vsel %vm1400, %v4229, 0
      %v4262 = vsel %vm1401, %v4230, 0
      %v4263 = vsel %vm1402, %v4231, 0
      %v4264 = vsel %vm1403, %v4232, 0
      %v4265 = vsel %vm1404, %v4233, 0
      %v4266 = vsel %vm1405, %v4234, 0
      %v4267 = vsel %vm1406, %v4235, 0
      %v4268 = vsel %vm1407, %v4236, 0
      %v4269 = vsel %vm1408, %v4237, 0
      %v4270 = vsel %vm1409, %v4238, 0
      %v4271 = vsel %vm1410, %v4239, 0
      %v4272 = vsel %vm1411, %v4240, 0
      %v4273 = vsel %vm1412, %v4241, 0
      %v4274 = vsel %vm1413, %v4242, 0
      %v4275 = vsel %vm1414, %v4243, 0
      %v4276 = vsel %vm1415, %v4244, 0
      %v4277 = vsel %vm1416, %v4245, 0
      %v4278 = vsel %vm1417, %v4246, 0
      %v4279 = vsel %vm1418, %v4247, 0
      %v4280 = vsel %vm1419, %v4248, 0
      %v4281 = vsel %vm1420, %v4249, 0
      %v4282 = vsel %vm1421, %v4250, 0
      %v4283 = vsel %vm1422, %v4251, 0
      %v4284 = vsel %vm1423, %v4252, 0
      %v4285 = vsel %vm1424, %v4253, 0
      %v4286 = vsel %vm1425, %v4254, 0
      %v4287 = vsel %vm1426, %v4255, 0
      %v4288 = vsel %vm1427, %v4256, 0
      %v4289 = vsel %vm1428, %v4257, 0
      %v4290 = vsel %vm1429, %v4258, 0
      %v4291 = vsel %vm1430, %v4259, 0
      %s4292 = scalar_lea.vmem %s3, 96
      %v4293 = vld [vmem:[%s4292] sm:$0xf]
      %v4294 = vld [vmem:[%s4292 + $0x4] sm:$0xf]
      %v4295 = vld [vmem:[%s4292 + $0x8] sm:$0xf]
      %v4296 = vld [vmem:[%s4292 + $0xc] sm:$0xf]
      %v4329 = vunpack.c.l.b16 %v4260
      %v4330 = vunpack.c.l.b16 %v4261
      %v4331 = vunpack.c.l.b16 %v4262
      %v4332 = vunpack.c.l.b16 %v4263
      %v4333 = vunpack.c.l.b16 %v4264
      %v4334 = vunpack.c.l.b16 %v4265
      %v4335 = vunpack.c.l.b16 %v4266
      %v4336 = vunpack.c.l.b16 %v4267
      %v4337 = vunpack.c.l.b16 %v4268
      %v4338 = vunpack.c.l.b16 %v4269
      %v4339 = vunpack.c.l.b16 %v4270
      %v4340 = vunpack.c.l.b16 %v4271
      %v4341 = vunpack.c.l.b16 %v4272
      %v4342 = vunpack.c.l.b16 %v4273
      %v4343 = vunpack.c.l.b16 %v4274
      %v4344 = vunpack.c.l.b16 %v4275
      %v4345 = vunpack.c.l.b16 %v4276
      %v4346 = vunpack.c.l.b16 %v4277
      %v4347 = vunpack.c.l.b16 %v4278
      %v4348 = vunpack.c.l.b16 %v4279
      %v4349 = vunpack.c.l.b16 %v4280
      %v4350 = vunpack.c.l.b16 %v4281
      %v4351 = vunpack.c.l.b16 %v4282
      %v4352 = vunpack.c.l.b16 %v4283
      %v4353 = vunpack.c.l.b16 %v4284
      %v4354 = vunpack.c.l.b16 %v4285
      %v4355 = vunpack.c.l.b16 %v4286
      %v4356 = vunpack.c.l.b16 %v4287
      %v4357 = vunpack.c.l.b16 %v4288
      %v4358 = vunpack.c.l.b16 %v4289
      %v4359 = vunpack.c.l.b16 %v4290
      %v4360 = vunpack.c.l.b16 %v4291
      %v4361 = vpack.c.b16 %v4330, %v4329
      %v4362 = vpack.c.b16 %v4332, %v4331
      %v4363 = vpack.c.b16 %v4334, %v4333
      %v4364 = vpack.c.b16 %v4336, %v4335
      %v4365 = vpack.c.b16 %v4338, %v4337
      %v4366 = vpack.c.b16 %v4340, %v4339
      %v4367 = vpack.c.b16 %v4342, %v4341
      %v4368 = vpack.c.b16 %v4344, %v4343
      %v4369 = vpack.c.b16 %v4346, %v4345
      %v4370 = vpack.c.b16 %v4348, %v4347
      %v4371 = vpack.c.b16 %v4350, %v4349
      %v4372 = vpack.c.b16 %v4352, %v4351
      %v4373 = vpack.c.b16 %v4354, %v4353
      %v4374 = vpack.c.b16 %v4356, %v4355
      %v4375 = vpack.c.b16 %v4358, %v4357
      %v4376 = vpack.c.b16 %v4360, %v4359
      %v4381 = vunpack.c.l.b16 %v4293
      %v4382 = vunpack.c.l.b16 %v4294
      %v4383 = vunpack.c.l.b16 %v4295
      %v4384 = vunpack.c.l.b16 %v4296
      %v4385 = vpack.c.b16 %v4382, %v4381
      %v4386 = vpack.c.b16 %v4384, %v4383
      %v4390 = vsel %vm1701, %v4361, 0
      %v4393 = vsel %vm1701, %v4362, 0
      %v4396 = vsel %vm1701, %v4363, 0
      %v4399 = vsel %vm1701, %v4364, 0
      %v4402 = vsel %vm1701, %v4365, 0
      %v4405 = vsel %vm1701, %v4366, 0
      %v4408 = vsel %vm1701, %v4367, 0
      %v4411 = vsel %vm1701, %v4368, 0
      %v4414 = vsel %vm1701, %v4369, 0
      %v4417 = vsel %vm1701, %v4370, 0
      %v4420 = vsel %vm1701, %v4371, 0
      %v4423 = vsel %vm1701, %v4372, 0
      %v4426 = vsel %vm1701, %v4373, 0
      %v4429 = vsel %vm1701, %v4374, 0
      %v4432 = vsel %vm1701, %v4375, 0
      %v4435 = vsel %vm1701, %v4376, 0
      %4437 = vmatprep.subr.bf16.mxu0 0
      %4438 = vmatpush1.bf16.msra.mxu0 %v4385
      %4439 = vmatprep.subr.bf16.mxu0 0
      %4440 = vmatpush1.bf16.msra.mxu0 %v4386
      %4441 = vmatprep.subr.bf16.mxu0 0
      %4442 = vmatpush1.bf16.msra.mxu0 0
      %4443 = vmatprep.subr.bf16.mxu0 0
      %4444 = vmatpush1.bf16.msra.mxu0 0
      %4445 = vmatprep.subr.bf16.mxu0 0
      %4446 = vmatpush1.bf16.msra.mxu0 0
      %4447 = vmatprep.subr.bf16.mxu0 0
      %4448 = vmatpush1.bf16.msra.mxu0 0
      %4449 = vmatprep.subr.bf16.mxu0 0
      %4450 = vmatpush1.bf16.msra.mxu0 0
      %4451 = vmatprep.subr.bf16.mxu0 0
      %4452 = vmatpush1.bf16.msra.mxu0 0
      %4453 = vmatprep.subr.bf16.mxu0 0
      %4454 = vmatpush1.bf16.msra.mxu0 0
      %4455 = vmatprep.subr.bf16.mxu0 0
      %4456 = vmatpush1.bf16.msra.mxu0 0
      %4457 = vmatprep.subr.bf16.mxu0 0
      %4458 = vmatpush1.bf16.msra.mxu0 0
      %4459 = vmatprep.subr.bf16.mxu0 0
      %4460 = vmatpush1.bf16.msra.mxu0 0
      %4461 = vmatprep.subr.bf16.mxu0 0
      %4462 = vmatpush1.bf16.msra.mxu0 0
      %4463 = vmatprep.subr.bf16.mxu0 0
      %4464 = vmatpush1.bf16.msra.mxu0 0
      %4465 = vmatprep.subr.bf16.mxu0 0
      %4466 = vmatpush1.bf16.msra.mxu0 0
      %4467 = vmatprep.subr.bf16.mxu0 0
      %4468 = vmatpush1.bf16.msra.mxu0 0
      %4469 = vmatprep.mubr.bf16.mxu0 0
      %4470 = vmatmul.mubr.bf16.gmra.mrb[0].mxu0 %v4390
      %v4471 = vpop.f32.mrb[0].mxu0
      %v4472 = vadd.f32 0.0, %v4471
      %v4473 = vpop.f32.mrb[0].mxu0
      %v4474 = vpop.f32.mrb[0].mxu0
      %v4475 = vadd.f32 0.0, %v4474
      %v4476 = vpop.f32.mrb[0].mxu0
      %4477 = vmatprep.mubr.bf16.mxu0 0
      %4478 = vmatmul.mubr.bf16.gmra.mrb[0].mxu0 %v4393
      %v4479 = vpop.f32.mrb[0].mxu0
      %v4480 = vadd.f32 0.0, %v4479
      %v4481 = vpop.f32.mrb[0].mxu0
      %v4482 = vpop.f32.mrb[0].mxu0
      %v4483 = vadd.f32 0.0, %v4482
      %v4484 = vpop.f32.mrb[0].mxu0
      %4485 = vmatprep.mubr.bf16.mxu0 0
      %4486 = vmatmul.mubr.bf16.gmra.mrb[0].mxu0 %v4396
      %v4487 = vpop.f32.mrb[0].mxu0
      %v4488 = vadd.f32 0.0, %v4487
      %v4489 = vpop.f32.mrb[0].mxu0
      %v4490 = vpop.f32.mrb[0].mxu0
      %v4491 = vadd.f32 0.0, %v4490
      %v4492 = vpop.f32.mrb[0].mxu0
      %4493 = vmatprep.mubr.bf16.mxu0 0
      %4494 = vmatmul.mubr.bf16.gmra.mrb[0].mxu0 %v4399
      %v4495 = vpop.f32.mrb[0].mxu0
      %v4496 = vadd.f32 0.0, %v4495
      %v4497 = vpop.f32.mrb[0].mxu0
      %v4498 = vpop.f32.mrb[0].mxu0
      %v4499 = vadd.f32 0.0, %v4498
      %v4500 = vpop.f32.mrb[0].mxu0
      %4501 = vmatprep.mubr.bf16.mxu0 0
      %4502 = vmatmul.mubr.bf16.gmra.mrb[0].mxu0 %v4402
      %v4503 = vpop.f32.mrb[0].mxu0
      %v4504 = vadd.f32 0.0, %v4503
      %v4505 = vpop.f32.mrb[0].mxu0
      %v4506 = vpop.f32.mrb[0].mxu0
      %v4507 = vadd.f32 0.0, %v4506
      %v4508 = vpop.f32.mrb[0].mxu0
      %4509 = vmatprep.mubr.bf16.mxu0 0
      %4510 = vmatmul.mubr.bf16.gmra.mrb[0].mxu0 %v4405
      %v4511 = vpop.f32.mrb[0].mxu0
      %v4512 = vadd.f32 0.0, %v4511
      %v4513 = vpop.f32.mrb[0].mxu0
      %v4514 = vpop.f32.mrb[0].mxu0
      %v4515 = vadd.f32 0.0, %v4514
      %v4516 = vpop.f32.mrb[0].mxu0
      %4517 = vmatprep.mubr.bf16.mxu0 0
      %4518 = vmatmul.mubr.bf16.gmra.mrb[0].mxu0 %v4408
      %v4519 = vpop.f32.mrb[0].mxu0
      %v4520 = vadd.f32 0.0, %v4519
      %v4521 = vpop.f32.mrb[0].mxu0
      %v4522 = vpop.f32.mrb[0].mxu0
      %v4523 = vadd.f32 0.0, %v4522
      %v4524 = vpop.f32.mrb[0].mxu0
      %4525 = vmatprep.mubr.bf16.mxu0 0
      %4526 = vmatmul.mubr.bf16.gmra.mrb[0].mxu0 %v4411
      %v4527 = vpop.f32.mrb[0].mxu0
      %v4528 = vadd.f32 0.0, %v4527
      %v4529 = vpop.f32.mrb[0].mxu0
      %v4530 = vpop.f32.mrb[0].mxu0
      %v4531 = vadd.f32 0.0, %v4530
      %v4532 = vpop.f32.mrb[0].mxu0
      %4533 = vmatprep.mubr.bf16.mxu0 0
      %4534 = vmatmul.mubr.bf16.gmra.mrb[0].mxu0 %v4414
      %v4535 = vpop.f32.mrb[0].mxu0
      %v4536 = vadd.f32 0.0, %v4535
      %v4537 = vpop.f32.mrb[0].mxu0
      %v4538 = vpop.f32.mrb[0].mxu0
      %v4539 = vadd.f32 0.0, %v4538
      %v4540 = vpop.f32.mrb[0].mxu0
      %4541 = vmatprep.mubr.bf16.mxu0 0
      %4542 = vmatmul.mubr.bf16.gmra.mrb[0].mxu0 %v4417
      %v4543 = vpop.f32.mrb[0].mxu0
      %v4544 = vadd.f32 0.0, %v4543
      %v4545 = vpop.f32.mrb[0].mxu0
      %v4546 = vpop.f32.mrb[0].mxu0
      %v4547 = vadd.f32 0.0, %v4546
      %v4548 = vpop.f32.mrb[0].mxu0
      %4549 = vmatprep.mubr.bf16.mxu0 0
      %4550 = vmatmul.mubr.bf16.gmra.mrb[0].mxu0 %v4420
      %v4551 = vpop.f32.mrb[0].mxu0
      %v4552 = vadd.f32 0.0, %v4551
      %v4553 = vpop.f32.mrb[0].mxu0
      %v4554 = vpop.f32.mrb[0].mxu0
      %v4555 = vadd.f32 0.0, %v4554
      %v4556 = vpop.f32.mrb[0].mxu0
      %4557 = vmatprep.mubr.bf16.mxu0 0
      %4558 = vmatmul.mubr.bf16.gmra.mrb[0].mxu0 %v4423
      %v4559 = vpop.f32.mrb[0].mxu0
      %v4560 = vadd.f32 0.0, %v4559
      %v4561 = vpop.f32.mrb[0].mxu0
      %v4562 = vpop.f32.mrb[0].mxu0
      %v4563 = vadd.f32 0.0, %v4562
      %v4564 = vpop.f32.mrb[0].mxu0
      %4565 = vmatprep.mubr.bf16.mxu0 0
      %4566 = vmatmul.mubr.bf16.gmra.mrb[0].mxu0 %v4426
      %v4567 = vpop.f32.mrb[0].mxu0
      %v4568 = vadd.f32 0.0, %v4567
      %v4569 = vpop.f32.mrb[0].mxu0
      %v4570 = vpop.f32.mrb[0].mxu0
      %v4571 = vadd.f32 0.0, %v4570
      %v4572 = vpop.f32.mrb[0].mxu0
      %4573 = vmatprep.mubr.bf16.mxu0 0
      %4574 = vmatmul.mubr.bf16.gmra.mrb[0].mxu0 %v4429
      %v4575 = vpop.f32.mrb[0].mxu0
      %v4576 = vadd.f32 0.0, %v4575
      %v4577 = vpop.f32.mrb[0].mxu0
      %v4578 = vpop.f32.mrb[0].mxu0
      %v4579 = vadd.f32 0.0, %v4578
      %v4580 = vpop.f32.mrb[0].mxu0
      %4581 = vmatprep.mubr.bf16.mxu0 0
      %4582 = vmatmul.mubr.bf16.gmra.mrb[0].mxu0 %v4432
      %v4583 = vpop.f32.mrb[0].mxu0
      %v4584 = vadd.f32 0.0, %v4583
      %v4585 = vpop.f32.mrb[0].mxu0
      %v4586 = vpop.f32.mrb[0].mxu0
      %v4587 = vadd.f32 0.0, %v4586
      %v4588 = vpop.f32.mrb[0].mxu0
      %4589 = vmatprep.mubr.bf16.mxu0 0
      %4590 = vmatmul.mubr.bf16.gmra.mrb[0].mxu0 %v4435
      %v4591 = vpop.f32.mrb[0].mxu0
      %v4592 = vadd.f32 0.0, %v4591
      %v4593 = vpop.f32.mrb[0].mxu0
      %v4594 = vpop.f32.mrb[0].mxu0
      %v4595 = vadd.f32 0.0, %v4594
      %v4596 = vpop.f32.mrb[0].mxu0
      %4597 = vdwg.mxu0
      %v4598 = vadd.f32 %v4196, %v4472
      %v4599 = vadd.f32 %v4197, %v4475
      %v4600 = vadd.f32 %v4198, %v4480
      %v4601 = vadd.f32 %v4199, %v4483
      %v4602 = vadd.f32 %v4200, %v4488
      %v4603 = vadd.f32 %v4201, %v4491
      %v4604 = vadd.f32 %v4202, %v4496
      %v4605 = vadd.f32 %v4203, %v4499
      %v4606 = vadd.f32 %v4204, %v4504
      %v4607 = vadd.f32 %v4205, %v4507
      %v4608 = vadd.f32 %v4206, %v4512
      %v4609 = vadd.f32 %v4207, %v4515
      %v4610 = vadd.f32 %v4208, %v4520
      %v4611 = vadd.f32 %v4209, %v4523
      %v4612 = vadd.f32 %v4210, %v4528
      %v4613 = vadd.f32 %v4211, %v4531
      %v4614 = vadd.f32 %v4212, %v4536
      %v4615 = vadd.f32 %v4213, %v4539
      %v4616 = vadd.f32 %v4214, %v4544
      %v4617 = vadd.f32 %v4215, %v4547
      %v4618 = vadd.f32 %v4216, %v4552
      %v4619 = vadd.f32 %v4217, %v4555
      %v4620 = vadd.f32 %v4218, %v4560
      %v4621 = vadd.f32 %v4219, %v4563
      %v4622 = vadd.f32 %v4220, %v4568
      %v4623 = vadd.f32 %v4221, %v4571
      %v4624 = vadd.f32 %v4222, %v4576
      %v4625 = vadd.f32 %v4223, %v4579
      %v4626 = vadd.f32 %v4224, %v4584
      %v4627 = vadd.f32 %v4225, %v4587
      %v4628 = vadd.f32 %v4226, %v4592
      %v4629 = vadd.f32 %v4227, %v4595
      %v4630 = vld [vmem:[#allocation2 + $0x10] sm:$0xf]
      %v4631 = vld [vmem:[#allocation2 + $0x14] sm:$0xf]
      %v4632 = vld [vmem:[#allocation2 + $0x18] sm:$0xf]
      %v4633 = vld [vmem:[#allocation2 + $0x1c] sm:$0xf]
      %v4634 = vld [vmem:[#allocation2 + $0x20] sm:$0xf]
      %v4635 = vld [vmem:[#allocation2 + $0x24] sm:$0xf]
      %v4636 = vld [vmem:[#allocation2 + $0x28] sm:$0xf]
      %v4637 = vld [vmem:[#allocation2 + $0x2c] sm:$0xf]
      %v4638 = vld [vmem:[#allocation2 + $0x30] sm:$0xf]
      %v4639 = vld [vmem:[#allocation2 + $0x34] sm:$0xf]
      %v4640 = vld [vmem:[#allocation2 + $0x38] sm:$0xf]
      %v4641 = vld [vmem:[#allocation2 + $0x3c] sm:$0xf]
      %v4642 = vld [vmem:[#allocation2 + $0x40] sm:$0xf]
      %v4643 = vld [vmem:[#allocation2 + $0x44] sm:$0xf]
      %v4644 = vld [vmem:[#allocation2 + $0x48] sm:$0xf]
      %v4645 = vld [vmem:[#allocation2 + $0x4c] sm:$0xf]
      %v4646 = vld [vmem:[#allocation2 + $0x50] sm:$0xf]
      %v4647 = vld [vmem:[#allocation2 + $0x54] sm:$0xf]
      %v4648 = vld [vmem:[#allocation2 + $0x58] sm:$0xf]
      %v4649 = vld [vmem:[#allocation2 + $0x5c] sm:$0xf]
      %v4650 = vld [vmem:[#allocation2 + $0x60] sm:$0xf]
      %v4651 = vld [vmem:[#allocation2 + $0x64] sm:$0xf]
      %v4652 = vld [vmem:[#allocation2 + $0x68] sm:$0xf]
      %v4653 = vld [vmem:[#allocation2 + $0x6c] sm:$0xf]
      %v4654 = vld [vmem:[#allocation2 + $0x70] sm:$0xf]
      %v4655 = vld [vmem:[#allocation2 + $0x74] sm:$0xf]
      %v4656 = vld [vmem:[#allocation2 + $0x78] sm:$0xf]
      %v4657 = vld [vmem:[#allocation2 + $0x7c] sm:$0xf]
      %v4658 = vld [vmem:[#allocation2 + $0x80] sm:$0xf]
      %v4659 = vld [vmem:[#allocation2 + $0x84] sm:$0xf]
      %v4660 = vld [vmem:[#allocation2 + $0x88] sm:$0xf]
      %v4661 = vld [vmem:[#allocation2 + $0x8c] sm:$0xf]
      %v4662 = vld [vmem:[#allocation2 + $0x90] sm:$0x1]
      %s4663 = scalar_lea.vmem %s3, 112
      %v4664 = vld [vmem:[%s4663] sm:$0xf]
      %v4665 = vld [vmem:[%s4663 + $0x4] sm:$0xf]
      %v4666 = vld [vmem:[%s4663 + $0x8] sm:$0xf]
      %v4667 = vld [vmem:[%s4663 + $0xc] sm:$0xf]
      %v4701 = vunpack.c.l.b16 %v4630
      %v4702 = vunpack.c.l.b16 %v4631
      %v4703 = vunpack.c.l.b16 %v4632
      %v4704 = vunpack.c.l.b16 %v4633
      %v4705 = vunpack.c.l.b16 %v4634
      %v4706 = vunpack.c.l.b16 %v4635
      %v4707 = vunpack.c.l.b16 %v4636
      %v4708 = vunpack.c.l.b16 %v4637
      %v4709 = vunpack.c.l.b16 %v4638
      %v4710 = vunpack.c.l.b16 %v4639
      %v4711 = vunpack.c.l.b16 %v4640
      %v4712 = vunpack.c.l.b16 %v4641
      %v4713 = vunpack.c.l.b16 %v4642
      %v4714 = vunpack.c.l.b16 %v4643
      %v4715 = vunpack.c.l.b16 %v4644
      %v4716 = vunpack.c.l.b16 %v4645
      %v4717 = vunpack.c.l.b16 %v4646
      %v4718 = vunpack.c.l.b16 %v4647
      %v4719 = vunpack.c.l.b16 %v4648
      %v4720 = vunpack.c.l.b16 %v4649
      %v4721 = vunpack.c.l.b16 %v4650
      %v4722 = vunpack.c.l.b16 %v4651
      %v4723 = vunpack.c.l.b16 %v4652
      %v4724 = vunpack.c.l.b16 %v4653
      %v4725 = vunpack.c.l.b16 %v4654
      %v4726 = vunpack.c.l.b16 %v4655
      %v4727 = vunpack.c.l.b16 %v4656
      %v4728 = vunpack.c.l.b16 %v4657
      %v4729 = vunpack.c.l.b16 %v4658
      %v4730 = vunpack.c.l.b16 %v4659
      %v4731 = vunpack.c.l.b16 %v4660
      %v4732 = vunpack.c.l.b16 %v4661
      %v4733 = vunpack.c.l.b16 %v4662
      %v4734 = vpack.c.b16 %v4702, %v4701
      %v4735 = vpack.c.b16 %v4704, %v4703
      %v4736 = vpack.c.b16 %v4706, %v4705
      %v4737 = vpack.c.b16 %v4708, %v4707
      %v4738 = vpack.c.b16 %v4710, %v4709
      %v4739 = vpack.c.b16 %v4712, %v4711
      %v4740 = vpack.c.b16 %v4714, %v4713
      %v4741 = vpack.c.b16 %v4716, %v4715
      %v4742 = vpack.c.b16 %v4718, %v4717
      %v4743 = vpack.c.b16 %v4720, %v4719
      %v4744 = vpack.c.b16 %v4722, %v4721
      %v4745 = vpack.c.b16 %v4724, %v4723
      %v4746 = vpack.c.b16 %v4726, %v4725
      %v4747 = vpack.c.b16 %v4728, %v4727
      %v4748 = vpack.c.b16 %v4730, %v4729
      %v4749 = vpack.c.b16 %v4732, %v4731
      %v4750 = vpack.c.b16 %v4733, %v4733
      %v4752 = vshrl.u32 %v4734, 16
      %v4754 = vshll.u32 %v4734, 16
      %v4756 = vrot.slane %v4754, 1
      %v4757 = vor.u32 %v4752, %v4756
      %v4759 = vshll.u32 %v4735, 16
      %v4761 = vrot.slane %v4759, 1
      %v4762 = vsel %vm1556, %v4757, %v4761
      %v4763 = vshrl.u32 %v4735, 16
      %v4765 = vor.u32 %v4763, %v4761
      %v4767 = vshll.u32 %v4736, 16
      %v4769 = vrot.slane %v4767, 1
      %v4770 = vsel %vm1556, %v4765, %v4769
      %v4771 = vshrl.u32 %v4736, 16
      %v4773 = vor.u32 %v4771, %v4769
      %v4775 = vshll.u32 %v4737, 16
      %v4777 = vrot.slane %v4775, 1
      %v4778 = vsel %vm1556, %v4773, %v4777
      %v4779 = vshrl.u32 %v4737, 16
      %v4781 = vor.u32 %v4779, %v4777
      %v4783 = vshll.u32 %v4738, 16
      %v4785 = vrot.slane %v4783, 1
      %v4786 = vsel %vm1556, %v4781, %v4785
      %v4787 = vshrl.u32 %v4738, 16
      %v4789 = vor.u32 %v4787, %v4785
      %v4791 = vshll.u32 %v4739, 16
      %v4793 = vrot.slane %v4791, 1
      %v4794 = vsel %vm1556, %v4789, %v4793
      %v4795 = vshrl.u32 %v4739, 16
      %v4797 = vor.u32 %v4795, %v4793
      %v4799 = vshll.u32 %v4740, 16
      %v4801 = vrot.slane %v4799, 1
      %v4802 = vsel %vm1556, %v4797, %v4801
      %v4803 = vshrl.u32 %v4740, 16
      %v4805 = vor.u32 %v4803, %v4801
      %v4807 = vshll.u32 %v4741, 16
      %v4809 = vrot.slane %v4807, 1
      %v4810 = vsel %vm1556, %v4805, %v4809
      %v4811 = vshrl.u32 %v4741, 16
      %v4813 = vor.u32 %v4811, %v4809
      %v4815 = vshll.u32 %v4742, 16
      %v4817 = vrot.slane %v4815, 1
      %v4818 = vsel %vm1556, %v4813, %v4817
      %v4819 = vshrl.u32 %v4742, 16
      %v4821 = vor.u32 %v4819, %v4817
      %v4823 = vshll.u32 %v4743, 16
      %v4825 = vrot.slane %v4823, 1
      %v4826 = vsel %vm1556, %v4821, %v4825
      %v4827 = vshrl.u32 %v4743, 16
      %v4829 = vor.u32 %v4827, %v4825
      %v4831 = vshll.u32 %v4744, 16
      %v4833 = vrot.slane %v4831, 1
      %v4834 = vsel %vm1556, %v4829, %v4833
      %v4835 = vshrl.u32 %v4744, 16
      %v4837 = vor.u32 %v4835, %v4833
      %v4839 = vshll.u32 %v4745, 16
      %v4841 = vrot.slane %v4839, 1
      %v4842 = vsel %vm1556, %v4837, %v4841
      %v4843 = vshrl.u32 %v4745, 16
      %v4845 = vor.u32 %v4843, %v4841
      %v4847 = vshll.u32 %v4746, 16
      %v4849 = vrot.slane %v4847, 1
      %v4850 = vsel %vm1556, %v4845, %v4849
      %v4851 = vshrl.u32 %v4746, 16
      %v4853 = vor.u32 %v4851, %v4849
      %v4855 = vshll.u32 %v4747, 16
      %v4857 = vrot.slane %v4855, 1
      %v4858 = vsel %vm1556, %v4853, %v4857
      %v4859 = vshrl.u32 %v4747, 16
      %v4861 = vor.u32 %v4859, %v4857
      %v4863 = vshll.u32 %v4748, 16
      %v4865 = vrot.slane %v4863, 1
      %v4866 = vsel %vm1556, %v4861, %v4865
      %v4867 = vshrl.u32 %v4748, 16
      %v4869 = vor.u32 %v4867, %v4865
      %v4871 = vshll.u32 %v4749, 16
      %v4873 = vrot.slane %v4871, 1
      %v4874 = vsel %vm1556, %v4869, %v4873
      %v4875 = vshrl.u32 %v4749, 16
      %v4877 = vor.u32 %v4875, %v4873
      %v4879 = vshll.u32 %v4750, 16
      %v4881 = vrot.slane %v4879, 1
      %v4882 = vsel %vm1556, %v4877, %v4881
      %v4887 = vunpack.c.l.b16 %v4664
      %v4888 = vunpack.c.l.b16 %v4665
      %v4889 = vunpack.c.l.b16 %v4666
      %v4890 = vunpack.c.l.b16 %v4667
      %v4891 = vpack.c.b16 %v4888, %v4887
      %v4892 = vpack.c.b16 %v4890, %v4889
      %v4896 = vsel %vm1701, %v4762, 0
      %v4899 = vsel %vm1701, %v4770, 0
      %v4902 = vsel %vm1701, %v4778, 0
      %v4905 = vsel %vm1701, %v4786, 0
      %v4908 = vsel %vm1701, %v4794, 0
      %v4911 = vsel %vm1701, %v4802, 0
      %v4914 = vsel %vm1701, %v4810, 0
      %v4917 = vsel %vm1701, %v4818, 0
      %v4920 = vsel %vm1701, %v4826, 0
      %v4923 = vsel %vm1701, %v4834, 0
      %v4926 = vsel %vm1701, %v4842, 0
      %v4929 = vsel %vm1701, %v4850, 0
      %v4932 = vsel %vm1701, %v4858, 0
      %v4935 = vsel %vm1701, %v4866, 0
      %v4938 = vsel %vm1701, %v4874, 0
      %v4941 = vsel %vm1701, %v4882, 0
      %4943 = vmatprep.subr.bf16.mxu0 0
      %4944 = vmatpush1.bf16.msra.mxu0 %v4891
      %4945 = vmatprep.subr.bf16.mxu0 0
      %4946 = vmatpush1.bf16.msra.mxu0 %v4892
      %4947 = vmatprep.subr.bf16.mxu0 0
      %4948 = vmatpush1.bf16.msra.mxu0 0
      %4949 = vmatprep.subr.bf16.mxu0 0
      %4950 = vmatpush1.bf16.msra.mxu0 0
      %4951 = vmatprep.subr.bf16.mxu0 0
      %4952 = vmatpush1.bf16.msra.mxu0 0
      %4953 = vmatprep.subr.bf16.mxu0 0
      %4954 = vmatpush1.bf16.msra.mxu0 0
      %4955 = vmatprep.subr.bf16.mxu0 0
      %4956 = vmatpush1.bf16.msra.mxu0 0
      %4957 = vmatprep.subr.bf16.mxu0 0
      %4958 = vmatpush1.bf16.msra.mxu0 0
      %4959 = vmatprep.subr.bf16.mxu0 0
      %4960 = vmatpush1.bf16.msra.mxu0 0
      %4961 = vmatprep.subr.bf16.mxu0 0
      %4962 = vmatpush1.bf16.msra.mxu0 0
      %4963 = vmatprep.subr.bf16.mxu0 0
      %4964 = vmatpush1.bf16.msra.mxu0 0
      %4965 = vmatprep.subr.bf16.mxu0 0
      %4966 = vmatpush1.bf16.msra.mxu0 0
      %4967 = vmatprep.subr.bf16.mxu0 0
      %4968 = vmatpush1.bf16.msra.mxu0 0
      %4969 = vmatprep.subr.bf16.mxu0 0
      %4970 = vmatpush1.bf16.msra.mxu0 0
      %4971 = vmatprep.subr.bf16.mxu0 0
      %4972 = vmatpush1.bf16.msra.mxu0 0
      %4973 = vmatprep.subr.bf16.mxu0 0
      %4974 = vmatpush1.bf16.msra.mxu0 0
      %4975 = vmatprep.mubr.bf16.mxu0 0
      %4976 = vmatmul.mubr.bf16.gmra.mrb[0].mxu0 %v4896
      %v4977 = vpop.f32.mrb[0].mxu0
      %v4978 = vadd.f32 0.0, %v4977
      %v4979 = vpop.f32.mrb[0].mxu0
      %v4980 = vpop.f32.mrb[0].mxu0
      %v4981 = vadd.f32 0.0, %v4980
      %v4982 = vpop.f32.mrb[0].mxu0
      %4983 = vmatprep.mubr.bf16.mxu0 0
      %4984 = vmatmul.mubr.bf16.gmra.mrb[0].mxu0 %v4899
      %v4985 = vpop.f32.mrb[0].mxu0
      %v4986 = vadd.f32 0.0, %v4985
      %v4987 = vpop.f32.mrb[0].mxu0
      %v4988 = vpop.f32.mrb[0].mxu0
      %v4989 = vadd.f32 0.0, %v4988
      %v4990 = vpop.f32.mrb[0].mxu0
      %4991 = vmatprep.mubr.bf16.mxu0 0
      %4992 = vmatmul.mubr.bf16.gmra.mrb[0].mxu0 %v4902
      %v4993 = vpop.f32.mrb[0].mxu0
      %v4994 = vadd.f32 0.0, %v4993
      %v4995 = vpop.f32.mrb[0].mxu0
      %v4996 = vpop.f32.mrb[0].mxu0
      %v4997 = vadd.f32 0.0, %v4996
      %v4998 = vpop.f32.mrb[0].mxu0
      %4999 = vmatprep.mubr.bf16.mxu0 0
      %5000 = vmatmul.mubr.bf16.gmra.mrb[0].mxu0 %v4905
      %v5001 = vpop.f32.mrb[0].mxu0
      %v5002 = vadd.f32 0.0, %v5001
      %v5003 = vpop.f32.mrb[0].mxu0
      %v5004 = vpop.f32.mrb[0].mxu0
      %v5005 = vadd.f32 0.0, %v5004
      %v5006 = vpop.f32.mrb[0].mxu0
      %5007 = vmatprep.mubr.bf16.mxu0 0
      %5008 = vmatmul.mubr.bf16.gmra.mrb[0].mxu0 %v4908
      %v5009 = vpop.f32.mrb[0].mxu0
      %v5010 = vadd.f32 0.0, %v5009
      %v5011 = vpop.f32.mrb[0].mxu0
      %v5012 = vpop.f32.mrb[0].mxu0
      %v5013 = vadd.f32 0.0, %v5012
      %v5014 = vpop.f32.mrb[0].mxu0
      %5015 = vmatprep.mubr.bf16.mxu0 0
      %5016 = vmatmul.mubr.bf16.gmra.mrb[0].mxu0 %v4911
      %v5017 = vpop.f32.mrb[0].mxu0
      %v5018 = vadd.f32 0.0, %v5017
      %v5019 = vpop.f32.mrb[0].mxu0
      %v5020 = vpop.f32.mrb[0].mxu0
      %v5021 = vadd.f32 0.0, %v5020
      %v5022 = vpop.f32.mrb[0].mxu0
      %5023 = vmatprep.mubr.bf16.mxu0 0
      %5024 = vmatmul.mubr.bf16.gmra.mrb[0].mxu0 %v4914
      %v5025 = vpop.f32.mrb[0].mxu0
      %v5026 = vadd.f32 0.0, %v5025
      %v5027 = vpop.f32.mrb[0].mxu0
      %v5028 = vpop.f32.mrb[0].mxu0
      %v5029 = vadd.f32 0.0, %v5028
      %v5030 = vpop.f32.mrb[0].mxu0
      %5031 = vmatprep.mubr.bf16.mxu0 0
      %5032 = vmatmul.mubr.bf16.gmra.mrb[0].mxu0 %v4917
      %v5033 = vpop.f32.mrb[0].mxu0
      %v5034 = vadd.f32 0.0, %v5033
      %v5035 = vpop.f32.mrb[0].mxu0
      %v5036 = vpop.f32.mrb[0].mxu0
      %v5037 = vadd.f32 0.0, %v5036
      %v5038 = vpop.f32.mrb[0].mxu0
      %5039 = vmatprep.mubr.bf16.mxu0 0
      %5040 = vmatmul.mubr.bf16.gmra.mrb[0].mxu0 %v4920
      %v5041 = vpop.f32.mrb[0].mxu0
      %v5042 = vadd.f32 0.0, %v5041
      %v5043 = vpop.f32.mrb[0].mxu0
      %v5044 = vpop.f32.mrb[0].mxu0
      %v5045 = vadd.f32 0.0, %v5044
      %v5046 = vpop.f32.mrb[0].mxu0
      %5047 = vmatprep.mubr.bf16.mxu0 0
      %5048 = vmatmul.mubr.bf16.gmra.mrb[0].mxu0 %v4923
      %v5049 = vpop.f32.mrb[0].mxu0
      %v5050 = vadd.f32 0.0, %v5049
      %v5051 = vpop.f32.mrb[0].mxu0
      %v5052 = vpop.f32.mrb[0].mxu0
      %v5053 = vadd.f32 0.0, %v5052
      %v5054 = vpop.f32.mrb[0].mxu0
      %5055 = vmatprep.mubr.bf16.mxu0 0
      %5056 = vmatmul.mubr.bf16.gmra.mrb[0].mxu0 %v4926
      %v5057 = vpop.f32.mrb[0].mxu0
      %v5058 = vadd.f32 0.0, %v5057
      %v5059 = vpop.f32.mrb[0].mxu0
      %v5060 = vpop.f32.mrb[0].mxu0
      %v5061 = vadd.f32 0.0, %v5060
      %v5062 = vpop.f32.mrb[0].mxu0
      %5063 = vmatprep.mubr.bf16.mxu0 0
      %5064 = vmatmul.mubr.bf16.gmra.mrb[0].mxu0 %v4929
      %v5065 = vpop.f32.mrb[0].mxu0
      %v5066 = vadd.f32 0.0, %v5065
      %v5067 = vpop.f32.mrb[0].mxu0
      %v5068 = vpop.f32.mrb[0].mxu0
      %v5069 = vadd.f32 0.0, %v5068
      %v5070 = vpop.f32.mrb[0].mxu0
      %5071 = vmatprep.mubr.bf16.mxu0 0
      %5072 = vmatmul.mubr.bf16.gmra.mrb[0].mxu0 %v4932
      %v5073 = vpop.f32.mrb[0].mxu0
      %v5074 = vadd.f32 0.0, %v5073
      %v5075 = vpop.f32.mrb[0].mxu0
      %v5076 = vpop.f32.mrb[0].mxu0
      %v5077 = vadd.f32 0.0, %v5076
      %v5078 = vpop.f32.mrb[0].mxu0
      %5079 = vmatprep.mubr.bf16.mxu0 0
      %5080 = vmatmul.mubr.bf16.gmra.mrb[0].mxu0 %v4935
      %v5081 = vpop.f32.mrb[0].mxu0
      %v5082 = vadd.f32 0.0, %v5081
      %v5083 = vpop.f32.mrb[0].mxu0
      %v5084 = vpop.f32.mrb[0].mxu0
      %v5085 = vadd.f32 0.0, %v5084
      %v5086 = vpop.f32.mrb[0].mxu0
      %5087 = vmatprep.mubr.bf16.mxu0 0
      %5088 = vmatmul.mubr.bf16.gmra.mrb[0].mxu0 %v4938
      %v5089 = vpop.f32.mrb[0].mxu0
      %v5090 = vadd.f32 0.0, %v5089
      %v5091 = vpop.f32.mrb[0].mxu0
      %v5092 = vpop.f32.mrb[0].mxu0
      %v5093 = vadd.f32 0.0, %v5092
      %v5094 = vpop.f32.mrb[0].mxu0
      %5095 = vmatprep.mubr.bf16.mxu0 0
      %5096 = vmatmul.mubr.bf16.gmra.mrb[0].mxu0 %v4941
      %v5097 = vpop.f32.mrb[0].mxu0
      %v5098 = vadd.f32 0.0, %v5097
      %v5099 = vpop.f32.mrb[0].mxu0
      %v5100 = vpop.f32.mrb[0].mxu0
      %v5101 = vadd.f32 0.0, %v5100
      %v5102 = vpop.f32.mrb[0].mxu0
      %5103 = vdwg.mxu0
      %v5104 = vadd.f32 %v4598, %v4978
      %v5105 = vadd.f32 %v4599, %v4981
      %v5106 = vadd.f32 %v4600, %v4986
      %v5107 = vadd.f32 %v4601, %v4989
      %v5108 = vadd.f32 %v4602, %v4994
      %v5109 = vadd.f32 %v4603, %v4997
      %v5110 = vadd.f32 %v4604, %v5002
      %v5111 = vadd.f32 %v4605, %v5005
      %v5112 = vadd.f32 %v4606, %v5010
      %v5113 = vadd.f32 %v4607, %v5013
      %v5114 = vadd.f32 %v4608, %v5018
      %v5115 = vadd.f32 %v4609, %v5021
      %v5116 = vadd.f32 %v4610, %v5026
      %v5117 = vadd.f32 %v4611, %v5029
      %v5118 = vadd.f32 %v4612, %v5034
      %v5119 = vadd.f32 %v4613, %v5037
      %v5120 = vadd.f32 %v4614, %v5042
      %v5121 = vadd.f32 %v4615, %v5045
      %v5122 = vadd.f32 %v4616, %v5050
      %v5123 = vadd.f32 %v4617, %v5053
      %v5124 = vadd.f32 %v4618, %v5058
      %v5125 = vadd.f32 %v4619, %v5061
      %v5126 = vadd.f32 %v4620, %v5066
      %v5127 = vadd.f32 %v4621, %v5069
      %v5128 = vadd.f32 %v4622, %v5074
      %v5129 = vadd.f32 %v4623, %v5077
      %v5130 = vadd.f32 %v4624, %v5082
      %v5131 = vadd.f32 %v4625, %v5085
      %v5132 = vadd.f32 %v4626, %v5090
      %v5133 = vadd.f32 %v4627, %v5093
      %v5134 = vadd.f32 %v4628, %v5098
      %v5135 = vadd.f32 %v4629, %v5101
      %v5136 = vld [vmem:[#allocation2 + $0x10] sm:$0xe]
      %v5137 = vsel %vm2471, %v5136, 0
      %v5138 = vsel %vm2472, %v4631, 0
      %v5139 = vsel %vm2473, %v4632, 0
      %v5140 = vsel %vm2474, %v4633, 0
      %v5141 = vsel %vm2475, %v4634, 0
      %v5142 = vsel %vm2476, %v4635, 0
      %v5143 = vsel %vm2477, %v4636, 0
      %v5144 = vsel %vm2478, %v4637, 0
      %v5145 = vsel %vm2479, %v4638, 0
      %v5146 = vsel %vm2480, %v4639, 0
      %v5147 = vsel %vm2481, %v4640, 0
      %v5148 = vsel %vm2482, %v4641, 0
      %v5149 = vsel %vm2483, %v4642, 0
      %v5150 = vsel %vm2484, %v4643, 0
      %v5151 = vsel %vm2485, %v4644, 0
      %v5152 = vsel %vm2486, %v4645, 0
      %v5153 = vsel %vm2487, %v4646, 0
      %v5154 = vsel %vm2488, %v4647, 0
      %v5155 = vsel %vm2489, %v4648, 0
      %v5156 = vsel %vm2490, %v4649, 0
      %v5157 = vsel %vm2491, %v4650, 0
      %v5158 = vsel %vm2492, %v4651, 0
      %v5159 = vsel %vm2493, %v4652, 0
      %v5160 = vsel %vm2494, %v4653, 0
      %v5161 = vsel %vm2495, %v4654, 0
      %v5162 = vsel %vm2496, %v4655, 0
      %v5163 = vsel %vm2497, %v4656, 0
      %v5164 = vsel %vm2498, %v4657, 0
      %v5165 = vsel %vm2499, %v4658, 0
      %v5166 = vsel %vm2500, %v4659, 0
      %v5167 = vsel %vm2501, %v4660, 0
      %v5168 = vsel %vm2502, %v4661, 0
      %v5169 = vsel %vm2503, %v4662, 0
      %s5170 = scalar_lea.vmem %s3, 128
      %v5171 = vld [vmem:[%s5170] sm:$0xf]
      %v5172 = vld [vmem:[%s5170 + $0x4] sm:$0xf]
      %v5173 = vld [vmem:[%s5170 + $0x8] sm:$0xf]
      %v5174 = vld [vmem:[%s5170 + $0xc] sm:$0xf]
      %v5208 = vunpack.c.l.b16 %v5137
      %v5209 = vunpack.c.l.b16 %v5138
      %v5210 = vunpack.c.l.b16 %v5139
      %v5211 = vunpack.c.l.b16 %v5140
      %v5212 = vunpack.c.l.b16 %v5141
      %v5213 = vunpack.c.l.b16 %v5142
      %v5214 = vunpack.c.l.b16 %v5143
      %v5215 = vunpack.c.l.b16 %v5144
      %v5216 = vunpack.c.l.b16 %v5145
      %v5217 = vunpack.c.l.b16 %v5146
      %v5218 = vunpack.c.l.b16 %v5147
      %v5219 = vunpack.c.l.b16 %v5148
      %v5220 = vunpack.c.l.b16 %v5149
      %v5221 = vunpack.c.l.b16 %v5150
      %v5222 = vunpack.c.l.b16 %v5151
      %v5223 = vunpack.c.l.b16 %v5152
      %v5224 = vunpack.c.l.b16 %v5153
      %v5225 = vunpack.c.l.b16 %v5154
      %v5226 = vunpack.c.l.b16 %v5155
      %v5227 = vunpack.c.l.b16 %v5156
      %v5228 = vunpack.c.l.b16 %v5157
      %v5229 = vunpack.c.l.b16 %v5158
      %v5230 = vunpack.c.l.b16 %v5159
      %v5231 = vunpack.c.l.b16 %v5160
      %v5232 = vunpack.c.l.b16 %v5161
      %v5233 = vunpack.c.l.b16 %v5162
      %v5234 = vunpack.c.l.b16 %v5163
      %v5235 = vunpack.c.l.b16 %v5164
      %v5236 = vunpack.c.l.b16 %v5165
      %v5237 = vunpack.c.l.b16 %v5166
      %v5238 = vunpack.c.l.b16 %v5167
      %v5239 = vunpack.c.l.b16 %v5168
      %v5240 = vunpack.c.l.b16 %v5169
      %v5241 = vpack.c.b16 %v5209, %v5208
      %v5242 = vpack.c.b16 %v5211, %v5210
      %v5243 = vpack.c.b16 %v5213, %v5212
      %v5244 = vpack.c.b16 %v5215, %v5214
      %v5245 = vpack.c.b16 %v5217, %v5216
      %v5246 = vpack.c.b16 %v5219, %v5218
      %v5247 = vpack.c.b16 %v5221, %v5220
      %v5248 = vpack.c.b16 %v5223, %v5222
      %v5249 = vpack.c.b16 %v5225, %v5224
      %v5250 = vpack.c.b16 %v5227, %v5226
      %v5251 = vpack.c.b16 %v5229, %v5228
      %v5252 = vpack.c.b16 %v5231, %v5230
      %v5253 = vpack.c.b16 %v5233, %v5232
      %v5254 = vpack.c.b16 %v5235, %v5234
      %v5255 = vpack.c.b16 %v5237, %v5236
      %v5256 = vpack.c.b16 %v5239, %v5238
      %v5257 = vpack.c.b16 %v5240, %v5240
      %v5258 = vrot.slane %v5241, 1
      %v5259 = vrot.slane %v5242, 1
      %v5260 = vsel %vm2625, %v5258, %v5259
      %v5261 = vrot.slane %v5243, 1
      %v5262 = vsel %vm2625, %v5259, %v5261
      %v5263 = vrot.slane %v5244, 1
      %v5264 = vsel %vm2625, %v5261, %v5263
      %v5265 = vrot.slane %v5245, 1
      %v5266 = vsel %vm2625, %v5263, %v5265
      %v5267 = vrot.slane %v5246, 1
      %v5268 = vsel %vm2625, %v5265, %v5267
      %v5269 = vrot.slane %v5247, 1
      %v5270 = vsel %vm2625, %v5267, %v5269
      %v5271 = vrot.slane %v5248, 1
      %v5272 = vsel %vm2625, %v5269, %v5271
      %v5273 = vrot.slane %v5249, 1
      %v5274 = vsel %vm2625, %v5271, %v5273
      %v5275 = vrot.slane %v5250, 1
      %v5276 = vsel %vm2625, %v5273, %v5275
      %v5277 = vrot.slane %v5251, 1
      %v5278 = vsel %vm2625, %v5275, %v5277
      %v5279 = vrot.slane %v5252, 1
      %v5280 = vsel %vm2625, %v5277, %v5279
      %v5281 = vrot.slane %v5253, 1
      %v5282 = vsel %vm2625, %v5279, %v5281
      %v5283 = vrot.slane %v5254, 1
      %v5284 = vsel %vm2625, %v5281, %v5283
      %v5285 = vrot.slane %v5255, 1
      %v5286 = vsel %vm2625, %v5283, %v5285
      %v5287 = vrot.slane %v5256, 1
      %v5288 = vsel %vm2625, %v5285, %v5287
      %v5289 = vrot.slane %v5257, 1
      %v5290 = vsel %vm2625, %v5287, %v5289
      %v5295 = vunpack.c.l.b16 %v5171
      %v5296 = vunpack.c.l.b16 %v5172
      %v5297 = vunpack.c.l.b16 %v5173
      %v5298 = vunpack.c.l.b16 %v5174
      %v5299 = vpack.c.b16 %v5296, %v5295
      %v5300 = vpack.c.b16 %v5298, %v5297
      %v5304 = vsel %vm1701, %v5260, 0
      %v5307 = vsel %vm1701, %v5262, 0
      %v5310 = vsel %vm1701, %v5264, 0
      %v5313 = vsel %vm1701, %v5266, 0
      %v5316 = vsel %vm1701, %v5268, 0
      %v5319 = vsel %vm1701, %v5270, 0
      %v5322 = vsel %vm1701, %v5272, 0
      %v5325 = vsel %vm1701, %v5274, 0
      %v5328 = vsel %vm1701, %v5276, 0
      %v5331 = vsel %vm1701, %v5278, 0
      %v5334 = vsel %vm1701, %v5280, 0
      %v5337 = vsel %vm1701, %v5282, 0
      %v5340 = vsel %vm1701, %v5284, 0
      %v5343 = vsel %vm1701, %v5286, 0
      %v5346 = vsel %vm1701, %v5288, 0
      %v5349 = vsel %vm1701, %v5290, 0
      %5351 = vmatprep.subr.bf16.mxu0 0
      %5352 = vmatpush1.bf16.msra.mxu0 %v5299
      %5353 = vmatprep.subr.bf16.mxu0 0
      %5354 = vmatpush1.bf16.msra.mxu0 %v5300
      %5355 = vmatprep.subr.bf16.mxu0 0
      %5356 = vmatpush1.bf16.msra.mxu0 0
      %5357 = vmatprep.subr.bf16.mxu0 0
      %5358 = vmatpush1.bf16.msra.mxu0 0
      %5359 = vmatprep.subr.bf16.mxu0 0
      %5360 = vmatpush1.bf16.msra.mxu0 0
      %5361 = vmatprep.subr.bf16.mxu0 0
      %5362 = vmatpush1.bf16.msra.mxu0 0
      %5363 = vmatprep.subr.bf16.mxu0 0
      %5364 = vmatpush1.bf16.msra.mxu0 0
      %5365 = vmatprep.subr.bf16.mxu0 0
      %5366 = vmatpush1.bf16.msra.mxu0 0
      %5367 = vmatprep.subr.bf16.mxu0 0
      %5368 = vmatpush1.bf16.msra.mxu0 0
      %5369 = vmatprep.subr.bf16.mxu0 0
      %5370 = vmatpush1.bf16.msra.mxu0 0
      %5371 = vmatprep.subr.bf16.mxu0 0
      %5372 = vmatpush1.bf16.msra.mxu0 0
      %5373 = vmatprep.subr.bf16.mxu0 0
      %5374 = vmatpush1.bf16.msra.mxu0 0
      %5375 = vmatprep.subr.bf16.mxu0 0
      %5376 = vmatpush1.bf16.msra.mxu0 0
      %5377 = vmatprep.subr.bf16.mxu0 0
      %5378 = vmatpush1.bf16.msra.mxu0 0
      %5379 = vmatprep.subr.bf16.mxu0 0
      %5380 = vmatpush1.bf16.msra.mxu0 0
      %5381 = vmatprep.subr.bf16.mxu0 0
      %5382 = vmatpush1.bf16.msra.mxu0 0
      %5383 = vmatprep.mubr.bf16.mxu0 0
      %5384 = vmatmul.mubr.bf16.gmra.mrb[0].mxu0 %v5304
      %v5385 = vpop.f32.mrb[0].mxu0
      %v5386 = vadd.f32 0.0, %v5385
      %v5387 = vpop.f32.mrb[0].mxu0
      %v5388 = vpop.f32.mrb[0].mxu0
      %v5389 = vadd.f32 0.0, %v5388
      %v5390 = vpop.f32.mrb[0].mxu0
      %5391 = vmatprep.mubr.bf16.mxu0 0
      %5392 = vmatmul.mubr.bf16.gmra.mrb[0].mxu0 %v5307
      %v5393 = vpop.f32.mrb[0].mxu0
      %v5394 = vadd.f32 0.0, %v5393
      %v5395 = vpop.f32.mrb[0].mxu0
      %v5396 = vpop.f32.mrb[0].mxu0
      %v5397 = vadd.f32 0.0, %v5396
      %v5398 = vpop.f32.mrb[0].mxu0
      %5399 = vmatprep.mubr.bf16.mxu0 0
      %5400 = vmatmul.mubr.bf16.gmra.mrb[0].mxu0 %v5310
      %v5401 = vpop.f32.mrb[0].mxu0
      %v5402 = vadd.f32 0.0, %v5401
      %v5403 = vpop.f32.mrb[0].mxu0
      %v5404 = vpop.f32.mrb[0].mxu0
      %v5405 = vadd.f32 0.0, %v5404
      %v5406 = vpop.f32.mrb[0].mxu0
      %5407 = vmatprep.mubr.bf16.mxu0 0
      %5408 = vmatmul.mubr.bf16.gmra.mrb[0].mxu0 %v5313
      %v5409 = vpop.f32.mrb[0].mxu0
      %v5410 = vadd.f32 0.0, %v5409
      %v5411 = vpop.f32.mrb[0].mxu0
      %v5412 = vpop.f32.mrb[0].mxu0
      %v5413 = vadd.f32 0.0, %v5412
      %v5414 = vpop.f32.mrb[0].mxu0
      %5415 = vmatprep.mubr.bf16.mxu0 0
      %5416 = vmatmul.mubr.bf16.gmra.mrb[0].mxu0 %v5316
      %v5417 = vpop.f32.mrb[0].mxu0
      %v5418 = vadd.f32 0.0, %v5417
      %v5419 = vpop.f32.mrb[0].mxu0
      %v5420 = vpop.f32.mrb[0].mxu0
      %v5421 = vadd.f32 0.0, %v5420
      %v5422 = vpop.f32.mrb[0].mxu0
      %5423 = vmatprep.mubr.bf16.mxu0 0
      %5424 = vmatmul.mubr.bf16.gmra.mrb[0].mxu0 %v5319
      %v5425 = vpop.f32.mrb[0].mxu0
      %v5426 = vadd.f32 0.0, %v5425
      %v5427 = vpop.f32.mrb[0].mxu0
      %v5428 = vpop.f32.mrb[0].mxu0
      %v5429 = vadd.f32 0.0, %v5428
      %v5430 = vpop.f32.mrb[0].mxu0
      %5431 = vmatprep.mubr.bf16.mxu0 0
      %5432 = vmatmul.mubr.bf16.gmra.mrb[0].mxu0 %v5322
      %v5433 = vpop.f32.mrb[0].mxu0
      %v5434 = vadd.f32 0.0, %v5433
      %v5435 = vpop.f32.mrb[0].mxu0
      %v5436 = vpop.f32.mrb[0].mxu0
      %v5437 = vadd.f32 0.0, %v5436
      %v5438 = vpop.f32.mrb[0].mxu0
      %5439 = vmatprep.mubr.bf16.mxu0 0
      %5440 = vmatmul.mubr.bf16.gmra.mrb[0].mxu0 %v5325
      %v5441 = vpop.f32.mrb[0].mxu0
      %v5442 = vadd.f32 0.0, %v5441
      %v5443 = vpop.f32.mrb[0].mxu0
      %v5444 = vpop.f32.mrb[0].mxu0
      %v5445 = vadd.f32 0.0, %v5444
      %v5446 = vpop.f32.mrb[0].mxu0
      %5447 = vmatprep.mubr.bf16.mxu0 0
      %5448 = vmatmul.mubr.bf16.gmra.mrb[0].mxu0 %v5328
      %v5449 = vpop.f32.mrb[0].mxu0
      %v5450 = vadd.f32 0.0, %v5449
      %v5451 = vpop.f32.mrb[0].mxu0
      %v5452 = vpop.f32.mrb[0].mxu0
      %v5453 = vadd.f32 0.0, %v5452
      %v5454 = vpop.f32.mrb[0].mxu0
      %5455 = vmatprep.mubr.bf16.mxu0 0
      %5456 = vmatmul.mubr.bf16.gmra.mrb[0].mxu0 %v5331
      %v5457 = vpop.f32.mrb[0].mxu0
      %v5458 = vadd.f32 0.0, %v5457
      %v5459 = vpop.f32.mrb[0].mxu0
      %v5460 = vpop.f32.mrb[0].mxu0
      %v5461 = vadd.f32 0.0, %v5460
      %v5462 = vpop.f32.mrb[0].mxu0
      %5463 = vmatprep.mubr.bf16.mxu0 0
      %5464 = vmatmul.mubr.bf16.gmra.mrb[0].mxu0 %v5334
      %v5465 = vpop.f32.mrb[0].mxu0
      %v5466 = vadd.f32 0.0, %v5465
      %v5467 = vpop.f32.mrb[0].mxu0
      %v5468 = vpop.f32.mrb[0].mxu0
      %v5469 = vadd.f32 0.0, %v5468
      %v5470 = vpop.f32.mrb[0].mxu0
      %5471 = vmatprep.mubr.bf16.mxu0 0
      %5472 = vmatmul.mubr.bf16.gmra.mrb[0].mxu0 %v5337
      %v5473 = vpop.f32.mrb[0].mxu0
      %v5474 = vadd.f32 0.0, %v5473
      %v5475 = vpop.f32.mrb[0].mxu0
      %v5476 = vpop.f32.mrb[0].mxu0
      %v5477 = vadd.f32 0.0, %v5476
      %v5478 = vpop.f32.mrb[0].mxu0
      %5479 = vmatprep.mubr.bf16.mxu0 0
      %5480 = vmatmul.mubr.bf16.gmra.mrb[0].mxu0 %v5340
      %v5481 = vpop.f32.mrb[0].mxu0
      %v5482 = vadd.f32 0.0, %v5481
      %v5483 = vpop.f32.mrb[0].mxu0
      %v5484 = vpop.f32.mrb[0].mxu0
      %v5485 = vadd.f32 0.0, %v5484
      %v5486 = vpop.f32.mrb[0].mxu0
      %5487 = vmatprep.mubr.bf16.mxu0 0
      %5488 = vmatmul.mubr.bf16.gmra.mrb[0].mxu0 %v5343
      %v5489 = vpop.f32.mrb[0].mxu0
      %v5490 = vadd.f32 0.0, %v5489
      %v5491 = vpop.f32.mrb[0].mxu0
      %v5492 = vpop.f32.mrb[0].mxu0
      %v5493 = vadd.f32 0.0, %v5492
      %v5494 = vpop.f32.mrb[0].mxu0
      %5495 = vmatprep.mubr.bf16.mxu0 0
      %5496 = vmatmul.mubr.bf16.gmra.mrb[0].mxu0 %v5346
      %v5497 = vpop.f32.mrb[0].mxu0
      %v5498 = vadd.f32 0.0, %v5497
      %v5499 = vpop.f32.mrb[0].mxu0
      %v5500 = vpop.f32.mrb[0].mxu0
      %v5501 = vadd.f32 0.0, %v5500
      %v5502 = vpop.f32.mrb[0].mxu0
      %5503 = vmatprep.mubr.bf16.mxu0 0
      %5504 = vmatmul.mubr.bf16.gmra.mrb[0].mxu0 %v5349
      %v5505 = vpop.f32.mrb[0].mxu0
      %v5506 = vadd.f32 0.0, %v5505
      %v5507 = vpop.f32.mrb[0].mxu0
      %v5508 = vpop.f32.mrb[0].mxu0
      %v5509 = vadd.f32 0.0, %v5508
      %v5510 = vpop.f32.mrb[0].mxu0
      %5511 = vdwg.mxu0
      %v5512 = vadd.f32 %v5104, %v5386
      %v5513 = vadd.f32 %v5105, %v5389
      %v5514 = vadd.f32 %v5106, %v5394
      %v5515 = vadd.f32 %v5107, %v5397
      %v5516 = vadd.f32 %v5108, %v5402
      %v5517 = vadd.f32 %v5109, %v5405
      %v5518 = vadd.f32 %v5110, %v5410
      %v5519 = vadd.f32 %v5111, %v5413
      %v5520 = vadd.f32 %v5112, %v5418
      %v5521 = vadd.f32 %v5113, %v5421
      %v5522 = vadd.f32 %v5114, %v5426
      %v5523 = vadd.f32 %v5115, %v5429
      %v5524 = vadd.f32 %v5116, %v5434
      %v5525 = vadd.f32 %v5117, %v5437
      %v5526 = vadd.f32 %v5118, %v5442
      %v5527 = vadd.f32 %v5119, %v5445
      %v5528 = vadd.f32 %v5120, %v5450
      %v5529 = vadd.f32 %v5121, %v5453
      %v5530 = vadd.f32 %v5122, %v5458
      %v5531 = vadd.f32 %v5123, %v5461
      %v5532 = vadd.f32 %v5124, %v5466
      %v5533 = vadd.f32 %v5125, %v5469
      %v5534 = vadd.f32 %v5126, %v5474
      %v5535 = vadd.f32 %v5127, %v5477
      %v5536 = vadd.f32 %v5128, %v5482
      %v5537 = vadd.f32 %v5129, %v5485
      %v5538 = vadd.f32 %v5130, %v5490
      %v5539 = vadd.f32 %v5131, %v5493
      %v5540 = vadd.f32 %v5132, %v5498
      %v5541 = vadd.f32 %v5133, %v5501
      %v5542 = vadd.f32 %v5134, %v5506
      %v5543 = vadd.f32 %v5135, %v5509
      %5544 = vst.msk [vmem:[%s231] sm:$0xff] %vm1701, %v5512
      %5545 = vst.msk [vmem:[%s231 + $0x8] sm:$0xff] %vm1701, %v5513
      %5546 = vst.msk [vmem:[%s231 + $0x10] sm:$0xff] %vm1701, %v5514
      %5547 = vst.msk [vmem:[%s231 + $0x18] sm:$0xff] %vm1701, %v5515
      %5548 = vst.msk [vmem:[%s231 + $0x20] sm:$0xff] %vm1701, %v5516
      %5549 = vst.msk [vmem:[%s231 + $0x28] sm:$0xff] %vm1701, %v5517
      %5550 = vst.msk [vmem:[%s231 + $0x30] sm:$0xff] %vm1701, %v5518
      %5551 = vst.msk [vmem:[%s231 + $0x38] sm:$0xff] %vm1701, %v5519
      %5552 = vst.msk [vmem:[%s231 + $0x40] sm:$0xff] %vm1701, %v5520
      %5553 = vst.msk [vmem:[%s231 + $0x48] sm:$0xff] %vm1701, %v5521
      %5554 = vst.msk [vmem:[%s231 + $0x50] sm:$0xff] %vm1701, %v5522
      %5555 = vst.msk [vmem:[%s231 + $0x58] sm:$0xff] %vm1701, %v5523
      %5556 = vst.msk [vmem:[%s231 + $0x60] sm:$0xff] %vm1701, %v5524
      %5557 = vst.msk [vmem:[%s231 + $0x68] sm:$0xff] %vm1701, %v5525
      %5558 = vst.msk [vmem:[%s231 + $0x70] sm:$0xff] %vm1701, %v5526
      %5559 = vst.msk [vmem:[%s231 + $0x78] sm:$0xff] %vm1701, %v5527
      %5560 = vst.msk [vmem:[%s231 + $0x80] sm:$0xff] %vm1701, %v5528
      %5561 = vst.msk [vmem:[%s231 + $0x88] sm:$0xff] %vm1701, %v5529
      %5562 = vst.msk [vmem:[%s231 + $0x90] sm:$0xff] %vm1701, %v5530
      %5563 = vst.msk [vmem:[%s231 + $0x98] sm:$0xff] %vm1701, %v5531
      %5564 = vst.msk [vmem:[%s231 + $0xa0] sm:$0xff] %vm1701, %v5532
      %5565 = vst.msk [vmem:[%s231 + $0xa8] sm:$0xff] %vm1701, %v5533
      %5566 = vst.msk [vmem:[%s231 + $0xb0] sm:$0xff] %vm1701, %v5534
      %5567 = vst.msk [vmem:[%s231 + $0xb8] sm:$0xff] %vm1701, %v5535
      %5568 = vst.msk [vmem:[%s231 + $0xc0] sm:$0xff] %vm1701, %v5536
      %5569 = vst.msk [vmem:[%s231 + $0xc8] sm:$0xff] %vm1701, %v5537
      %5570 = vst.msk [vmem:[%s231 + $0xd0] sm:$0xff] %vm1701, %v5538
      %5571 = vst.msk [vmem:[%s231 + $0xd8] sm:$0xff] %vm1701, %v5539
      %5572 = vst.msk [vmem:[%s231 + $0xe0] sm:$0xff] %vm1701, %v5540
      %5573 = vst.msk [vmem:[%s231 + $0xe8] sm:$0xff] %vm1701, %v5541
      %5574 = vst.msk [vmem:[%s231 + $0xf0] sm:$0xff] %vm1701, %v5542
      %5575 = vst.msk [vmem:[%s231 + $0xf8] sm:$0xff] %vm1701, %v5543
      %v5576 = vsel %vm1701, %v5512, 0.0
      %v5577 = vsel %vm1701, %v5513, 0.0
      %v5578 = vadd.f32 %v5576, %v5577
      %v5579 = vsel %vm1701, %v5514, 0.0
      %v5580 = vadd.f32 %v5578, %v5579
      %v5581 = vsel %vm1701, %v5515, 0.0
      %v5582 = vadd.f32 %v5580, %v5581
      %v5583 = vsel %vm1701, %v5516, 0.0
      %v5584 = vadd.f32 %v5582, %v5583
      %v5585 = vsel %vm1701, %v5517, 0.0
      %v5586 = vadd.f32 %v5584, %v5585
      %v5587 = vsel %vm1701, %v5518, 0.0
      %v5588 = vadd.f32 %v5586, %v5587
      %v5589 = vsel %vm1701, %v5519, 0.0
      %v5590 = vadd.f32 %v5588, %v5589
      %v5591 = vsel %vm1701, %v5520, 0.0
      %v5592 = vadd.f32 %v5590, %v5591
      %v5593 = vsel %vm1701, %v5521, 0.0
      %v5594 = vadd.f32 %v5592, %v5593
      %v5595 = vsel %vm1701, %v5522, 0.0
      %v5596 = vadd.f32 %v5594, %v5595
      %v5597 = vsel %vm1701, %v5523, 0.0
      %v5598 = vadd.f32 %v5596, %v5597
      %v5599 = vsel %vm1701, %v5524, 0.0
      %v5600 = vadd.f32 %v5598, %v5599
      %v5601 = vsel %vm1701, %v5525, 0.0
      %v5602 = vadd.f32 %v5600, %v5601
      %v5603 = vsel %vm1701, %v5526, 0.0
      %v5604 = vadd.f32 %v5602, %v5603
      %v5605 = vsel %vm1701, %v5527, 0.0
      %v5606 = vadd.f32 %v5604, %v5605
      %v5607 = vsel %vm1701, %v5528, 0.0
      %v5608 = vadd.f32 %v5606, %v5607
      %v5609 = vsel %vm1701, %v5529, 0.0
      %v5610 = vadd.f32 %v5608, %v5609
      %v5611 = vsel %vm1701, %v5530, 0.0
      %v5612 = vadd.f32 %v5610, %v5611
      %v5613 = vsel %vm1701, %v5531, 0.0
      %v5614 = vadd.f32 %v5612, %v5613
      %v5615 = vsel %vm1701, %v5532, 0.0
      %v5616 = vadd.f32 %v5614, %v5615
      %v5617 = vsel %vm1701, %v5533, 0.0
      %v5618 = vadd.f32 %v5616, %v5617
      %v5619 = vsel %vm1701, %v5534, 0.0
      %v5620 = vadd.f32 %v5618, %v5619
      %v5621 = vsel %vm1701, %v5535, 0.0
      %v5622 = vadd.f32 %v5620, %v5621
      %v5623 = vsel %vm1701, %v5536, 0.0
      %v5624 = vadd.f32 %v5622, %v5623
      %v5625 = vsel %vm1701, %v5537, 0.0
      %v5626 = vadd.f32 %v5624, %v5625
      %v5627 = vsel %vm1701, %v5538, 0.0
      %v5628 = vadd.f32 %v5626, %v5627
      %v5629 = vsel %vm1701, %v5539, 0.0
      %v5630 = vadd.f32 %v5628, %v5629
      %v5631 = vsel %vm1701, %v5540, 0.0
      %v5632 = vadd.f32 %v5630, %v5631
      %v5633 = vsel %vm1701, %v5541, 0.0
      %v5634 = vadd.f32 %v5632, %v5633
      %v5635 = vsel %vm1701, %v5542, 0.0
      %v5636 = vadd.f32 %v5634, %v5635
      %v5637 = vsel %vm1701, %v5543, 0.0
      %v5638 = vadd.f32 %v5636, %v5637
      %v5639 = vrot.slane %v5638, 4
      %v5640 = vadd.f32 %v5638, %v5639
      %v5641 = vrot.slane %v5640, 2
      %v5642 = vadd.f32 %v5640, %v5641
      %v5643 = vrot.slane %v5642, 1
      %v5644 = vadd.f32 %v5642, %v5643
      %v5645 = vmul.f32 %v5512, %v5512
      %v5646 = vmul.f32 %v5513, %v5513
      %v5647 = vmul.f32 %v5514, %v5514
      %v5648 = vmul.f32 %v5515, %v5515
      %v5649 = vmul.f32 %v5516, %v5516
      %v5650 = vmul.f32 %v5517, %v5517
      %v5651 = vmul.f32 %v5518, %v5518
      %v5652 = vmul.f32 %v5519, %v5519
      %v5653 = vmul.f32 %v5520, %v5520
      %v5654 = vmul.f32 %v5521, %v5521
      %v5655 = vmul.f32 %v5522, %v5522
      %v5656 = vmul.f32 %v5523, %v5523
      %v5657 = vmul.f32 %v5524, %v5524
      %v5658 = vmul.f32 %v5525, %v5525
      %v5659 = vmul.f32 %v5526, %v5526
      %v5660 = vmul.f32 %v5527, %v5527
      %v5661 = vmul.f32 %v5528, %v5528
      %v5662 = vmul.f32 %v5529, %v5529
      %v5663 = vmul.f32 %v5530, %v5530
      %v5664 = vmul.f32 %v5531, %v5531
      %v5665 = vmul.f32 %v5532, %v5532
      %v5666 = vmul.f32 %v5533, %v5533
      %v5667 = vmul.f32 %v5534, %v5534
      %v5668 = vmul.f32 %v5535, %v5535
      %v5669 = vmul.f32 %v5536, %v5536
      %v5670 = vmul.f32 %v5537, %v5537
      %v5671 = vmul.f32 %v5538, %v5538
      %v5672 = vmul.f32 %v5539, %v5539
      %v5673 = vmul.f32 %v5540, %v5540
      %v5674 = vmul.f32 %v5541, %v5541
      %v5675 = vmul.f32 %v5542, %v5542
      %v5676 = vmul.f32 %v5543, %v5543
      %v5677 = vsel %vm1701, %v5645, 0.0
      %v5678 = vsel %vm1701, %v5646, 0.0
      %v5679 = vadd.f32 %v5677, %v5678
      %v5680 = vsel %vm1701, %v5647, 0.0
      %v5681 = vadd.f32 %v5679, %v5680
      %v5682 = vsel %vm1701, %v5648, 0.0
      %v5683 = vadd.f32 %v5681, %v5682
      %v5684 = vsel %vm1701, %v5649, 0.0
      %v5685 = vadd.f32 %v5683, %v5684
      %v5686 = vsel %vm1701, %v5650, 0.0
      %v5687 = vadd.f32 %v5685, %v5686
      %v5688 = vsel %vm1701, %v5651, 0.0
      %v5689 = vadd.f32 %v5687, %v5688
      %v5690 = vsel %vm1701, %v5652, 0.0
      %v5691 = vadd.f32 %v5689, %v5690
      %v5692 = vsel %vm1701, %v5653, 0.0
      %v5693 = vadd.f32 %v5691, %v5692
      %v5694 = vsel %vm1701, %v5654, 0.0
      %v5695 = vadd.f32 %v5693, %v5694
      %v5696 = vsel %vm1701, %v5655, 0.0
      %v5697 = vadd.f32 %v5695, %v5696
      %v5698 = vsel %vm1701, %v5656, 0.0
      %v5699 = vadd.f32 %v5697, %v5698
      %v5700 = vsel %vm1701, %v5657, 0.0
      %v5701 = vadd.f32 %v5699, %v5700
      %v5702 = vsel %vm1701, %v5658, 0.0
      %v5703 = vadd.f32 %v5701, %v5702
      %v5704 = vsel %vm1701, %v5659, 0.0
      %v5705 = vadd.f32 %v5703, %v5704
      %v5706 = vsel %vm1701, %v5660, 0.0
      %v5707 = vadd.f32 %v5705, %v5706
      %v5708 = vsel %vm1701, %v5661, 0.0
      %v5709 = vadd.f32 %v5707, %v5708
      %v5710 = vsel %vm1701, %v5662, 0.0
      %v5711 = vadd.f32 %v5709, %v5710
      %v5712 = vsel %vm1701, %v5663, 0.0
      %v5713 = vadd.f32 %v5711, %v5712
      %v5714 = vsel %vm1701, %v5664, 0.0
      %v5715 = vadd.f32 %v5713, %v5714
      %v5716 = vsel %vm1701, %v5665, 0.0
      %v5717 = vadd.f32 %v5715, %v5716
      %v5718 = vsel %vm1701, %v5666, 0.0
      %v5719 = vadd.f32 %v5717, %v5718
      %v5720 = vsel %vm1701, %v5667, 0.0
      %v5721 = vadd.f32 %v5719, %v5720
      %v5722 = vsel %vm1701, %v5668, 0.0
      %v5723 = vadd.f32 %v5721, %v5722
      %v5724 = vsel %vm1701, %v5669, 0.0
      %v5725 = vadd.f32 %v5723, %v5724
      %v5726 = vsel %vm1701, %v5670, 0.0
      %v5727 = vadd.f32 %v5725, %v5726
      %v5728 = vsel %vm1701, %v5671, 0.0
      %v5729 = vadd.f32 %v5727, %v5728
      %v5730 = vsel %vm1701, %v5672, 0.0
      %v5731 = vadd.f32 %v5729, %v5730
      %v5732 = vsel %vm1701, %v5673, 0.0
      %v5733 = vadd.f32 %v5731, %v5732
      %v5734 = vsel %vm1701, %v5674, 0.0
      %v5735 = vadd.f32 %v5733, %v5734
      %v5736 = vsel %vm1701, %v5675, 0.0
      %v5737 = vadd.f32 %v5735, %v5736
      %v5738 = vsel %vm1701, %v5676, 0.0
      %v5739 = vadd.f32 %v5737, %v5738
      %v5740 = vrot.slane %v5739, 4
      %v5741 = vadd.f32 %v5739, %v5740
      %v5742 = vrot.slane %v5741, 2
      %v5743 = vadd.f32 %v5741, %v5742
      %v5744 = vrot.slane %v5743, 1
      %v5745 = vadd.f32 %v5743, %v5744
      %vm5746 = vcmask 1040384
      %v5747 = vsel %vm5746, %v5644, %v5745
      %vm5748 = vcmask 254976
      %5749 = vst.msk [vmem:[%s235] sm:$0x3] %vm5748, %v5747
      %p5750 = scmp.lt.s32.totalorder %s17, 1
      %s5751 = scalar_select %p5750, %s17, 1
      %s5752 = smul.addr %s5751, 32
      %s5753 = smul.addr %s5752, 8
      %s5754 = scalar_lea.vmem %s4, %s5753
      %p5755 = scmp.lt.s32.totalorder %s17, 1
      %s5756 = scalar_select %p5755, %s17, 1
      %s5757 = smul.addr %s5756, 2
      %s5758 = scalar_lea.vmem %s5, %s5757
      // Predicated region
      $region37: #{bottleneck_forward.5} parent=35 // pred_check
        %p5759 = pneg %p124
      $region38: #{bottleneck_forward.5} parent=35 // pred_check_branch
        %5761 = sbr.rel (%p5759) target = $region40
      $region39: #{bottleneck_forward.5} parent=35 // pred_region
        _
      $region40: #{bottleneck_forward.5} parent=35 // pred_fallthru
        _
      // Predicated region
      $region41: #{bottleneck_forward.5} parent=35 // pred_check
        %p5762 = pneg %p150
      $region42: #{bottleneck_forward.5} parent=35 // pred_check_branch
        %5764 = sbr.rel (%p5762) target = $region44
      $region43: #{bottleneck_forward.5} parent=35 // pred_region
        _
      $region44: #{bottleneck_forward.5} parent=35 // pred_fallthru
        _
    $region36: #{bottleneck_forward.5} parent=5 // pred_fallthru
      _
    %p5765 = scmp.le.s32.totalorder 2, %s12
    // Predicated region
    $region45: #{bottleneck_forward.5} parent=5 // pred_check
      %p5766 = pneg %p5765
    $region46: #{bottleneck_forward.5} parent=5 // pred_check_branch
      %5768 = sbr.rel (%p5766) target = $region48
    $region47: #{bottleneck_forward.5} parent=5 // pred_region
      %s5769 = ssub.s32 %s12, 2
      // Predicated region
      $region49: #{bottleneck_forward.5} parent=47 // pred_check
        %p5770 = pneg %p130
      $region50: #{bottleneck_forward.5} parent=47 // pred_check_branch
        %5772 = sbr.rel (%p5770) target = $region52
      $region51: #{bottleneck_forward.5} parent=47 // pred_region
        %p5773 = scmp.lt.s32.totalorder %s18, 1
        %s5774 = scalar_select %p5773, %s18, 1
        %s5775 = smul.addr %s5774, 32
        %s5776 = smul.addr %s5775, 8
        %s5777 = scalar_lea.vmem %s4, %s5776
      $region52: #{bottleneck_forward.5} parent=47 // pred_fallthru
        _
      // Predicated region
      $region53: #{bottleneck_forward.5} parent=47 // pred_check
        %p5778 = pneg %p156
      $region54: #{bottleneck_forward.5} parent=47 // pred_check_branch
        %5780 = sbr.rel (%p5778) target = $region56
      $region55: #{bottleneck_forward.5} parent=47 // pred_region
        %p5781 = scmp.lt.s32.totalorder %s18, 1
        %s5782 = scalar_select %p5781, %s18, 1
        %s5783 = smul.addr %s5782, 2
        %s5784 = scalar_lea.vmem %s5, %s5783
      $region56: #{bottleneck_forward.5} parent=47 // pred_fallthru
        _
    $region48: #{bottleneck_forward.5} parent=5 // pred_fallthru
      _
  $region6: #{bottleneck_forward.5} parent=0 // loop_footer
    %s16 = sadd.s32 1, %s12
  $region7: #{bottleneck_forward.5} parent=0 // loop_footer_branch
    %11 = sbr.rel target = $region3
  $region8: #{bottleneck_forward.5} parent=0 // loop_exit
    _

</llo_original>
